<compile_context>
chip_gen: v6e
topology: v6e:2x2x1
jax: 0.10.0
libtpu: 0.0.40
codegen_flags: <defaults>
</compile_context>

<pallas_src>
import functools

import jax
import jax.numpy as jnp
from jax.experimental import pallas as pl
from jax.experimental.pallas import tpu as pltpu

# Module hyper-parameters (PRNeRF defaults).
D = 8
RELIGHT_D = 5
W = 256
INPUT_CH = 3
INPUT_CH_VIEWS = 3
OUTPUT_CH = 4
SKIPS = (4,)

OUT_PAD = 128          # lane-dense output width (>= OUTPUT_CH, multiple of 128)
DEFAULT_TILE_N = 512   # rows per grid step; keep grid length >= 2 on v7x for
                       # realistic batches so both TensorCores are used.


# -----------------------------------------------------------------------------
# Pallas kernel
# -----------------------------------------------------------------------------
def _prnerf_kernel(relight, x_ref, pw_in_ref, pwh_ref, pb_ref, pwo_ref,
                   pbo_ref, *rest):
    if relight:
        rw0_ref, rwh_ref, rb_ref, rwo_ref, rbo_ref, out_ref = rest
    else:
        (out_ref,) = rest

    x = x_ref[...]                             # (TN, 6) f32
    x_bf = x.astype(jnp.bfloat16)              # MXU operands in bf16
    pts_bf = x_bf[:, :INPUT_CH]                # (TN, 3)

    # Fused input projection: [pw0 | pw_skip] is one (3, 2W) bf16 weight.
    pts_proj = jnp.dot(pts_bf, pw_in_ref[...],
                       preferred_element_type=jnp.float32)      # (TN, 2W) f32

    # Paint trunk.  Layer 0: input_ch -> W.
    h = jax.nn.relu(pts_proj[:, :W] + pb_ref[0])                # f32
    # Layers 1 .. D-1 (W -> W); layer (skip+1) additionally consumes input_pts.
    for i in range(1, D):
        z = (jnp.dot(h.astype(jnp.bfloat16), pwh_ref[i - 1],
                     preferred_element_type=jnp.float32) + pb_ref[i])
        if (i - 1) in SKIPS:
            # Equivalent to cat([input_pts, h]) @ W_full (W_full split).
            z = z + pts_proj[:, W:]
        h = jax.nn.relu(z)

    # Output layer, lane-dense (columns OUTPUT_CH..127 of pwo/pbo are zero).
    paint = (jnp.dot(h.astype(jnp.bfloat16), pwo_ref[...],
                     preferred_element_type=jnp.float32) + pbo_ref[...])

    if relight:
        hx = jax.nn.relu(
            jnp.dot(x_bf, rw0_ref[...], preferred_element_type=jnp.float32)
            + rb_ref[0])
        for i in range(1, RELIGHT_D + 1):
            hx = jax.nn.relu(
                jnp.dot(hx.astype(jnp.bfloat16), rwh_ref[i - 1],
                        preferred_element_type=jnp.float32) + rb_ref[i])
        # rwo/rbo are zero-padded past column 3, so r[:, 3:] == 0 and the plain
        # add implements paint_out[..., :3] += relight_out.
        r = (jnp.dot(hx.astype(jnp.bfloat16), rwo_ref[...],
                     preferred_element_type=jnp.float32) + rbo_ref[...])
        paint = paint + r

    out_ref[...] = paint.astype(out_ref.dtype)


def _const_map(ndim):
    return lambda i: (0,) * ndim


# -----------------------------------------------------------------------------
# Kernel-layout parameter preparation (bf16 weights, f32 biases, padded output)
# -----------------------------------------------------------------------------
def _prep_kernel_params(params, relight):
    wdt = jnp.bfloat16
    # Fuse layer-0 and skip input weights into one (INPUT_CH, 2W) matrix.
    pw_in = jnp.concatenate([params["pw0"], params["pw_skip"]],
                            axis=1).astype(wdt)                  # (3, 2W)
    pwh = params["pwh"].astype(wdt)                              # (D-1, W, W)
    pb = params["pb"].astype(jnp.float32)                        # (D, W)
    pwo = jnp.zeros((W, OUT_PAD), wdt).at[:, :OUTPUT_CH].set(
        params["pwo"].astype(wdt))                               # (W, 128)
    pbo = jnp.zeros((1, OUT_PAD), jnp.float32).at[:, :OUTPUT_CH].set(
        params["pbo"].reshape(1, OUTPUT_CH).astype(jnp.float32)) # (1, 128)
    arrays = [pw_in, pwh, pb, pwo, pbo]
    if relight:
        rw0 = params["rw0"].astype(wdt)                          # (6, W)
        rwh = params["rwh"].astype(wdt)                          # (RD, W, W)
        rb = params["rb"].astype(jnp.float32)                    # (RD+1, W)
        rwo = jnp.zeros((W, OUT_PAD), wdt).at[:, :3].set(
            params["rwo"].astype(wdt))                           # (W, 128)
        rbo = jnp.zeros((1, OUT_PAD), jnp.float32).at[:, :3].set(
            params["rbo"].reshape(1, 3).astype(jnp.float32))     # (1, 128)
        arrays += [rw0, rwh, rb, rwo, rbo]
    return arrays


def prnerf_forward(x, params, relight=False, tile_n=DEFAULT_TILE_N):
    n = x.shape[0]
    n_blocks = pl.cdiv(n, tile_n)
    n_pad = n_blocks * tile_n
    if n_pad != n:
        x = jnp.pad(x, ((0, n_pad - n), (0, 0)))

    weight_arrays = _prep_kernel_params(params, relight)
    arrays = [x] + weight_arrays

    in_specs = [pl.BlockSpec((tile_n, INPUT_CH + INPUT_CH_VIEWS),
                             lambda i: (i, 0))]
    for a in weight_arrays:
        # Weights/biases are grid-invariant: whole array, constant block index.
        in_specs.append(pl.BlockSpec(a.shape, _const_map(a.ndim)))

    # Advisory cost estimate (helps XLA schedule around the custom call).
    flops = 2 * n_pad * (2 * INPUT_CH * W + (D - 1) * W * W + W * OUT_PAD)
    if relight:
        flops += 2 * n_pad * ((INPUT_CH + INPUT_CH_VIEWS) * W
                              + RELIGHT_D * W * W + W * OUT_PAD)
    bytes_accessed = (n_pad * OUT_PAD * 4
                      + sum(int(a.size) * a.dtype.itemsize for a in arrays))
    cost = pl.CostEstimate(flops=int(flops), transcendentals=0,
                           bytes_accessed=int(bytes_accessed))

    out = pl.pallas_call(
        functools.partial(_prnerf_kernel, relight),
        out_shape=jax.ShapeDtypeStruct((n_pad, OUT_PAD), x.dtype),
        grid=(n_blocks,),
        in_specs=in_specs,
        out_specs=pl.BlockSpec((tile_n, OUT_PAD), lambda i: (i, 0)),
        compiler_params=pltpu.CompilerParams(
            dimension_semantics=("parallel",)),
        cost_estimate=cost,
    )(*arrays)
    return out[:n, :OUTPUT_CH]


# -----------------------------------------------------------------------------
# Deterministic parameter construction (PyTorch-Linear-style uniform init)
# -----------------------------------------------------------------------------
def _linear(key, fan_in, fan_out):
    kw, kb = jax.random.split(key)
    bound = 1.0 / float(fan_in) ** 0.5
    w = jax.random.uniform(kw, (fan_in, fan_out), jnp.float32, -bound, bound)
    b = jax.random.uniform(kb, (fan_out,), jnp.float32, -bound, bound)
    return w, b


def make_params(key):
    keys = jax.random.split(key, D + 1 + RELIGHT_D + 1 + 2)
    ki = iter(keys)

    # Paint trunk.
    pw0, pb0 = _linear(next(ki), INPUT_CH, W)
    hidden_ws, hidden_bs = [], [pb0]
    pw_skip = None
    for i in range(1, D):
        fan_in = W + INPUT_CH if (i - 1) in SKIPS else W
        w, b = _linear(next(ki), fan_in, W)
        if fan_in == W + INPUT_CH:
            pw_skip = w[:INPUT_CH]       # part applied to input_pts
            w = w[INPUT_CH:]             # part applied to hidden state
        hidden_ws.append(w)
        hidden_bs.append(b)
    pwo, pbo = _linear(next(ki), W, OUTPUT_CH)

    # Relight branch.
    rw0, rb0 = _linear(next(ki), INPUT_CH + INPUT_CH_VIEWS, W)
    r_ws, r_bs = [], [rb0]
    for _ in range(RELIGHT_D):
        w, b = _linear(next(ki), W, W)
        r_ws.append(w)
        r_bs.append(b)
    rwo, rbo = _linear(next(ki), W, 3)

    return {
        "pw0": pw0,                             # (3, W)
        "pw_skip": pw_skip,                     # (3, W)
        "pwh": jnp.stack(hidden_ws),            # (D-1, W, W)
        "pb": jnp.stack(hidden_bs),             # (D, W)
        "pwo": pwo,                             # (W, 4)
        "pbo": pbo.reshape(1, OUTPUT_CH),       # (1, 4)
        "rw0": rw0,                             # (6, W)
        "rwh": jnp.stack(r_ws),                 # (RELIGHT_D, W, W)
        "rb": jnp.stack(r_bs),                  # (RELIGHT_D+1, W)
        "rwo": rwo,                             # (W, 3)
        "rbo": rbo.reshape(1, 3),               # (1, 3)
    }


# -----------------------------------------------------------------------------
# Pure-JAX reference (mirrors the PyTorch forward exactly; matmul_dtype lets us
# reproduce the kernel's bf16-operand / f32-accumulate numerics)
# -----------------------------------------------------------------------------
def prnerf_reference(x, p, relight=False, matmul_dtype=jnp.float32):
    def mm(a, w):
        return jnp.dot(a.astype(matmul_dtype), w.astype(matmul_dtype),
                       preferred_element_type=jnp.float32)

    pts = x[:, :INPUT_CH]
    h = jax.nn.relu(mm(pts, p["pw0"]) + p["pb"][0])
    for i in range(1, D):
        if (i - 1) in SKIPS:
            h_cat = jnp.concatenate([pts, h], axis=-1)
            w_full = jnp.concatenate([p["pw_skip"], p["pwh"][i - 1]], axis=0)
            h = jax.nn.relu(mm(h_cat, w_full) + p["pb"][i])
        else:
            h = jax.nn.relu(mm(h, p["pwh"][i - 1]) + p["pb"][i])
    paint = mm(h, p["pwo"]) + p["pbo"]
    if relight:
        hx = jax.nn.relu(mm(x, p["rw0"]) + p["rb"][0])
        for i in range(1, RELIGHT_D + 1):
            hx = jax.nn.relu(mm(hx, p["rwh"][i - 1]) + p["rb"][i])
        r = mm(hx, p["rwo"]) + p["rbo"]
        paint = paint.at[:, :3].add(r)
    return paint


if __name__ == "__main__":
    key = jax.random.PRNGKey(0)
    kx, kp = jax.random.split(key)

    # Deliberately NOT a multiple of tile_n: exercises the cdiv/padding path.
    n_rays = 300
    x = jax.random.normal(kx, (n_rays, INPUT_CH + INPUT_CH_VIEWS), jnp.float32)
    params = make_params(kp)

    fwd = jax.jit(prnerf_forward, static_argnames=("relight", "tile_n"))

    for relight in (False, True):   # False = PRNeRF.__init__, True = .relighting()
        out = jax.block_until_ready(fwd(x, params, relight=relight))
        assert out.shape == (n_rays, OUTPUT_CH)
        # Exact-wiring check against a reference with the same bf16 matmul
        # operands / f32 accumulation as the kernel.
        ref_bf = prnerf_reference(x, params, relight=relight,
                                  matmul_dtype=jnp.bfloat16)
        assert jnp.allclose(out, ref_bf, atol=1e-2, rtol=1e-2), relight
        # Proximity to the original full-f32 PyTorch semantics.
        ref_f32 = prnerf_reference(x, params, relight=relight,
                                   matmul_dtype=jnp.float32)
        assert jnp.allclose(out, ref_f32, atol=6e-2, rtol=6e-2), relight

    print("KERNEL_OK")
</pallas_src>

<mosaic_0001>
module attributes {stable_mosaic.version = 11 : i64} {
  func.func @_prnerf_kernel(%arg0: i32, %arg1: memref<512x6xf32, #tpu.memory_space<vmem>>, %arg2: memref<3x512xbf16, #tpu.memory_space<vmem>>, %arg3: memref<7x256x256xbf16, #tpu.memory_space<vmem>>, %arg4: memref<8x256xf32, #tpu.memory_space<vmem>>, %arg5: memref<256x128xbf16, #tpu.memory_space<vmem>>, %arg6: memref<1x128xf32, #tpu.memory_space<vmem>>, %arg7: memref<512x128xf32, #tpu.memory_space<vmem>>) attributes {dimension_semantics = [#tpu.dimension_semantics<parallel>], iteration_bounds = array<i64: 1>, scalar_prefetch = 0 : i64, scratch_operands = 0 : i64, tpu.core_type = #tpu.core_type<tc>, window_params = [{transform_indices = @transform_0, window_bounds = array<i64: 512, 6>}, {pipeline_mode = #tpu.pipeline_mode<synchronous>, transform_indices = @transform_1, window_bounds = array<i64: 3, 512>}, {pipeline_mode = #tpu.pipeline_mode<synchronous>, transform_indices = @transform_2, window_bounds = array<i64: 7, 256, 256>}, {pipeline_mode = #tpu.pipeline_mode<synchronous>, transform_indices = @transform_3, window_bounds = array<i64: 8, 256>}, {pipeline_mode = #tpu.pipeline_mode<synchronous>, transform_indices = @transform_4, window_bounds = array<i64: 256, 128>}, {pipeline_mode = #tpu.pipeline_mode<synchronous>, transform_indices = @transform_5, window_bounds = array<i64: 1, 128>}, {transform_indices = @transform_6, window_bounds = array<i64: 512, 128>}]} {
    %c0 = arith.constant 0 : index
    %c0_0 = arith.constant 0 : index
    %0 = vector.load %arg1[%c0, %c0_0] : memref<512x6xf32, #tpu.memory_space<vmem>>, vector<512x6xf32>
    %1 = arith.truncf %0 : vector<512x6xf32> to vector<512x6xbf16>
    %2 = vector.extract_strided_slice %1 {offsets = [0, 0], sizes = [512, 3], strides = [1, 1]} : vector<512x6xbf16> to vector<512x3xbf16>
    %c0_1 = arith.constant 0 : index
    %c0_2 = arith.constant 0 : index
    %3 = vector.load %arg2[%c0_1, %c0_2] : memref<3x512xbf16, #tpu.memory_space<vmem>>, vector<3x512xbf16>
    %cst = arith.constant dense<0.000000e+00> : vector<512x512xf32>
    %4 = tpu.matmul %2, %3, %cst {dimension_numbers = #tpu.dot_dimension_numbers<[1], [0], [0], [1], [0, 0, 1, 1], [], []>} : vector<512x3xbf16>, vector<3x512xbf16>, vector<512x512xf32> -> vector<512x512xf32>
    %5 = vector.extract_strided_slice %4 {offsets = [0, 0], sizes = [512, 256], strides = [1, 1]} : vector<512x512xf32> to vector<512x256xf32>
    %c0_3 = arith.constant 0 : index
    %c0_4 = arith.constant 0 : index
    %6 = vector.load %arg4[%c0_3, %c0_4] : memref<8x256xf32, #tpu.memory_space<vmem>>, vector<1x256xf32>
    %7 = vector.shape_cast %6 : vector<1x256xf32> to vector<256xf32>
    %8 = vector.shape_cast %7 : vector<256xf32> to vector<1x256xf32>
    %9 = vector.broadcast %8 : vector<1x256xf32> to vector<512x256xf32>
    %10 = arith.addf %5, %9 : vector<512x256xf32>
    %cst_5 = arith.constant 0.000000e+00 : f32
    %11 = vector.broadcast %cst_5 : f32 to vector<512x256xf32>
    %12 = arith.maximumf %10, %11 : vector<512x256xf32>
    %13 = arith.truncf %12 : vector<512x256xf32> to vector<512x256xbf16>
    %c0_6 = arith.constant 0 : index
    %c0_7 = arith.constant 0 : index
    %c0_8 = arith.constant 0 : index
    %14 = vector.load %arg3[%c0_6, %c0_7, %c0_8] : memref<7x256x256xbf16, #tpu.memory_space<vmem>>, vector<1x256x256xbf16>
    %15 = vector.shape_cast %14 : vector<1x256x256xbf16> to vector<256x256xbf16>
    %cst_9 = arith.constant dense<0.000000e+00> : vector<512x256xf32>
    %16 = tpu.matmul %13, %15, %cst_9 {dimension_numbers = #tpu.dot_dimension_numbers<[1], [0], [0], [1], [0, 0, 1, 1], [], []>} : vector<512x256xbf16>, vector<256x256xbf16>, vector<512x256xf32> -> vector<512x256xf32>
    %c1 = arith.constant 1 : index
    %c0_10 = arith.constant 0 : index
    %17 = vector.load %arg4[%c1, %c0_10] : memref<8x256xf32, #tpu.memory_space<vmem>>, vector<1x256xf32>
    %18 = vector.shape_cast %17 : vector<1x256xf32> to vector<256xf32>
    %19 = vector.shape_cast %18 : vector<256xf32> to vector<1x256xf32>
    %20 = vector.broadcast %19 : vector<1x256xf32> to vector<512x256xf32>
    %21 = arith.addf %16, %20 : vector<512x256xf32>
    %cst_11 = arith.constant 0.000000e+00 : f32
    %22 = vector.broadcast %cst_11 : f32 to vector<512x256xf32>
    %23 = arith.maximumf %21, %22 : vector<512x256xf32>
    %24 = arith.truncf %23 : vector<512x256xf32> to vector<512x256xbf16>
    %c1_12 = arith.constant 1 : index
    %c0_13 = arith.constant 0 : index
    %c0_14 = arith.constant 0 : index
    %25 = vector.load %arg3[%c1_12, %c0_13, %c0_14] : memref<7x256x256xbf16, #tpu.memory_space<vmem>>, vector<1x256x256xbf16>
    %26 = vector.shape_cast %25 : vector<1x256x256xbf16> to vector<256x256xbf16>
    %cst_15 = arith.constant dense<0.000000e+00> : vector<512x256xf32>
    %27 = tpu.matmul %24, %26, %cst_15 {dimension_numbers = #tpu.dot_dimension_numbers<[1], [0], [0], [1], [0, 0, 1, 1], [], []>} : vector<512x256xbf16>, vector<256x256xbf16>, vector<512x256xf32> -> vector<512x256xf32>
    %c2 = arith.constant 2 : index
    %c0_16 = arith.constant 0 : index
    %28 = vector.load %arg4[%c2, %c0_16] : memref<8x256xf32, #tpu.memory_space<vmem>>, vector<1x256xf32>
    %29 = vector.shape_cast %28 : vector<1x256xf32> to vector<256xf32>
    %30 = vector.shape_cast %29 : vector<256xf32> to vector<1x256xf32>
    %31 = vector.broadcast %30 : vector<1x256xf32> to vector<512x256xf32>
    %32 = arith.addf %27, %31 : vector<512x256xf32>
    %cst_17 = arith.constant 0.000000e+00 : f32
    %33 = vector.broadcast %cst_17 : f32 to vector<512x256xf32>
    %34 = arith.maximumf %32, %33 : vector<512x256xf32>
    %35 = arith.truncf %34 : vector<512x256xf32> to vector<512x256xbf16>
    %c2_18 = arith.constant 2 : index
    %c0_19 = arith.constant 0 : index
    %c0_20 = arith.constant 0 : index
    %36 = vector.load %arg3[%c2_18, %c0_19, %c0_20] : memref<7x256x256xbf16, #tpu.memory_space<vmem>>, vector<1x256x256xbf16>
    %37 = vector.shape_cast %36 : vector<1x256x256xbf16> to vector<256x256xbf16>
    %cst_21 = arith.constant dense<0.000000e+00> : vector<512x256xf32>
    %38 = tpu.matmul %35, %37, %cst_21 {dimension_numbers = #tpu.dot_dimension_numbers<[1], [0], [0], [1], [0, 0, 1, 1], [], []>} : vector<512x256xbf16>, vector<256x256xbf16>, vector<512x256xf32> -> vector<512x256xf32>
    %c3 = arith.constant 3 : index
    %c0_22 = arith.constant 0 : index
    %39 = vector.load %arg4[%c3, %c0_22] : memref<8x256xf32, #tpu.memory_space<vmem>>, vector<1x256xf32>
    %40 = vector.shape_cast %39 : vector<1x256xf32> to vector<256xf32>
    %41 = vector.shape_cast %40 : vector<256xf32> to vector<1x256xf32>
    %42 = vector.broadcast %41 : vector<1x256xf32> to vector<512x256xf32>
    %43 = arith.addf %38, %42 : vector<512x256xf32>
    %cst_23 = arith.constant 0.000000e+00 : f32
    %44 = vector.broadcast %cst_23 : f32 to vector<512x256xf32>
    %45 = arith.maximumf %43, %44 : vector<512x256xf32>
    %46 = arith.truncf %45 : vector<512x256xf32> to vector<512x256xbf16>
    %c3_24 = arith.constant 3 : index
    %c0_25 = arith.constant 0 : index
    %c0_26 = arith.constant 0 : index
    %47 = vector.load %arg3[%c3_24, %c0_25, %c0_26] : memref<7x256x256xbf16, #tpu.memory_space<vmem>>, vector<1x256x256xbf16>
    %48 = vector.shape_cast %47 : vector<1x256x256xbf16> to vector<256x256xbf16>
    %cst_27 = arith.constant dense<0.000000e+00> : vector<512x256xf32>
    %49 = tpu.matmul %46, %48, %cst_27 {dimension_numbers = #tpu.dot_dimension_numbers<[1], [0], [0], [1], [0, 0, 1, 1], [], []>} : vector<512x256xbf16>, vector<256x256xbf16>, vector<512x256xf32> -> vector<512x256xf32>
    %c4 = arith.constant 4 : index
    %c0_28 = arith.constant 0 : index
    %50 = vector.load %arg4[%c4, %c0_28] : memref<8x256xf32, #tpu.memory_space<vmem>>, vector<1x256xf32>
    %51 = vector.shape_cast %50 : vector<1x256xf32> to vector<256xf32>
    %52 = vector.shape_cast %51 : vector<256xf32> to vector<1x256xf32>
    %53 = vector.broadcast %52 : vector<1x256xf32> to vector<512x256xf32>
    %54 = arith.addf %49, %53 : vector<512x256xf32>
    %cst_29 = arith.constant 0.000000e+00 : f32
    %55 = vector.broadcast %cst_29 : f32 to vector<512x256xf32>
    %56 = arith.maximumf %54, %55 : vector<512x256xf32>
    %57 = arith.truncf %56 : vector<512x256xf32> to vector<512x256xbf16>
    %c4_30 = arith.constant 4 : index
    %c0_31 = arith.constant 0 : index
    %c0_32 = arith.constant 0 : index
    %58 = vector.load %arg3[%c4_30, %c0_31, %c0_32] : memref<7x256x256xbf16, #tpu.memory_space<vmem>>, vector<1x256x256xbf16>
    %59 = vector.shape_cast %58 : vector<1x256x256xbf16> to vector<256x256xbf16>
    %cst_33 = arith.constant dense<0.000000e+00> : vector<512x256xf32>
    %60 = tpu.matmul %57, %59, %cst_33 {dimension_numbers = #tpu.dot_dimension_numbers<[1], [0], [0], [1], [0, 0, 1, 1], [], []>} : vector<512x256xbf16>, vector<256x256xbf16>, vector<512x256xf32> -> vector<512x256xf32>
    %c5 = arith.constant 5 : index
    %c0_34 = arith.constant 0 : index
    %61 = vector.load %arg4[%c5, %c0_34] : memref<8x256xf32, #tpu.memory_space<vmem>>, vector<1x256xf32>
    %62 = vector.shape_cast %61 : vector<1x256xf32> to vector<256xf32>
    %63 = vector.shape_cast %62 : vector<256xf32> to vector<1x256xf32>
    %64 = vector.broadcast %63 : vector<1x256xf32> to vector<512x256xf32>
    %65 = arith.addf %60, %64 : vector<512x256xf32>
    %66 = vector.extract_strided_slice %4 {offsets = [0, 256], sizes = [512, 256], strides = [1, 1]} : vector<512x512xf32> to vector<512x256xf32>
    %67 = arith.addf %65, %66 : vector<512x256xf32>
    %cst_35 = arith.constant 0.000000e+00 : f32
    %68 = vector.broadcast %cst_35 : f32 to vector<512x256xf32>
    %69 = arith.maximumf %67, %68 : vector<512x256xf32>
    %70 = arith.truncf %69 : vector<512x256xf32> to vector<512x256xbf16>
    %c5_36 = arith.constant 5 : index
    %c0_37 = arith.constant 0 : index
    %c0_38 = arith.constant 0 : index
    %71 = vector.load %arg3[%c5_36, %c0_37, %c0_38] : memref<7x256x256xbf16, #tpu.memory_space<vmem>>, vector<1x256x256xbf16>
    %72 = vector.shape_cast %71 : vector<1x256x256xbf16> to vector<256x256xbf16>
    %cst_39 = arith.constant dense<0.000000e+00> : vector<512x256xf32>
    %73 = tpu.matmul %70, %72, %cst_39 {dimension_numbers = #tpu.dot_dimension_numbers<[1], [0], [0], [1], [0, 0, 1, 1], [], []>} : vector<512x256xbf16>, vector<256x256xbf16>, vector<512x256xf32> -> vector<512x256xf32>
    %c6 = arith.constant 6 : index
    %c0_40 = arith.constant 0 : index
    %74 = vector.load %arg4[%c6, %c0_40] : memref<8x256xf32, #tpu.memory_space<vmem>>, vector<1x256xf32>
    %75 = vector.shape_cast %74 : vector<1x256xf32> to vector<256xf32>
    %76 = vector.shape_cast %75 : vector<256xf32> to vector<1x256xf32>
    %77 = vector.broadcast %76 : vector<1x256xf32> to vector<512x256xf32>
    %78 = arith.addf %73, %77 : vector<512x256xf32>
    %cst_41 = arith.constant 0.000000e+00 : f32
    %79 = vector.broadcast %cst_41 : f32 to vector<512x256xf32>
    %80 = arith.maximumf %78, %79 : vector<512x256xf32>
    %81 = arith.truncf %80 : vector<512x256xf32> to vector<512x256xbf16>
    %c6_42 = arith.constant 6 : index
    %c0_43 = arith.constant 0 : index
    %c0_44 = arith.constant 0 : index
    %82 = vector.load %arg3[%c6_42, %c0_43, %c0_44] : memref<7x256x256xbf16, #tpu.memory_space<vmem>>, vector<1x256x256xbf16>
    %83 = vector.shape_cast %82 : vector<1x256x256xbf16> to vector<256x256xbf16>
    %cst_45 = arith.constant dense<0.000000e+00> : vector<512x256xf32>
    %84 = tpu.matmul %81, %83, %cst_45 {dimension_numbers = #tpu.dot_dimension_numbers<[1], [0], [0], [1], [0, 0, 1, 1], [], []>} : vector<512x256xbf16>, vector<256x256xbf16>, vector<512x256xf32> -> vector<512x256xf32>
    %c7 = arith.constant 7 : index
    %c0_46 = arith.constant 0 : index
    %85 = vector.load %arg4[%c7, %c0_46] : memref<8x256xf32, #tpu.memory_space<vmem>>, vector<1x256xf32>
    %86 = vector.shape_cast %85 : vector<1x256xf32> to vector<256xf32>
    %87 = vector.shape_cast %86 : vector<256xf32> to vector<1x256xf32>
    %88 = vector.broadcast %87 : vector<1x256xf32> to vector<512x256xf32>
    %89 = arith.addf %84, %88 : vector<512x256xf32>
    %cst_47 = arith.constant 0.000000e+00 : f32
    %90 = vector.broadcast %cst_47 : f32 to vector<512x256xf32>
    %91 = arith.maximumf %89, %90 : vector<512x256xf32>
    %92 = arith.truncf %91 : vector<512x256xf32> to vector<512x256xbf16>
    %c0_48 = arith.constant 0 : index
    %c0_49 = arith.constant 0 : index
    %93 = vector.load %arg5[%c0_48, %c0_49] : memref<256x128xbf16, #tpu.memory_space<vmem>>, vector<256x128xbf16>
    %cst_50 = arith.constant dense<0.000000e+00> : vector<512x128xf32>
    %94 = tpu.matmul %92, %93, %cst_50 {dimension_numbers = #tpu.dot_dimension_numbers<[1], [0], [0], [1], [0, 0, 1, 1], [], []>} : vector<512x256xbf16>, vector<256x128xbf16>, vector<512x128xf32> -> vector<512x128xf32>
    %c0_51 = arith.constant 0 : index
    %c0_52 = arith.constant 0 : index
    %95 = vector.load %arg6[%c0_51, %c0_52] : memref<1x128xf32, #tpu.memory_space<vmem>>, vector<1x128xf32>
    %96 = vector.broadcast %95 : vector<1x128xf32> to vector<512x128xf32>
    %97 = arith.addf %94, %96 : vector<512x128xf32>
    %c0_53 = arith.constant 0 : index
    %c0_54 = arith.constant 0 : index
    %98 = vector.load %arg7[%c0_53, %c0_54] : memref<512x128xf32, #tpu.memory_space<vmem>>, vector<512x128xf32>
    tpu.vector_store %arg7[%c0_53, %c0_54], %97 {strides = array<i32>} : memref<512x128xf32, #tpu.memory_space<vmem>>, vector<512x128xf32>,
    return
  }
  func.func @transform_0(%arg0: i32) -> (i32, i32) {
    %c0_i32 = arith.constant 0 : i32
    %c0_i32_0 = arith.constant 0 : i32
    return %arg0, %c0_i32 : i32, i32
  }
  func.func @transform_1(%arg0: i32) -> (i32, i32) {
    %c0_i32 = arith.constant 0 : i32
    %c0_i32_0 = arith.constant 0 : i32
    %c0_i32_1 = arith.constant 0 : i32
    return %c0_i32, %c0_i32_0 : i32, i32
  }
  func.func @transform_2(%arg0: i32) -> (i32, i32, i32) {
    %c0_i32 = arith.constant 0 : i32
    %c0_i32_0 = arith.constant 0 : i32
    %c0_i32_1 = arith.constant 0 : i32
    %c0_i32_2 = arith.constant 0 : i32
    return %c0_i32, %c0_i32_0, %c0_i32_1 : i32, i32, i32
  }
  func.func @transform_3(%arg0: i32) -> (i32, i32) {
    %c0_i32 = arith.constant 0 : i32
    %c0_i32_0 = arith.constant 0 : i32
    %c0_i32_1 = arith.constant 0 : i32
    return %c0_i32, %c0_i32_0 : i32, i32
  }
  func.func @transform_4(%arg0: i32) -> (i32, i32) {
    %c0_i32 = arith.constant 0 : i32
    %c0_i32_0 = arith.constant 0 : i32
    %c0_i32_1 = arith.constant 0 : i32
    return %c0_i32, %c0_i32_0 : i32, i32
  }
  func.func @transform_5(%arg0: i32) -> (i32, i32) {
    %c0_i32 = arith.constant 0 : i32
    %c0_i32_0 = arith.constant 0 : i32
    %c0_i32_1 = arith.constant 0 : i32
    return %c0_i32, %c0_i32_0 : i32, i32
  }
  func.func @transform_6(%arg0: i32) -> (i32, i32) {
    %c0_i32 = arith.constant 0 : i32
    %c0_i32_0 = arith.constant 0 : i32
    return %arg0, %c0_i32 : i32, i32
  }
}

</mosaic_0001>

<llo_original>
// kernel: prnerf_forward.1
$region0: #{prnerf_forward.1}
  #allocation0 [shape = 'u32[]', space=smem, size = 0x4, offset = 0x4, fixed_abs, tag = 'smem constant byte address 0x4 - core index']
  #allocation1 [shape = 'u32[144,128]{1,0:T(1,128)}', space=vmem, size = 0x12000, scoped, tag = 'internal scratch']
  %s0 = inlined_call_operand.vmem [shape: f32[512,6], index: 0, kind: input, shape index: {}]
  %s1 = inlined_call_operand.vmem [shape: bf16[3,512], index: 1, kind: input, shape index: {}]
  %s2 = inlined_call_operand.vmem [shape: bf16[7,256,256], index: 2, kind: input, shape index: {}]
  %s3 = inlined_call_operand.vmem [shape: f32[8,256], index: 3, kind: input, shape index: {}]
  %s4 = inlined_call_operand.vmem [shape: bf16[256,128], index: 4, kind: input, shape index: {}]
  %s5 = inlined_call_operand.vmem [shape: f32[1,128], index: 5, kind: input, shape index: {}]
  %s6 = inlined_call_operand.vmem [shape: f32[512,128], index: 6, kind: output, shape index: {}]
  %s7 = sld [smem:[#allocation0]]
  $region34: #{prnerf_forward.1} parent=0
    _
  %s9 = ssub.s32 1, %s7
  %s10 = scalar_select 0, %s9, %s7
  // Predicated region
  $region2: #{prnerf_forward.1} parent=0 // pred_check
    _
  $region3: #{prnerf_forward.1} parent=0 // pred_check_branch
    %12 = sbr.rel (0) target = $region5
  $region4: #{prnerf_forward.1} parent=0 // pred_region
    _
  $region5: #{prnerf_forward.1} parent=0 // pred_fallthru
    _
  // Predicated region
  $region6: #{prnerf_forward.1} parent=0 // pred_check
    _
  $region7: #{prnerf_forward.1} parent=0 // pred_check_branch
    %14 = sbr.rel (0) target = $region9
  $region8: #{prnerf_forward.1} parent=0 // pred_region
    _
  $region9: #{prnerf_forward.1} parent=0 // pred_fallthru
    _
  // Predicated region
  $region10: #{prnerf_forward.1} parent=0 // pred_check
    _
  $region11: #{prnerf_forward.1} parent=0 // pred_check_branch
    %16 = sbr.rel (0) target = $region13
  $region12: #{prnerf_forward.1} parent=0 // pred_region
    _
  $region13: #{prnerf_forward.1} parent=0 // pred_fallthru
    _
  // Predicated region
  $region14: #{prnerf_forward.1} parent=0 // pred_check
    _
  $region15: #{prnerf_forward.1} parent=0 // pred_check_branch
    %18 = sbr.rel (0) target = $region17
  $region16: #{prnerf_forward.1} parent=0 // pred_region
    _
  $region17: #{prnerf_forward.1} parent=0 // pred_fallthru
    _
  // Predicated region
  $region18: #{prnerf_forward.1} parent=0 // pred_check
    _
  $region19: #{prnerf_forward.1} parent=0 // pred_check_branch
    %20 = sbr.rel (0) target = $region21
  $region20: #{prnerf_forward.1} parent=0 // pred_region
    _
  $region21: #{prnerf_forward.1} parent=0 // pred_fallthru
    _
  // Predicated region
  $region22: #{prnerf_forward.1} parent=0 // pred_check
    _
  $region23: #{prnerf_forward.1} parent=0 // pred_check_branch
    %22 = sbr.rel (0) target = $region25
  $region24: #{prnerf_forward.1} parent=0 // pred_region
    _
  $region25: #{prnerf_forward.1} parent=0 // pred_fallthru
    _
  %v24 = vld [vmem:[%s0] sm:$0xff]
  %v25 = vld [vmem:[%s0 + $0x8] sm:$0xff]
  %v26 = vld [vmem:[%s0 + $0x10] sm:$0xff]
  %v27 = vld [vmem:[%s0 + $0x18] sm:$0xff]
  %v28 = vld [vmem:[%s0 + $0x20] sm:$0xff]
  %v29 = vld [vmem:[%s0 + $0x28] sm:$0xff]
  %v30 = vld [vmem:[%s0 + $0x30] sm:$0xff]
  %v31 = vld [vmem:[%s0 + $0x38] sm:$0xff]
  %v32 = vld [vmem:[%s0 + $0x40] sm:$0xff]
  %v33 = vld [vmem:[%s0 + $0x48] sm:$0xff]
  %v34 = vld [vmem:[%s0 + $0x50] sm:$0xff]
  %v35 = vld [vmem:[%s0 + $0x58] sm:$0xff]
  %v36 = vld [vmem:[%s0 + $0x60] sm:$0xff]
  %v37 = vld [vmem:[%s0 + $0x68] sm:$0xff]
  %v38 = vld [vmem:[%s0 + $0x70] sm:$0xff]
  %v39 = vld [vmem:[%s0 + $0x78] sm:$0xff]
  %v40 = vld [vmem:[%s0 + $0x80] sm:$0xff]
  %v41 = vld [vmem:[%s0 + $0x88] sm:$0xff]
  %v42 = vld [vmem:[%s0 + $0x90] sm:$0xff]
  %v43 = vld [vmem:[%s0 + $0x98] sm:$0xff]
  %v44 = vld [vmem:[%s0 + $0xa0] sm:$0xff]
  %v45 = vld [vmem:[%s0 + $0xa8] sm:$0xff]
  %v46 = vld [vmem:[%s0 + $0xb0] sm:$0xff]
  %v47 = vld [vmem:[%s0 + $0xb8] sm:$0xff]
  %v48 = vld [vmem:[%s0 + $0xc0] sm:$0xff]
  %v49 = vld [vmem:[%s0 + $0xc8] sm:$0xff]
  %v50 = vld [vmem:[%s0 + $0xd0] sm:$0xff]
  %v51 = vld [vmem:[%s0 + $0xd8] sm:$0xff]
  %v52 = vld [vmem:[%s0 + $0xe0] sm:$0xff]
  %v53 = vld [vmem:[%s0 + $0xe8] sm:$0xff]
  %v54 = vld [vmem:[%s0 + $0xf0] sm:$0xff]
  %v55 = vld [vmem:[%s0 + $0xf8] sm:$0xff]
  %v56 = vld [vmem:[%s0 + $0x100] sm:$0xff]
  %v57 = vld [vmem:[%s0 + $0x108] sm:$0xff]
  %v58 = vld [vmem:[%s0 + $0x110] sm:$0xff]
  %v59 = vld [vmem:[%s0 + $0x118] sm:$0xff]
  %v60 = vld [vmem:[%s0 + $0x120] sm:$0xff]
  %v61 = vld [vmem:[%s0 + $0x128] sm:$0xff]
  %v62 = vld [vmem:[%s0 + $0x130] sm:$0xff]
  %v63 = vld [vmem:[%s0 + $0x138] sm:$0xff]
  %v64 = vld [vmem:[%s0 + $0x140] sm:$0xff]
  %v65 = vld [vmem:[%s0 + $0x148] sm:$0xff]
  %v66 = vld [vmem:[%s0 + $0x150] sm:$0xff]
  %v67 = vld [vmem:[%s0 + $0x158] sm:$0xff]
  %v68 = vld [vmem:[%s0 + $0x160] sm:$0xff]
  %v69 = vld [vmem:[%s0 + $0x168] sm:$0xff]
  %v70 = vld [vmem:[%s0 + $0x170] sm:$0xff]
  %v71 = vld [vmem:[%s0 + $0x178] sm:$0xff]
  %v72 = vld [vmem:[%s0 + $0x180] sm:$0xff]
  %v73 = vld [vmem:[%s0 + $0x188] sm:$0xff]
  %v74 = vld [vmem:[%s0 + $0x190] sm:$0xff]
  %v75 = vld [vmem:[%s0 + $0x198] sm:$0xff]
  %v76 = vld [vmem:[%s0 + $0x1a0] sm:$0xff]
  %v77 = vld [vmem:[%s0 + $0x1a8] sm:$0xff]
  %v78 = vld [vmem:[%s0 + $0x1b0] sm:$0xff]
  %v79 = vld [vmem:[%s0 + $0x1b8] sm:$0xff]
  %v80 = vld [vmem:[%s0 + $0x1c0] sm:$0xff]
  %v81 = vld [vmem:[%s0 + $0x1c8] sm:$0xff]
  %v82 = vld [vmem:[%s0 + $0x1d0] sm:$0xff]
  %v83 = vld [vmem:[%s0 + $0x1d8] sm:$0xff]
  %v84 = vld [vmem:[%s0 + $0x1e0] sm:$0xff]
  %v85 = vld [vmem:[%s0 + $0x1e8] sm:$0xff]
  %v86 = vld [vmem:[%s0 + $0x1f0] sm:$0xff]
  %v87 = vld [vmem:[%s0 + $0x1f8] sm:$0xff]
  %v88 = vpack.c.bf16 %v25, %v24
  %v89 = vpack.c.bf16 %v27, %v26
  %v90 = vpack.c.bf16 %v29, %v28
  %v91 = vpack.c.bf16 %v31, %v30
  %v92 = vpack.c.bf16 %v33, %v32
  %v93 = vpack.c.bf16 %v35, %v34
  %v94 = vpack.c.bf16 %v37, %v36
  %v95 = vpack.c.bf16 %v39, %v38
  %v96 = vpack.c.bf16 %v41, %v40
  %v97 = vpack.c.bf16 %v43, %v42
  %v98 = vpack.c.bf16 %v45, %v44
  %v99 = vpack.c.bf16 %v47, %v46
  %v100 = vpack.c.bf16 %v49, %v48
  %v101 = vpack.c.bf16 %v51, %v50
  %v102 = vpack.c.bf16 %v53, %v52
  %v103 = vpack.c.bf16 %v55, %v54
  %v104 = vpack.c.bf16 %v57, %v56
  %v105 = vpack.c.bf16 %v59, %v58
  %v106 = vpack.c.bf16 %v61, %v60
  %v107 = vpack.c.bf16 %v63, %v62
  %v108 = vpack.c.bf16 %v65, %v64
  %v109 = vpack.c.bf16 %v67, %v66
  %v110 = vpack.c.bf16 %v69, %v68
  %v111 = vpack.c.bf16 %v71, %v70
  %v112 = vpack.c.bf16 %v73, %v72
  %v113 = vpack.c.bf16 %v75, %v74
  %v114 = vpack.c.bf16 %v77, %v76
  %v115 = vpack.c.bf16 %v79, %v78
  %v116 = vpack.c.bf16 %v81, %v80
  %v117 = vpack.c.bf16 %v83, %v82
  %v118 = vpack.c.bf16 %v85, %v84
  %v119 = vpack.c.bf16 %v87, %v86
  %v120 = vld [vmem:[%s1] sm:$0xff]
  %v122 = vcombine.high %v120, %v120
  %v124 = vunpack.c.l.s4 1983009808
  %v125 = vunpack.c.0.s8 %v124
  %v126 = vlaneseq
  %v127 = vshrl.u32 %v126, 7
  %v128 = vsub.s32 %v125, %v127
  %v129 = vrot.slane %v120, %v128
  %v131 = vunpack.c.l.s4 1983009808
  %v132 = vunpack.c.0.s8 %v131
  %v133 = vlaneseq
  %v134 = vshrl.u32 %v133, 7
  %v135 = vsub.s32 %v132, %v134
  %v136 = vrot.slane %v122, %v135
  %v137 = vcombine.high %v129, %v129
  %v138 = vcombine.high %v136, %v136
  %vm139 = vcmask 23552
  %v141 = vsel %vm139, %v88, 0
  %v144 = vsel %vm139, %v89, 0
  %v147 = vsel %vm139, %v90, 0
  %v150 = vsel %vm139, %v91, 0
  %v153 = vsel %vm139, %v92, 0
  %v156 = vsel %vm139, %v93, 0
  %v159 = vsel %vm139, %v94, 0
  %v162 = vsel %vm139, %v95, 0
  %v165 = vsel %vm139, %v96, 0
  %v168 = vsel %vm139, %v97, 0
  %v171 = vsel %vm139, %v98, 0
  %v174 = vsel %vm139, %v99, 0
  %v177 = vsel %vm139, %v100, 0
  %v180 = vsel %vm139, %v101, 0
  %v183 = vsel %vm139, %v102, 0
  %v186 = vsel %vm139, %v103, 0
  %v189 = vsel %vm139, %v104, 0
  %v192 = vsel %vm139, %v105, 0
  %v195 = vsel %vm139, %v106, 0
  %v198 = vsel %vm139, %v107, 0
  %v201 = vsel %vm139, %v108, 0
  %v204 = vsel %vm139, %v109, 0
  %v207 = vsel %vm139, %v110, 0
  %v210 = vsel %vm139, %v111, 0
  %v213 = vsel %vm139, %v112, 0
  %v216 = vsel %vm139, %v113, 0
  %v219 = vsel %vm139, %v114, 0
  %v222 = vsel %vm139, %v115, 0
  %v225 = vsel %vm139, %v116, 0
  %v228 = vsel %vm139, %v117, 0
  %v231 = vsel %vm139, %v118, 0
  %v234 = vsel %vm139, %v119, 0
  %vm236 = vcmask 1040384
  %vm237 = vcmask 1041408
  %v238 = vsel %vm236, 4294967295, 65535
  %v239 = vsel %vm237, %v238, 0
  %v241 = vand.u32 %v129, %v239
  %v244 = vand.u32 %v137, %v239
  %v247 = vand.u32 %v136, %v239
  %v250 = vand.u32 %v138, %v239
  %252 = vmatprep.subr.bf16.mxu0 0
  %253 = vmatpush1.bf16.msra.mxu0 0
  %254 = vmatprep.subr.bf16.mxu0 0
  %255 = vmatpush1.bf16.msra.mxu0 0
  %256 = vmatprep.subr.bf16.mxu0 0
  %257 = vmatpush1.bf16.msra.mxu0 0
  %258 = vmatprep.subr.bf16.mxu0 0
  %259 = vmatpush1.bf16.msra.mxu0 0
  %260 = vmatprep.subr.bf16.mxu0 0
  %261 = vmatpush1.bf16.msra.mxu0 0
  %262 = vmatprep.subr.bf16.mxu0 0
  %263 = vmatpush1.bf16.msra.mxu0 0
  %264 = vmatprep.subr.bf16.mxu0 0
  %265 = vmatpush1.bf16.msra.mxu0 0
  %266 = vmatprep.subr.bf16.mxu0 %v244
  %267 = vmatpush1.bf16.msra.mxu0 %v241
  %268 = vmatprep.subr.bf16.mxu0 0
  %269 = vmatpush2.bf16.msra.mxu0 0
  %270 = vmatprep.subr.bf16.mxu0 0
  %271 = vmatpush2.bf16.msra.mxu0 0
  %272 = vmatprep.subr.bf16.mxu0 0
  %273 = vmatpush2.bf16.msra.mxu0 0
  %274 = vmatprep.subr.bf16.mxu0 0
  %275 = vmatpush2.bf16.msra.mxu0 0
  %276 = vmatprep.subr.bf16.mxu0 0
  %277 = vmatpush2.bf16.msra.mxu0 0
  %278 = vmatprep.subr.bf16.mxu0 0
  %279 = vmatpush2.bf16.msra.mxu0 0
  %280 = vmatprep.subr.bf16.mxu0 0
  %281 = vmatpush2.bf16.msra.mxu0 0
  %282 = vmatprep.subr.bf16.mxu0 0
  %283 = vmatpush2.bf16.msra.mxu0 0
  %284 = vmatprep.mubr.bf16.mxu0 0
  %285 = vmatmul.mubr.bf16.gmra.mxu0 %v141
  %v286 = vpop.f32.mrf.mxu0
  %v287 = vadd.f32 0.0, %v286
  %v288 = vpop.f32.mrf.mxu0
  %v289 = vadd.f32 0.0, %v288
  %v290 = vpop.f32.mrf.mxu0
  %v291 = vadd.f32 0.0, %v290
  %v292 = vpop.f32.mrf.mxu0
  %v293 = vadd.f32 0.0, %v292
  %294 = vmatprep.mubr.bf16.mxu0 0
  %295 = vmatmul.mubr.bf16.gmra.mxu0 %v144
  %v296 = vpop.f32.mrf.mxu0
  %v297 = vadd.f32 0.0, %v296
  %v298 = vpop.f32.mrf.mxu0
  %v299 = vadd.f32 0.0, %v298
  %v300 = vpop.f32.mrf.mxu0
  %v301 = vadd.f32 0.0, %v300
  %v302 = vpop.f32.mrf.mxu0
  %v303 = vadd.f32 0.0, %v302
  %304 = vmatprep.mubr.bf16.mxu0 0
  %305 = vmatmul.mubr.bf16.gmra.mxu0 %v147
  %v306 = vpop.f32.mrf.mxu0
  %v307 = vadd.f32 0.0, %v306
  %v308 = vpop.f32.mrf.mxu0
  %v309 = vadd.f32 0.0, %v308
  %v310 = vpop.f32.mrf.mxu0
  %v311 = vadd.f32 0.0, %v310
  %v312 = vpop.f32.mrf.mxu0
  %v313 = vadd.f32 0.0, %v312
  %314 = vmatprep.mubr.bf16.mxu0 0
  %315 = vmatmul.mubr.bf16.gmra.mxu0 %v150
  %v316 = vpop.f32.mrf.mxu0
  %v317 = vadd.f32 0.0, %v316
  %v318 = vpop.f32.mrf.mxu0
  %v319 = vadd.f32 0.0, %v318
  %v320 = vpop.f32.mrf.mxu0
  %v321 = vadd.f32 0.0, %v320
  %v322 = vpop.f32.mrf.mxu0
  %v323 = vadd.f32 0.0, %v322
  %324 = vmatprep.mubr.bf16.mxu0 0
  %325 = vmatmul.mubr.bf16.gmra.mxu0 %v153
  %v326 = vpop.f32.mrf.mxu0
  %v327 = vadd.f32 0.0, %v326
  %v328 = vpop.f32.mrf.mxu0
  %v329 = vadd.f32 0.0, %v328
  %v330 = vpop.f32.mrf.mxu0
  %v331 = vadd.f32 0.0, %v330
  %v332 = vpop.f32.mrf.mxu0
  %v333 = vadd.f32 0.0, %v332
  %334 = vmatprep.mubr.bf16.mxu0 0
  %335 = vmatmul.mubr.bf16.gmra.mxu0 %v156
  %v336 = vpop.f32.mrf.mxu0
  %v337 = vadd.f32 0.0, %v336
  %v338 = vpop.f32.mrf.mxu0
  %v339 = vadd.f32 0.0, %v338
  %v340 = vpop.f32.mrf.mxu0
  %v341 = vadd.f32 0.0, %v340
  %v342 = vpop.f32.mrf.mxu0
  %v343 = vadd.f32 0.0, %v342
  %344 = vmatprep.mubr.bf16.mxu0 0
  %345 = vmatmul.mubr.bf16.gmra.mxu0 %v159
  %v346 = vpop.f32.mrf.mxu0
  %v347 = vadd.f32 0.0, %v346
  %v348 = vpop.f32.mrf.mxu0
  %v349 = vadd.f32 0.0, %v348
  %v350 = vpop.f32.mrf.mxu0
  %v351 = vadd.f32 0.0, %v350
  %v352 = vpop.f32.mrf.mxu0
  %v353 = vadd.f32 0.0, %v352
  %354 = vmatprep.mubr.bf16.mxu0 0
  %355 = vmatmul.mubr.bf16.gmra.mxu0 %v162
  %v356 = vpop.f32.mrf.mxu0
  %v357 = vadd.f32 0.0, %v356
  %v358 = vpop.f32.mrf.mxu0
  %v359 = vadd.f32 0.0, %v358
  %v360 = vpop.f32.mrf.mxu0
  %v361 = vadd.f32 0.0, %v360
  %v362 = vpop.f32.mrf.mxu0
  %v363 = vadd.f32 0.0, %v362
  %364 = vmatprep.mubr.bf16.mxu0 0
  %365 = vmatmul.mubr.bf16.gmra.mxu0 %v165
  %v366 = vpop.f32.mrf.mxu0
  %v367 = vadd.f32 0.0, %v366
  %v368 = vpop.f32.mrf.mxu0
  %v369 = vadd.f32 0.0, %v368
  %v370 = vpop.f32.mrf.mxu0
  %v371 = vadd.f32 0.0, %v370
  %v372 = vpop.f32.mrf.mxu0
  %v373 = vadd.f32 0.0, %v372
  %374 = vmatprep.mubr.bf16.mxu0 0
  %375 = vmatmul.mubr.bf16.gmra.mxu0 %v168
  %v376 = vpop.f32.mrf.mxu0
  %v377 = vadd.f32 0.0, %v376
  %v378 = vpop.f32.mrf.mxu0
  %v379 = vadd.f32 0.0, %v378
  %v380 = vpop.f32.mrf.mxu0
  %v381 = vadd.f32 0.0, %v380
  %v382 = vpop.f32.mrf.mxu0
  %v383 = vadd.f32 0.0, %v382
  %384 = vmatprep.mubr.bf16.mxu0 0
  %385 = vmatmul.mubr.bf16.gmra.mxu0 %v171
  %v386 = vpop.f32.mrf.mxu0
  %v387 = vadd.f32 0.0, %v386
  %v388 = vpop.f32.mrf.mxu0
  %v389 = vadd.f32 0.0, %v388
  %v390 = vpop.f32.mrf.mxu0
  %v391 = vadd.f32 0.0, %v390
  %v392 = vpop.f32.mrf.mxu0
  %v393 = vadd.f32 0.0, %v392
  %394 = vmatprep.mubr.bf16.mxu0 0
  %395 = vmatmul.mubr.bf16.gmra.mxu0 %v174
  %v396 = vpop.f32.mrf.mxu0
  %v397 = vadd.f32 0.0, %v396
  %v398 = vpop.f32.mrf.mxu0
  %v399 = vadd.f32 0.0, %v398
  %v400 = vpop.f32.mrf.mxu0
  %v401 = vadd.f32 0.0, %v400
  %v402 = vpop.f32.mrf.mxu0
  %v403 = vadd.f32 0.0, %v402
  %404 = vmatprep.mubr.bf16.mxu0 0
  %405 = vmatmul.mubr.bf16.gmra.mxu0 %v177
  %v406 = vpop.f32.mrf.mxu0
  %v407 = vadd.f32 0.0, %v406
  %v408 = vpop.f32.mrf.mxu0
  %v409 = vadd.f32 0.0, %v408
  %v410 = vpop.f32.mrf.mxu0
  %v411 = vadd.f32 0.0, %v410
  %v412 = vpop.f32.mrf.mxu0
  %v413 = vadd.f32 0.0, %v412
  %414 = vmatprep.mubr.bf16.mxu0 0
  %415 = vmatmul.mubr.bf16.gmra.mxu0 %v180
  %v416 = vpop.f32.mrf.mxu0
  %v417 = vadd.f32 0.0, %v416
  %v418 = vpop.f32.mrf.mxu0
  %v419 = vadd.f32 0.0, %v418
  %v420 = vpop.f32.mrf.mxu0
  %v421 = vadd.f32 0.0, %v420
  %v422 = vpop.f32.mrf.mxu0
  %v423 = vadd.f32 0.0, %v422
  %424 = vmatprep.mubr.bf16.mxu0 0
  %425 = vmatmul.mubr.bf16.gmra.mxu0 %v183
  %v426 = vpop.f32.mrf.mxu0
  %v427 = vadd.f32 0.0, %v426
  %v428 = vpop.f32.mrf.mxu0
  %v429 = vadd.f32 0.0, %v428
  %v430 = vpop.f32.mrf.mxu0
  %v431 = vadd.f32 0.0, %v430
  %v432 = vpop.f32.mrf.mxu0
  %v433 = vadd.f32 0.0, %v432
  %434 = vmatprep.mubr.bf16.mxu0 0
  %435 = vmatmul.mubr.bf16.gmra.mxu0 %v186
  %v436 = vpop.f32.mrf.mxu0
  %v437 = vadd.f32 0.0, %v436
  %v438 = vpop.f32.mrf.mxu0
  %v439 = vadd.f32 0.0, %v438
  %v440 = vpop.f32.mrf.mxu0
  %v441 = vadd.f32 0.0, %v440
  %v442 = vpop.f32.mrf.mxu0
  %v443 = vadd.f32 0.0, %v442
  %444 = vmatprep.mubr.bf16.mxu0 0
  %445 = vmatmul.mubr.bf16.gmra.mxu0 %v189
  %v446 = vpop.f32.mrf.mxu0
  %v447 = vadd.f32 0.0, %v446
  %v448 = vpop.f32.mrf.mxu0
  %v449 = vadd.f32 0.0, %v448
  %v450 = vpop.f32.mrf.mxu0
  %v451 = vadd.f32 0.0, %v450
  %v452 = vpop.f32.mrf.mxu0
  %v453 = vadd.f32 0.0, %v452
  %454 = vmatprep.mubr.bf16.mxu0 0
  %455 = vmatmul.mubr.bf16.gmra.mxu0 %v192
  %v456 = vpop.f32.mrf.mxu0
  %v457 = vadd.f32 0.0, %v456
  %v458 = vpop.f32.mrf.mxu0
  %v459 = vadd.f32 0.0, %v458
  %v460 = vpop.f32.mrf.mxu0
  %v461 = vadd.f32 0.0, %v460
  %v462 = vpop.f32.mrf.mxu0
  %v463 = vadd.f32 0.0, %v462
  %464 = vmatprep.mubr.bf16.mxu0 0
  %465 = vmatmul.mubr.bf16.gmra.mxu0 %v195
  %v466 = vpop.f32.mrf.mxu0
  %v467 = vadd.f32 0.0, %v466
  %v468 = vpop.f32.mrf.mxu0
  %v469 = vadd.f32 0.0, %v468
  %v470 = vpop.f32.mrf.mxu0
  %v471 = vadd.f32 0.0, %v470
  %v472 = vpop.f32.mrf.mxu0
  %v473 = vadd.f32 0.0, %v472
  %474 = vmatprep.mubr.bf16.mxu0 0
  %475 = vmatmul.mubr.bf16.gmra.mxu0 %v198
  %v476 = vpop.f32.mrf.mxu0
  %v477 = vadd.f32 0.0, %v476
  %v478 = vpop.f32.mrf.mxu0
  %v479 = vadd.f32 0.0, %v478
  %v480 = vpop.f32.mrf.mxu0
  %v481 = vadd.f32 0.0, %v480
  %v482 = vpop.f32.mrf.mxu0
  %v483 = vadd.f32 0.0, %v482
  %484 = vmatprep.mubr.bf16.mxu0 0
  %485 = vmatmul.mubr.bf16.gmra.mxu0 %v201
  %v486 = vpop.f32.mrf.mxu0
  %v487 = vadd.f32 0.0, %v486
  %v488 = vpop.f32.mrf.mxu0
  %v489 = vadd.f32 0.0, %v488
  %v490 = vpop.f32.mrf.mxu0
  %v491 = vadd.f32 0.0, %v490
  %v492 = vpop.f32.mrf.mxu0
  %v493 = vadd.f32 0.0, %v492
  %494 = vmatprep.mubr.bf16.mxu0 0
  %495 = vmatmul.mubr.bf16.gmra.mxu0 %v204
  %v496 = vpop.f32.mrf.mxu0
  %v497 = vadd.f32 0.0, %v496
  %v498 = vpop.f32.mrf.mxu0
  %v499 = vadd.f32 0.0, %v498
  %v500 = vpop.f32.mrf.mxu0
  %v501 = vadd.f32 0.0, %v500
  %v502 = vpop.f32.mrf.mxu0
  %v503 = vadd.f32 0.0, %v502
  %504 = vmatprep.mubr.bf16.mxu0 0
  %505 = vmatmul.mubr.bf16.gmra.mxu0 %v207
  %v506 = vpop.f32.mrf.mxu0
  %v507 = vadd.f32 0.0, %v506
  %v508 = vpop.f32.mrf.mxu0
  %v509 = vadd.f32 0.0, %v508
  %v510 = vpop.f32.mrf.mxu0
  %v511 = vadd.f32 0.0, %v510
  %v512 = vpop.f32.mrf.mxu0
  %v513 = vadd.f32 0.0, %v512
  %514 = vmatprep.mubr.bf16.mxu0 0
  %515 = vmatmul.mubr.bf16.gmra.mxu0 %v210
  %v516 = vpop.f32.mrf.mxu0
  %v517 = vadd.f32 0.0, %v516
  %v518 = vpop.f32.mrf.mxu0
  %v519 = vadd.f32 0.0, %v518
  %v520 = vpop.f32.mrf.mxu0
  %v521 = vadd.f32 0.0, %v520
  %v522 = vpop.f32.mrf.mxu0
  %v523 = vadd.f32 0.0, %v522
  %524 = vmatprep.mubr.bf16.mxu0 0
  %525 = vmatmul.mubr.bf16.gmra.mxu0 %v213
  %v526 = vpop.f32.mrf.mxu0
  %v527 = vadd.f32 0.0, %v526
  %v528 = vpop.f32.mrf.mxu0
  %v529 = vadd.f32 0.0, %v528
  %v530 = vpop.f32.mrf.mxu0
  %v531 = vadd.f32 0.0, %v530
  %v532 = vpop.f32.mrf.mxu0
  %v533 = vadd.f32 0.0, %v532
  %534 = vmatprep.mubr.bf16.mxu0 0
  %535 = vmatmul.mubr.bf16.gmra.mxu0 %v216
  %v536 = vpop.f32.mrf.mxu0
  %v537 = vadd.f32 0.0, %v536
  %v538 = vpop.f32.mrf.mxu0
  %v539 = vadd.f32 0.0, %v538
  %v540 = vpop.f32.mrf.mxu0
  %v541 = vadd.f32 0.0, %v540
  %v542 = vpop.f32.mrf.mxu0
  %v543 = vadd.f32 0.0, %v542
  %544 = vmatprep.mubr.bf16.mxu0 0
  %545 = vmatmul.mubr.bf16.gmra.mxu0 %v219
  %v546 = vpop.f32.mrf.mxu0
  %v547 = vadd.f32 0.0, %v546
  %v548 = vpop.f32.mrf.mxu0
  %v549 = vadd.f32 0.0, %v548
  %v550 = vpop.f32.mrf.mxu0
  %v551 = vadd.f32 0.0, %v550
  %v552 = vpop.f32.mrf.mxu0
  %v553 = vadd.f32 0.0, %v552
  %554 = vmatprep.mubr.bf16.mxu0 0
  %555 = vmatmul.mubr.bf16.gmra.mxu0 %v222
  %v556 = vpop.f32.mrf.mxu0
  %v557 = vadd.f32 0.0, %v556
  %v558 = vpop.f32.mrf.mxu0
  %v559 = vadd.f32 0.0, %v558
  %v560 = vpop.f32.mrf.mxu0
  %v561 = vadd.f32 0.0, %v560
  %v562 = vpop.f32.mrf.mxu0
  %v563 = vadd.f32 0.0, %v562
  %564 = vmatprep.mubr.bf16.mxu0 0
  %565 = vmatmul.mubr.bf16.gmra.mxu0 %v225
  %v566 = vpop.f32.mrf.mxu0
  %v567 = vadd.f32 0.0, %v566
  %v568 = vpop.f32.mrf.mxu0
  %v569 = vadd.f32 0.0, %v568
  %v570 = vpop.f32.mrf.mxu0
  %v571 = vadd.f32 0.0, %v570
  %v572 = vpop.f32.mrf.mxu0
  %v573 = vadd.f32 0.0, %v572
  %574 = vmatprep.mubr.bf16.mxu0 0
  %575 = vmatmul.mubr.bf16.gmra.mxu0 %v228
  %v576 = vpop.f32.mrf.mxu0
  %v577 = vadd.f32 0.0, %v576
  %v578 = vpop.f32.mrf.mxu0
  %v579 = vadd.f32 0.0, %v578
  %v580 = vpop.f32.mrf.mxu0
  %v581 = vadd.f32 0.0, %v580
  %v582 = vpop.f32.mrf.mxu0
  %v583 = vadd.f32 0.0, %v582
  %584 = vmatprep.mubr.bf16.mxu0 0
  %585 = vmatmul.mubr.bf16.gmra.mxu0 %v231
  %v586 = vpop.f32.mrf.mxu0
  %v587 = vadd.f32 0.0, %v586
  %v588 = vpop.f32.mrf.mxu0
  %v589 = vadd.f32 0.0, %v588
  %v590 = vpop.f32.mrf.mxu0
  %v591 = vadd.f32 0.0, %v590
  %v592 = vpop.f32.mrf.mxu0
  %v593 = vadd.f32 0.0, %v592
  %594 = vmatprep.mubr.bf16.mxu0 0
  %595 = vmatmul.mubr.bf16.gmra.mxu0 %v234
  %v596 = vpop.f32.mrf.mxu0
  %v597 = vadd.f32 0.0, %v596
  %v598 = vpop.f32.mrf.mxu0
  %v599 = vadd.f32 0.0, %v598
  %v600 = vpop.f32.mrf.mxu0
  %v601 = vadd.f32 0.0, %v600
  %v602 = vpop.f32.mrf.mxu0
  %v603 = vadd.f32 0.0, %v602
  %604 = vdwg.mxu0
  %605 = vmatprep.subr.bf16.mxu0 0
  %606 = vmatpush1.bf16.msra.mxu0 0
  %607 = vmatprep.subr.bf16.mxu0 0
  %608 = vmatpush1.bf16.msra.mxu0 0
  %609 = vmatprep.subr.bf16.mxu0 0
  %610 = vmatpush1.bf16.msra.mxu0 0
  %611 = vmatprep.subr.bf16.mxu0 0
  %612 = vmatpush1.bf16.msra.mxu0 0
  %613 = vmatprep.subr.bf16.mxu0 0
  %614 = vmatpush1.bf16.msra.mxu0 0
  %615 = vmatprep.subr.bf16.mxu0 0
  %616 = vmatpush1.bf16.msra.mxu0 0
  %617 = vmatprep.subr.bf16.mxu0 0
  %618 = vmatpush1.bf16.msra.mxu0 0
  %619 = vmatprep.subr.bf16.mxu0 %v250
  %620 = vmatpush1.bf16.msra.mxu0 %v247
  %621 = vmatprep.subr.bf16.mxu0 0
  %622 = vmatpush2.bf16.msra.mxu0 0
  %623 = vmatprep.subr.bf16.mxu0 0
  %624 = vmatpush2.bf16.msra.mxu0 0
  %625 = vmatprep.subr.bf16.mxu0 0
  %626 = vmatpush2.bf16.msra.mxu0 0
  %627 = vmatprep.subr.bf16.mxu0 0
  %628 = vmatpush2.bf16.msra.mxu0 0
  %629 = vmatprep.subr.bf16.mxu0 0
  %630 = vmatpush2.bf16.msra.mxu0 0
  %631 = vmatprep.subr.bf16.mxu0 0
  %632 = vmatpush2.bf16.msra.mxu0 0
  %633 = vmatprep.subr.bf16.mxu0 0
  %634 = vmatpush2.bf16.msra.mxu0 0
  %635 = vmatprep.subr.bf16.mxu0 0
  %636 = vmatpush2.bf16.msra.mxu0 0
  %637 = vmatprep.mubr.bf16.mxu0 0
  %638 = vmatmul.mubr.bf16.gmra.mxu0 %v141
  %v639 = vpop.f32.mrf.mxu0
  %v640 = vadd.f32 0.0, %v639
  %v641 = vpop.f32.mrf.mxu0
  %v642 = vadd.f32 0.0, %v641
  %v643 = vpop.f32.mrf.mxu0
  %v644 = vadd.f32 0.0, %v643
  %v645 = vpop.f32.mrf.mxu0
  %v646 = vadd.f32 0.0, %v645
  %647 = vmatprep.mubr.bf16.mxu0 0
  %648 = vmatmul.mubr.bf16.gmra.mxu0 %v144
  %v649 = vpop.f32.mrf.mxu0
  %v650 = vadd.f32 0.0, %v649
  %v651 = vpop.f32.mrf.mxu0
  %v652 = vadd.f32 0.0, %v651
  %v653 = vpop.f32.mrf.mxu0
  %v654 = vadd.f32 0.0, %v653
  %v655 = vpop.f32.mrf.mxu0
  %v656 = vadd.f32 0.0, %v655
  %657 = vmatprep.mubr.bf16.mxu0 0
  %658 = vmatmul.mubr.bf16.gmra.mxu0 %v147
  %v659 = vpop.f32.mrf.mxu0
  %v660 = vadd.f32 0.0, %v659
  %v661 = vpop.f32.mrf.mxu0
  %v662 = vadd.f32 0.0, %v661
  %v663 = vpop.f32.mrf.mxu0
  %v664 = vadd.f32 0.0, %v663
  %v665 = vpop.f32.mrf.mxu0
  %v666 = vadd.f32 0.0, %v665
  %667 = vmatprep.mubr.bf16.mxu0 0
  %668 = vmatmul.mubr.bf16.gmra.mxu0 %v150
  %v669 = vpop.f32.mrf.mxu0
  %v670 = vadd.f32 0.0, %v669
  %v671 = vpop.f32.mrf.mxu0
  %v672 = vadd.f32 0.0, %v671
  %v673 = vpop.f32.mrf.mxu0
  %v674 = vadd.f32 0.0, %v673
  %v675 = vpop.f32.mrf.mxu0
  %v676 = vadd.f32 0.0, %v675
  %677 = vmatprep.mubr.bf16.mxu0 0
  %678 = vmatmul.mubr.bf16.gmra.mxu0 %v153
  %v679 = vpop.f32.mrf.mxu0
  %v680 = vadd.f32 0.0, %v679
  %v681 = vpop.f32.mrf.mxu0
  %v682 = vadd.f32 0.0, %v681
  %v683 = vpop.f32.mrf.mxu0
  %v684 = vadd.f32 0.0, %v683
  %v685 = vpop.f32.mrf.mxu0
  %v686 = vadd.f32 0.0, %v685
  %687 = vmatprep.mubr.bf16.mxu0 0
  %688 = vmatmul.mubr.bf16.gmra.mxu0 %v156
  %v689 = vpop.f32.mrf.mxu0
  %v690 = vadd.f32 0.0, %v689
  %v691 = vpop.f32.mrf.mxu0
  %v692 = vadd.f32 0.0, %v691
  %v693 = vpop.f32.mrf.mxu0
  %v694 = vadd.f32 0.0, %v693
  %v695 = vpop.f32.mrf.mxu0
  %v696 = vadd.f32 0.0, %v695
  %697 = vmatprep.mubr.bf16.mxu0 0
  %698 = vmatmul.mubr.bf16.gmra.mxu0 %v159
  %v699 = vpop.f32.mrf.mxu0
  %v700 = vadd.f32 0.0, %v699
  %v701 = vpop.f32.mrf.mxu0
  %v702 = vadd.f32 0.0, %v701
  %v703 = vpop.f32.mrf.mxu0
  %v704 = vadd.f32 0.0, %v703
  %v705 = vpop.f32.mrf.mxu0
  %v706 = vadd.f32 0.0, %v705
  %707 = vmatprep.mubr.bf16.mxu0 0
  %708 = vmatmul.mubr.bf16.gmra.mxu0 %v162
  %v709 = vpop.f32.mrf.mxu0
  %v710 = vadd.f32 0.0, %v709
  %v711 = vpop.f32.mrf.mxu0
  %v712 = vadd.f32 0.0, %v711
  %v713 = vpop.f32.mrf.mxu0
  %v714 = vadd.f32 0.0, %v713
  %v715 = vpop.f32.mrf.mxu0
  %v716 = vadd.f32 0.0, %v715
  %717 = vmatprep.mubr.bf16.mxu0 0
  %718 = vmatmul.mubr.bf16.gmra.mxu0 %v165
  %v719 = vpop.f32.mrf.mxu0
  %v720 = vadd.f32 0.0, %v719
  %v721 = vpop.f32.mrf.mxu0
  %v722 = vadd.f32 0.0, %v721
  %v723 = vpop.f32.mrf.mxu0
  %v724 = vadd.f32 0.0, %v723
  %v725 = vpop.f32.mrf.mxu0
  %v726 = vadd.f32 0.0, %v725
  %727 = vmatprep.mubr.bf16.mxu0 0
  %728 = vmatmul.mubr.bf16.gmra.mxu0 %v168
  %v729 = vpop.f32.mrf.mxu0
  %v730 = vadd.f32 0.0, %v729
  %v731 = vpop.f32.mrf.mxu0
  %v732 = vadd.f32 0.0, %v731
  %v733 = vpop.f32.mrf.mxu0
  %v734 = vadd.f32 0.0, %v733
  %v735 = vpop.f32.mrf.mxu0
  %v736 = vadd.f32 0.0, %v735
  %737 = vmatprep.mubr.bf16.mxu0 0
  %738 = vmatmul.mubr.bf16.gmra.mxu0 %v171
  %v739 = vpop.f32.mrf.mxu0
  %v740 = vadd.f32 0.0, %v739
  %v741 = vpop.f32.mrf.mxu0
  %v742 = vadd.f32 0.0, %v741
  %v743 = vpop.f32.mrf.mxu0
  %v744 = vadd.f32 0.0, %v743
  %v745 = vpop.f32.mrf.mxu0
  %v746 = vadd.f32 0.0, %v745
  %747 = vmatprep.mubr.bf16.mxu0 0
  %748 = vmatmul.mubr.bf16.gmra.mxu0 %v174
  %v749 = vpop.f32.mrf.mxu0
  %v750 = vadd.f32 0.0, %v749
  %v751 = vpop.f32.mrf.mxu0
  %v752 = vadd.f32 0.0, %v751
  %v753 = vpop.f32.mrf.mxu0
  %v754 = vadd.f32 0.0, %v753
  %v755 = vpop.f32.mrf.mxu0
  %v756 = vadd.f32 0.0, %v755
  %757 = vmatprep.mubr.bf16.mxu0 0
  %758 = vmatmul.mubr.bf16.gmra.mxu0 %v177
  %v759 = vpop.f32.mrf.mxu0
  %v760 = vadd.f32 0.0, %v759
  %v761 = vpop.f32.mrf.mxu0
  %v762 = vadd.f32 0.0, %v761
  %v763 = vpop.f32.mrf.mxu0
  %v764 = vadd.f32 0.0, %v763
  %v765 = vpop.f32.mrf.mxu0
  %v766 = vadd.f32 0.0, %v765
  %767 = vmatprep.mubr.bf16.mxu0 0
  %768 = vmatmul.mubr.bf16.gmra.mxu0 %v180
  %v769 = vpop.f32.mrf.mxu0
  %v770 = vadd.f32 0.0, %v769
  %v771 = vpop.f32.mrf.mxu0
  %v772 = vadd.f32 0.0, %v771
  %v773 = vpop.f32.mrf.mxu0
  %v774 = vadd.f32 0.0, %v773
  %v775 = vpop.f32.mrf.mxu0
  %v776 = vadd.f32 0.0, %v775
  %777 = vmatprep.mubr.bf16.mxu0 0
  %778 = vmatmul.mubr.bf16.gmra.mxu0 %v183
  %v779 = vpop.f32.mrf.mxu0
  %v780 = vadd.f32 0.0, %v779
  %v781 = vpop.f32.mrf.mxu0
  %v782 = vadd.f32 0.0, %v781
  %v783 = vpop.f32.mrf.mxu0
  %v784 = vadd.f32 0.0, %v783
  %v785 = vpop.f32.mrf.mxu0
  %v786 = vadd.f32 0.0, %v785
  %787 = vmatprep.mubr.bf16.mxu0 0
  %788 = vmatmul.mubr.bf16.gmra.mxu0 %v186
  %v789 = vpop.f32.mrf.mxu0
  %v790 = vadd.f32 0.0, %v789
  %v791 = vpop.f32.mrf.mxu0
  %v792 = vadd.f32 0.0, %v791
  %v793 = vpop.f32.mrf.mxu0
  %v794 = vadd.f32 0.0, %v793
  %v795 = vpop.f32.mrf.mxu0
  %v796 = vadd.f32 0.0, %v795
  %797 = vmatprep.mubr.bf16.mxu0 0
  %798 = vmatmul.mubr.bf16.gmra.mxu0 %v189
  %v799 = vpop.f32.mrf.mxu0
  %v800 = vadd.f32 0.0, %v799
  %v801 = vpop.f32.mrf.mxu0
  %v802 = vadd.f32 0.0, %v801
  %v803 = vpop.f32.mrf.mxu0
  %v804 = vadd.f32 0.0, %v803
  %v805 = vpop.f32.mrf.mxu0
  %v806 = vadd.f32 0.0, %v805
  %807 = vmatprep.mubr.bf16.mxu0 0
  %808 = vmatmul.mubr.bf16.gmra.mxu0 %v192
  %v809 = vpop.f32.mrf.mxu0
  %v810 = vadd.f32 0.0, %v809
  %v811 = vpop.f32.mrf.mxu0
  %v812 = vadd.f32 0.0, %v811
  %v813 = vpop.f32.mrf.mxu0
  %v814 = vadd.f32 0.0, %v813
  %v815 = vpop.f32.mrf.mxu0
  %v816 = vadd.f32 0.0, %v815
  %817 = vmatprep.mubr.bf16.mxu0 0
  %818 = vmatmul.mubr.bf16.gmra.mxu0 %v195
  %v819 = vpop.f32.mrf.mxu0
  %v820 = vadd.f32 0.0, %v819
  %v821 = vpop.f32.mrf.mxu0
  %v822 = vadd.f32 0.0, %v821
  %v823 = vpop.f32.mrf.mxu0
  %v824 = vadd.f32 0.0, %v823
  %v825 = vpop.f32.mrf.mxu0
  %v826 = vadd.f32 0.0, %v825
  %827 = vmatprep.mubr.bf16.mxu0 0
  %828 = vmatmul.mubr.bf16.gmra.mxu0 %v198
  %v829 = vpop.f32.mrf.mxu0
  %v830 = vadd.f32 0.0, %v829
  %v831 = vpop.f32.mrf.mxu0
  %v832 = vadd.f32 0.0, %v831
  %v833 = vpop.f32.mrf.mxu0
  %v834 = vadd.f32 0.0, %v833
  %v835 = vpop.f32.mrf.mxu0
  %v836 = vadd.f32 0.0, %v835
  %837 = vmatprep.mubr.bf16.mxu0 0
  %838 = vmatmul.mubr.bf16.gmra.mxu0 %v201
  %v839 = vpop.f32.mrf.mxu0
  %v840 = vadd.f32 0.0, %v839
  %v841 = vpop.f32.mrf.mxu0
  %v842 = vadd.f32 0.0, %v841
  %v843 = vpop.f32.mrf.mxu0
  %v844 = vadd.f32 0.0, %v843
  %v845 = vpop.f32.mrf.mxu0
  %v846 = vadd.f32 0.0, %v845
  %847 = vmatprep.mubr.bf16.mxu0 0
  %848 = vmatmul.mubr.bf16.gmra.mxu0 %v204
  %v849 = vpop.f32.mrf.mxu0
  %v850 = vadd.f32 0.0, %v849
  %v851 = vpop.f32.mrf.mxu0
  %v852 = vadd.f32 0.0, %v851
  %v853 = vpop.f32.mrf.mxu0
  %v854 = vadd.f32 0.0, %v853
  %v855 = vpop.f32.mrf.mxu0
  %v856 = vadd.f32 0.0, %v855
  %857 = vmatprep.mubr.bf16.mxu0 0
  %858 = vmatmul.mubr.bf16.gmra.mxu0 %v207
  %v859 = vpop.f32.mrf.mxu0
  %v860 = vadd.f32 0.0, %v859
  %v861 = vpop.f32.mrf.mxu0
  %v862 = vadd.f32 0.0, %v861
  %v863 = vpop.f32.mrf.mxu0
  %v864 = vadd.f32 0.0, %v863
  %v865 = vpop.f32.mrf.mxu0
  %v866 = vadd.f32 0.0, %v865
  %867 = vmatprep.mubr.bf16.mxu0 0
  %868 = vmatmul.mubr.bf16.gmra.mxu0 %v210
  %v869 = vpop.f32.mrf.mxu0
  %v870 = vadd.f32 0.0, %v869
  %v871 = vpop.f32.mrf.mxu0
  %v872 = vadd.f32 0.0, %v871
  %v873 = vpop.f32.mrf.mxu0
  %v874 = vadd.f32 0.0, %v873
  %v875 = vpop.f32.mrf.mxu0
  %v876 = vadd.f32 0.0, %v875
  %877 = vmatprep.mubr.bf16.mxu0 0
  %878 = vmatmul.mubr.bf16.gmra.mxu0 %v213
  %v879 = vpop.f32.mrf.mxu0
  %v880 = vadd.f32 0.0, %v879
  %v881 = vpop.f32.mrf.mxu0
  %v882 = vadd.f32 0.0, %v881
  %v883 = vpop.f32.mrf.mxu0
  %v884 = vadd.f32 0.0, %v883
  %v885 = vpop.f32.mrf.mxu0
  %v886 = vadd.f32 0.0, %v885
  %887 = vmatprep.mubr.bf16.mxu0 0
  %888 = vmatmul.mubr.bf16.gmra.mxu0 %v216
  %v889 = vpop.f32.mrf.mxu0
  %v890 = vadd.f32 0.0, %v889
  %v891 = vpop.f32.mrf.mxu0
  %v892 = vadd.f32 0.0, %v891
  %v893 = vpop.f32.mrf.mxu0
  %v894 = vadd.f32 0.0, %v893
  %v895 = vpop.f32.mrf.mxu0
  %v896 = vadd.f32 0.0, %v895
  %897 = vmatprep.mubr.bf16.mxu0 0
  %898 = vmatmul.mubr.bf16.gmra.mxu0 %v219
  %v899 = vpop.f32.mrf.mxu0
  %v900 = vadd.f32 0.0, %v899
  %v901 = vpop.f32.mrf.mxu0
  %v902 = vadd.f32 0.0, %v901
  %v903 = vpop.f32.mrf.mxu0
  %v904 = vadd.f32 0.0, %v903
  %v905 = vpop.f32.mrf.mxu0
  %v906 = vadd.f32 0.0, %v905
  %907 = vmatprep.mubr.bf16.mxu0 0
  %908 = vmatmul.mubr.bf16.gmra.mxu0 %v222
  %v909 = vpop.f32.mrf.mxu0
  %v910 = vadd.f32 0.0, %v909
  %v911 = vpop.f32.mrf.mxu0
  %v912 = vadd.f32 0.0, %v911
  %v913 = vpop.f32.mrf.mxu0
  %v914 = vadd.f32 0.0, %v913
  %v915 = vpop.f32.mrf.mxu0
  %v916 = vadd.f32 0.0, %v915
  %917 = vmatprep.mubr.bf16.mxu0 0
  %918 = vmatmul.mubr.bf16.gmra.mxu0 %v225
  %v919 = vpop.f32.mrf.mxu0
  %v920 = vadd.f32 0.0, %v919
  %v921 = vpop.f32.mrf.mxu0
  %v922 = vadd.f32 0.0, %v921
  %v923 = vpop.f32.mrf.mxu0
  %v924 = vadd.f32 0.0, %v923
  %v925 = vpop.f32.mrf.mxu0
  %v926 = vadd.f32 0.0, %v925
  %927 = vmatprep.mubr.bf16.mxu0 0
  %928 = vmatmul.mubr.bf16.gmra.mxu0 %v228
  %v929 = vpop.f32.mrf.mxu0
  %v930 = vadd.f32 0.0, %v929
  %v931 = vpop.f32.mrf.mxu0
  %v932 = vadd.f32 0.0, %v931
  %v933 = vpop.f32.mrf.mxu0
  %v934 = vadd.f32 0.0, %v933
  %v935 = vpop.f32.mrf.mxu0
  %v936 = vadd.f32 0.0, %v935
  %937 = vmatprep.mubr.bf16.mxu0 0
  %938 = vmatmul.mubr.bf16.gmra.mxu0 %v231
  %v939 = vpop.f32.mrf.mxu0
  %v940 = vadd.f32 0.0, %v939
  %v941 = vpop.f32.mrf.mxu0
  %v942 = vadd.f32 0.0, %v941
  %v943 = vpop.f32.mrf.mxu0
  %v944 = vadd.f32 0.0, %v943
  %v945 = vpop.f32.mrf.mxu0
  %v946 = vadd.f32 0.0, %v945
  %947 = vmatprep.mubr.bf16.mxu0 0
  %948 = vmatmul.mubr.bf16.gmra.mxu0 %v234
  %v949 = vpop.f32.mrf.mxu0
  %v950 = vadd.f32 0.0, %v949
  %v951 = vpop.f32.mrf.mxu0
  %v952 = vadd.f32 0.0, %v951
  %v953 = vpop.f32.mrf.mxu0
  %v954 = vadd.f32 0.0, %v953
  %v955 = vpop.f32.mrf.mxu0
  %v956 = vadd.f32 0.0, %v955
  %957 = vdwg.mxu0
  %v958 = vld [vmem:[%s3] ss:$8 sm:$0x3]
  %v960 = vlaneseq
  %v961 = vshrl.u32 %v960, 7
  %v962 = vsub.s32 0, %v961
  %v963 = vrot.slane %v958, %v962
  %v964 = vlaneseq
  %v965 = vshrl.u32 %v964, 7
  %v966 = vsub.s32 1, %v965
  %v967 = vrot.slane %v958, %v966
  %v970 = vadd.f32 %v287, %v963
  %v971 = vadd.f32 %v289, %v967
  %v972 = vadd.f32 %v291, %v963
  %v973 = vadd.f32 %v293, %v967
  %v974 = vadd.f32 %v297, %v963
  %v975 = vadd.f32 %v299, %v967
  %v976 = vadd.f32 %v301, %v963
  %v977 = vadd.f32 %v303, %v967
  %v978 = vadd.f32 %v307, %v963
  %v979 = vadd.f32 %v309, %v967
  %v980 = vadd.f32 %v311, %v963
  %v981 = vadd.f32 %v313, %v967
  %v982 = vadd.f32 %v317, %v963
  %v983 = vadd.f32 %v319, %v967
  %v984 = vadd.f32 %v321, %v963
  %v985 = vadd.f32 %v323, %v967
  %v986 = vadd.f32 %v327, %v963
  %v987 = vadd.f32 %v329, %v967
  %v988 = vadd.f32 %v331, %v963
  %v989 = vadd.f32 %v333, %v967
  %v990 = vadd.f32 %v337, %v963
  %v991 = vadd.f32 %v339, %v967
  %v992 = vadd.f32 %v341, %v963
  %v993 = vadd.f32 %v343, %v967
  %v994 = vadd.f32 %v347, %v963
  %v995 = vadd.f32 %v349, %v967
  %v996 = vadd.f32 %v351, %v963
  %v997 = vadd.f32 %v353, %v967
  %v998 = vadd.f32 %v357, %v963
  %v999 = vadd.f32 %v359, %v967
  %v1000 = vadd.f32 %v361, %v963
  %v1001 = vadd.f32 %v363, %v967
  %v1002 = vadd.f32 %v367, %v963
  %v1003 = vadd.f32 %v369, %v967
  %v1004 = vadd.f32 %v371, %v963
  %v1005 = vadd.f32 %v373, %v967
  %v1006 = vadd.f32 %v377, %v963
  %v1007 = vadd.f32 %v379, %v967
  %v1008 = vadd.f32 %v381, %v963
  %v1009 = vadd.f32 %v383, %v967
  %v1010 = vadd.f32 %v387, %v963
  %v1011 = vadd.f32 %v389, %v967
  %v1012 = vadd.f32 %v391, %v963
  %v1013 = vadd.f32 %v393, %v967
  %v1014 = vadd.f32 %v397, %v963
  %v1015 = vadd.f32 %v399, %v967
  %v1016 = vadd.f32 %v401, %v963
  %v1017 = vadd.f32 %v403, %v967
  %v1018 = vadd.f32 %v407, %v963
  %v1019 = vadd.f32 %v409, %v967
  %v1020 = vadd.f32 %v411, %v963
  %v1021 = vadd.f32 %v413, %v967
  %v1022 = vadd.f32 %v417, %v963
  %v1023 = vadd.f32 %v419, %v967
  %v1024 = vadd.f32 %v421, %v963
  %v1025 = vadd.f32 %v423, %v967
  %v1026 = vadd.f32 %v427, %v963
  %v1027 = vadd.f32 %v429, %v967
  %v1028 = vadd.f32 %v431, %v963
  %v1029 = vadd.f32 %v433, %v967
  %v1030 = vadd.f32 %v437, %v963
  %v1031 = vadd.f32 %v439, %v967
  %v1032 = vadd.f32 %v441, %v963
  %v1033 = vadd.f32 %v443, %v967
  %v1034 = vadd.f32 %v447, %v963
  %v1035 = vadd.f32 %v449, %v967
  %v1036 = vadd.f32 %v451, %v963
  %v1037 = vadd.f32 %v453, %v967
  %v1038 = vadd.f32 %v457, %v963
  %v1039 = vadd.f32 %v459, %v967
  %v1040 = vadd.f32 %v461, %v963
  %v1041 = vadd.f32 %v463, %v967
  %v1042 = vadd.f32 %v467, %v963
  %v1043 = vadd.f32 %v469, %v967
  %v1044 = vadd.f32 %v471, %v963
  %v1045 = vadd.f32 %v473, %v967
  %v1046 = vadd.f32 %v477, %v963
  %v1047 = vadd.f32 %v479, %v967
  %v1048 = vadd.f32 %v481, %v963
  %v1049 = vadd.f32 %v483, %v967
  %v1050 = vadd.f32 %v487, %v963
  %v1051 = vadd.f32 %v489, %v967
  %v1052 = vadd.f32 %v491, %v963
  %v1053 = vadd.f32 %v493, %v967
  %v1054 = vadd.f32 %v497, %v963
  %v1055 = vadd.f32 %v499, %v967
  %v1056 = vadd.f32 %v501, %v963
  %v1057 = vadd.f32 %v503, %v967
  %v1058 = vadd.f32 %v507, %v963
  %v1059 = vadd.f32 %v509, %v967
  %v1060 = vadd.f32 %v511, %v963
  %v1061 = vadd.f32 %v513, %v967
  %v1062 = vadd.f32 %v517, %v963
  %v1063 = vadd.f32 %v519, %v967
  %v1064 = vadd.f32 %v521, %v963
  %v1065 = vadd.f32 %v523, %v967
  %v1066 = vadd.f32 %v527, %v963
  %v1067 = vadd.f32 %v529, %v967
  %v1068 = vadd.f32 %v531, %v963
  %v1069 = vadd.f32 %v533, %v967
  %v1070 = vadd.f32 %v537, %v963
  %v1071 = vadd.f32 %v539, %v967
  %v1072 = vadd.f32 %v541, %v963
  %v1073 = vadd.f32 %v543, %v967
  %v1074 = vadd.f32 %v547, %v963
  %v1075 = vadd.f32 %v549, %v967
  %v1076 = vadd.f32 %v551, %v963
  %v1077 = vadd.f32 %v553, %v967
  %v1078 = vadd.f32 %v557, %v963
  %v1079 = vadd.f32 %v559, %v967
  %v1080 = vadd.f32 %v561, %v963
  %v1081 = vadd.f32 %v563, %v967
  %v1082 = vadd.f32 %v567, %v963
  %v1083 = vadd.f32 %v569, %v967
  %v1084 = vadd.f32 %v571, %v963
  %v1085 = vadd.f32 %v573, %v967
  %v1086 = vadd.f32 %v577, %v963
  %v1087 = vadd.f32 %v579, %v967
  %v1088 = vadd.f32 %v581, %v963
  %v1089 = vadd.f32 %v583, %v967
  %v1090 = vadd.f32 %v587, %v963
  %v1091 = vadd.f32 %v589, %v967
  %v1092 = vadd.f32 %v591, %v963
  %v1093 = vadd.f32 %v593, %v967
  %v1094 = vadd.f32 %v597, %v963
  %v1095 = vadd.f32 %v599, %v967
  %v1096 = vadd.f32 %v601, %v963
  %v1097 = vadd.f32 %v603, %v967
  %v1098 = vmax.f32 %v970, 0.0
  %v1099 = vmax.f32 %v971, 0.0
  %v1100 = vmax.f32 %v972, 0.0
  %v1101 = vmax.f32 %v973, 0.0
  %v1102 = vmax.f32 %v974, 0.0
  %v1103 = vmax.f32 %v975, 0.0
  %v1104 = vmax.f32 %v976, 0.0
  %v1105 = vmax.f32 %v977, 0.0
  %v1106 = vmax.f32 %v978, 0.0
  %v1107 = vmax.f32 %v979, 0.0
  %v1108 = vmax.f32 %v980, 0.0
  %v1109 = vmax.f32 %v981, 0.0
  %v1110 = vmax.f32 %v982, 0.0
  %v1111 = vmax.f32 %v983, 0.0
  %v1112 = vmax.f32 %v984, 0.0
  %v1113 = vmax.f32 %v985, 0.0
  %v1114 = vmax.f32 %v986, 0.0
  %v1115 = vmax.f32 %v987, 0.0
  %v1116 = vmax.f32 %v988, 0.0
  %v1117 = vmax.f32 %v989, 0.0
  %v1118 = vmax.f32 %v990, 0.0
  %v1119 = vmax.f32 %v991, 0.0
  %v1120 = vmax.f32 %v992, 0.0
  %v1121 = vmax.f32 %v993, 0.0
  %v1122 = vmax.f32 %v994, 0.0
  %v1123 = vmax.f32 %v995, 0.0
  %v1124 = vmax.f32 %v996, 0.0
  %v1125 = vmax.f32 %v997, 0.0
  %v1126 = vmax.f32 %v998, 0.0
  %v1127 = vmax.f32 %v999, 0.0
  %v1128 = vmax.f32 %v1000, 0.0
  %v1129 = vmax.f32 %v1001, 0.0
  %v1130 = vmax.f32 %v1002, 0.0
  %v1131 = vmax.f32 %v1003, 0.0
  %v1132 = vmax.f32 %v1004, 0.0
  %v1133 = vmax.f32 %v1005, 0.0
  %v1134 = vmax.f32 %v1006, 0.0
  %v1135 = vmax.f32 %v1007, 0.0
  %v1136 = vmax.f32 %v1008, 0.0
  %v1137 = vmax.f32 %v1009, 0.0
  %v1138 = vmax.f32 %v1010, 0.0
  %v1139 = vmax.f32 %v1011, 0.0
  %v1140 = vmax.f32 %v1012, 0.0
  %v1141 = vmax.f32 %v1013, 0.0
  %v1142 = vmax.f32 %v1014, 0.0
  %v1143 = vmax.f32 %v1015, 0.0
  %v1144 = vmax.f32 %v1016, 0.0
  %v1145 = vmax.f32 %v1017, 0.0
  %v1146 = vmax.f32 %v1018, 0.0
  %v1147 = vmax.f32 %v1019, 0.0
  %v1148 = vmax.f32 %v1020, 0.0
  %v1149 = vmax.f32 %v1021, 0.0
  %v1150 = vmax.f32 %v1022, 0.0
  %v1151 = vmax.f32 %v1023, 0.0
  %v1152 = vmax.f32 %v1024, 0.0
  %v1153 = vmax.f32 %v1025, 0.0
  %v1154 = vmax.f32 %v1026, 0.0
  %v1155 = vmax.f32 %v1027, 0.0
  %v1156 = vmax.f32 %v1028, 0.0
  %v1157 = vmax.f32 %v1029, 0.0
  %v1158 = vmax.f32 %v1030, 0.0
  %v1159 = vmax.f32 %v1031, 0.0
  %v1160 = vmax.f32 %v1032, 0.0
  %v1161 = vmax.f32 %v1033, 0.0
  %v1162 = vmax.f32 %v1034, 0.0
  %v1163 = vmax.f32 %v1035, 0.0
  %v1164 = vmax.f32 %v1036, 0.0
  %v1165 = vmax.f32 %v1037, 0.0
  %v1166 = vmax.f32 %v1038, 0.0
  %v1167 = vmax.f32 %v1039, 0.0
  %v1168 = vmax.f32 %v1040, 0.0
  %v1169 = vmax.f32 %v1041, 0.0
  %v1170 = vmax.f32 %v1042, 0.0
  %v1171 = vmax.f32 %v1043, 0.0
  %v1172 = vmax.f32 %v1044, 0.0
  %v1173 = vmax.f32 %v1045, 0.0
  %v1174 = vmax.f32 %v1046, 0.0
  %v1175 = vmax.f32 %v1047, 0.0
  %v1176 = vmax.f32 %v1048, 0.0
  %v1177 = vmax.f32 %v1049, 0.0
  %v1178 = vmax.f32 %v1050, 0.0
  %v1179 = vmax.f32 %v1051, 0.0
  %v1180 = vmax.f32 %v1052, 0.0
  %v1181 = vmax.f32 %v1053, 0.0
  %v1182 = vmax.f32 %v1054, 0.0
  %v1183 = vmax.f32 %v1055, 0.0
  %v1184 = vmax.f32 %v1056, 0.0
  %v1185 = vmax.f32 %v1057, 0.0
  %v1186 = vmax.f32 %v1058, 0.0
  %v1187 = vmax.f32 %v1059, 0.0
  %v1188 = vmax.f32 %v1060, 0.0
  %v1189 = vmax.f32 %v1061, 0.0
  %v1190 = vmax.f32 %v1062, 0.0
  %v1191 = vmax.f32 %v1063, 0.0
  %v1192 = vmax.f32 %v1064, 0.0
  %v1193 = vmax.f32 %v1065, 0.0
  %v1194 = vmax.f32 %v1066, 0.0
  %v1195 = vmax.f32 %v1067, 0.0
  %v1196 = vmax.f32 %v1068, 0.0
  %v1197 = vmax.f32 %v1069, 0.0
  %v1198 = vmax.f32 %v1070, 0.0
  %v1199 = vmax.f32 %v1071, 0.0
  %v1200 = vmax.f32 %v1072, 0.0
  %v1201 = vmax.f32 %v1073, 0.0
  %v1202 = vmax.f32 %v1074, 0.0
  %v1203 = vmax.f32 %v1075, 0.0
  %v1204 = vmax.f32 %v1076, 0.0
  %v1205 = vmax.f32 %v1077, 0.0
  %v1206 = vmax.f32 %v1078, 0.0
  %v1207 = vmax.f32 %v1079, 0.0
  %v1208 = vmax.f32 %v1080, 0.0
  %v1209 = vmax.f32 %v1081, 0.0
  %v1210 = vmax.f32 %v1082, 0.0
  %v1211 = vmax.f32 %v1083, 0.0
  %v1212 = vmax.f32 %v1084, 0.0
  %v1213 = vmax.f32 %v1085, 0.0
  %v1214 = vmax.f32 %v1086, 0.0
  %v1215 = vmax.f32 %v1087, 0.0
  %v1216 = vmax.f32 %v1088, 0.0
  %v1217 = vmax.f32 %v1089, 0.0
  %v1218 = vmax.f32 %v1090, 0.0
  %v1219 = vmax.f32 %v1091, 0.0
  %v1220 = vmax.f32 %v1092, 0.0
  %v1221 = vmax.f32 %v1093, 0.0
  %v1222 = vmax.f32 %v1094, 0.0
  %v1223 = vmax.f32 %v1095, 0.0
  %v1224 = vmax.f32 %v1096, 0.0
  %v1225 = vmax.f32 %v1097, 0.0
  %v1226 = vpack.c.bf16 %v1100, %v1098
  %v1227 = vpack.c.bf16 %v1101, %v1099
  %v1228 = vpack.c.bf16 %v1104, %v1102
  %v1229 = vpack.c.bf16 %v1105, %v1103
  %v1230 = vpack.c.bf16 %v1108, %v1106
  %v1231 = vpack.c.bf16 %v1109, %v1107
  %v1232 = vpack.c.bf16 %v1112, %v1110
  %v1233 = vpack.c.bf16 %v1113, %v1111
  %v1234 = vpack.c.bf16 %v1116, %v1114
  %v1235 = vpack.c.bf16 %v1117, %v1115
  %v1236 = vpack.c.bf16 %v1120, %v1118
  %v1237 = vpack.c.bf16 %v1121, %v1119
  %v1238 = vpack.c.bf16 %v1124, %v1122
  %v1239 = vpack.c.bf16 %v1125, %v1123
  %v1240 = vpack.c.bf16 %v1128, %v1126
  %v1241 = vpack.c.bf16 %v1129, %v1127
  %v1242 = vpack.c.bf16 %v1132, %v1130
  %v1243 = vpack.c.bf16 %v1133, %v1131
  %v1244 = vpack.c.bf16 %v1136, %v1134
  %v1245 = vpack.c.bf16 %v1137, %v1135
  %v1246 = vpack.c.bf16 %v1140, %v1138
  %v1247 = vpack.c.bf16 %v1141, %v1139
  %v1248 = vpack.c.bf16 %v1144, %v1142
  %v1249 = vpack.c.bf16 %v1145, %v1143
  %v1250 = vpack.c.bf16 %v1148, %v1146
  %v1251 = vpack.c.bf16 %v1149, %v1147
  %v1252 = vpack.c.bf16 %v1152, %v1150
  %v1253 = vpack.c.bf16 %v1153, %v1151
  %v1254 = vpack.c.bf16 %v1156, %v1154
  %v1255 = vpack.c.bf16 %v1157, %v1155
  %v1256 = vpack.c.bf16 %v1160, %v1158
  %v1257 = vpack.c.bf16 %v1161, %v1159
  %v1258 = vpack.c.bf16 %v1164, %v1162
  %v1259 = vpack.c.bf16 %v1165, %v1163
  %v1260 = vpack.c.bf16 %v1168, %v1166
  %v1261 = vpack.c.bf16 %v1169, %v1167
  %v1262 = vpack.c.bf16 %v1172, %v1170
  %v1263 = vpack.c.bf16 %v1173, %v1171
  %v1264 = vpack.c.bf16 %v1176, %v1174
  %v1265 = vpack.c.bf16 %v1177, %v1175
  %v1266 = vpack.c.bf16 %v1180, %v1178
  %v1267 = vpack.c.bf16 %v1181, %v1179
  %v1268 = vpack.c.bf16 %v1184, %v1182
  %v1269 = vpack.c.bf16 %v1185, %v1183
  %v1270 = vpack.c.bf16 %v1188, %v1186
  %v1271 = vpack.c.bf16 %v1189, %v1187
  %v1272 = vpack.c.bf16 %v1192, %v1190
  %v1273 = vpack.c.bf16 %v1193, %v1191
  %v1274 = vpack.c.bf16 %v1196, %v1194
  %v1275 = vpack.c.bf16 %v1197, %v1195
  %v1276 = vpack.c.bf16 %v1200, %v1198
  %v1277 = vpack.c.bf16 %v1201, %v1199
  %v1278 = vpack.c.bf16 %v1204, %v1202
  %v1279 = vpack.c.bf16 %v1205, %v1203
  %v1280 = vpack.c.bf16 %v1208, %v1206
  %v1281 = vpack.c.bf16 %v1209, %v1207
  %v1282 = vpack.c.bf16 %v1212, %v1210
  %v1283 = vpack.c.bf16 %v1213, %v1211
  %v1284 = vpack.c.bf16 %v1216, %v1214
  %v1285 = vpack.c.bf16 %v1217, %v1215
  %v1286 = vpack.c.bf16 %v1220, %v1218
  %v1287 = vpack.c.bf16 %v1221, %v1219
  %v1288 = vpack.c.bf16 %v1224, %v1222
  %v1289 = vpack.c.bf16 %v1225, %v1223
  %v1290 = vld [vmem:[%s2] sm:$0xff]
  %v1291 = vld [vmem:[%s2 + $0x8] sm:$0xff]
  %v1292 = vld [vmem:[%s2 + $0x10] sm:$0xff]
  %v1293 = vld [vmem:[%s2 + $0x18] sm:$0xff]
  %v1294 = vld [vmem:[%s2 + $0x20] sm:$0xff]
  %v1295 = vld [vmem:[%s2 + $0x28] sm:$0xff]
  %v1296 = vld [vmem:[%s2 + $0x30] sm:$0xff]
  %v1297 = vld [vmem:[%s2 + $0x38] sm:$0xff]
  %v1298 = vld [vmem:[%s2 + $0x40] sm:$0xff]
  %v1299 = vld [vmem:[%s2 + $0x48] sm:$0xff]
  %v1300 = vld [vmem:[%s2 + $0x50] sm:$0xff]
  %v1301 = vld [vmem:[%s2 + $0x58] sm:$0xff]
  %v1302 = vld [vmem:[%s2 + $0x60] sm:$0xff]
  %v1303 = vld [vmem:[%s2 + $0x68] sm:$0xff]
  %v1304 = vld [vmem:[%s2 + $0x70] sm:$0xff]
  %v1305 = vld [vmem:[%s2 + $0x78] sm:$0xff]
  %v1306 = vld [vmem:[%s2 + $0x80] sm:$0xff]
  %v1307 = vld [vmem:[%s2 + $0x88] sm:$0xff]
  %v1308 = vld [vmem:[%s2 + $0x90] sm:$0xff]
  %v1309 = vld [vmem:[%s2 + $0x98] sm:$0xff]
  %v1310 = vld [vmem:[%s2 + $0xa0] sm:$0xff]
  %v1311 = vld [vmem:[%s2 + $0xa8] sm:$0xff]
  %v1312 = vld [vmem:[%s2 + $0xb0] sm:$0xff]
  %v1313 = vld [vmem:[%s2 + $0xb8] sm:$0xff]
  %v1314 = vld [vmem:[%s2 + $0xc0] sm:$0xff]
  %v1315 = vld [vmem:[%s2 + $0xc8] sm:$0xff]
  %v1316 = vld [vmem:[%s2 + $0xd0] sm:$0xff]
  %v1317 = vld [vmem:[%s2 + $0xd8] sm:$0xff]
  %v1318 = vld [vmem:[%s2 + $0xe0] sm:$0xff]
  %v1319 = vld [vmem:[%s2 + $0xe8] sm:$0xff]
  %v1320 = vld [vmem:[%s2 + $0xf0] sm:$0xff]
  %v1321 = vld [vmem:[%s2 + $0xf8] sm:$0xff]
  %s1322 = scalar_lea.vmem %s3, 1
  %v1323 = vld [vmem:[%s1322] ss:$8 sm:$0x3]
  %v1325 = vlaneseq
  %v1326 = vshrl.u32 %v1325, 7
  %v1327 = vsub.s32 0, %v1326
  %v1328 = vrot.slane %v1323, %v1327
  %v1329 = vlaneseq
  %v1330 = vshrl.u32 %v1329, 7
  %v1331 = vsub.s32 1, %v1330
  %v1332 = vrot.slane %v1323, %v1331
  %v1367 = vunpack.c.l.b16 %v1290
  %v1368 = vunpack.c.h.b16 %v1290
  %v1369 = vunpack.c.l.b16 %v1291
  %v1370 = vunpack.c.h.b16 %v1291
  %v1371 = vunpack.c.l.b16 %v1292
  %v1372 = vunpack.c.h.b16 %v1292
  %v1373 = vunpack.c.l.b16 %v1293
  %v1374 = vunpack.c.h.b16 %v1293
  %v1375 = vunpack.c.l.b16 %v1294
  %v1376 = vunpack.c.h.b16 %v1294
  %v1377 = vunpack.c.l.b16 %v1295
  %v1378 = vunpack.c.h.b16 %v1295
  %v1379 = vunpack.c.l.b16 %v1296
  %v1380 = vunpack.c.h.b16 %v1296
  %v1381 = vunpack.c.l.b16 %v1297
  %v1382 = vunpack.c.h.b16 %v1297
  %v1383 = vunpack.c.l.b16 %v1298
  %v1384 = vunpack.c.h.b16 %v1298
  %v1385 = vunpack.c.l.b16 %v1299
  %v1386 = vunpack.c.h.b16 %v1299
  %v1387 = vunpack.c.l.b16 %v1300
  %v1388 = vunpack.c.h.b16 %v1300
  %v1389 = vunpack.c.l.b16 %v1301
  %v1390 = vunpack.c.h.b16 %v1301
  %v1391 = vunpack.c.l.b16 %v1302
  %v1392 = vunpack.c.h.b16 %v1302
  %v1393 = vunpack.c.l.b16 %v1303
  %v1394 = vunpack.c.h.b16 %v1303
  %v1395 = vunpack.c.l.b16 %v1304
  %v1396 = vunpack.c.h.b16 %v1304
  %v1397 = vunpack.c.l.b16 %v1305
  %v1398 = vunpack.c.h.b16 %v1305
  %v1399 = vunpack.c.l.b16 %v1306
  %v1400 = vunpack.c.h.b16 %v1306
  %v1401 = vunpack.c.l.b16 %v1307
  %v1402 = vunpack.c.h.b16 %v1307
  %v1403 = vunpack.c.l.b16 %v1308
  %v1404 = vunpack.c.h.b16 %v1308
  %v1405 = vunpack.c.l.b16 %v1309
  %v1406 = vunpack.c.h.b16 %v1309
  %v1407 = vunpack.c.l.b16 %v1310
  %v1408 = vunpack.c.h.b16 %v1310
  %v1409 = vunpack.c.l.b16 %v1311
  %v1410 = vunpack.c.h.b16 %v1311
  %v1411 = vunpack.c.l.b16 %v1312
  %v1412 = vunpack.c.h.b16 %v1312
  %v1413 = vunpack.c.l.b16 %v1313
  %v1414 = vunpack.c.h.b16 %v1313
  %v1415 = vunpack.c.l.b16 %v1314
  %v1416 = vunpack.c.h.b16 %v1314
  %v1417 = vunpack.c.l.b16 %v1315
  %v1418 = vunpack.c.h.b16 %v1315
  %v1419 = vunpack.c.l.b16 %v1316
  %v1420 = vunpack.c.h.b16 %v1316
  %v1421 = vunpack.c.l.b16 %v1317
  %v1422 = vunpack.c.h.b16 %v1317
  %v1423 = vunpack.c.l.b16 %v1318
  %v1424 = vunpack.c.h.b16 %v1318
  %v1425 = vunpack.c.l.b16 %v1319
  %v1426 = vunpack.c.h.b16 %v1319
  %v1427 = vunpack.c.l.b16 %v1320
  %v1428 = vunpack.c.h.b16 %v1320
  %v1429 = vunpack.c.l.b16 %v1321
  %v1430 = vunpack.c.h.b16 %v1321
  %v1431 = vpack.c.b16 %v1369, %v1367
  %v1432 = vpack.c.b16 %v1370, %v1368
  %v1433 = vpack.c.b16 %v1373, %v1371
  %v1434 = vpack.c.b16 %v1374, %v1372
  %v1435 = vpack.c.b16 %v1377, %v1375
  %v1436 = vpack.c.b16 %v1378, %v1376
  %v1437 = vpack.c.b16 %v1381, %v1379
  %v1438 = vpack.c.b16 %v1382, %v1380
  %v1439 = vpack.c.b16 %v1385, %v1383
  %v1440 = vpack.c.b16 %v1386, %v1384
  %v1441 = vpack.c.b16 %v1389, %v1387
  %v1442 = vpack.c.b16 %v1390, %v1388
  %v1443 = vpack.c.b16 %v1393, %v1391
  %v1444 = vpack.c.b16 %v1394, %v1392
  %v1445 = vpack.c.b16 %v1397, %v1395
  %v1446 = vpack.c.b16 %v1398, %v1396
  %v1447 = vpack.c.b16 %v1401, %v1399
  %v1448 = vpack.c.b16 %v1402, %v1400
  %v1449 = vpack.c.b16 %v1405, %v1403
  %v1450 = vpack.c.b16 %v1406, %v1404
  %v1451 = vpack.c.b16 %v1409, %v1407
  %v1452 = vpack.c.b16 %v1410, %v1408
  %v1453 = vpack.c.b16 %v1413, %v1411
  %v1454 = vpack.c.b16 %v1414, %v1412
  %v1455 = vpack.c.b16 %v1417, %v1415
  %v1456 = vpack.c.b16 %v1418, %v1416
  %v1457 = vpack.c.b16 %v1421, %v1419
  %v1458 = vpack.c.b16 %v1422, %v1420
  %v1459 = vpack.c.b16 %v1425, %v1423
  %v1460 = vpack.c.b16 %v1426, %v1424
  %v1461 = vpack.c.b16 %v1429, %v1427
  %v1462 = vpack.c.b16 %v1430, %v1428
  %1495 = vmatprep.subr.bf16.mxu0 %v1446
  %1496 = vmatpush1.bf16.msra.mxu0 %v1445
  %1497 = vmatprep.subr.bf16.mxu0 %v1444
  %1498 = vmatpush1.bf16.msra.mxu0 %v1443
  %1499 = vmatprep.subr.bf16.mxu0 %v1442
  %1500 = vmatpush1.bf16.msra.mxu0 %v1441
  %1501 = vmatprep.subr.bf16.mxu0 %v1440
  %1502 = vmatpush1.bf16.msra.mxu0 %v1439
  %1503 = vmatprep.subr.bf16.mxu0 %v1438
  %1504 = vmatpush1.bf16.msra.mxu0 %v1437
  %1505 = vmatprep.subr.bf16.mxu0 %v1436
  %1506 = vmatpush1.bf16.msra.mxu0 %v1435
  %1507 = vmatprep.subr.bf16.mxu0 %v1434
  %1508 = vmatpush1.bf16.msra.mxu0 %v1433
  %1509 = vmatprep.subr.bf16.mxu0 %v1432
  %1510 = vmatpush1.bf16.msra.mxu0 %v1431
  %1511 = vmatprep.subr.bf16.mxu0 %v1462
  %1512 = vmatpush2.bf16.msra.mxu0 %v1461
  %1513 = vmatprep.subr.bf16.mxu0 %v1460
  %1514 = vmatpush2.bf16.msra.mxu0 %v1459
  %1515 = vmatprep.subr.bf16.mxu0 %v1458
  %1516 = vmatpush2.bf16.msra.mxu0 %v1457
  %1517 = vmatprep.subr.bf16.mxu0 %v1456
  %1518 = vmatpush2.bf16.msra.mxu0 %v1455
  %1519 = vmatprep.subr.bf16.mxu0 %v1454
  %1520 = vmatpush2.bf16.msra.mxu0 %v1453
  %1521 = vmatprep.subr.bf16.mxu0 %v1452
  %1522 = vmatpush2.bf16.msra.mxu0 %v1451
  %1523 = vmatprep.subr.bf16.mxu0 %v1450
  %1524 = vmatpush2.bf16.msra.mxu0 %v1449
  %1525 = vmatprep.subr.bf16.mxu0 %v1448
  %1526 = vmatpush2.bf16.msra.mxu0 %v1447
  %1527 = vmatprep.mubr.bf16.mxu0 %v1227
  %1528 = vmatmul.mubr.bf16.gmra.mxu0 %v1226
  %v1529 = vpop.f32.mrf.mxu0
  %v1530 = vadd.f32 %v1328, %v1529
  %v1531 = vpop.f32.mrf.mxu0
  %v1532 = vadd.f32 %v1332, %v1531
  %v1533 = vpop.f32.mrf.mxu0
  %v1534 = vadd.f32 %v1328, %v1533
  %v1535 = vpop.f32.mrf.mxu0
  %v1536 = vadd.f32 %v1332, %v1535
  %1537 = vmatprep.mubr.bf16.mxu0 %v1229
  %1538 = vmatmul.mubr.bf16.gmra.mxu0 %v1228
  %v1539 = vpop.f32.mrf.mxu0
  %v1540 = vadd.f32 %v1328, %v1539
  %v1541 = vpop.f32.mrf.mxu0
  %v1542 = vadd.f32 %v1332, %v1541
  %v1543 = vpop.f32.mrf.mxu0
  %v1544 = vadd.f32 %v1328, %v1543
  %v1545 = vpop.f32.mrf.mxu0
  %v1546 = vadd.f32 %v1332, %v1545
  %1547 = vmatprep.mubr.bf16.mxu0 %v1231
  %1548 = vmatmul.mubr.bf16.gmra.mxu0 %v1230
  %v1549 = vpop.f32.mrf.mxu0
  %v1550 = vadd.f32 %v1328, %v1549
  %v1551 = vpop.f32.mrf.mxu0
  %v1552 = vadd.f32 %v1332, %v1551
  %v1553 = vpop.f32.mrf.mxu0
  %v1554 = vadd.f32 %v1328, %v1553
  %v1555 = vpop.f32.mrf.mxu0
  %v1556 = vadd.f32 %v1332, %v1555
  %1557 = vmatprep.mubr.bf16.mxu0 %v1233
  %1558 = vmatmul.mubr.bf16.gmra.mxu0 %v1232
  %v1559 = vpop.f32.mrf.mxu0
  %v1560 = vadd.f32 %v1328, %v1559
  %v1561 = vpop.f32.mrf.mxu0
  %v1562 = vadd.f32 %v1332, %v1561
  %v1563 = vpop.f32.mrf.mxu0
  %v1564 = vadd.f32 %v1328, %v1563
  %v1565 = vpop.f32.mrf.mxu0
  %v1566 = vadd.f32 %v1332, %v1565
  %1567 = vmatprep.mubr.bf16.mxu0 %v1235
  %1568 = vmatmul.mubr.bf16.gmra.mxu0 %v1234
  %v1569 = vpop.f32.mrf.mxu0
  %v1570 = vadd.f32 %v1328, %v1569
  %v1571 = vpop.f32.mrf.mxu0
  %v1572 = vadd.f32 %v1332, %v1571
  %v1573 = vpop.f32.mrf.mxu0
  %v1574 = vadd.f32 %v1328, %v1573
  %v1575 = vpop.f32.mrf.mxu0
  %v1576 = vadd.f32 %v1332, %v1575
  %1577 = vmatprep.mubr.bf16.mxu0 %v1237
  %1578 = vmatmul.mubr.bf16.gmra.mxu0 %v1236
  %v1579 = vpop.f32.mrf.mxu0
  %v1580 = vadd.f32 %v1328, %v1579
  %v1581 = vpop.f32.mrf.mxu0
  %v1582 = vadd.f32 %v1332, %v1581
  %v1583 = vpop.f32.mrf.mxu0
  %v1584 = vadd.f32 %v1328, %v1583
  %v1585 = vpop.f32.mrf.mxu0
  %v1586 = vadd.f32 %v1332, %v1585
  %1587 = vmatprep.mubr.bf16.mxu0 %v1239
  %1588 = vmatmul.mubr.bf16.gmra.mxu0 %v1238
  %v1589 = vpop.f32.mrf.mxu0
  %v1590 = vadd.f32 %v1328, %v1589
  %v1591 = vpop.f32.mrf.mxu0
  %v1592 = vadd.f32 %v1332, %v1591
  %v1593 = vpop.f32.mrf.mxu0
  %v1594 = vadd.f32 %v1328, %v1593
  %v1595 = vpop.f32.mrf.mxu0
  %v1596 = vadd.f32 %v1332, %v1595
  %1597 = vmatprep.mubr.bf16.mxu0 %v1241
  %1598 = vmatmul.mubr.bf16.gmra.mxu0 %v1240
  %v1599 = vpop.f32.mrf.mxu0
  %v1600 = vadd.f32 %v1328, %v1599
  %v1601 = vpop.f32.mrf.mxu0
  %v1602 = vadd.f32 %v1332, %v1601
  %v1603 = vpop.f32.mrf.mxu0
  %v1604 = vadd.f32 %v1328, %v1603
  %v1605 = vpop.f32.mrf.mxu0
  %v1606 = vadd.f32 %v1332, %v1605
  %1607 = vmatprep.mubr.bf16.mxu0 %v1243
  %1608 = vmatmul.mubr.bf16.gmra.mxu0 %v1242
  %v1609 = vpop.f32.mrf.mxu0
  %v1610 = vadd.f32 %v1328, %v1609
  %v1611 = vpop.f32.mrf.mxu0
  %v1612 = vadd.f32 %v1332, %v1611
  %v1613 = vpop.f32.mrf.mxu0
  %v1614 = vadd.f32 %v1328, %v1613
  %v1615 = vpop.f32.mrf.mxu0
  %v1616 = vadd.f32 %v1332, %v1615
  %1617 = vmatprep.mubr.bf16.mxu0 %v1245
  %1618 = vmatmul.mubr.bf16.gmra.mxu0 %v1244
  %v1619 = vpop.f32.mrf.mxu0
  %v1620 = vadd.f32 %v1328, %v1619
  %v1621 = vpop.f32.mrf.mxu0
  %v1622 = vadd.f32 %v1332, %v1621
  %v1623 = vpop.f32.mrf.mxu0
  %v1624 = vadd.f32 %v1328, %v1623
  %v1625 = vpop.f32.mrf.mxu0
  %v1626 = vadd.f32 %v1332, %v1625
  %1627 = vmatprep.mubr.bf16.mxu0 %v1247
  %1628 = vmatmul.mubr.bf16.gmra.mxu0 %v1246
  %v1629 = vpop.f32.mrf.mxu0
  %v1630 = vadd.f32 %v1328, %v1629
  %v1631 = vpop.f32.mrf.mxu0
  %v1632 = vadd.f32 %v1332, %v1631
  %v1633 = vpop.f32.mrf.mxu0
  %v1634 = vadd.f32 %v1328, %v1633
  %v1635 = vpop.f32.mrf.mxu0
  %v1636 = vadd.f32 %v1332, %v1635
  %1637 = vmatprep.mubr.bf16.mxu0 %v1249
  %1638 = vmatmul.mubr.bf16.gmra.mxu0 %v1248
  %v1639 = vpop.f32.mrf.mxu0
  %v1640 = vadd.f32 %v1328, %v1639
  %v1641 = vpop.f32.mrf.mxu0
  %v1642 = vadd.f32 %v1332, %v1641
  %v1643 = vpop.f32.mrf.mxu0
  %v1644 = vadd.f32 %v1328, %v1643
  %v1645 = vpop.f32.mrf.mxu0
  %v1646 = vadd.f32 %v1332, %v1645
  %1647 = vmatprep.mubr.bf16.mxu0 %v1251
  %1648 = vmatmul.mubr.bf16.gmra.mxu0 %v1250
  %v1649 = vpop.f32.mrf.mxu0
  %v1650 = vadd.f32 %v1328, %v1649
  %v1651 = vpop.f32.mrf.mxu0
  %v1652 = vadd.f32 %v1332, %v1651
  %v1653 = vpop.f32.mrf.mxu0
  %v1654 = vadd.f32 %v1328, %v1653
  %v1655 = vpop.f32.mrf.mxu0
  %v1656 = vadd.f32 %v1332, %v1655
  %1657 = vmatprep.mubr.bf16.mxu0 %v1253
  %1658 = vmatmul.mubr.bf16.gmra.mxu0 %v1252
  %v1659 = vpop.f32.mrf.mxu0
  %v1660 = vadd.f32 %v1328, %v1659
  %v1661 = vpop.f32.mrf.mxu0
  %v1662 = vadd.f32 %v1332, %v1661
  %v1663 = vpop.f32.mrf.mxu0
  %v1664 = vadd.f32 %v1328, %v1663
  %v1665 = vpop.f32.mrf.mxu0
  %v1666 = vadd.f32 %v1332, %v1665
  %1667 = vmatprep.mubr.bf16.mxu0 %v1255
  %1668 = vmatmul.mubr.bf16.gmra.mxu0 %v1254
  %v1669 = vpop.f32.mrf.mxu0
  %v1670 = vadd.f32 %v1328, %v1669
  %v1671 = vpop.f32.mrf.mxu0
  %v1672 = vadd.f32 %v1332, %v1671
  %v1673 = vpop.f32.mrf.mxu0
  %v1674 = vadd.f32 %v1328, %v1673
  %v1675 = vpop.f32.mrf.mxu0
  %v1676 = vadd.f32 %v1332, %v1675
  %1677 = vmatprep.mubr.bf16.mxu0 %v1257
  %1678 = vmatmul.mubr.bf16.gmra.mxu0 %v1256
  %v1679 = vpop.f32.mrf.mxu0
  %v1680 = vadd.f32 %v1328, %v1679
  %v1681 = vpop.f32.mrf.mxu0
  %v1682 = vadd.f32 %v1332, %v1681
  %v1683 = vpop.f32.mrf.mxu0
  %v1684 = vadd.f32 %v1328, %v1683
  %v1685 = vpop.f32.mrf.mxu0
  %v1686 = vadd.f32 %v1332, %v1685
  %1687 = vmatprep.mubr.bf16.mxu0 %v1259
  %1688 = vmatmul.mubr.bf16.gmra.mxu0 %v1258
  %v1689 = vpop.f32.mrf.mxu0
  %v1690 = vadd.f32 %v1328, %v1689
  %v1691 = vpop.f32.mrf.mxu0
  %v1692 = vadd.f32 %v1332, %v1691
  %v1693 = vpop.f32.mrf.mxu0
  %v1694 = vadd.f32 %v1328, %v1693
  %v1695 = vpop.f32.mrf.mxu0
  %v1696 = vadd.f32 %v1332, %v1695
  %1697 = vmatprep.mubr.bf16.mxu0 %v1261
  %1698 = vmatmul.mubr.bf16.gmra.mxu0 %v1260
  %v1699 = vpop.f32.mrf.mxu0
  %v1700 = vadd.f32 %v1328, %v1699
  %v1701 = vpop.f32.mrf.mxu0
  %v1702 = vadd.f32 %v1332, %v1701
  %v1703 = vpop.f32.mrf.mxu0
  %v1704 = vadd.f32 %v1328, %v1703
  %v1705 = vpop.f32.mrf.mxu0
  %v1706 = vadd.f32 %v1332, %v1705
  %1707 = vmatprep.mubr.bf16.mxu0 %v1263
  %1708 = vmatmul.mubr.bf16.gmra.mxu0 %v1262
  %v1709 = vpop.f32.mrf.mxu0
  %v1710 = vadd.f32 %v1328, %v1709
  %v1711 = vpop.f32.mrf.mxu0
  %v1712 = vadd.f32 %v1332, %v1711
  %v1713 = vpop.f32.mrf.mxu0
  %v1714 = vadd.f32 %v1328, %v1713
  %v1715 = vpop.f32.mrf.mxu0
  %v1716 = vadd.f32 %v1332, %v1715
  %1717 = vmatprep.mubr.bf16.mxu0 %v1265
  %1718 = vmatmul.mubr.bf16.gmra.mxu0 %v1264
  %v1719 = vpop.f32.mrf.mxu0
  %v1720 = vadd.f32 %v1328, %v1719
  %v1721 = vpop.f32.mrf.mxu0
  %v1722 = vadd.f32 %v1332, %v1721
  %v1723 = vpop.f32.mrf.mxu0
  %v1724 = vadd.f32 %v1328, %v1723
  %v1725 = vpop.f32.mrf.mxu0
  %v1726 = vadd.f32 %v1332, %v1725
  %1727 = vmatprep.mubr.bf16.mxu0 %v1267
  %1728 = vmatmul.mubr.bf16.gmra.mxu0 %v1266
  %v1729 = vpop.f32.mrf.mxu0
  %v1730 = vadd.f32 %v1328, %v1729
  %v1731 = vpop.f32.mrf.mxu0
  %v1732 = vadd.f32 %v1332, %v1731
  %v1733 = vpop.f32.mrf.mxu0
  %v1734 = vadd.f32 %v1328, %v1733
  %v1735 = vpop.f32.mrf.mxu0
  %v1736 = vadd.f32 %v1332, %v1735
  %1737 = vmatprep.mubr.bf16.mxu0 %v1269
  %1738 = vmatmul.mubr.bf16.gmra.mxu0 %v1268
  %v1739 = vpop.f32.mrf.mxu0
  %v1740 = vadd.f32 %v1328, %v1739
  %v1741 = vpop.f32.mrf.mxu0
  %v1742 = vadd.f32 %v1332, %v1741
  %v1743 = vpop.f32.mrf.mxu0
  %v1744 = vadd.f32 %v1328, %v1743
  %v1745 = vpop.f32.mrf.mxu0
  %v1746 = vadd.f32 %v1332, %v1745
  %1747 = vmatprep.mubr.bf16.mxu0 %v1271
  %1748 = vmatmul.mubr.bf16.gmra.mxu0 %v1270
  %v1749 = vpop.f32.mrf.mxu0
  %v1750 = vadd.f32 %v1328, %v1749
  %v1751 = vpop.f32.mrf.mxu0
  %v1752 = vadd.f32 %v1332, %v1751
  %v1753 = vpop.f32.mrf.mxu0
  %v1754 = vadd.f32 %v1328, %v1753
  %v1755 = vpop.f32.mrf.mxu0
  %v1756 = vadd.f32 %v1332, %v1755
  %1757 = vmatprep.mubr.bf16.mxu0 %v1273
  %1758 = vmatmul.mubr.bf16.gmra.mxu0 %v1272
  %v1759 = vpop.f32.mrf.mxu0
  %v1760 = vadd.f32 %v1328, %v1759
  %v1761 = vpop.f32.mrf.mxu0
  %v1762 = vadd.f32 %v1332, %v1761
  %v1763 = vpop.f32.mrf.mxu0
  %v1764 = vadd.f32 %v1328, %v1763
  %v1765 = vpop.f32.mrf.mxu0
  %v1766 = vadd.f32 %v1332, %v1765
  %1767 = vmatprep.mubr.bf16.mxu0 %v1275
  %1768 = vmatmul.mubr.bf16.gmra.mxu0 %v1274
  %v1769 = vpop.f32.mrf.mxu0
  %v1770 = vadd.f32 %v1328, %v1769
  %v1771 = vpop.f32.mrf.mxu0
  %v1772 = vadd.f32 %v1332, %v1771
  %v1773 = vpop.f32.mrf.mxu0
  %v1774 = vadd.f32 %v1328, %v1773
  %v1775 = vpop.f32.mrf.mxu0
  %v1776 = vadd.f32 %v1332, %v1775
  %1777 = vmatprep.mubr.bf16.mxu0 %v1277
  %1778 = vmatmul.mubr.bf16.gmra.mxu0 %v1276
  %v1779 = vpop.f32.mrf.mxu0
  %v1780 = vadd.f32 %v1328, %v1779
  %v1781 = vpop.f32.mrf.mxu0
  %v1782 = vadd.f32 %v1332, %v1781
  %v1783 = vpop.f32.mrf.mxu0
  %v1784 = vadd.f32 %v1328, %v1783
  %v1785 = vpop.f32.mrf.mxu0
  %v1786 = vadd.f32 %v1332, %v1785
  %1787 = vmatprep.mubr.bf16.mxu0 %v1279
  %1788 = vmatmul.mubr.bf16.gmra.mxu0 %v1278
  %v1789 = vpop.f32.mrf.mxu0
  %v1790 = vadd.f32 %v1328, %v1789
  %v1791 = vpop.f32.mrf.mxu0
  %v1792 = vadd.f32 %v1332, %v1791
  %v1793 = vpop.f32.mrf.mxu0
  %v1794 = vadd.f32 %v1328, %v1793
  %v1795 = vpop.f32.mrf.mxu0
  %v1796 = vadd.f32 %v1332, %v1795
  %1797 = vmatprep.mubr.bf16.mxu0 %v1281
  %1798 = vmatmul.mubr.bf16.gmra.mxu0 %v1280
  %v1799 = vpop.f32.mrf.mxu0
  %v1800 = vadd.f32 %v1328, %v1799
  %v1801 = vpop.f32.mrf.mxu0
  %v1802 = vadd.f32 %v1332, %v1801
  %v1803 = vpop.f32.mrf.mxu0
  %v1804 = vadd.f32 %v1328, %v1803
  %v1805 = vpop.f32.mrf.mxu0
  %v1806 = vadd.f32 %v1332, %v1805
  %1807 = vmatprep.mubr.bf16.mxu0 %v1283
  %1808 = vmatmul.mubr.bf16.gmra.mxu0 %v1282
  %v1809 = vpop.f32.mrf.mxu0
  %v1810 = vadd.f32 %v1328, %v1809
  %v1811 = vpop.f32.mrf.mxu0
  %v1812 = vadd.f32 %v1332, %v1811
  %v1813 = vpop.f32.mrf.mxu0
  %v1814 = vadd.f32 %v1328, %v1813
  %v1815 = vpop.f32.mrf.mxu0
  %v1816 = vadd.f32 %v1332, %v1815
  %1817 = vmatprep.mubr.bf16.mxu0 %v1285
  %1818 = vmatmul.mubr.bf16.gmra.mxu0 %v1284
  %v1819 = vpop.f32.mrf.mxu0
  %v1820 = vadd.f32 %v1328, %v1819
  %v1821 = vpop.f32.mrf.mxu0
  %v1822 = vadd.f32 %v1332, %v1821
  %v1823 = vpop.f32.mrf.mxu0
  %v1824 = vadd.f32 %v1328, %v1823
  %v1825 = vpop.f32.mrf.mxu0
  %v1826 = vadd.f32 %v1332, %v1825
  %1827 = vmatprep.mubr.bf16.mxu0 %v1287
  %1828 = vmatmul.mubr.bf16.gmra.mxu0 %v1286
  %v1829 = vpop.f32.mrf.mxu0
  %v1830 = vadd.f32 %v1328, %v1829
  %v1831 = vpop.f32.mrf.mxu0
  %v1832 = vadd.f32 %v1332, %v1831
  %v1833 = vpop.f32.mrf.mxu0
  %v1834 = vadd.f32 %v1328, %v1833
  %v1835 = vpop.f32.mrf.mxu0
  %v1836 = vadd.f32 %v1332, %v1835
  %1837 = vmatprep.mubr.bf16.mxu0 %v1289
  %1838 = vmatmul.mubr.bf16.gmra.mxu0 %v1288
  %v1839 = vpop.f32.mrf.mxu0
  %v1840 = vadd.f32 %v1328, %v1839
  %v1841 = vpop.f32.mrf.mxu0
  %v1842 = vadd.f32 %v1332, %v1841
  %v1843 = vpop.f32.mrf.mxu0
  %v1844 = vadd.f32 %v1328, %v1843
  %v1845 = vpop.f32.mrf.mxu0
  %v1846 = vadd.f32 %v1332, %v1845
  %1847 = vdwg.mxu0
  %v1848 = vmax.f32 %v1530, 0.0
  %v1849 = vmax.f32 %v1532, 0.0
  %v1850 = vmax.f32 %v1534, 0.0
  %v1851 = vmax.f32 %v1536, 0.0
  %v1852 = vmax.f32 %v1540, 0.0
  %v1853 = vmax.f32 %v1542, 0.0
  %v1854 = vmax.f32 %v1544, 0.0
  %v1855 = vmax.f32 %v1546, 0.0
  %v1856 = vmax.f32 %v1550, 0.0
  %v1857 = vmax.f32 %v1552, 0.0
  %v1858 = vmax.f32 %v1554, 0.0
  %v1859 = vmax.f32 %v1556, 0.0
  %v1860 = vmax.f32 %v1560, 0.0
  %v1861 = vmax.f32 %v1562, 0.0
  %v1862 = vmax.f32 %v1564, 0.0
  %v1863 = vmax.f32 %v1566, 0.0
  %v1864 = vmax.f32 %v1570, 0.0
  %v1865 = vmax.f32 %v1572, 0.0
  %v1866 = vmax.f32 %v1574, 0.0
  %v1867 = vmax.f32 %v1576, 0.0
  %v1868 = vmax.f32 %v1580, 0.0
  %v1869 = vmax.f32 %v1582, 0.0
  %v1870 = vmax.f32 %v1584, 0.0
  %v1871 = vmax.f32 %v1586, 0.0
  %v1872 = vmax.f32 %v1590, 0.0
  %v1873 = vmax.f32 %v1592, 0.0
  %v1874 = vmax.f32 %v1594, 0.0
  %v1875 = vmax.f32 %v1596, 0.0
  %v1876 = vmax.f32 %v1600, 0.0
  %v1877 = vmax.f32 %v1602, 0.0
  %v1878 = vmax.f32 %v1604, 0.0
  %v1879 = vmax.f32 %v1606, 0.0
  %v1880 = vmax.f32 %v1610, 0.0
  %v1881 = vmax.f32 %v1612, 0.0
  %v1882 = vmax.f32 %v1614, 0.0
  %v1883 = vmax.f32 %v1616, 0.0
  %v1884 = vmax.f32 %v1620, 0.0
  %v1885 = vmax.f32 %v1622, 0.0
  %v1886 = vmax.f32 %v1624, 0.0
  %v1887 = vmax.f32 %v1626, 0.0
  %v1888 = vmax.f32 %v1630, 0.0
  %v1889 = vmax.f32 %v1632, 0.0
  %v1890 = vmax.f32 %v1634, 0.0
  %v1891 = vmax.f32 %v1636, 0.0
  %v1892 = vmax.f32 %v1640, 0.0
  %v1893 = vmax.f32 %v1642, 0.0
  %v1894 = vmax.f32 %v1644, 0.0
  %v1895 = vmax.f32 %v1646, 0.0
  %v1896 = vmax.f32 %v1650, 0.0
  %v1897 = vmax.f32 %v1652, 0.0
  %v1898 = vmax.f32 %v1654, 0.0
  %v1899 = vmax.f32 %v1656, 0.0
  %v1900 = vmax.f32 %v1660, 0.0
  %v1901 = vmax.f32 %v1662, 0.0
  %v1902 = vmax.f32 %v1664, 0.0
  %v1903 = vmax.f32 %v1666, 0.0
  %v1904 = vmax.f32 %v1670, 0.0
  %v1905 = vmax.f32 %v1672, 0.0
  %v1906 = vmax.f32 %v1674, 0.0
  %v1907 = vmax.f32 %v1676, 0.0
  %v1908 = vmax.f32 %v1680, 0.0
  %v1909 = vmax.f32 %v1682, 0.0
  %v1910 = vmax.f32 %v1684, 0.0
  %v1911 = vmax.f32 %v1686, 0.0
  %v1912 = vmax.f32 %v1690, 0.0
  %v1913 = vmax.f32 %v1692, 0.0
  %v1914 = vmax.f32 %v1694, 0.0
  %v1915 = vmax.f32 %v1696, 0.0
  %v1916 = vmax.f32 %v1700, 0.0
  %v1917 = vmax.f32 %v1702, 0.0
  %v1918 = vmax.f32 %v1704, 0.0
  %v1919 = vmax.f32 %v1706, 0.0
  %v1920 = vmax.f32 %v1710, 0.0
  %v1921 = vmax.f32 %v1712, 0.0
  %v1922 = vmax.f32 %v1714, 0.0
  %v1923 = vmax.f32 %v1716, 0.0
  %v1924 = vmax.f32 %v1720, 0.0
  %v1925 = vmax.f32 %v1722, 0.0
  %v1926 = vmax.f32 %v1724, 0.0
  %v1927 = vmax.f32 %v1726, 0.0
  %v1928 = vmax.f32 %v1730, 0.0
  %v1929 = vmax.f32 %v1732, 0.0
  %v1930 = vmax.f32 %v1734, 0.0
  %v1931 = vmax.f32 %v1736, 0.0
  %v1932 = vmax.f32 %v1740, 0.0
  %v1933 = vmax.f32 %v1742, 0.0
  %v1934 = vmax.f32 %v1744, 0.0
  %v1935 = vmax.f32 %v1746, 0.0
  %v1936 = vmax.f32 %v1750, 0.0
  %v1937 = vmax.f32 %v1752, 0.0
  %v1938 = vmax.f32 %v1754, 0.0
  %v1939 = vmax.f32 %v1756, 0.0
  %v1940 = vmax.f32 %v1760, 0.0
  %v1941 = vmax.f32 %v1762, 0.0
  %v1942 = vmax.f32 %v1764, 0.0
  %v1943 = vmax.f32 %v1766, 0.0
  %v1944 = vmax.f32 %v1770, 0.0
  %v1945 = vmax.f32 %v1772, 0.0
  %v1946 = vmax.f32 %v1774, 0.0
  %v1947 = vmax.f32 %v1776, 0.0
  %v1948 = vmax.f32 %v1780, 0.0
  %v1949 = vmax.f32 %v1782, 0.0
  %v1950 = vmax.f32 %v1784, 0.0
  %v1951 = vmax.f32 %v1786, 0.0
  %v1952 = vmax.f32 %v1790, 0.0
  %v1953 = vmax.f32 %v1792, 0.0
  %v1954 = vmax.f32 %v1794, 0.0
  %v1955 = vmax.f32 %v1796, 0.0
  %v1956 = vmax.f32 %v1800, 0.0
  %v1957 = vmax.f32 %v1802, 0.0
  %v1958 = vmax.f32 %v1804, 0.0
  %v1959 = vmax.f32 %v1806, 0.0
  %v1960 = vmax.f32 %v1810, 0.0
  %v1961 = vmax.f32 %v1812, 0.0
  %v1962 = vmax.f32 %v1814, 0.0
  %v1963 = vmax.f32 %v1816, 0.0
  %v1964 = vmax.f32 %v1820, 0.0
  %v1965 = vmax.f32 %v1822, 0.0
  %v1966 = vmax.f32 %v1824, 0.0
  %v1967 = vmax.f32 %v1826, 0.0
  %v1968 = vmax.f32 %v1830, 0.0
  %v1969 = vmax.f32 %v1832, 0.0
  %v1970 = vmax.f32 %v1834, 0.0
  %v1971 = vmax.f32 %v1836, 0.0
  %v1972 = vmax.f32 %v1840, 0.0
  %v1973 = vmax.f32 %v1842, 0.0
  %v1974 = vmax.f32 %v1844, 0.0
  %v1975 = vmax.f32 %v1846, 0.0
  %v1976 = vpack.c.bf16 %v1850, %v1848
  %v1977 = vpack.c.bf16 %v1851, %v1849
  %v1978 = vpack.c.bf16 %v1854, %v1852
  %v1979 = vpack.c.bf16 %v1855, %v1853
  %v1980 = vpack.c.bf16 %v1858, %v1856
  %v1981 = vpack.c.bf16 %v1859, %v1857
  %v1982 = vpack.c.bf16 %v1862, %v1860
  %v1983 = vpack.c.bf16 %v1863, %v1861
  %v1984 = vpack.c.bf16 %v1866, %v1864
  %v1985 = vpack.c.bf16 %v1867, %v1865
  %v1986 = vpack.c.bf16 %v1870, %v1868
  %v1987 = vpack.c.bf16 %v1871, %v1869
  %v1988 = vpack.c.bf16 %v1874, %v1872
  %v1989 = vpack.c.bf16 %v1875, %v1873
  %v1990 = vpack.c.bf16 %v1878, %v1876
  %v1991 = vpack.c.bf16 %v1879, %v1877
  %v1992 = vpack.c.bf16 %v1882, %v1880
  %v1993 = vpack.c.bf16 %v1883, %v1881
  %v1994 = vpack.c.bf16 %v1886, %v1884
  %v1995 = vpack.c.bf16 %v1887, %v1885
  %v1996 = vpack.c.bf16 %v1890, %v1888
  %v1997 = vpack.c.bf16 %v1891, %v1889
  %v1998 = vpack.c.bf16 %v1894, %v1892
  %v1999 = vpack.c.bf16 %v1895, %v1893
  %v2000 = vpack.c.bf16 %v1898, %v1896
  %v2001 = vpack.c.bf16 %v1899, %v1897
  %v2002 = vpack.c.bf16 %v1902, %v1900
  %v2003 = vpack.c.bf16 %v1903, %v1901
  %v2004 = vpack.c.bf16 %v1906, %v1904
  %v2005 = vpack.c.bf16 %v1907, %v1905
  %v2006 = vpack.c.bf16 %v1910, %v1908
  %v2007 = vpack.c.bf16 %v1911, %v1909
  %v2008 = vpack.c.bf16 %v1914, %v1912
  %v2009 = vpack.c.bf16 %v1915, %v1913
  %v2010 = vpack.c.bf16 %v1918, %v1916
  %v2011 = vpack.c.bf16 %v1919, %v1917
  %v2012 = vpack.c.bf16 %v1922, %v1920
  %v2013 = vpack.c.bf16 %v1923, %v1921
  %v2014 = vpack.c.bf16 %v1926, %v1924
  %v2015 = vpack.c.bf16 %v1927, %v1925
  %v2016 = vpack.c.bf16 %v1930, %v1928
  %v2017 = vpack.c.bf16 %v1931, %v1929
  %v2018 = vpack.c.bf16 %v1934, %v1932
  %v2019 = vpack.c.bf16 %v1935, %v1933
  %v2020 = vpack.c.bf16 %v1938, %v1936
  %v2021 = vpack.c.bf16 %v1939, %v1937
  %v2022 = vpack.c.bf16 %v1942, %v1940
  %v2023 = vpack.c.bf16 %v1943, %v1941
  %v2024 = vpack.c.bf16 %v1946, %v1944
  %v2025 = vpack.c.bf16 %v1947, %v1945
  %v2026 = vpack.c.bf16 %v1950, %v1948
  %v2027 = vpack.c.bf16 %v1951, %v1949
  %v2028 = vpack.c.bf16 %v1954, %v1952
  %v2029 = vpack.c.bf16 %v1955, %v1953
  %v2030 = vpack.c.bf16 %v1958, %v1956
  %v2031 = vpack.c.bf16 %v1959, %v1957
  %v2032 = vpack.c.bf16 %v1962, %v1960
  %v2033 = vpack.c.bf16 %v1963, %v1961
  %v2034 = vpack.c.bf16 %v1966, %v1964
  %v2035 = vpack.c.bf16 %v1967, %v1965
  %v2036 = vpack.c.bf16 %v1970, %v1968
  %v2037 = vpack.c.bf16 %v1971, %v1969
  %v2038 = vpack.c.bf16 %v1974, %v1972
  %v2039 = vpack.c.bf16 %v1975, %v1973
  %s2040 = scalar_lea.vmem %s2, 256
  %v2041 = vld [vmem:[%s2040] sm:$0xff]
  %v2042 = vld [vmem:[%s2040 + $0x8] sm:$0xff]
  %v2043 = vld [vmem:[%s2040 + $0x10] sm:$0xff]
  %v2044 = vld [vmem:[%s2040 + $0x18] sm:$0xff]
  %v2045 = vld [vmem:[%s2040 + $0x20] sm:$0xff]
  %v2046 = vld [vmem:[%s2040 + $0x28] sm:$0xff]
  %v2047 = vld [vmem:[%s2040 + $0x30] sm:$0xff]
  %v2048 = vld [vmem:[%s2040 + $0x38] sm:$0xff]
  %v2049 = vld [vmem:[%s2040 + $0x40] sm:$0xff]
  %v2050 = vld [vmem:[%s2040 + $0x48] sm:$0xff]
  %v2051 = vld [vmem:[%s2040 + $0x50] sm:$0xff]
  %v2052 = vld [vmem:[%s2040 + $0x58] sm:$0xff]
  %v2053 = vld [vmem:[%s2040 + $0x60] sm:$0xff]
  %v2054 = vld [vmem:[%s2040 + $0x68] sm:$0xff]
  %v2055 = vld [vmem:[%s2040 + $0x70] sm:$0xff]
  %v2056 = vld [vmem:[%s2040 + $0x78] sm:$0xff]
  %v2057 = vld [vmem:[%s2040 + $0x80] sm:$0xff]
  %v2058 = vld [vmem:[%s2040 + $0x88] sm:$0xff]
  %v2059 = vld [vmem:[%s2040 + $0x90] sm:$0xff]
  %v2060 = vld [vmem:[%s2040 + $0x98] sm:$0xff]
  %v2061 = vld [vmem:[%s2040 + $0xa0] sm:$0xff]
  %v2062 = vld [vmem:[%s2040 + $0xa8] sm:$0xff]
  %v2063 = vld [vmem:[%s2040 + $0xb0] sm:$0xff]
  %v2064 = vld [vmem:[%s2040 + $0xb8] sm:$0xff]
  %v2065 = vld [vmem:[%s2040 + $0xc0] sm:$0xff]
  %v2066 = vld [vmem:[%s2040 + $0xc8] sm:$0xff]
  %v2067 = vld [vmem:[%s2040 + $0xd0] sm:$0xff]
  %v2068 = vld [vmem:[%s2040 + $0xd8] sm:$0xff]
  %v2069 = vld [vmem:[%s2040 + $0xe0] sm:$0xff]
  %v2070 = vld [vmem:[%s2040 + $0xe8] sm:$0xff]
  %v2071 = vld [vmem:[%s2040 + $0xf0] sm:$0xff]
  %v2072 = vld [vmem:[%s2040 + $0xf8] sm:$0xff]
  %s2073 = scalar_lea.vmem %s3, 2
  %v2074 = vld [vmem:[%s2073] ss:$8 sm:$0x3]
  %v2076 = vlaneseq
  %v2077 = vshrl.u32 %v2076, 7
  %v2078 = vsub.s32 0, %v2077
  %v2079 = vrot.slane %v2074, %v2078
  %v2080 = vlaneseq
  %v2081 = vshrl.u32 %v2080, 7
  %v2082 = vsub.s32 1, %v2081
  %v2083 = vrot.slane %v2074, %v2082
  %v2118 = vunpack.c.l.b16 %v2041
  %v2119 = vunpack.c.h.b16 %v2041
  %v2120 = vunpack.c.l.b16 %v2042
  %v2121 = vunpack.c.h.b16 %v2042
  %v2122 = vunpack.c.l.b16 %v2043
  %v2123 = vunpack.c.h.b16 %v2043
  %v2124 = vunpack.c.l.b16 %v2044
  %v2125 = vunpack.c.h.b16 %v2044
  %v2126 = vunpack.c.l.b16 %v2045
  %v2127 = vunpack.c.h.b16 %v2045
  %v2128 = vunpack.c.l.b16 %v2046
  %v2129 = vunpack.c.h.b16 %v2046
  %v2130 = vunpack.c.l.b16 %v2047
  %v2131 = vunpack.c.h.b16 %v2047
  %v2132 = vunpack.c.l.b16 %v2048
  %v2133 = vunpack.c.h.b16 %v2048
  %v2134 = vunpack.c.l.b16 %v2049
  %v2135 = vunpack.c.h.b16 %v2049
  %v2136 = vunpack.c.l.b16 %v2050
  %v2137 = vunpack.c.h.b16 %v2050
  %v2138 = vunpack.c.l.b16 %v2051
  %v2139 = vunpack.c.h.b16 %v2051
  %v2140 = vunpack.c.l.b16 %v2052
  %v2141 = vunpack.c.h.b16 %v2052
  %v2142 = vunpack.c.l.b16 %v2053
  %v2143 = vunpack.c.h.b16 %v2053
  %v2144 = vunpack.c.l.b16 %v2054
  %v2145 = vunpack.c.h.b16 %v2054
  %v2146 = vunpack.c.l.b16 %v2055
  %v2147 = vunpack.c.h.b16 %v2055
  %v2148 = vunpack.c.l.b16 %v2056
  %v2149 = vunpack.c.h.b16 %v2056
  %v2150 = vunpack.c.l.b16 %v2057
  %v2151 = vunpack.c.h.b16 %v2057
  %v2152 = vunpack.c.l.b16 %v2058
  %v2153 = vunpack.c.h.b16 %v2058
  %v2154 = vunpack.c.l.b16 %v2059
  %v2155 = vunpack.c.h.b16 %v2059
  %v2156 = vunpack.c.l.b16 %v2060
  %v2157 = vunpack.c.h.b16 %v2060
  %v2158 = vunpack.c.l.b16 %v2061
  %v2159 = vunpack.c.h.b16 %v2061
  %v2160 = vunpack.c.l.b16 %v2062
  %v2161 = vunpack.c.h.b16 %v2062
  %v2162 = vunpack.c.l.b16 %v2063
  %v2163 = vunpack.c.h.b16 %v2063
  %v2164 = vunpack.c.l.b16 %v2064
  %v2165 = vunpack.c.h.b16 %v2064
  %v2166 = vunpack.c.l.b16 %v2065
  %v2167 = vunpack.c.h.b16 %v2065
  %v2168 = vunpack.c.l.b16 %v2066
  %v2169 = vunpack.c.h.b16 %v2066
  %v2170 = vunpack.c.l.b16 %v2067
  %v2171 = vunpack.c.h.b16 %v2067
  %v2172 = vunpack.c.l.b16 %v2068
  %v2173 = vunpack.c.h.b16 %v2068
  %v2174 = vunpack.c.l.b16 %v2069
  %v2175 = vunpack.c.h.b16 %v2069
  %v2176 = vunpack.c.l.b16 %v2070
  %v2177 = vunpack.c.h.b16 %v2070
  %v2178 = vunpack.c.l.b16 %v2071
  %v2179 = vunpack.c.h.b16 %v2071
  %v2180 = vunpack.c.l.b16 %v2072
  %v2181 = vunpack.c.h.b16 %v2072
  %v2182 = vpack.c.b16 %v2120, %v2118
  %v2183 = vpack.c.b16 %v2121, %v2119
  %v2184 = vpack.c.b16 %v2124, %v2122
  %v2185 = vpack.c.b16 %v2125, %v2123
  %v2186 = vpack.c.b16 %v2128, %v2126
  %v2187 = vpack.c.b16 %v2129, %v2127
  %v2188 = vpack.c.b16 %v2132, %v2130
  %v2189 = vpack.c.b16 %v2133, %v2131
  %v2190 = vpack.c.b16 %v2136, %v2134
  %v2191 = vpack.c.b16 %v2137, %v2135
  %v2192 = vpack.c.b16 %v2140, %v2138
  %v2193 = vpack.c.b16 %v2141, %v2139
  %v2194 = vpack.c.b16 %v2144, %v2142
  %v2195 = vpack.c.b16 %v2145, %v2143
  %v2196 = vpack.c.b16 %v2148, %v2146
  %v2197 = vpack.c.b16 %v2149, %v2147
  %v2198 = vpack.c.b16 %v2152, %v2150
  %v2199 = vpack.c.b16 %v2153, %v2151
  %v2200 = vpack.c.b16 %v2156, %v2154
  %v2201 = vpack.c.b16 %v2157, %v2155
  %v2202 = vpack.c.b16 %v2160, %v2158
  %v2203 = vpack.c.b16 %v2161, %v2159
  %v2204 = vpack.c.b16 %v2164, %v2162
  %v2205 = vpack.c.b16 %v2165, %v2163
  %v2206 = vpack.c.b16 %v2168, %v2166
  %v2207 = vpack.c.b16 %v2169, %v2167
  %v2208 = vpack.c.b16 %v2172, %v2170
  %v2209 = vpack.c.b16 %v2173, %v2171
  %v2210 = vpack.c.b16 %v2176, %v2174
  %v2211 = vpack.c.b16 %v2177, %v2175
  %v2212 = vpack.c.b16 %v2180, %v2178
  %v2213 = vpack.c.b16 %v2181, %v2179
  %2246 = vmatprep.subr.bf16.mxu0 %v2197
  %2247 = vmatpush1.bf16.msra.mxu0 %v2196
  %2248 = vmatprep.subr.bf16.mxu0 %v2195
  %2249 = vmatpush1.bf16.msra.mxu0 %v2194
  %2250 = vmatprep.subr.bf16.mxu0 %v2193
  %2251 = vmatpush1.bf16.msra.mxu0 %v2192
  %2252 = vmatprep.subr.bf16.mxu0 %v2191
  %2253 = vmatpush1.bf16.msra.mxu0 %v2190
  %2254 = vmatprep.subr.bf16.mxu0 %v2189
  %2255 = vmatpush1.bf16.msra.mxu0 %v2188
  %2256 = vmatprep.subr.bf16.mxu0 %v2187
  %2257 = vmatpush1.bf16.msra.mxu0 %v2186
  %2258 = vmatprep.subr.bf16.mxu0 %v2185
  %2259 = vmatpush1.bf16.msra.mxu0 %v2184
  %2260 = vmatprep.subr.bf16.mxu0 %v2183
  %2261 = vmatpush1.bf16.msra.mxu0 %v2182
  %2262 = vmatprep.subr.bf16.mxu0 %v2213
  %2263 = vmatpush2.bf16.msra.mxu0 %v2212
  %2264 = vmatprep.subr.bf16.mxu0 %v2211
  %2265 = vmatpush2.bf16.msra.mxu0 %v2210
  %2266 = vmatprep.subr.bf16.mxu0 %v2209
  %2267 = vmatpush2.bf16.msra.mxu0 %v2208
  %2268 = vmatprep.subr.bf16.mxu0 %v2207
  %2269 = vmatpush2.bf16.msra.mxu0 %v2206
  %2270 = vmatprep.subr.bf16.mxu0 %v2205
  %2271 = vmatpush2.bf16.msra.mxu0 %v2204
  %2272 = vmatprep.subr.bf16.mxu0 %v2203
  %2273 = vmatpush2.bf16.msra.mxu0 %v2202
  %2274 = vmatprep.subr.bf16.mxu0 %v2201
  %2275 = vmatpush2.bf16.msra.mxu0 %v2200
  %2276 = vmatprep.subr.bf16.mxu0 %v2199
  %2277 = vmatpush2.bf16.msra.mxu0 %v2198
  %2278 = vmatprep.mubr.bf16.mxu0 %v1977
  %2279 = vmatmul.mubr.bf16.gmra.mxu0 %v1976
  %v2280 = vpop.f32.mrf.mxu0
  %v2281 = vadd.f32 %v2079, %v2280
  %v2282 = vpop.f32.mrf.mxu0
  %v2283 = vadd.f32 %v2083, %v2282
  %v2284 = vpop.f32.mrf.mxu0
  %v2285 = vadd.f32 %v2079, %v2284
  %v2286 = vpop.f32.mrf.mxu0
  %v2287 = vadd.f32 %v2083, %v2286
  %2288 = vmatprep.mubr.bf16.mxu0 %v1979
  %2289 = vmatmul.mubr.bf16.gmra.mxu0 %v1978
  %v2290 = vpop.f32.mrf.mxu0
  %v2291 = vadd.f32 %v2079, %v2290
  %v2292 = vpop.f32.mrf.mxu0
  %v2293 = vadd.f32 %v2083, %v2292
  %v2294 = vpop.f32.mrf.mxu0
  %v2295 = vadd.f32 %v2079, %v2294
  %v2296 = vpop.f32.mrf.mxu0
  %v2297 = vadd.f32 %v2083, %v2296
  %2298 = vmatprep.mubr.bf16.mxu0 %v1981
  %2299 = vmatmul.mubr.bf16.gmra.mxu0 %v1980
  %v2300 = vpop.f32.mrf.mxu0
  %v2301 = vadd.f32 %v2079, %v2300
  %v2302 = vpop.f32.mrf.mxu0
  %v2303 = vadd.f32 %v2083, %v2302
  %v2304 = vpop.f32.mrf.mxu0
  %v2305 = vadd.f32 %v2079, %v2304
  %v2306 = vpop.f32.mrf.mxu0
  %v2307 = vadd.f32 %v2083, %v2306
  %2308 = vmatprep.mubr.bf16.mxu0 %v1983
  %2309 = vmatmul.mubr.bf16.gmra.mxu0 %v1982
  %v2310 = vpop.f32.mrf.mxu0
  %v2311 = vadd.f32 %v2079, %v2310
  %v2312 = vpop.f32.mrf.mxu0
  %v2313 = vadd.f32 %v2083, %v2312
  %v2314 = vpop.f32.mrf.mxu0
  %v2315 = vadd.f32 %v2079, %v2314
  %v2316 = vpop.f32.mrf.mxu0
  %v2317 = vadd.f32 %v2083, %v2316
  %2318 = vmatprep.mubr.bf16.mxu0 %v1985
  %2319 = vmatmul.mubr.bf16.gmra.mxu0 %v1984
  %v2320 = vpop.f32.mrf.mxu0
  %v2321 = vadd.f32 %v2079, %v2320
  %v2322 = vpop.f32.mrf.mxu0
  %v2323 = vadd.f32 %v2083, %v2322
  %v2324 = vpop.f32.mrf.mxu0
  %v2325 = vadd.f32 %v2079, %v2324
  %v2326 = vpop.f32.mrf.mxu0
  %v2327 = vadd.f32 %v2083, %v2326
  %2328 = vmatprep.mubr.bf16.mxu0 %v1987
  %2329 = vmatmul.mubr.bf16.gmra.mxu0 %v1986
  %v2330 = vpop.f32.mrf.mxu0
  %v2331 = vadd.f32 %v2079, %v2330
  %v2332 = vpop.f32.mrf.mxu0
  %v2333 = vadd.f32 %v2083, %v2332
  %v2334 = vpop.f32.mrf.mxu0
  %v2335 = vadd.f32 %v2079, %v2334
  %v2336 = vpop.f32.mrf.mxu0
  %v2337 = vadd.f32 %v2083, %v2336
  %2338 = vmatprep.mubr.bf16.mxu0 %v1989
  %2339 = vmatmul.mubr.bf16.gmra.mxu0 %v1988
  %v2340 = vpop.f32.mrf.mxu0
  %v2341 = vadd.f32 %v2079, %v2340
  %v2342 = vpop.f32.mrf.mxu0
  %v2343 = vadd.f32 %v2083, %v2342
  %v2344 = vpop.f32.mrf.mxu0
  %v2345 = vadd.f32 %v2079, %v2344
  %v2346 = vpop.f32.mrf.mxu0
  %v2347 = vadd.f32 %v2083, %v2346
  %2348 = vmatprep.mubr.bf16.mxu0 %v1991
  %2349 = vmatmul.mubr.bf16.gmra.mxu0 %v1990
  %v2350 = vpop.f32.mrf.mxu0
  %v2351 = vadd.f32 %v2079, %v2350
  %v2352 = vpop.f32.mrf.mxu0
  %v2353 = vadd.f32 %v2083, %v2352
  %v2354 = vpop.f32.mrf.mxu0
  %v2355 = vadd.f32 %v2079, %v2354
  %v2356 = vpop.f32.mrf.mxu0
  %v2357 = vadd.f32 %v2083, %v2356
  %2358 = vmatprep.mubr.bf16.mxu0 %v1993
  %2359 = vmatmul.mubr.bf16.gmra.mxu0 %v1992
  %v2360 = vpop.f32.mrf.mxu0
  %v2361 = vadd.f32 %v2079, %v2360
  %v2362 = vpop.f32.mrf.mxu0
  %v2363 = vadd.f32 %v2083, %v2362
  %v2364 = vpop.f32.mrf.mxu0
  %v2365 = vadd.f32 %v2079, %v2364
  %v2366 = vpop.f32.mrf.mxu0
  %v2367 = vadd.f32 %v2083, %v2366
  %2368 = vmatprep.mubr.bf16.mxu0 %v1995
  %2369 = vmatmul.mubr.bf16.gmra.mxu0 %v1994
  %v2370 = vpop.f32.mrf.mxu0
  %v2371 = vadd.f32 %v2079, %v2370
  %v2372 = vpop.f32.mrf.mxu0
  %v2373 = vadd.f32 %v2083, %v2372
  %v2374 = vpop.f32.mrf.mxu0
  %v2375 = vadd.f32 %v2079, %v2374
  %v2376 = vpop.f32.mrf.mxu0
  %v2377 = vadd.f32 %v2083, %v2376
  %2378 = vmatprep.mubr.bf16.mxu0 %v1997
  %2379 = vmatmul.mubr.bf16.gmra.mxu0 %v1996
  %v2380 = vpop.f32.mrf.mxu0
  %v2381 = vadd.f32 %v2079, %v2380
  %v2382 = vpop.f32.mrf.mxu0
  %v2383 = vadd.f32 %v2083, %v2382
  %v2384 = vpop.f32.mrf.mxu0
  %v2385 = vadd.f32 %v2079, %v2384
  %v2386 = vpop.f32.mrf.mxu0
  %v2387 = vadd.f32 %v2083, %v2386
  %2388 = vmatprep.mubr.bf16.mxu0 %v1999
  %2389 = vmatmul.mubr.bf16.gmra.mxu0 %v1998
  %v2390 = vpop.f32.mrf.mxu0
  %v2391 = vadd.f32 %v2079, %v2390
  %v2392 = vpop.f32.mrf.mxu0
  %v2393 = vadd.f32 %v2083, %v2392
  %v2394 = vpop.f32.mrf.mxu0
  %v2395 = vadd.f32 %v2079, %v2394
  %v2396 = vpop.f32.mrf.mxu0
  %v2397 = vadd.f32 %v2083, %v2396
  %2398 = vmatprep.mubr.bf16.mxu0 %v2001
  %2399 = vmatmul.mubr.bf16.gmra.mxu0 %v2000
  %v2400 = vpop.f32.mrf.mxu0
  %v2401 = vadd.f32 %v2079, %v2400
  %v2402 = vpop.f32.mrf.mxu0
  %v2403 = vadd.f32 %v2083, %v2402
  %v2404 = vpop.f32.mrf.mxu0
  %v2405 = vadd.f32 %v2079, %v2404
  %v2406 = vpop.f32.mrf.mxu0
  %v2407 = vadd.f32 %v2083, %v2406
  %2408 = vmatprep.mubr.bf16.mxu0 %v2003
  %2409 = vmatmul.mubr.bf16.gmra.mxu0 %v2002
  %v2410 = vpop.f32.mrf.mxu0
  %v2411 = vadd.f32 %v2079, %v2410
  %v2412 = vpop.f32.mrf.mxu0
  %v2413 = vadd.f32 %v2083, %v2412
  %v2414 = vpop.f32.mrf.mxu0
  %v2415 = vadd.f32 %v2079, %v2414
  %v2416 = vpop.f32.mrf.mxu0
  %v2417 = vadd.f32 %v2083, %v2416
  %2418 = vmatprep.mubr.bf16.mxu0 %v2005
  %2419 = vmatmul.mubr.bf16.gmra.mxu0 %v2004
  %v2420 = vpop.f32.mrf.mxu0
  %v2421 = vadd.f32 %v2079, %v2420
  %v2422 = vpop.f32.mrf.mxu0
  %v2423 = vadd.f32 %v2083, %v2422
  %v2424 = vpop.f32.mrf.mxu0
  %v2425 = vadd.f32 %v2079, %v2424
  %v2426 = vpop.f32.mrf.mxu0
  %v2427 = vadd.f32 %v2083, %v2426
  %2428 = vmatprep.mubr.bf16.mxu0 %v2007
  %2429 = vmatmul.mubr.bf16.gmra.mxu0 %v2006
  %v2430 = vpop.f32.mrf.mxu0
  %v2431 = vadd.f32 %v2079, %v2430
  %v2432 = vpop.f32.mrf.mxu0
  %v2433 = vadd.f32 %v2083, %v2432
  %v2434 = vpop.f32.mrf.mxu0
  %v2435 = vadd.f32 %v2079, %v2434
  %v2436 = vpop.f32.mrf.mxu0
  %v2437 = vadd.f32 %v2083, %v2436
  %2438 = vmatprep.mubr.bf16.mxu0 %v2009
  %2439 = vmatmul.mubr.bf16.gmra.mxu0 %v2008
  %v2440 = vpop.f32.mrf.mxu0
  %v2441 = vadd.f32 %v2079, %v2440
  %v2442 = vpop.f32.mrf.mxu0
  %v2443 = vadd.f32 %v2083, %v2442
  %v2444 = vpop.f32.mrf.mxu0
  %v2445 = vadd.f32 %v2079, %v2444
  %v2446 = vpop.f32.mrf.mxu0
  %v2447 = vadd.f32 %v2083, %v2446
  %2448 = vmatprep.mubr.bf16.mxu0 %v2011
  %2449 = vmatmul.mubr.bf16.gmra.mxu0 %v2010
  %v2450 = vpop.f32.mrf.mxu0
  %v2451 = vadd.f32 %v2079, %v2450
  %v2452 = vpop.f32.mrf.mxu0
  %v2453 = vadd.f32 %v2083, %v2452
  %v2454 = vpop.f32.mrf.mxu0
  %v2455 = vadd.f32 %v2079, %v2454
  %v2456 = vpop.f32.mrf.mxu0
  %v2457 = vadd.f32 %v2083, %v2456
  %2458 = vmatprep.mubr.bf16.mxu0 %v2013
  %2459 = vmatmul.mubr.bf16.gmra.mxu0 %v2012
  %v2460 = vpop.f32.mrf.mxu0
  %v2461 = vadd.f32 %v2079, %v2460
  %v2462 = vpop.f32.mrf.mxu0
  %v2463 = vadd.f32 %v2083, %v2462
  %v2464 = vpop.f32.mrf.mxu0
  %v2465 = vadd.f32 %v2079, %v2464
  %v2466 = vpop.f32.mrf.mxu0
  %v2467 = vadd.f32 %v2083, %v2466
  %2468 = vmatprep.mubr.bf16.mxu0 %v2015
  %2469 = vmatmul.mubr.bf16.gmra.mxu0 %v2014
  %v2470 = vpop.f32.mrf.mxu0
  %v2471 = vadd.f32 %v2079, %v2470
  %v2472 = vpop.f32.mrf.mxu0
  %v2473 = vadd.f32 %v2083, %v2472
  %v2474 = vpop.f32.mrf.mxu0
  %v2475 = vadd.f32 %v2079, %v2474
  %v2476 = vpop.f32.mrf.mxu0
  %v2477 = vadd.f32 %v2083, %v2476
  %2478 = vmatprep.mubr.bf16.mxu0 %v2017
  %2479 = vmatmul.mubr.bf16.gmra.mxu0 %v2016
  %v2480 = vpop.f32.mrf.mxu0
  %v2481 = vadd.f32 %v2079, %v2480
  %v2482 = vpop.f32.mrf.mxu0
  %v2483 = vadd.f32 %v2083, %v2482
  %v2484 = vpop.f32.mrf.mxu0
  %v2485 = vadd.f32 %v2079, %v2484
  %v2486 = vpop.f32.mrf.mxu0
  %v2487 = vadd.f32 %v2083, %v2486
  %2488 = vmatprep.mubr.bf16.mxu0 %v2019
  %2489 = vmatmul.mubr.bf16.gmra.mxu0 %v2018
  %v2490 = vpop.f32.mrf.mxu0
  %v2491 = vadd.f32 %v2079, %v2490
  %v2492 = vpop.f32.mrf.mxu0
  %v2493 = vadd.f32 %v2083, %v2492
  %v2494 = vpop.f32.mrf.mxu0
  %v2495 = vadd.f32 %v2079, %v2494
  %v2496 = vpop.f32.mrf.mxu0
  %v2497 = vadd.f32 %v2083, %v2496
  %2498 = vmatprep.mubr.bf16.mxu0 %v2021
  %2499 = vmatmul.mubr.bf16.gmra.mxu0 %v2020
  %v2500 = vpop.f32.mrf.mxu0
  %v2501 = vadd.f32 %v2079, %v2500
  %v2502 = vpop.f32.mrf.mxu0
  %v2503 = vadd.f32 %v2083, %v2502
  %v2504 = vpop.f32.mrf.mxu0
  %v2505 = vadd.f32 %v2079, %v2504
  %v2506 = vpop.f32.mrf.mxu0
  %v2507 = vadd.f32 %v2083, %v2506
  %2508 = vmatprep.mubr.bf16.mxu0 %v2023
  %2509 = vmatmul.mubr.bf16.gmra.mxu0 %v2022
  %v2510 = vpop.f32.mrf.mxu0
  %v2511 = vadd.f32 %v2079, %v2510
  %v2512 = vpop.f32.mrf.mxu0
  %v2513 = vadd.f32 %v2083, %v2512
  %v2514 = vpop.f32.mrf.mxu0
  %v2515 = vadd.f32 %v2079, %v2514
  %v2516 = vpop.f32.mrf.mxu0
  %v2517 = vadd.f32 %v2083, %v2516
  %2518 = vmatprep.mubr.bf16.mxu0 %v2025
  %2519 = vmatmul.mubr.bf16.gmra.mxu0 %v2024
  %v2520 = vpop.f32.mrf.mxu0
  %v2521 = vadd.f32 %v2079, %v2520
  %v2522 = vpop.f32.mrf.mxu0
  %v2523 = vadd.f32 %v2083, %v2522
  %v2524 = vpop.f32.mrf.mxu0
  %v2525 = vadd.f32 %v2079, %v2524
  %v2526 = vpop.f32.mrf.mxu0
  %v2527 = vadd.f32 %v2083, %v2526
  %2528 = vmatprep.mubr.bf16.mxu0 %v2027
  %2529 = vmatmul.mubr.bf16.gmra.mxu0 %v2026
  %v2530 = vpop.f32.mrf.mxu0
  %v2531 = vadd.f32 %v2079, %v2530
  %v2532 = vpop.f32.mrf.mxu0
  %v2533 = vadd.f32 %v2083, %v2532
  %v2534 = vpop.f32.mrf.mxu0
  %v2535 = vadd.f32 %v2079, %v2534
  %v2536 = vpop.f32.mrf.mxu0
  %v2537 = vadd.f32 %v2083, %v2536
  %2538 = vmatprep.mubr.bf16.mxu0 %v2029
  %2539 = vmatmul.mubr.bf16.gmra.mxu0 %v2028
  %v2540 = vpop.f32.mrf.mxu0
  %v2541 = vadd.f32 %v2079, %v2540
  %v2542 = vpop.f32.mrf.mxu0
  %v2543 = vadd.f32 %v2083, %v2542
  %v2544 = vpop.f32.mrf.mxu0
  %v2545 = vadd.f32 %v2079, %v2544
  %v2546 = vpop.f32.mrf.mxu0
  %v2547 = vadd.f32 %v2083, %v2546
  %2548 = vmatprep.mubr.bf16.mxu0 %v2031
  %2549 = vmatmul.mubr.bf16.gmra.mxu0 %v2030
  %v2550 = vpop.f32.mrf.mxu0
  %v2551 = vadd.f32 %v2079, %v2550
  %v2552 = vpop.f32.mrf.mxu0
  %v2553 = vadd.f32 %v2083, %v2552
  %v2554 = vpop.f32.mrf.mxu0
  %v2555 = vadd.f32 %v2079, %v2554
  %v2556 = vpop.f32.mrf.mxu0
  %v2557 = vadd.f32 %v2083, %v2556
  %2558 = vmatprep.mubr.bf16.mxu0 %v2033
  %2559 = vmatmul.mubr.bf16.gmra.mxu0 %v2032
  %v2560 = vpop.f32.mrf.mxu0
  %v2561 = vadd.f32 %v2079, %v2560
  %v2562 = vpop.f32.mrf.mxu0
  %v2563 = vadd.f32 %v2083, %v2562
  %v2564 = vpop.f32.mrf.mxu0
  %v2565 = vadd.f32 %v2079, %v2564
  %v2566 = vpop.f32.mrf.mxu0
  %v2567 = vadd.f32 %v2083, %v2566
  %2568 = vmatprep.mubr.bf16.mxu0 %v2035
  %2569 = vmatmul.mubr.bf16.gmra.mxu0 %v2034
  %v2570 = vpop.f32.mrf.mxu0
  %v2571 = vadd.f32 %v2079, %v2570
  %v2572 = vpop.f32.mrf.mxu0
  %v2573 = vadd.f32 %v2083, %v2572
  %v2574 = vpop.f32.mrf.mxu0
  %v2575 = vadd.f32 %v2079, %v2574
  %v2576 = vpop.f32.mrf.mxu0
  %v2577 = vadd.f32 %v2083, %v2576
  %2578 = vmatprep.mubr.bf16.mxu0 %v2037
  %2579 = vmatmul.mubr.bf16.gmra.mxu0 %v2036
  %v2580 = vpop.f32.mrf.mxu0
  %v2581 = vadd.f32 %v2079, %v2580
  %v2582 = vpop.f32.mrf.mxu0
  %v2583 = vadd.f32 %v2083, %v2582
  %v2584 = vpop.f32.mrf.mxu0
  %v2585 = vadd.f32 %v2079, %v2584
  %v2586 = vpop.f32.mrf.mxu0
  %v2587 = vadd.f32 %v2083, %v2586
  %2588 = vmatprep.mubr.bf16.mxu0 %v2039
  %2589 = vmatmul.mubr.bf16.gmra.mxu0 %v2038
  %v2590 = vpop.f32.mrf.mxu0
  %v2591 = vadd.f32 %v2079, %v2590
  %v2592 = vpop.f32.mrf.mxu0
  %v2593 = vadd.f32 %v2083, %v2592
  %v2594 = vpop.f32.mrf.mxu0
  %v2595 = vadd.f32 %v2079, %v2594
  %v2596 = vpop.f32.mrf.mxu0
  %v2597 = vadd.f32 %v2083, %v2596
  %2598 = vdwg.mxu0
  %v2599 = vmax.f32 %v2281, 0.0
  %v2600 = vmax.f32 %v2283, 0.0
  %v2601 = vmax.f32 %v2285, 0.0
  %v2602 = vmax.f32 %v2287, 0.0
  %v2603 = vmax.f32 %v2291, 0.0
  %v2604 = vmax.f32 %v2293, 0.0
  %v2605 = vmax.f32 %v2295, 0.0
  %v2606 = vmax.f32 %v2297, 0.0
  %v2607 = vmax.f32 %v2301, 0.0
  %v2608 = vmax.f32 %v2303, 0.0
  %v2609 = vmax.f32 %v2305, 0.0
  %v2610 = vmax.f32 %v2307, 0.0
  %v2611 = vmax.f32 %v2311, 0.0
  %v2612 = vmax.f32 %v2313, 0.0
  %v2613 = vmax.f32 %v2315, 0.0
  %v2614 = vmax.f32 %v2317, 0.0
  %v2615 = vmax.f32 %v2321, 0.0
  %v2616 = vmax.f32 %v2323, 0.0
  %v2617 = vmax.f32 %v2325, 0.0
  %v2618 = vmax.f32 %v2327, 0.0
  %v2619 = vmax.f32 %v2331, 0.0
  %v2620 = vmax.f32 %v2333, 0.0
  %v2621 = vmax.f32 %v2335, 0.0
  %v2622 = vmax.f32 %v2337, 0.0
  %v2623 = vmax.f32 %v2341, 0.0
  %v2624 = vmax.f32 %v2343, 0.0
  %v2625 = vmax.f32 %v2345, 0.0
  %v2626 = vmax.f32 %v2347, 0.0
  %v2627 = vmax.f32 %v2351, 0.0
  %v2628 = vmax.f32 %v2353, 0.0
  %v2629 = vmax.f32 %v2355, 0.0
  %v2630 = vmax.f32 %v2357, 0.0
  %v2631 = vmax.f32 %v2361, 0.0
  %v2632 = vmax.f32 %v2363, 0.0
  %v2633 = vmax.f32 %v2365, 0.0
  %v2634 = vmax.f32 %v2367, 0.0
  %v2635 = vmax.f32 %v2371, 0.0
  %v2636 = vmax.f32 %v2373, 0.0
  %v2637 = vmax.f32 %v2375, 0.0
  %v2638 = vmax.f32 %v2377, 0.0
  %v2639 = vmax.f32 %v2381, 0.0
  %v2640 = vmax.f32 %v2383, 0.0
  %v2641 = vmax.f32 %v2385, 0.0
  %v2642 = vmax.f32 %v2387, 0.0
  %v2643 = vmax.f32 %v2391, 0.0
  %v2644 = vmax.f32 %v2393, 0.0
  %v2645 = vmax.f32 %v2395, 0.0
  %v2646 = vmax.f32 %v2397, 0.0
  %v2647 = vmax.f32 %v2401, 0.0
  %v2648 = vmax.f32 %v2403, 0.0
  %v2649 = vmax.f32 %v2405, 0.0
  %v2650 = vmax.f32 %v2407, 0.0
  %v2651 = vmax.f32 %v2411, 0.0
  %v2652 = vmax.f32 %v2413, 0.0
  %v2653 = vmax.f32 %v2415, 0.0
  %v2654 = vmax.f32 %v2417, 0.0
  %v2655 = vmax.f32 %v2421, 0.0
  %v2656 = vmax.f32 %v2423, 0.0
  %v2657 = vmax.f32 %v2425, 0.0
  %v2658 = vmax.f32 %v2427, 0.0
  %v2659 = vmax.f32 %v2431, 0.0
  %v2660 = vmax.f32 %v2433, 0.0
  %v2661 = vmax.f32 %v2435, 0.0
  %v2662 = vmax.f32 %v2437, 0.0
  %v2663 = vmax.f32 %v2441, 0.0
  %v2664 = vmax.f32 %v2443, 0.0
  %v2665 = vmax.f32 %v2445, 0.0
  %v2666 = vmax.f32 %v2447, 0.0
  %v2667 = vmax.f32 %v2451, 0.0
  %v2668 = vmax.f32 %v2453, 0.0
  %v2669 = vmax.f32 %v2455, 0.0
  %v2670 = vmax.f32 %v2457, 0.0
  %v2671 = vmax.f32 %v2461, 0.0
  %v2672 = vmax.f32 %v2463, 0.0
  %v2673 = vmax.f32 %v2465, 0.0
  %v2674 = vmax.f32 %v2467, 0.0
  %v2675 = vmax.f32 %v2471, 0.0
  %v2676 = vmax.f32 %v2473, 0.0
  %v2677 = vmax.f32 %v2475, 0.0
  %v2678 = vmax.f32 %v2477, 0.0
  %v2679 = vmax.f32 %v2481, 0.0
  %v2680 = vmax.f32 %v2483, 0.0
  %v2681 = vmax.f32 %v2485, 0.0
  %v2682 = vmax.f32 %v2487, 0.0
  %v2683 = vmax.f32 %v2491, 0.0
  %v2684 = vmax.f32 %v2493, 0.0
  %v2685 = vmax.f32 %v2495, 0.0
  %v2686 = vmax.f32 %v2497, 0.0
  %v2687 = vmax.f32 %v2501, 0.0
  %v2688 = vmax.f32 %v2503, 0.0
  %v2689 = vmax.f32 %v2505, 0.0
  %v2690 = vmax.f32 %v2507, 0.0
  %v2691 = vmax.f32 %v2511, 0.0
  %v2692 = vmax.f32 %v2513, 0.0
  %v2693 = vmax.f32 %v2515, 0.0
  %v2694 = vmax.f32 %v2517, 0.0
  %v2695 = vmax.f32 %v2521, 0.0
  %v2696 = vmax.f32 %v2523, 0.0
  %v2697 = vmax.f32 %v2525, 0.0
  %v2698 = vmax.f32 %v2527, 0.0
  %v2699 = vmax.f32 %v2531, 0.0
  %v2700 = vmax.f32 %v2533, 0.0
  %v2701 = vmax.f32 %v2535, 0.0
  %v2702 = vmax.f32 %v2537, 0.0
  %v2703 = vmax.f32 %v2541, 0.0
  %v2704 = vmax.f32 %v2543, 0.0
  %v2705 = vmax.f32 %v2545, 0.0
  %v2706 = vmax.f32 %v2547, 0.0
  %v2707 = vmax.f32 %v2551, 0.0
  %v2708 = vmax.f32 %v2553, 0.0
  %v2709 = vmax.f32 %v2555, 0.0
  %v2710 = vmax.f32 %v2557, 0.0
  %v2711 = vmax.f32 %v2561, 0.0
  %v2712 = vmax.f32 %v2563, 0.0
  %v2713 = vmax.f32 %v2565, 0.0
  %v2714 = vmax.f32 %v2567, 0.0
  %v2715 = vmax.f32 %v2571, 0.0
  %v2716 = vmax.f32 %v2573, 0.0
  %v2717 = vmax.f32 %v2575, 0.0
  %v2718 = vmax.f32 %v2577, 0.0
  %v2719 = vmax.f32 %v2581, 0.0
  %v2720 = vmax.f32 %v2583, 0.0
  %v2721 = vmax.f32 %v2585, 0.0
  %v2722 = vmax.f32 %v2587, 0.0
  %v2723 = vmax.f32 %v2591, 0.0
  %v2724 = vmax.f32 %v2593, 0.0
  %v2725 = vmax.f32 %v2595, 0.0
  %v2726 = vmax.f32 %v2597, 0.0
  %v2727 = vpack.c.bf16 %v2601, %v2599
  %v2728 = vpack.c.bf16 %v2602, %v2600
  %v2729 = vpack.c.bf16 %v2605, %v2603
  %v2730 = vpack.c.bf16 %v2606, %v2604
  %v2731 = vpack.c.bf16 %v2609, %v2607
  %v2732 = vpack.c.bf16 %v2610, %v2608
  %v2733 = vpack.c.bf16 %v2613, %v2611
  %v2734 = vpack.c.bf16 %v2614, %v2612
  %v2735 = vpack.c.bf16 %v2617, %v2615
  %v2736 = vpack.c.bf16 %v2618, %v2616
  %v2737 = vpack.c.bf16 %v2621, %v2619
  %v2738 = vpack.c.bf16 %v2622, %v2620
  %v2739 = vpack.c.bf16 %v2625, %v2623
  %v2740 = vpack.c.bf16 %v2626, %v2624
  %v2741 = vpack.c.bf16 %v2629, %v2627
  %v2742 = vpack.c.bf16 %v2630, %v2628
  %v2743 = vpack.c.bf16 %v2633, %v2631
  %v2744 = vpack.c.bf16 %v2634, %v2632
  %v2745 = vpack.c.bf16 %v2637, %v2635
  %v2746 = vpack.c.bf16 %v2638, %v2636
  %v2747 = vpack.c.bf16 %v2641, %v2639
  %v2748 = vpack.c.bf16 %v2642, %v2640
  %v2749 = vpack.c.bf16 %v2645, %v2643
  %v2750 = vpack.c.bf16 %v2646, %v2644
  %v2751 = vpack.c.bf16 %v2649, %v2647
  %v2752 = vpack.c.bf16 %v2650, %v2648
  %v2753 = vpack.c.bf16 %v2653, %v2651
  %v2754 = vpack.c.bf16 %v2654, %v2652
  %v2755 = vpack.c.bf16 %v2657, %v2655
  %v2756 = vpack.c.bf16 %v2658, %v2656
  %v2757 = vpack.c.bf16 %v2661, %v2659
  %v2758 = vpack.c.bf16 %v2662, %v2660
  %v2759 = vpack.c.bf16 %v2665, %v2663
  %v2760 = vpack.c.bf16 %v2666, %v2664
  %v2761 = vpack.c.bf16 %v2669, %v2667
  %v2762 = vpack.c.bf16 %v2670, %v2668
  %v2763 = vpack.c.bf16 %v2673, %v2671
  %v2764 = vpack.c.bf16 %v2674, %v2672
  %v2765 = vpack.c.bf16 %v2677, %v2675
  %v2766 = vpack.c.bf16 %v2678, %v2676
  %v2767 = vpack.c.bf16 %v2681, %v2679
  %v2768 = vpack.c.bf16 %v2682, %v2680
  %v2769 = vpack.c.bf16 %v2685, %v2683
  %v2770 = vpack.c.bf16 %v2686, %v2684
  %v2771 = vpack.c.bf16 %v2689, %v2687
  %v2772 = vpack.c.bf16 %v2690, %v2688
  %v2773 = vpack.c.bf16 %v2693, %v2691
  %v2774 = vpack.c.bf16 %v2694, %v2692
  %v2775 = vpack.c.bf16 %v2697, %v2695
  %v2776 = vpack.c.bf16 %v2698, %v2696
  %v2777 = vpack.c.bf16 %v2701, %v2699
  %v2778 = vpack.c.bf16 %v2702, %v2700
  %v2779 = vpack.c.bf16 %v2705, %v2703
  %v2780 = vpack.c.bf16 %v2706, %v2704
  %v2781 = vpack.c.bf16 %v2709, %v2707
  %v2782 = vpack.c.bf16 %v2710, %v2708
  %v2783 = vpack.c.bf16 %v2713, %v2711
  %v2784 = vpack.c.bf16 %v2714, %v2712
  %v2785 = vpack.c.bf16 %v2717, %v2715
  %v2786 = vpack.c.bf16 %v2718, %v2716
  %v2787 = vpack.c.bf16 %v2721, %v2719
  %v2788 = vpack.c.bf16 %v2722, %v2720
  %v2789 = vpack.c.bf16 %v2725, %v2723
  %v2790 = vpack.c.bf16 %v2726, %v2724
  %s2791 = scalar_lea.vmem %s2, 512
  %v2792 = vld [vmem:[%s2791] sm:$0xff]
  %v2793 = vld [vmem:[%s2791 + $0x8] sm:$0xff]
  %v2794 = vld [vmem:[%s2791 + $0x10] sm:$0xff]
  %v2795 = vld [vmem:[%s2791 + $0x18] sm:$0xff]
  %v2796 = vld [vmem:[%s2791 + $0x20] sm:$0xff]
  %v2797 = vld [vmem:[%s2791 + $0x28] sm:$0xff]
  %v2798 = vld [vmem:[%s2791 + $0x30] sm:$0xff]
  %v2799 = vld [vmem:[%s2791 + $0x38] sm:$0xff]
  %v2800 = vld [vmem:[%s2791 + $0x40] sm:$0xff]
  %v2801 = vld [vmem:[%s2791 + $0x48] sm:$0xff]
  %v2802 = vld [vmem:[%s2791 + $0x50] sm:$0xff]
  %v2803 = vld [vmem:[%s2791 + $0x58] sm:$0xff]
  %v2804 = vld [vmem:[%s2791 + $0x60] sm:$0xff]
  %v2805 = vld [vmem:[%s2791 + $0x68] sm:$0xff]
  %v2806 = vld [vmem:[%s2791 + $0x70] sm:$0xff]
  %v2807 = vld [vmem:[%s2791 + $0x78] sm:$0xff]
  %v2808 = vld [vmem:[%s2791 + $0x80] sm:$0xff]
  %v2809 = vld [vmem:[%s2791 + $0x88] sm:$0xff]
  %v2810 = vld [vmem:[%s2791 + $0x90] sm:$0xff]
  %v2811 = vld [vmem:[%s2791 + $0x98] sm:$0xff]
  %v2812 = vld [vmem:[%s2791 + $0xa0] sm:$0xff]
  %v2813 = vld [vmem:[%s2791 + $0xa8] sm:$0xff]
  %v2814 = vld [vmem:[%s2791 + $0xb0] sm:$0xff]
  %v2815 = vld [vmem:[%s2791 + $0xb8] sm:$0xff]
  %v2816 = vld [vmem:[%s2791 + $0xc0] sm:$0xff]
  %v2817 = vld [vmem:[%s2791 + $0xc8] sm:$0xff]
  %v2818 = vld [vmem:[%s2791 + $0xd0] sm:$0xff]
  %v2819 = vld [vmem:[%s2791 + $0xd8] sm:$0xff]
  %v2820 = vld [vmem:[%s2791 + $0xe0] sm:$0xff]
  %v2821 = vld [vmem:[%s2791 + $0xe8] sm:$0xff]
  %v2822 = vld [vmem:[%s2791 + $0xf0] sm:$0xff]
  %v2823 = vld [vmem:[%s2791 + $0xf8] sm:$0xff]
  %s2824 = scalar_lea.vmem %s3, 3
  %v2825 = vld [vmem:[%s2824] ss:$8 sm:$0x3]
  %v2827 = vlaneseq
  %v2828 = vshrl.u32 %v2827, 7
  %v2829 = vsub.s32 0, %v2828
  %v2830 = vrot.slane %v2825, %v2829
  %v2831 = vlaneseq
  %v2832 = vshrl.u32 %v2831, 7
  %v2833 = vsub.s32 1, %v2832
  %v2834 = vrot.slane %v2825, %v2833
  %v2869 = vunpack.c.l.b16 %v2792
  %v2870 = vunpack.c.h.b16 %v2792
  %v2871 = vunpack.c.l.b16 %v2793
  %v2872 = vunpack.c.h.b16 %v2793
  %v2873 = vunpack.c.l.b16 %v2794
  %v2874 = vunpack.c.h.b16 %v2794
  %v2875 = vunpack.c.l.b16 %v2795
  %v2876 = vunpack.c.h.b16 %v2795
  %v2877 = vunpack.c.l.b16 %v2796
  %v2878 = vunpack.c.h.b16 %v2796
  %v2879 = vunpack.c.l.b16 %v2797
  %v2880 = vunpack.c.h.b16 %v2797
  %v2881 = vunpack.c.l.b16 %v2798
  %v2882 = vunpack.c.h.b16 %v2798
  %v2883 = vunpack.c.l.b16 %v2799
  %v2884 = vunpack.c.h.b16 %v2799
  %v2885 = vunpack.c.l.b16 %v2800
  %v2886 = vunpack.c.h.b16 %v2800
  %v2887 = vunpack.c.l.b16 %v2801
  %v2888 = vunpack.c.h.b16 %v2801
  %v2889 = vunpack.c.l.b16 %v2802
  %v2890 = vunpack.c.h.b16 %v2802
  %v2891 = vunpack.c.l.b16 %v2803
  %v2892 = vunpack.c.h.b16 %v2803
  %v2893 = vunpack.c.l.b16 %v2804
  %v2894 = vunpack.c.h.b16 %v2804
  %v2895 = vunpack.c.l.b16 %v2805
  %v2896 = vunpack.c.h.b16 %v2805
  %v2897 = vunpack.c.l.b16 %v2806
  %v2898 = vunpack.c.h.b16 %v2806
  %v2899 = vunpack.c.l.b16 %v2807
  %v2900 = vunpack.c.h.b16 %v2807
  %v2901 = vunpack.c.l.b16 %v2808
  %v2902 = vunpack.c.h.b16 %v2808
  %v2903 = vunpack.c.l.b16 %v2809
  %v2904 = vunpack.c.h.b16 %v2809
  %v2905 = vunpack.c.l.b16 %v2810
  %v2906 = vunpack.c.h.b16 %v2810
  %v2907 = vunpack.c.l.b16 %v2811
  %v2908 = vunpack.c.h.b16 %v2811
  %v2909 = vunpack.c.l.b16 %v2812
  %v2910 = vunpack.c.h.b16 %v2812
  %v2911 = vunpack.c.l.b16 %v2813
  %v2912 = vunpack.c.h.b16 %v2813
  %v2913 = vunpack.c.l.b16 %v2814
  %v2914 = vunpack.c.h.b16 %v2814
  %v2915 = vunpack.c.l.b16 %v2815
  %v2916 = vunpack.c.h.b16 %v2815
  %v2917 = vunpack.c.l.b16 %v2816
  %v2918 = vunpack.c.h.b16 %v2816
  %v2919 = vunpack.c.l.b16 %v2817
  %v2920 = vunpack.c.h.b16 %v2817
  %v2921 = vunpack.c.l.b16 %v2818
  %v2922 = vunpack.c.h.b16 %v2818
  %v2923 = vunpack.c.l.b16 %v2819
  %v2924 = vunpack.c.h.b16 %v2819
  %v2925 = vunpack.c.l.b16 %v2820
  %v2926 = vunpack.c.h.b16 %v2820
  %v2927 = vunpack.c.l.b16 %v2821
  %v2928 = vunpack.c.h.b16 %v2821
  %v2929 = vunpack.c.l.b16 %v2822
  %v2930 = vunpack.c.h.b16 %v2822
  %v2931 = vunpack.c.l.b16 %v2823
  %v2932 = vunpack.c.h.b16 %v2823
  %v2933 = vpack.c.b16 %v2871, %v2869
  %v2934 = vpack.c.b16 %v2872, %v2870
  %v2935 = vpack.c.b16 %v2875, %v2873
  %v2936 = vpack.c.b16 %v2876, %v2874
  %v2937 = vpack.c.b16 %v2879, %v2877
  %v2938 = vpack.c.b16 %v2880, %v2878
  %v2939 = vpack.c.b16 %v2883, %v2881
  %v2940 = vpack.c.b16 %v2884, %v2882
  %v2941 = vpack.c.b16 %v2887, %v2885
  %v2942 = vpack.c.b16 %v2888, %v2886
  %v2943 = vpack.c.b16 %v2891, %v2889
  %v2944 = vpack.c.b16 %v2892, %v2890
  %v2945 = vpack.c.b16 %v2895, %v2893
  %v2946 = vpack.c.b16 %v2896, %v2894
  %v2947 = vpack.c.b16 %v2899, %v2897
  %v2948 = vpack.c.b16 %v2900, %v2898
  %v2949 = vpack.c.b16 %v2903, %v2901
  %v2950 = vpack.c.b16 %v2904, %v2902
  %v2951 = vpack.c.b16 %v2907, %v2905
  %v2952 = vpack.c.b16 %v2908, %v2906
  %v2953 = vpack.c.b16 %v2911, %v2909
  %v2954 = vpack.c.b16 %v2912, %v2910
  %v2955 = vpack.c.b16 %v2915, %v2913
  %v2956 = vpack.c.b16 %v2916, %v2914
  %v2957 = vpack.c.b16 %v2919, %v2917
  %v2958 = vpack.c.b16 %v2920, %v2918
  %v2959 = vpack.c.b16 %v2923, %v2921
  %v2960 = vpack.c.b16 %v2924, %v2922
  %v2961 = vpack.c.b16 %v2927, %v2925
  %v2962 = vpack.c.b16 %v2928, %v2926
  %v2963 = vpack.c.b16 %v2931, %v2929
  %v2964 = vpack.c.b16 %v2932, %v2930
  %2997 = vmatprep.subr.bf16.mxu0 %v2948
  %2998 = vmatpush1.bf16.msra.mxu0 %v2947
  %2999 = vmatprep.subr.bf16.mxu0 %v2946
  %3000 = vmatpush1.bf16.msra.mxu0 %v2945
  %3001 = vmatprep.subr.bf16.mxu0 %v2944
  %3002 = vmatpush1.bf16.msra.mxu0 %v2943
  %3003 = vmatprep.subr.bf16.mxu0 %v2942
  %3004 = vmatpush1.bf16.msra.mxu0 %v2941
  %3005 = vmatprep.subr.bf16.mxu0 %v2940
  %3006 = vmatpush1.bf16.msra.mxu0 %v2939
  %3007 = vmatprep.subr.bf16.mxu0 %v2938
  %3008 = vmatpush1.bf16.msra.mxu0 %v2937
  %3009 = vmatprep.subr.bf16.mxu0 %v2936
  %3010 = vmatpush1.bf16.msra.mxu0 %v2935
  %3011 = vmatprep.subr.bf16.mxu0 %v2934
  %3012 = vmatpush1.bf16.msra.mxu0 %v2933
  %3013 = vmatprep.subr.bf16.mxu0 %v2964
  %3014 = vmatpush2.bf16.msra.mxu0 %v2963
  %3015 = vmatprep.subr.bf16.mxu0 %v2962
  %3016 = vmatpush2.bf16.msra.mxu0 %v2961
  %3017 = vmatprep.subr.bf16.mxu0 %v2960
  %3018 = vmatpush2.bf16.msra.mxu0 %v2959
  %3019 = vmatprep.subr.bf16.mxu0 %v2958
  %3020 = vmatpush2.bf16.msra.mxu0 %v2957
  %3021 = vmatprep.subr.bf16.mxu0 %v2956
  %3022 = vmatpush2.bf16.msra.mxu0 %v2955
  %3023 = vmatprep.subr.bf16.mxu0 %v2954
  %3024 = vmatpush2.bf16.msra.mxu0 %v2953
  %3025 = vmatprep.subr.bf16.mxu0 %v2952
  %3026 = vmatpush2.bf16.msra.mxu0 %v2951
  %3027 = vmatprep.subr.bf16.mxu0 %v2950
  %3028 = vmatpush2.bf16.msra.mxu0 %v2949
  %3029 = vmatprep.mubr.bf16.mxu0 %v2728
  %3030 = vmatmul.mubr.bf16.gmra.mxu0 %v2727
  %v3031 = vpop.f32.mrf.mxu0
  %v3032 = vadd.f32 %v2830, %v3031
  %v3033 = vpop.f32.mrf.mxu0
  %v3034 = vadd.f32 %v2834, %v3033
  %v3035 = vpop.f32.mrf.mxu0
  %v3036 = vadd.f32 %v2830, %v3035
  %v3037 = vpop.f32.mrf.mxu0
  %v3038 = vadd.f32 %v2834, %v3037
  %3039 = vmatprep.mubr.bf16.mxu0 %v2730
  %3040 = vmatmul.mubr.bf16.gmra.mxu0 %v2729
  %v3041 = vpop.f32.mrf.mxu0
  %v3042 = vadd.f32 %v2830, %v3041
  %v3043 = vpop.f32.mrf.mxu0
  %v3044 = vadd.f32 %v2834, %v3043
  %v3045 = vpop.f32.mrf.mxu0
  %v3046 = vadd.f32 %v2830, %v3045
  %v3047 = vpop.f32.mrf.mxu0
  %v3048 = vadd.f32 %v2834, %v3047
  %3049 = vmatprep.mubr.bf16.mxu0 %v2732
  %3050 = vmatmul.mubr.bf16.gmra.mxu0 %v2731
  %v3051 = vpop.f32.mrf.mxu0
  %v3052 = vadd.f32 %v2830, %v3051
  %v3053 = vpop.f32.mrf.mxu0
  %v3054 = vadd.f32 %v2834, %v3053
  %v3055 = vpop.f32.mrf.mxu0
  %v3056 = vadd.f32 %v2830, %v3055
  %v3057 = vpop.f32.mrf.mxu0
  %v3058 = vadd.f32 %v2834, %v3057
  %3059 = vmatprep.mubr.bf16.mxu0 %v2734
  %3060 = vmatmul.mubr.bf16.gmra.mxu0 %v2733
  %v3061 = vpop.f32.mrf.mxu0
  %v3062 = vadd.f32 %v2830, %v3061
  %v3063 = vpop.f32.mrf.mxu0
  %v3064 = vadd.f32 %v2834, %v3063
  %v3065 = vpop.f32.mrf.mxu0
  %v3066 = vadd.f32 %v2830, %v3065
  %v3067 = vpop.f32.mrf.mxu0
  %v3068 = vadd.f32 %v2834, %v3067
  %3069 = vmatprep.mubr.bf16.mxu0 %v2736
  %3070 = vmatmul.mubr.bf16.gmra.mxu0 %v2735
  %v3071 = vpop.f32.mrf.mxu0
  %v3072 = vadd.f32 %v2830, %v3071
  %v3073 = vpop.f32.mrf.mxu0
  %v3074 = vadd.f32 %v2834, %v3073
  %v3075 = vpop.f32.mrf.mxu0
  %v3076 = vadd.f32 %v2830, %v3075
  %v3077 = vpop.f32.mrf.mxu0
  %v3078 = vadd.f32 %v2834, %v3077
  %3079 = vmatprep.mubr.bf16.mxu0 %v2738
  %3080 = vmatmul.mubr.bf16.gmra.mxu0 %v2737
  %v3081 = vpop.f32.mrf.mxu0
  %v3082 = vadd.f32 %v2830, %v3081
  %v3083 = vpop.f32.mrf.mxu0
  %v3084 = vadd.f32 %v2834, %v3083
  %v3085 = vpop.f32.mrf.mxu0
  %v3086 = vadd.f32 %v2830, %v3085
  %v3087 = vpop.f32.mrf.mxu0
  %v3088 = vadd.f32 %v2834, %v3087
  %3089 = vmatprep.mubr.bf16.mxu0 %v2740
  %3090 = vmatmul.mubr.bf16.gmra.mxu0 %v2739
  %v3091 = vpop.f32.mrf.mxu0
  %v3092 = vadd.f32 %v2830, %v3091
  %v3093 = vpop.f32.mrf.mxu0
  %v3094 = vadd.f32 %v2834, %v3093
  %v3095 = vpop.f32.mrf.mxu0
  %v3096 = vadd.f32 %v2830, %v3095
  %v3097 = vpop.f32.mrf.mxu0
  %v3098 = vadd.f32 %v2834, %v3097
  %3099 = vmatprep.mubr.bf16.mxu0 %v2742
  %3100 = vmatmul.mubr.bf16.gmra.mxu0 %v2741
  %v3101 = vpop.f32.mrf.mxu0
  %v3102 = vadd.f32 %v2830, %v3101
  %v3103 = vpop.f32.mrf.mxu0
  %v3104 = vadd.f32 %v2834, %v3103
  %v3105 = vpop.f32.mrf.mxu0
  %v3106 = vadd.f32 %v2830, %v3105
  %v3107 = vpop.f32.mrf.mxu0
  %v3108 = vadd.f32 %v2834, %v3107
  %3109 = vmatprep.mubr.bf16.mxu0 %v2744
  %3110 = vmatmul.mubr.bf16.gmra.mxu0 %v2743
  %v3111 = vpop.f32.mrf.mxu0
  %v3112 = vadd.f32 %v2830, %v3111
  %v3113 = vpop.f32.mrf.mxu0
  %v3114 = vadd.f32 %v2834, %v3113
  %v3115 = vpop.f32.mrf.mxu0
  %v3116 = vadd.f32 %v2830, %v3115
  %v3117 = vpop.f32.mrf.mxu0
  %v3118 = vadd.f32 %v2834, %v3117
  %3119 = vmatprep.mubr.bf16.mxu0 %v2746
  %3120 = vmatmul.mubr.bf16.gmra.mxu0 %v2745
  %v3121 = vpop.f32.mrf.mxu0
  %v3122 = vadd.f32 %v2830, %v3121
  %v3123 = vpop.f32.mrf.mxu0
  %v3124 = vadd.f32 %v2834, %v3123
  %v3125 = vpop.f32.mrf.mxu0
  %v3126 = vadd.f32 %v2830, %v3125
  %v3127 = vpop.f32.mrf.mxu0
  %v3128 = vadd.f32 %v2834, %v3127
  %3129 = vmatprep.mubr.bf16.mxu0 %v2748
  %3130 = vmatmul.mubr.bf16.gmra.mxu0 %v2747
  %v3131 = vpop.f32.mrf.mxu0
  %v3132 = vadd.f32 %v2830, %v3131
  %v3133 = vpop.f32.mrf.mxu0
  %v3134 = vadd.f32 %v2834, %v3133
  %v3135 = vpop.f32.mrf.mxu0
  %v3136 = vadd.f32 %v2830, %v3135
  %v3137 = vpop.f32.mrf.mxu0
  %v3138 = vadd.f32 %v2834, %v3137
  %3139 = vmatprep.mubr.bf16.mxu0 %v2750
  %3140 = vmatmul.mubr.bf16.gmra.mxu0 %v2749
  %v3141 = vpop.f32.mrf.mxu0
  %v3142 = vadd.f32 %v2830, %v3141
  %v3143 = vpop.f32.mrf.mxu0
  %v3144 = vadd.f32 %v2834, %v3143
  %v3145 = vpop.f32.mrf.mxu0
  %v3146 = vadd.f32 %v2830, %v3145
  %v3147 = vpop.f32.mrf.mxu0
  %v3148 = vadd.f32 %v2834, %v3147
  %3149 = vmatprep.mubr.bf16.mxu0 %v2752
  %3150 = vmatmul.mubr.bf16.gmra.mxu0 %v2751
  %v3151 = vpop.f32.mrf.mxu0
  %v3152 = vadd.f32 %v2830, %v3151
  %v3153 = vpop.f32.mrf.mxu0
  %v3154 = vadd.f32 %v2834, %v3153
  %v3155 = vpop.f32.mrf.mxu0
  %v3156 = vadd.f32 %v2830, %v3155
  %v3157 = vpop.f32.mrf.mxu0
  %v3158 = vadd.f32 %v2834, %v3157
  %3159 = vmatprep.mubr.bf16.mxu0 %v2754
  %3160 = vmatmul.mubr.bf16.gmra.mxu0 %v2753
  %v3161 = vpop.f32.mrf.mxu0
  %v3162 = vadd.f32 %v2830, %v3161
  %v3163 = vpop.f32.mrf.mxu0
  %v3164 = vadd.f32 %v2834, %v3163
  %v3165 = vpop.f32.mrf.mxu0
  %v3166 = vadd.f32 %v2830, %v3165
  %v3167 = vpop.f32.mrf.mxu0
  %v3168 = vadd.f32 %v2834, %v3167
  %3169 = vmatprep.mubr.bf16.mxu0 %v2756
  %3170 = vmatmul.mubr.bf16.gmra.mxu0 %v2755
  %v3171 = vpop.f32.mrf.mxu0
  %v3172 = vadd.f32 %v2830, %v3171
  %v3173 = vpop.f32.mrf.mxu0
  %v3174 = vadd.f32 %v2834, %v3173
  %v3175 = vpop.f32.mrf.mxu0
  %v3176 = vadd.f32 %v2830, %v3175
  %v3177 = vpop.f32.mrf.mxu0
  %v3178 = vadd.f32 %v2834, %v3177
  %3179 = vmatprep.mubr.bf16.mxu0 %v2758
  %3180 = vmatmul.mubr.bf16.gmra.mxu0 %v2757
  %v3181 = vpop.f32.mrf.mxu0
  %v3182 = vadd.f32 %v2830, %v3181
  %v3183 = vpop.f32.mrf.mxu0
  %v3184 = vadd.f32 %v2834, %v3183
  %v3185 = vpop.f32.mrf.mxu0
  %v3186 = vadd.f32 %v2830, %v3185
  %v3187 = vpop.f32.mrf.mxu0
  %v3188 = vadd.f32 %v2834, %v3187
  %3189 = vmatprep.mubr.bf16.mxu0 %v2760
  %3190 = vmatmul.mubr.bf16.gmra.mxu0 %v2759
  %v3191 = vpop.f32.mrf.mxu0
  %v3192 = vadd.f32 %v2830, %v3191
  %v3193 = vpop.f32.mrf.mxu0
  %v3194 = vadd.f32 %v2834, %v3193
  %v3195 = vpop.f32.mrf.mxu0
  %v3196 = vadd.f32 %v2830, %v3195
  %v3197 = vpop.f32.mrf.mxu0
  %v3198 = vadd.f32 %v2834, %v3197
  %3199 = vmatprep.mubr.bf16.mxu0 %v2762
  %3200 = vmatmul.mubr.bf16.gmra.mxu0 %v2761
  %v3201 = vpop.f32.mrf.mxu0
  %v3202 = vadd.f32 %v2830, %v3201
  %v3203 = vpop.f32.mrf.mxu0
  %v3204 = vadd.f32 %v2834, %v3203
  %v3205 = vpop.f32.mrf.mxu0
  %v3206 = vadd.f32 %v2830, %v3205
  %v3207 = vpop.f32.mrf.mxu0
  %v3208 = vadd.f32 %v2834, %v3207
  %3209 = vmatprep.mubr.bf16.mxu0 %v2764
  %3210 = vmatmul.mubr.bf16.gmra.mxu0 %v2763
  %v3211 = vpop.f32.mrf.mxu0
  %v3212 = vadd.f32 %v2830, %v3211
  %v3213 = vpop.f32.mrf.mxu0
  %v3214 = vadd.f32 %v2834, %v3213
  %v3215 = vpop.f32.mrf.mxu0
  %v3216 = vadd.f32 %v2830, %v3215
  %v3217 = vpop.f32.mrf.mxu0
  %v3218 = vadd.f32 %v2834, %v3217
  %3219 = vmatprep.mubr.bf16.mxu0 %v2766
  %3220 = vmatmul.mubr.bf16.gmra.mxu0 %v2765
  %v3221 = vpop.f32.mrf.mxu0
  %v3222 = vadd.f32 %v2830, %v3221
  %v3223 = vpop.f32.mrf.mxu0
  %v3224 = vadd.f32 %v2834, %v3223
  %v3225 = vpop.f32.mrf.mxu0
  %v3226 = vadd.f32 %v2830, %v3225
  %v3227 = vpop.f32.mrf.mxu0
  %v3228 = vadd.f32 %v2834, %v3227
  %3229 = vmatprep.mubr.bf16.mxu0 %v2768
  %3230 = vmatmul.mubr.bf16.gmra.mxu0 %v2767
  %v3231 = vpop.f32.mrf.mxu0
  %v3232 = vadd.f32 %v2830, %v3231
  %v3233 = vpop.f32.mrf.mxu0
  %v3234 = vadd.f32 %v2834, %v3233
  %v3235 = vpop.f32.mrf.mxu0
  %v3236 = vadd.f32 %v2830, %v3235
  %v3237 = vpop.f32.mrf.mxu0
  %v3238 = vadd.f32 %v2834, %v3237
  %3239 = vmatprep.mubr.bf16.mxu0 %v2770
  %3240 = vmatmul.mubr.bf16.gmra.mxu0 %v2769
  %v3241 = vpop.f32.mrf.mxu0
  %v3242 = vadd.f32 %v2830, %v3241
  %v3243 = vpop.f32.mrf.mxu0
  %v3244 = vadd.f32 %v2834, %v3243
  %v3245 = vpop.f32.mrf.mxu0
  %v3246 = vadd.f32 %v2830, %v3245
  %v3247 = vpop.f32.mrf.mxu0
  %v3248 = vadd.f32 %v2834, %v3247
  %3249 = vmatprep.mubr.bf16.mxu0 %v2772
  %3250 = vmatmul.mubr.bf16.gmra.mxu0 %v2771
  %v3251 = vpop.f32.mrf.mxu0
  %v3252 = vadd.f32 %v2830, %v3251
  %v3253 = vpop.f32.mrf.mxu0
  %v3254 = vadd.f32 %v2834, %v3253
  %v3255 = vpop.f32.mrf.mxu0
  %v3256 = vadd.f32 %v2830, %v3255
  %v3257 = vpop.f32.mrf.mxu0
  %v3258 = vadd.f32 %v2834, %v3257
  %3259 = vmatprep.mubr.bf16.mxu0 %v2774
  %3260 = vmatmul.mubr.bf16.gmra.mxu0 %v2773
  %v3261 = vpop.f32.mrf.mxu0
  %v3262 = vadd.f32 %v2830, %v3261
  %v3263 = vpop.f32.mrf.mxu0
  %v3264 = vadd.f32 %v2834, %v3263
  %v3265 = vpop.f32.mrf.mxu0
  %v3266 = vadd.f32 %v2830, %v3265
  %v3267 = vpop.f32.mrf.mxu0
  %v3268 = vadd.f32 %v2834, %v3267
  %3269 = vmatprep.mubr.bf16.mxu0 %v2776
  %3270 = vmatmul.mubr.bf16.gmra.mxu0 %v2775
  %v3271 = vpop.f32.mrf.mxu0
  %v3272 = vadd.f32 %v2830, %v3271
  %v3273 = vpop.f32.mrf.mxu0
  %v3274 = vadd.f32 %v2834, %v3273
  %v3275 = vpop.f32.mrf.mxu0
  %v3276 = vadd.f32 %v2830, %v3275
  %v3277 = vpop.f32.mrf.mxu0
  %v3278 = vadd.f32 %v2834, %v3277
  %3279 = vmatprep.mubr.bf16.mxu0 %v2778
  %3280 = vmatmul.mubr.bf16.gmra.mxu0 %v2777
  %v3281 = vpop.f32.mrf.mxu0
  %v3282 = vadd.f32 %v2830, %v3281
  %v3283 = vpop.f32.mrf.mxu0
  %v3284 = vadd.f32 %v2834, %v3283
  %v3285 = vpop.f32.mrf.mxu0
  %v3286 = vadd.f32 %v2830, %v3285
  %v3287 = vpop.f32.mrf.mxu0
  %v3288 = vadd.f32 %v2834, %v3287
  %3289 = vmatprep.mubr.bf16.mxu0 %v2780
  %3290 = vmatmul.mubr.bf16.gmra.mxu0 %v2779
  %v3291 = vpop.f32.mrf.mxu0
  %v3292 = vadd.f32 %v2830, %v3291
  %v3293 = vpop.f32.mrf.mxu0
  %v3294 = vadd.f32 %v2834, %v3293
  %v3295 = vpop.f32.mrf.mxu0
  %v3296 = vadd.f32 %v2830, %v3295
  %v3297 = vpop.f32.mrf.mxu0
  %v3298 = vadd.f32 %v2834, %v3297
  %3299 = vmatprep.mubr.bf16.mxu0 %v2782
  %3300 = vmatmul.mubr.bf16.gmra.mxu0 %v2781
  %v3301 = vpop.f32.mrf.mxu0
  %v3302 = vadd.f32 %v2830, %v3301
  %v3303 = vpop.f32.mrf.mxu0
  %v3304 = vadd.f32 %v2834, %v3303
  %v3305 = vpop.f32.mrf.mxu0
  %v3306 = vadd.f32 %v2830, %v3305
  %v3307 = vpop.f32.mrf.mxu0
  %v3308 = vadd.f32 %v2834, %v3307
  %3309 = vmatprep.mubr.bf16.mxu0 %v2784
  %3310 = vmatmul.mubr.bf16.gmra.mxu0 %v2783
  %v3311 = vpop.f32.mrf.mxu0
  %v3312 = vadd.f32 %v2830, %v3311
  %v3313 = vpop.f32.mrf.mxu0
  %v3314 = vadd.f32 %v2834, %v3313
  %v3315 = vpop.f32.mrf.mxu0
  %v3316 = vadd.f32 %v2830, %v3315
  %v3317 = vpop.f32.mrf.mxu0
  %v3318 = vadd.f32 %v2834, %v3317
  %3319 = vmatprep.mubr.bf16.mxu0 %v2786
  %3320 = vmatmul.mubr.bf16.gmra.mxu0 %v2785
  %v3321 = vpop.f32.mrf.mxu0
  %v3322 = vadd.f32 %v2830, %v3321
  %v3323 = vpop.f32.mrf.mxu0
  %v3324 = vadd.f32 %v2834, %v3323
  %v3325 = vpop.f32.mrf.mxu0
  %v3326 = vadd.f32 %v2830, %v3325
  %v3327 = vpop.f32.mrf.mxu0
  %v3328 = vadd.f32 %v2834, %v3327
  %3329 = vmatprep.mubr.bf16.mxu0 %v2788
  %3330 = vmatmul.mubr.bf16.gmra.mxu0 %v2787
  %v3331 = vpop.f32.mrf.mxu0
  %v3332 = vadd.f32 %v2830, %v3331
  %v3333 = vpop.f32.mrf.mxu0
  %v3334 = vadd.f32 %v2834, %v3333
  %v3335 = vpop.f32.mrf.mxu0
  %v3336 = vadd.f32 %v2830, %v3335
  %v3337 = vpop.f32.mrf.mxu0
  %v3338 = vadd.f32 %v2834, %v3337
  %3339 = vmatprep.mubr.bf16.mxu0 %v2790
  %3340 = vmatmul.mubr.bf16.gmra.mxu0 %v2789
  %v3341 = vpop.f32.mrf.mxu0
  %v3342 = vadd.f32 %v2830, %v3341
  %v3343 = vpop.f32.mrf.mxu0
  %v3344 = vadd.f32 %v2834, %v3343
  %v3345 = vpop.f32.mrf.mxu0
  %v3346 = vadd.f32 %v2830, %v3345
  %v3347 = vpop.f32.mrf.mxu0
  %v3348 = vadd.f32 %v2834, %v3347
  %3349 = vdwg.mxu0
  %v3350 = vmax.f32 %v3032, 0.0
  %v3351 = vmax.f32 %v3034, 0.0
  %v3352 = vmax.f32 %v3036, 0.0
  %v3353 = vmax.f32 %v3038, 0.0
  %v3354 = vmax.f32 %v3042, 0.0
  %v3355 = vmax.f32 %v3044, 0.0
  %v3356 = vmax.f32 %v3046, 0.0
  %v3357 = vmax.f32 %v3048, 0.0
  %v3358 = vmax.f32 %v3052, 0.0
  %v3359 = vmax.f32 %v3054, 0.0
  %v3360 = vmax.f32 %v3056, 0.0
  %v3361 = vmax.f32 %v3058, 0.0
  %v3362 = vmax.f32 %v3062, 0.0
  %v3363 = vmax.f32 %v3064, 0.0
  %v3364 = vmax.f32 %v3066, 0.0
  %v3365 = vmax.f32 %v3068, 0.0
  %v3366 = vmax.f32 %v3072, 0.0
  %v3367 = vmax.f32 %v3074, 0.0
  %v3368 = vmax.f32 %v3076, 0.0
  %v3369 = vmax.f32 %v3078, 0.0
  %v3370 = vmax.f32 %v3082, 0.0
  %v3371 = vmax.f32 %v3084, 0.0
  %v3372 = vmax.f32 %v3086, 0.0
  %v3373 = vmax.f32 %v3088, 0.0
  %v3374 = vmax.f32 %v3092, 0.0
  %v3375 = vmax.f32 %v3094, 0.0
  %v3376 = vmax.f32 %v3096, 0.0
  %v3377 = vmax.f32 %v3098, 0.0
  %v3378 = vmax.f32 %v3102, 0.0
  %v3379 = vmax.f32 %v3104, 0.0
  %v3380 = vmax.f32 %v3106, 0.0
  %v3381 = vmax.f32 %v3108, 0.0
  %v3382 = vmax.f32 %v3112, 0.0
  %v3383 = vmax.f32 %v3114, 0.0
  %v3384 = vmax.f32 %v3116, 0.0
  %v3385 = vmax.f32 %v3118, 0.0
  %v3386 = vmax.f32 %v3122, 0.0
  %v3387 = vmax.f32 %v3124, 0.0
  %v3388 = vmax.f32 %v3126, 0.0
  %v3389 = vmax.f32 %v3128, 0.0
  %v3390 = vmax.f32 %v3132, 0.0
  %v3391 = vmax.f32 %v3134, 0.0
  %v3392 = vmax.f32 %v3136, 0.0
  %v3393 = vmax.f32 %v3138, 0.0
  %v3394 = vmax.f32 %v3142, 0.0
  %v3395 = vmax.f32 %v3144, 0.0
  %v3396 = vmax.f32 %v3146, 0.0
  %v3397 = vmax.f32 %v3148, 0.0
  %v3398 = vmax.f32 %v3152, 0.0
  %v3399 = vmax.f32 %v3154, 0.0
  %v3400 = vmax.f32 %v3156, 0.0
  %v3401 = vmax.f32 %v3158, 0.0
  %v3402 = vmax.f32 %v3162, 0.0
  %v3403 = vmax.f32 %v3164, 0.0
  %v3404 = vmax.f32 %v3166, 0.0
  %v3405 = vmax.f32 %v3168, 0.0
  %v3406 = vmax.f32 %v3172, 0.0
  %v3407 = vmax.f32 %v3174, 0.0
  %v3408 = vmax.f32 %v3176, 0.0
  %v3409 = vmax.f32 %v3178, 0.0
  %v3410 = vmax.f32 %v3182, 0.0
  %v3411 = vmax.f32 %v3184, 0.0
  %v3412 = vmax.f32 %v3186, 0.0
  %v3413 = vmax.f32 %v3188, 0.0
  %v3414 = vmax.f32 %v3192, 0.0
  %v3415 = vmax.f32 %v3194, 0.0
  %v3416 = vmax.f32 %v3196, 0.0
  %v3417 = vmax.f32 %v3198, 0.0
  %v3418 = vmax.f32 %v3202, 0.0
  %v3419 = vmax.f32 %v3204, 0.0
  %v3420 = vmax.f32 %v3206, 0.0
  %v3421 = vmax.f32 %v3208, 0.0
  %v3422 = vmax.f32 %v3212, 0.0
  %v3423 = vmax.f32 %v3214, 0.0
  %v3424 = vmax.f32 %v3216, 0.0
  %v3425 = vmax.f32 %v3218, 0.0
  %v3426 = vmax.f32 %v3222, 0.0
  %v3427 = vmax.f32 %v3224, 0.0
  %v3428 = vmax.f32 %v3226, 0.0
  %v3429 = vmax.f32 %v3228, 0.0
  %v3430 = vmax.f32 %v3232, 0.0
  %v3431 = vmax.f32 %v3234, 0.0
  %v3432 = vmax.f32 %v3236, 0.0
  %v3433 = vmax.f32 %v3238, 0.0
  %v3434 = vmax.f32 %v3242, 0.0
  %v3435 = vmax.f32 %v3244, 0.0
  %v3436 = vmax.f32 %v3246, 0.0
  %v3437 = vmax.f32 %v3248, 0.0
  %v3438 = vmax.f32 %v3252, 0.0
  %v3439 = vmax.f32 %v3254, 0.0
  %v3440 = vmax.f32 %v3256, 0.0
  %v3441 = vmax.f32 %v3258, 0.0
  %v3442 = vmax.f32 %v3262, 0.0
  %v3443 = vmax.f32 %v3264, 0.0
  %v3444 = vmax.f32 %v3266, 0.0
  %v3445 = vmax.f32 %v3268, 0.0
  %v3446 = vmax.f32 %v3272, 0.0
  %v3447 = vmax.f32 %v3274, 0.0
  %v3448 = vmax.f32 %v3276, 0.0
  %v3449 = vmax.f32 %v3278, 0.0
  %v3450 = vmax.f32 %v3282, 0.0
  %v3451 = vmax.f32 %v3284, 0.0
  %v3452 = vmax.f32 %v3286, 0.0
  %v3453 = vmax.f32 %v3288, 0.0
  %v3454 = vmax.f32 %v3292, 0.0
  %v3455 = vmax.f32 %v3294, 0.0
  %v3456 = vmax.f32 %v3296, 0.0
  %v3457 = vmax.f32 %v3298, 0.0
  %v3458 = vmax.f32 %v3302, 0.0
  %v3459 = vmax.f32 %v3304, 0.0
  %v3460 = vmax.f32 %v3306, 0.0
  %v3461 = vmax.f32 %v3308, 0.0
  %v3462 = vmax.f32 %v3312, 0.0
  %v3463 = vmax.f32 %v3314, 0.0
  %v3464 = vmax.f32 %v3316, 0.0
  %v3465 = vmax.f32 %v3318, 0.0
  %v3466 = vmax.f32 %v3322, 0.0
  %v3467 = vmax.f32 %v3324, 0.0
  %v3468 = vmax.f32 %v3326, 0.0
  %v3469 = vmax.f32 %v3328, 0.0
  %v3470 = vmax.f32 %v3332, 0.0
  %v3471 = vmax.f32 %v3334, 0.0
  %v3472 = vmax.f32 %v3336, 0.0
  %v3473 = vmax.f32 %v3338, 0.0
  %v3474 = vmax.f32 %v3342, 0.0
  %v3475 = vmax.f32 %v3344, 0.0
  %v3476 = vmax.f32 %v3346, 0.0
  %v3477 = vmax.f32 %v3348, 0.0
  %v3478 = vpack.c.bf16 %v3352, %v3350
  %v3479 = vpack.c.bf16 %v3353, %v3351
  %v3480 = vpack.c.bf16 %v3356, %v3354
  %v3481 = vpack.c.bf16 %v3357, %v3355
  %v3482 = vpack.c.bf16 %v3360, %v3358
  %v3483 = vpack.c.bf16 %v3361, %v3359
  %v3484 = vpack.c.bf16 %v3364, %v3362
  %v3485 = vpack.c.bf16 %v3365, %v3363
  %v3486 = vpack.c.bf16 %v3368, %v3366
  %v3487 = vpack.c.bf16 %v3369, %v3367
  %v3488 = vpack.c.bf16 %v3372, %v3370
  %v3489 = vpack.c.bf16 %v3373, %v3371
  %v3490 = vpack.c.bf16 %v3376, %v3374
  %v3491 = vpack.c.bf16 %v3377, %v3375
  %v3492 = vpack.c.bf16 %v3380, %v3378
  %v3493 = vpack.c.bf16 %v3381, %v3379
  %v3494 = vpack.c.bf16 %v3384, %v3382
  %v3495 = vpack.c.bf16 %v3385, %v3383
  %v3496 = vpack.c.bf16 %v3388, %v3386
  %v3497 = vpack.c.bf16 %v3389, %v3387
  %v3498 = vpack.c.bf16 %v3392, %v3390
  %v3499 = vpack.c.bf16 %v3393, %v3391
  %v3500 = vpack.c.bf16 %v3396, %v3394
  %v3501 = vpack.c.bf16 %v3397, %v3395
  %v3502 = vpack.c.bf16 %v3400, %v3398
  %v3503 = vpack.c.bf16 %v3401, %v3399
  %v3504 = vpack.c.bf16 %v3404, %v3402
  %v3505 = vpack.c.bf16 %v3405, %v3403
  %v3506 = vpack.c.bf16 %v3408, %v3406
  %v3507 = vpack.c.bf16 %v3409, %v3407
  %v3508 = vpack.c.bf16 %v3412, %v3410
  %v3509 = vpack.c.bf16 %v3413, %v3411
  %v3510 = vpack.c.bf16 %v3416, %v3414
  %v3511 = vpack.c.bf16 %v3417, %v3415
  %v3512 = vpack.c.bf16 %v3420, %v3418
  %v3513 = vpack.c.bf16 %v3421, %v3419
  %v3514 = vpack.c.bf16 %v3424, %v3422
  %v3515 = vpack.c.bf16 %v3425, %v3423
  %v3516 = vpack.c.bf16 %v3428, %v3426
  %v3517 = vpack.c.bf16 %v3429, %v3427
  %v3518 = vpack.c.bf16 %v3432, %v3430
  %v3519 = vpack.c.bf16 %v3433, %v3431
  %v3520 = vpack.c.bf16 %v3436, %v3434
  %v3521 = vpack.c.bf16 %v3437, %v3435
  %v3522 = vpack.c.bf16 %v3440, %v3438
  %v3523 = vpack.c.bf16 %v3441, %v3439
  %v3524 = vpack.c.bf16 %v3444, %v3442
  %v3525 = vpack.c.bf16 %v3445, %v3443
  %v3526 = vpack.c.bf16 %v3448, %v3446
  %v3527 = vpack.c.bf16 %v3449, %v3447
  %v3528 = vpack.c.bf16 %v3452, %v3450
  %v3529 = vpack.c.bf16 %v3453, %v3451
  %v3530 = vpack.c.bf16 %v3456, %v3454
  %v3531 = vpack.c.bf16 %v3457, %v3455
  %v3532 = vpack.c.bf16 %v3460, %v3458
  %v3533 = vpack.c.bf16 %v3461, %v3459
  %v3534 = vpack.c.bf16 %v3464, %v3462
  %v3535 = vpack.c.bf16 %v3465, %v3463
  %v3536 = vpack.c.bf16 %v3468, %v3466
  %v3537 = vpack.c.bf16 %v3469, %v3467
  %v3538 = vpack.c.bf16 %v3472, %v3470
  %v3539 = vpack.c.bf16 %v3473, %v3471
  %v3540 = vpack.c.bf16 %v3476, %v3474
  %v3541 = vpack.c.bf16 %v3477, %v3475
  %s3542 = scalar_lea.vmem %s2, 768
  %v3543 = vld [vmem:[%s3542] sm:$0xff]
  %v3544 = vld [vmem:[%s3542 + $0x8] sm:$0xff]
  %v3545 = vld [vmem:[%s3542 + $0x10] sm:$0xff]
  %v3546 = vld [vmem:[%s3542 + $0x18] sm:$0xff]
  %v3547 = vld [vmem:[%s3542 + $0x20] sm:$0xff]
  %v3548 = vld [vmem:[%s3542 + $0x28] sm:$0xff]
  %v3549 = vld [vmem:[%s3542 + $0x30] sm:$0xff]
  %v3550 = vld [vmem:[%s3542 + $0x38] sm:$0xff]
  %v3551 = vld [vmem:[%s3542 + $0x40] sm:$0xff]
  %v3552 = vld [vmem:[%s3542 + $0x48] sm:$0xff]
  %v3553 = vld [vmem:[%s3542 + $0x50] sm:$0xff]
  %v3554 = vld [vmem:[%s3542 + $0x58] sm:$0xff]
  %v3555 = vld [vmem:[%s3542 + $0x60] sm:$0xff]
  %v3556 = vld [vmem:[%s3542 + $0x68] sm:$0xff]
  %v3557 = vld [vmem:[%s3542 + $0x70] sm:$0xff]
  %v3558 = vld [vmem:[%s3542 + $0x78] sm:$0xff]
  %v3559 = vld [vmem:[%s3542 + $0x80] sm:$0xff]
  %v3560 = vld [vmem:[%s3542 + $0x88] sm:$0xff]
  %v3561 = vld [vmem:[%s3542 + $0x90] sm:$0xff]
  %v3562 = vld [vmem:[%s3542 + $0x98] sm:$0xff]
  %v3563 = vld [vmem:[%s3542 + $0xa0] sm:$0xff]
  %v3564 = vld [vmem:[%s3542 + $0xa8] sm:$0xff]
  %v3565 = vld [vmem:[%s3542 + $0xb0] sm:$0xff]
  %v3566 = vld [vmem:[%s3542 + $0xb8] sm:$0xff]
  %v3567 = vld [vmem:[%s3542 + $0xc0] sm:$0xff]
  %v3568 = vld [vmem:[%s3542 + $0xc8] sm:$0xff]
  %v3569 = vld [vmem:[%s3542 + $0xd0] sm:$0xff]
  %v3570 = vld [vmem:[%s3542 + $0xd8] sm:$0xff]
  %v3571 = vld [vmem:[%s3542 + $0xe0] sm:$0xff]
  %v3572 = vld [vmem:[%s3542 + $0xe8] sm:$0xff]
  %v3573 = vld [vmem:[%s3542 + $0xf0] sm:$0xff]
  %v3574 = vld [vmem:[%s3542 + $0xf8] sm:$0xff]
  %s3575 = scalar_lea.vmem %s3, 4
  %v3576 = vld [vmem:[%s3575] ss:$8 sm:$0x3]
  %v3578 = vlaneseq
  %v3579 = vshrl.u32 %v3578, 7
  %v3580 = vsub.s32 0, %v3579
  %v3581 = vrot.slane %v3576, %v3580
  %v3582 = vlaneseq
  %v3583 = vshrl.u32 %v3582, 7
  %v3584 = vsub.s32 1, %v3583
  %v3585 = vrot.slane %v3576, %v3584
  %v3620 = vunpack.c.l.b16 %v3543
  %v3621 = vunpack.c.h.b16 %v3543
  %v3622 = vunpack.c.l.b16 %v3544
  %v3623 = vunpack.c.h.b16 %v3544
  %v3624 = vunpack.c.l.b16 %v3545
  %v3625 = vunpack.c.h.b16 %v3545
  %v3626 = vunpack.c.l.b16 %v3546
  %v3627 = vunpack.c.h.b16 %v3546
  %v3628 = vunpack.c.l.b16 %v3547
  %v3629 = vunpack.c.h.b16 %v3547
  %v3630 = vunpack.c.l.b16 %v3548
  %v3631 = vunpack.c.h.b16 %v3548
  %v3632 = vunpack.c.l.b16 %v3549
  %v3633 = vunpack.c.h.b16 %v3549
  %v3634 = vunpack.c.l.b16 %v3550
  %v3635 = vunpack.c.h.b16 %v3550
  %v3636 = vunpack.c.l.b16 %v3551
  %v3637 = vunpack.c.h.b16 %v3551
  %v3638 = vunpack.c.l.b16 %v3552
  %v3639 = vunpack.c.h.b16 %v3552
  %v3640 = vunpack.c.l.b16 %v3553
  %v3641 = vunpack.c.h.b16 %v3553
  %v3642 = vunpack.c.l.b16 %v3554
  %v3643 = vunpack.c.h.b16 %v3554
  %v3644 = vunpack.c.l.b16 %v3555
  %v3645 = vunpack.c.h.b16 %v3555
  %v3646 = vunpack.c.l.b16 %v3556
  %v3647 = vunpack.c.h.b16 %v3556
  %v3648 = vunpack.c.l.b16 %v3557
  %v3649 = vunpack.c.h.b16 %v3557
  %v3650 = vunpack.c.l.b16 %v3558
  %v3651 = vunpack.c.h.b16 %v3558
  %v3652 = vunpack.c.l.b16 %v3559
  %v3653 = vunpack.c.h.b16 %v3559
  %v3654 = vunpack.c.l.b16 %v3560
  %v3655 = vunpack.c.h.b16 %v3560
  %v3656 = vunpack.c.l.b16 %v3561
  %v3657 = vunpack.c.h.b16 %v3561
  %v3658 = vunpack.c.l.b16 %v3562
  %v3659 = vunpack.c.h.b16 %v3562
  %v3660 = vunpack.c.l.b16 %v3563
  %v3661 = vunpack.c.h.b16 %v3563
  %v3662 = vunpack.c.l.b16 %v3564
  %v3663 = vunpack.c.h.b16 %v3564
  %v3664 = vunpack.c.l.b16 %v3565
  %v3665 = vunpack.c.h.b16 %v3565
  %v3666 = vunpack.c.l.b16 %v3566
  %v3667 = vunpack.c.h.b16 %v3566
  %v3668 = vunpack.c.l.b16 %v3567
  %v3669 = vunpack.c.h.b16 %v3567
  %v3670 = vunpack.c.l.b16 %v3568
  %v3671 = vunpack.c.h.b16 %v3568
  %v3672 = vunpack.c.l.b16 %v3569
  %v3673 = vunpack.c.h.b16 %v3569
  %v3674 = vunpack.c.l.b16 %v3570
  %v3675 = vunpack.c.h.b16 %v3570
  %v3676 = vunpack.c.l.b16 %v3571
  %v3677 = vunpack.c.h.b16 %v3571
  %v3678 = vunpack.c.l.b16 %v3572
  %v3679 = vunpack.c.h.b16 %v3572
  %v3680 = vunpack.c.l.b16 %v3573
  %v3681 = vunpack.c.h.b16 %v3573
  %v3682 = vunpack.c.l.b16 %v3574
  %v3683 = vunpack.c.h.b16 %v3574
  %v3684 = vpack.c.b16 %v3622, %v3620
  %v3685 = vpack.c.b16 %v3623, %v3621
  %v3686 = vpack.c.b16 %v3626, %v3624
  %v3687 = vpack.c.b16 %v3627, %v3625
  %v3688 = vpack.c.b16 %v3630, %v3628
  %v3689 = vpack.c.b16 %v3631, %v3629
  %v3690 = vpack.c.b16 %v3634, %v3632
  %v3691 = vpack.c.b16 %v3635, %v3633
  %v3692 = vpack.c.b16 %v3638, %v3636
  %v3693 = vpack.c.b16 %v3639, %v3637
  %v3694 = vpack.c.b16 %v3642, %v3640
  %v3695 = vpack.c.b16 %v3643, %v3641
  %v3696 = vpack.c.b16 %v3646, %v3644
  %v3697 = vpack.c.b16 %v3647, %v3645
  %v3698 = vpack.c.b16 %v3650, %v3648
  %v3699 = vpack.c.b16 %v3651, %v3649
  %v3700 = vpack.c.b16 %v3654, %v3652
  %v3701 = vpack.c.b16 %v3655, %v3653
  %v3702 = vpack.c.b16 %v3658, %v3656
  %v3703 = vpack.c.b16 %v3659, %v3657
  %v3704 = vpack.c.b16 %v3662, %v3660
  %v3705 = vpack.c.b16 %v3663, %v3661
  %v3706 = vpack.c.b16 %v3666, %v3664
  %v3707 = vpack.c.b16 %v3667, %v3665
  %v3708 = vpack.c.b16 %v3670, %v3668
  %v3709 = vpack.c.b16 %v3671, %v3669
  %v3710 = vpack.c.b16 %v3674, %v3672
  %v3711 = vpack.c.b16 %v3675, %v3673
  %v3712 = vpack.c.b16 %v3678, %v3676
  %v3713 = vpack.c.b16 %v3679, %v3677
  %v3714 = vpack.c.b16 %v3682, %v3680
  %v3715 = vpack.c.b16 %v3683, %v3681
  %3748 = vmatprep.subr.bf16.mxu0 %v3699
  %3749 = vmatpush1.bf16.msra.mxu0 %v3698
  %3750 = vmatprep.subr.bf16.mxu0 %v3697
  %3751 = vmatpush1.bf16.msra.mxu0 %v3696
  %3752 = vmatprep.subr.bf16.mxu0 %v3695
  %3753 = vmatpush1.bf16.msra.mxu0 %v3694
  %3754 = vmatprep.subr.bf16.mxu0 %v3693
  %3755 = vmatpush1.bf16.msra.mxu0 %v3692
  %3756 = vmatprep.subr.bf16.mxu0 %v3691
  %3757 = vmatpush1.bf16.msra.mxu0 %v3690
  %3758 = vmatprep.subr.bf16.mxu0 %v3689
  %3759 = vmatpush1.bf16.msra.mxu0 %v3688
  %3760 = vmatprep.subr.bf16.mxu0 %v3687
  %3761 = vmatpush1.bf16.msra.mxu0 %v3686
  %3762 = vmatprep.subr.bf16.mxu0 %v3685
  %3763 = vmatpush1.bf16.msra.mxu0 %v3684
  %3764 = vmatprep.subr.bf16.mxu0 %v3715
  %3765 = vmatpush2.bf16.msra.mxu0 %v3714
  %3766 = vmatprep.subr.bf16.mxu0 %v3713
  %3767 = vmatpush2.bf16.msra.mxu0 %v3712
  %3768 = vmatprep.subr.bf16.mxu0 %v3711
  %3769 = vmatpush2.bf16.msra.mxu0 %v3710
  %3770 = vmatprep.subr.bf16.mxu0 %v3709
  %3771 = vmatpush2.bf16.msra.mxu0 %v3708
  %3772 = vmatprep.subr.bf16.mxu0 %v3707
  %3773 = vmatpush2.bf16.msra.mxu0 %v3706
  %3774 = vmatprep.subr.bf16.mxu0 %v3705
  %3775 = vmatpush2.bf16.msra.mxu0 %v3704
  %3776 = vmatprep.subr.bf16.mxu0 %v3703
  %3777 = vmatpush2.bf16.msra.mxu0 %v3702
  %3778 = vmatprep.subr.bf16.mxu0 %v3701
  %3779 = vmatpush2.bf16.msra.mxu0 %v3700
  %3780 = vmatprep.mubr.bf16.mxu0 %v3479
  %3781 = vmatmul.mubr.bf16.gmra.mxu0 %v3478
  %v3782 = vpop.f32.mrf.mxu0
  %v3783 = vadd.f32 %v3581, %v3782
  %v3784 = vpop.f32.mrf.mxu0
  %v3785 = vadd.f32 %v3585, %v3784
  %v3786 = vpop.f32.mrf.mxu0
  %v3787 = vadd.f32 %v3581, %v3786
  %v3788 = vpop.f32.mrf.mxu0
  %v3789 = vadd.f32 %v3585, %v3788
  %3790 = vmatprep.mubr.bf16.mxu0 %v3481
  %3791 = vmatmul.mubr.bf16.gmra.mxu0 %v3480
  %v3792 = vpop.f32.mrf.mxu0
  %v3793 = vadd.f32 %v3581, %v3792
  %v3794 = vpop.f32.mrf.mxu0
  %v3795 = vadd.f32 %v3585, %v3794
  %v3796 = vpop.f32.mrf.mxu0
  %v3797 = vadd.f32 %v3581, %v3796
  %v3798 = vpop.f32.mrf.mxu0
  %v3799 = vadd.f32 %v3585, %v3798
  %3800 = vmatprep.mubr.bf16.mxu0 %v3483
  %3801 = vmatmul.mubr.bf16.gmra.mxu0 %v3482
  %v3802 = vpop.f32.mrf.mxu0
  %v3803 = vadd.f32 %v3581, %v3802
  %v3804 = vpop.f32.mrf.mxu0
  %v3805 = vadd.f32 %v3585, %v3804
  %v3806 = vpop.f32.mrf.mxu0
  %v3807 = vadd.f32 %v3581, %v3806
  %v3808 = vpop.f32.mrf.mxu0
  %v3809 = vadd.f32 %v3585, %v3808
  %3810 = vmatprep.mubr.bf16.mxu0 %v3485
  %3811 = vmatmul.mubr.bf16.gmra.mxu0 %v3484
  %v3812 = vpop.f32.mrf.mxu0
  %v3813 = vadd.f32 %v3581, %v3812
  %v3814 = vpop.f32.mrf.mxu0
  %v3815 = vadd.f32 %v3585, %v3814
  %v3816 = vpop.f32.mrf.mxu0
  %v3817 = vadd.f32 %v3581, %v3816
  %v3818 = vpop.f32.mrf.mxu0
  %v3819 = vadd.f32 %v3585, %v3818
  %3820 = vmatprep.mubr.bf16.mxu0 %v3487
  %3821 = vmatmul.mubr.bf16.gmra.mxu0 %v3486
  %v3822 = vpop.f32.mrf.mxu0
  %v3823 = vadd.f32 %v3581, %v3822
  %v3824 = vpop.f32.mrf.mxu0
  %v3825 = vadd.f32 %v3585, %v3824
  %v3826 = vpop.f32.mrf.mxu0
  %v3827 = vadd.f32 %v3581, %v3826
  %v3828 = vpop.f32.mrf.mxu0
  %v3829 = vadd.f32 %v3585, %v3828
  %3830 = vmatprep.mubr.bf16.mxu0 %v3489
  %3831 = vmatmul.mubr.bf16.gmra.mxu0 %v3488
  %v3832 = vpop.f32.mrf.mxu0
  %v3833 = vadd.f32 %v3581, %v3832
  %v3834 = vpop.f32.mrf.mxu0
  %v3835 = vadd.f32 %v3585, %v3834
  %v3836 = vpop.f32.mrf.mxu0
  %v3837 = vadd.f32 %v3581, %v3836
  %v3838 = vpop.f32.mrf.mxu0
  %v3839 = vadd.f32 %v3585, %v3838
  %3840 = vmatprep.mubr.bf16.mxu0 %v3491
  %3841 = vmatmul.mubr.bf16.gmra.mxu0 %v3490
  %v3842 = vpop.f32.mrf.mxu0
  %v3843 = vadd.f32 %v3581, %v3842
  %v3844 = vpop.f32.mrf.mxu0
  %v3845 = vadd.f32 %v3585, %v3844
  %v3846 = vpop.f32.mrf.mxu0
  %v3847 = vadd.f32 %v3581, %v3846
  %v3848 = vpop.f32.mrf.mxu0
  %v3849 = vadd.f32 %v3585, %v3848
  %3850 = vmatprep.mubr.bf16.mxu0 %v3493
  %3851 = vmatmul.mubr.bf16.gmra.mxu0 %v3492
  %v3852 = vpop.f32.mrf.mxu0
  %v3853 = vadd.f32 %v3581, %v3852
  %v3854 = vpop.f32.mrf.mxu0
  %v3855 = vadd.f32 %v3585, %v3854
  %v3856 = vpop.f32.mrf.mxu0
  %v3857 = vadd.f32 %v3581, %v3856
  %v3858 = vpop.f32.mrf.mxu0
  %v3859 = vadd.f32 %v3585, %v3858
  %3860 = vmatprep.mubr.bf16.mxu0 %v3495
  %3861 = vmatmul.mubr.bf16.gmra.mxu0 %v3494
  %v3862 = vpop.f32.mrf.mxu0
  %v3863 = vadd.f32 %v3581, %v3862
  %v3864 = vpop.f32.mrf.mxu0
  %v3865 = vadd.f32 %v3585, %v3864
  %v3866 = vpop.f32.mrf.mxu0
  %v3867 = vadd.f32 %v3581, %v3866
  %v3868 = vpop.f32.mrf.mxu0
  %v3869 = vadd.f32 %v3585, %v3868
  %3870 = vmatprep.mubr.bf16.mxu0 %v3497
  %3871 = vmatmul.mubr.bf16.gmra.mxu0 %v3496
  %v3872 = vpop.f32.mrf.mxu0
  %v3873 = vadd.f32 %v3581, %v3872
  %v3874 = vpop.f32.mrf.mxu0
  %v3875 = vadd.f32 %v3585, %v3874
  %v3876 = vpop.f32.mrf.mxu0
  %v3877 = vadd.f32 %v3581, %v3876
  %v3878 = vpop.f32.mrf.mxu0
  %v3879 = vadd.f32 %v3585, %v3878
  %3880 = vmatprep.mubr.bf16.mxu0 %v3499
  %3881 = vmatmul.mubr.bf16.gmra.mxu0 %v3498
  %v3882 = vpop.f32.mrf.mxu0
  %v3883 = vadd.f32 %v3581, %v3882
  %v3884 = vpop.f32.mrf.mxu0
  %v3885 = vadd.f32 %v3585, %v3884
  %v3886 = vpop.f32.mrf.mxu0
  %v3887 = vadd.f32 %v3581, %v3886
  %v3888 = vpop.f32.mrf.mxu0
  %v3889 = vadd.f32 %v3585, %v3888
  %3890 = vmatprep.mubr.bf16.mxu0 %v3501
  %3891 = vmatmul.mubr.bf16.gmra.mxu0 %v3500
  %v3892 = vpop.f32.mrf.mxu0
  %v3893 = vadd.f32 %v3581, %v3892
  %v3894 = vpop.f32.mrf.mxu0
  %v3895 = vadd.f32 %v3585, %v3894
  %v3896 = vpop.f32.mrf.mxu0
  %v3897 = vadd.f32 %v3581, %v3896
  %v3898 = vpop.f32.mrf.mxu0
  %v3899 = vadd.f32 %v3585, %v3898
  %3900 = vmatprep.mubr.bf16.mxu0 %v3503
  %3901 = vmatmul.mubr.bf16.gmra.mxu0 %v3502
  %v3902 = vpop.f32.mrf.mxu0
  %v3903 = vadd.f32 %v3581, %v3902
  %v3904 = vpop.f32.mrf.mxu0
  %v3905 = vadd.f32 %v3585, %v3904
  %v3906 = vpop.f32.mrf.mxu0
  %v3907 = vadd.f32 %v3581, %v3906
  %v3908 = vpop.f32.mrf.mxu0
  %v3909 = vadd.f32 %v3585, %v3908
  %3910 = vmatprep.mubr.bf16.mxu0 %v3505
  %3911 = vmatmul.mubr.bf16.gmra.mxu0 %v3504
  %v3912 = vpop.f32.mrf.mxu0
  %v3913 = vadd.f32 %v3581, %v3912
  %v3914 = vpop.f32.mrf.mxu0
  %v3915 = vadd.f32 %v3585, %v3914
  %v3916 = vpop.f32.mrf.mxu0
  %v3917 = vadd.f32 %v3581, %v3916
  %v3918 = vpop.f32.mrf.mxu0
  %v3919 = vadd.f32 %v3585, %v3918
  %3920 = vmatprep.mubr.bf16.mxu0 %v3507
  %3921 = vmatmul.mubr.bf16.gmra.mxu0 %v3506
  %v3922 = vpop.f32.mrf.mxu0
  %v3923 = vadd.f32 %v3581, %v3922
  %v3924 = vpop.f32.mrf.mxu0
  %v3925 = vadd.f32 %v3585, %v3924
  %v3926 = vpop.f32.mrf.mxu0
  %v3927 = vadd.f32 %v3581, %v3926
  %v3928 = vpop.f32.mrf.mxu0
  %v3929 = vadd.f32 %v3585, %v3928
  %3930 = vmatprep.mubr.bf16.mxu0 %v3509
  %3931 = vmatmul.mubr.bf16.gmra.mxu0 %v3508
  %v3932 = vpop.f32.mrf.mxu0
  %v3933 = vadd.f32 %v3581, %v3932
  %v3934 = vpop.f32.mrf.mxu0
  %v3935 = vadd.f32 %v3585, %v3934
  %v3936 = vpop.f32.mrf.mxu0
  %v3937 = vadd.f32 %v3581, %v3936
  %v3938 = vpop.f32.mrf.mxu0
  %v3939 = vadd.f32 %v3585, %v3938
  %3940 = vmatprep.mubr.bf16.mxu0 %v3511
  %3941 = vmatmul.mubr.bf16.gmra.mxu0 %v3510
  %v3942 = vpop.f32.mrf.mxu0
  %v3943 = vadd.f32 %v3581, %v3942
  %v3944 = vpop.f32.mrf.mxu0
  %v3945 = vadd.f32 %v3585, %v3944
  %v3946 = vpop.f32.mrf.mxu0
  %v3947 = vadd.f32 %v3581, %v3946
  %v3948 = vpop.f32.mrf.mxu0
  %v3949 = vadd.f32 %v3585, %v3948
  %3950 = vmatprep.mubr.bf16.mxu0 %v3513
  %3951 = vmatmul.mubr.bf16.gmra.mxu0 %v3512
  %v3952 = vpop.f32.mrf.mxu0
  %v3953 = vadd.f32 %v3581, %v3952
  %v3954 = vpop.f32.mrf.mxu0
  %v3955 = vadd.f32 %v3585, %v3954
  %v3956 = vpop.f32.mrf.mxu0
  %v3957 = vadd.f32 %v3581, %v3956
  %v3958 = vpop.f32.mrf.mxu0
  %v3959 = vadd.f32 %v3585, %v3958
  %3960 = vmatprep.mubr.bf16.mxu0 %v3515
  %3961 = vmatmul.mubr.bf16.gmra.mxu0 %v3514
  %v3962 = vpop.f32.mrf.mxu0
  %v3963 = vadd.f32 %v3581, %v3962
  %v3964 = vpop.f32.mrf.mxu0
  %v3965 = vadd.f32 %v3585, %v3964
  %v3966 = vpop.f32.mrf.mxu0
  %v3967 = vadd.f32 %v3581, %v3966
  %v3968 = vpop.f32.mrf.mxu0
  %v3969 = vadd.f32 %v3585, %v3968
  %3970 = vmatprep.mubr.bf16.mxu0 %v3517
  %3971 = vmatmul.mubr.bf16.gmra.mxu0 %v3516
  %v3972 = vpop.f32.mrf.mxu0
  %v3973 = vadd.f32 %v3581, %v3972
  %v3974 = vpop.f32.mrf.mxu0
  %v3975 = vadd.f32 %v3585, %v3974
  %v3976 = vpop.f32.mrf.mxu0
  %v3977 = vadd.f32 %v3581, %v3976
  %v3978 = vpop.f32.mrf.mxu0
  %v3979 = vadd.f32 %v3585, %v3978
  %3980 = vmatprep.mubr.bf16.mxu0 %v3519
  %3981 = vmatmul.mubr.bf16.gmra.mxu0 %v3518
  %v3982 = vpop.f32.mrf.mxu0
  %v3983 = vadd.f32 %v3581, %v3982
  %v3984 = vpop.f32.mrf.mxu0
  %v3985 = vadd.f32 %v3585, %v3984
  %v3986 = vpop.f32.mrf.mxu0
  %v3987 = vadd.f32 %v3581, %v3986
  %v3988 = vpop.f32.mrf.mxu0
  %v3989 = vadd.f32 %v3585, %v3988
  %3990 = vmatprep.mubr.bf16.mxu0 %v3521
  %3991 = vmatmul.mubr.bf16.gmra.mxu0 %v3520
  %v3992 = vpop.f32.mrf.mxu0
  %v3993 = vadd.f32 %v3581, %v3992
  %v3994 = vpop.f32.mrf.mxu0
  %v3995 = vadd.f32 %v3585, %v3994
  %v3996 = vpop.f32.mrf.mxu0
  %v3997 = vadd.f32 %v3581, %v3996
  %v3998 = vpop.f32.mrf.mxu0
  %v3999 = vadd.f32 %v3585, %v3998
  %4000 = vmatprep.mubr.bf16.mxu0 %v3523
  %4001 = vmatmul.mubr.bf16.gmra.mxu0 %v3522
  %v4002 = vpop.f32.mrf.mxu0
  %v4003 = vadd.f32 %v3581, %v4002
  %v4004 = vpop.f32.mrf.mxu0
  %v4005 = vadd.f32 %v3585, %v4004
  %v4006 = vpop.f32.mrf.mxu0
  %v4007 = vadd.f32 %v3581, %v4006
  %v4008 = vpop.f32.mrf.mxu0
  %v4009 = vadd.f32 %v3585, %v4008
  %4010 = vmatprep.mubr.bf16.mxu0 %v3525
  %4011 = vmatmul.mubr.bf16.gmra.mxu0 %v3524
  %v4012 = vpop.f32.mrf.mxu0
  %v4013 = vadd.f32 %v3581, %v4012
  %v4014 = vpop.f32.mrf.mxu0
  %v4015 = vadd.f32 %v3585, %v4014
  %v4016 = vpop.f32.mrf.mxu0
  %v4017 = vadd.f32 %v3581, %v4016
  %v4018 = vpop.f32.mrf.mxu0
  %v4019 = vadd.f32 %v3585, %v4018
  %4020 = vmatprep.mubr.bf16.mxu0 %v3527
  %4021 = vmatmul.mubr.bf16.gmra.mxu0 %v3526
  %v4022 = vpop.f32.mrf.mxu0
  %v4023 = vadd.f32 %v3581, %v4022
  %v4024 = vpop.f32.mrf.mxu0
  %v4025 = vadd.f32 %v3585, %v4024
  %v4026 = vpop.f32.mrf.mxu0
  %v4027 = vadd.f32 %v3581, %v4026
  %v4028 = vpop.f32.mrf.mxu0
  %v4029 = vadd.f32 %v3585, %v4028
  %4030 = vmatprep.mubr.bf16.mxu0 %v3529
  %4031 = vmatmul.mubr.bf16.gmra.mxu0 %v3528
  %v4032 = vpop.f32.mrf.mxu0
  %v4033 = vadd.f32 %v3581, %v4032
  %v4034 = vpop.f32.mrf.mxu0
  %v4035 = vadd.f32 %v3585, %v4034
  %v4036 = vpop.f32.mrf.mxu0
  %v4037 = vadd.f32 %v3581, %v4036
  %v4038 = vpop.f32.mrf.mxu0
  %v4039 = vadd.f32 %v3585, %v4038
  %4040 = vmatprep.mubr.bf16.mxu0 %v3531
  %4041 = vmatmul.mubr.bf16.gmra.mxu0 %v3530
  %v4042 = vpop.f32.mrf.mxu0
  %v4043 = vadd.f32 %v3581, %v4042
  %v4044 = vpop.f32.mrf.mxu0
  %v4045 = vadd.f32 %v3585, %v4044
  %v4046 = vpop.f32.mrf.mxu0
  %v4047 = vadd.f32 %v3581, %v4046
  %v4048 = vpop.f32.mrf.mxu0
  %v4049 = vadd.f32 %v3585, %v4048
  %4050 = vmatprep.mubr.bf16.mxu0 %v3533
  %4051 = vmatmul.mubr.bf16.gmra.mxu0 %v3532
  %v4052 = vpop.f32.mrf.mxu0
  %v4053 = vadd.f32 %v3581, %v4052
  %v4054 = vpop.f32.mrf.mxu0
  %v4055 = vadd.f32 %v3585, %v4054
  %v4056 = vpop.f32.mrf.mxu0
  %v4057 = vadd.f32 %v3581, %v4056
  %v4058 = vpop.f32.mrf.mxu0
  %v4059 = vadd.f32 %v3585, %v4058
  %4060 = vmatprep.mubr.bf16.mxu0 %v3535
  %4061 = vmatmul.mubr.bf16.gmra.mxu0 %v3534
  %v4062 = vpop.f32.mrf.mxu0
  %v4063 = vadd.f32 %v3581, %v4062
  %v4064 = vpop.f32.mrf.mxu0
  %v4065 = vadd.f32 %v3585, %v4064
  %v4066 = vpop.f32.mrf.mxu0
  %v4067 = vadd.f32 %v3581, %v4066
  %v4068 = vpop.f32.mrf.mxu0
  %v4069 = vadd.f32 %v3585, %v4068
  %4070 = vmatprep.mubr.bf16.mxu0 %v3537
  %4071 = vmatmul.mubr.bf16.gmra.mxu0 %v3536
  %v4072 = vpop.f32.mrf.mxu0
  %v4073 = vadd.f32 %v3581, %v4072
  %v4074 = vpop.f32.mrf.mxu0
  %v4075 = vadd.f32 %v3585, %v4074
  %v4076 = vpop.f32.mrf.mxu0
  %v4077 = vadd.f32 %v3581, %v4076
  %v4078 = vpop.f32.mrf.mxu0
  %v4079 = vadd.f32 %v3585, %v4078
  %4080 = vmatprep.mubr.bf16.mxu0 %v3539
  %4081 = vmatmul.mubr.bf16.gmra.mxu0 %v3538
  %v4082 = vpop.f32.mrf.mxu0
  %v4083 = vadd.f32 %v3581, %v4082
  %v4084 = vpop.f32.mrf.mxu0
  %v4085 = vadd.f32 %v3585, %v4084
  %v4086 = vpop.f32.mrf.mxu0
  %v4087 = vadd.f32 %v3581, %v4086
  %v4088 = vpop.f32.mrf.mxu0
  %v4089 = vadd.f32 %v3585, %v4088
  %4090 = vmatprep.mubr.bf16.mxu0 %v3541
  %4091 = vmatmul.mubr.bf16.gmra.mxu0 %v3540
  %v4092 = vpop.f32.mrf.mxu0
  %v4093 = vadd.f32 %v3581, %v4092
  %v4094 = vpop.f32.mrf.mxu0
  %v4095 = vadd.f32 %v3585, %v4094
  %v4096 = vpop.f32.mrf.mxu0
  %v4097 = vadd.f32 %v3581, %v4096
  %v4098 = vpop.f32.mrf.mxu0
  %v4099 = vadd.f32 %v3585, %v4098
  %4100 = vdwg.mxu0
  %v4101 = vmax.f32 %v3783, 0.0
  %v4102 = vmax.f32 %v3785, 0.0
  %v4103 = vmax.f32 %v3787, 0.0
  %v4104 = vmax.f32 %v3789, 0.0
  %v4105 = vmax.f32 %v3793, 0.0
  %v4106 = vmax.f32 %v3795, 0.0
  %v4107 = vmax.f32 %v3797, 0.0
  %v4108 = vmax.f32 %v3799, 0.0
  %v4109 = vmax.f32 %v3803, 0.0
  %v4110 = vmax.f32 %v3805, 0.0
  %v4111 = vmax.f32 %v3807, 0.0
  %v4112 = vmax.f32 %v3809, 0.0
  %v4113 = vmax.f32 %v3813, 0.0
  %v4114 = vmax.f32 %v3815, 0.0
  %v4115 = vmax.f32 %v3817, 0.0
  %v4116 = vmax.f32 %v3819, 0.0
  %v4117 = vmax.f32 %v3823, 0.0
  %v4118 = vmax.f32 %v3825, 0.0
  %v4119 = vmax.f32 %v3827, 0.0
  %v4120 = vmax.f32 %v3829, 0.0
  %v4121 = vmax.f32 %v3833, 0.0
  %v4122 = vmax.f32 %v3835, 0.0
  %v4123 = vmax.f32 %v3837, 0.0
  %v4124 = vmax.f32 %v3839, 0.0
  %v4125 = vmax.f32 %v3843, 0.0
  %v4126 = vmax.f32 %v3845, 0.0
  %v4127 = vmax.f32 %v3847, 0.0
  %v4128 = vmax.f32 %v3849, 0.0
  %v4129 = vmax.f32 %v3853, 0.0
  %v4130 = vmax.f32 %v3855, 0.0
  %v4131 = vmax.f32 %v3857, 0.0
  %v4132 = vmax.f32 %v3859, 0.0
  %v4133 = vmax.f32 %v3863, 0.0
  %v4134 = vmax.f32 %v3865, 0.0
  %v4135 = vmax.f32 %v3867, 0.0
  %v4136 = vmax.f32 %v3869, 0.0
  %v4137 = vmax.f32 %v3873, 0.0
  %v4138 = vmax.f32 %v3875, 0.0
  %v4139 = vmax.f32 %v3877, 0.0
  %v4140 = vmax.f32 %v3879, 0.0
  %v4141 = vmax.f32 %v3883, 0.0
  %v4142 = vmax.f32 %v3885, 0.0
  %v4143 = vmax.f32 %v3887, 0.0
  %v4144 = vmax.f32 %v3889, 0.0
  %v4145 = vmax.f32 %v3893, 0.0
  %v4146 = vmax.f32 %v3895, 0.0
  %v4147 = vmax.f32 %v3897, 0.0
  %v4148 = vmax.f32 %v3899, 0.0
  %v4149 = vmax.f32 %v3903, 0.0
  %v4150 = vmax.f32 %v3905, 0.0
  %v4151 = vmax.f32 %v3907, 0.0
  %v4152 = vmax.f32 %v3909, 0.0
  %v4153 = vmax.f32 %v3913, 0.0
  %v4154 = vmax.f32 %v3915, 0.0
  %v4155 = vmax.f32 %v3917, 0.0
  %v4156 = vmax.f32 %v3919, 0.0
  %v4157 = vmax.f32 %v3923, 0.0
  %v4158 = vmax.f32 %v3925, 0.0
  %v4159 = vmax.f32 %v3927, 0.0
  %v4160 = vmax.f32 %v3929, 0.0
  %v4161 = vmax.f32 %v3933, 0.0
  %v4162 = vmax.f32 %v3935, 0.0
  %v4163 = vmax.f32 %v3937, 0.0
  %v4164 = vmax.f32 %v3939, 0.0
  %v4165 = vmax.f32 %v3943, 0.0
  %v4166 = vmax.f32 %v3945, 0.0
  %v4167 = vmax.f32 %v3947, 0.0
  %v4168 = vmax.f32 %v3949, 0.0
  %v4169 = vmax.f32 %v3953, 0.0
  %v4170 = vmax.f32 %v3955, 0.0
  %v4171 = vmax.f32 %v3957, 0.0
  %v4172 = vmax.f32 %v3959, 0.0
  %v4173 = vmax.f32 %v3963, 0.0
  %v4174 = vmax.f32 %v3965, 0.0
  %v4175 = vmax.f32 %v3967, 0.0
  %v4176 = vmax.f32 %v3969, 0.0
  %v4177 = vmax.f32 %v3973, 0.0
  %v4178 = vmax.f32 %v3975, 0.0
  %v4179 = vmax.f32 %v3977, 0.0
  %v4180 = vmax.f32 %v3979, 0.0
  %v4181 = vmax.f32 %v3983, 0.0
  %v4182 = vmax.f32 %v3985, 0.0
  %v4183 = vmax.f32 %v3987, 0.0
  %v4184 = vmax.f32 %v3989, 0.0
  %v4185 = vmax.f32 %v3993, 0.0
  %v4186 = vmax.f32 %v3995, 0.0
  %v4187 = vmax.f32 %v3997, 0.0
  %v4188 = vmax.f32 %v3999, 0.0
  %v4189 = vmax.f32 %v4003, 0.0
  %v4190 = vmax.f32 %v4005, 0.0
  %v4191 = vmax.f32 %v4007, 0.0
  %v4192 = vmax.f32 %v4009, 0.0
  %v4193 = vmax.f32 %v4013, 0.0
  %v4194 = vmax.f32 %v4015, 0.0
  %v4195 = vmax.f32 %v4017, 0.0
  %v4196 = vmax.f32 %v4019, 0.0
  %v4197 = vmax.f32 %v4023, 0.0
  %v4198 = vmax.f32 %v4025, 0.0
  %v4199 = vmax.f32 %v4027, 0.0
  %v4200 = vmax.f32 %v4029, 0.0
  %v4201 = vmax.f32 %v4033, 0.0
  %v4202 = vmax.f32 %v4035, 0.0
  %v4203 = vmax.f32 %v4037, 0.0
  %v4204 = vmax.f32 %v4039, 0.0
  %v4205 = vmax.f32 %v4043, 0.0
  %v4206 = vmax.f32 %v4045, 0.0
  %v4207 = vmax.f32 %v4047, 0.0
  %v4208 = vmax.f32 %v4049, 0.0
  %v4209 = vmax.f32 %v4053, 0.0
  %v4210 = vmax.f32 %v4055, 0.0
  %v4211 = vmax.f32 %v4057, 0.0
  %v4212 = vmax.f32 %v4059, 0.0
  %v4213 = vmax.f32 %v4063, 0.0
  %v4214 = vmax.f32 %v4065, 0.0
  %v4215 = vmax.f32 %v4067, 0.0
  %v4216 = vmax.f32 %v4069, 0.0
  %v4217 = vmax.f32 %v4073, 0.0
  %v4218 = vmax.f32 %v4075, 0.0
  %v4219 = vmax.f32 %v4077, 0.0
  %v4220 = vmax.f32 %v4079, 0.0
  %v4221 = vmax.f32 %v4083, 0.0
  %v4222 = vmax.f32 %v4085, 0.0
  %v4223 = vmax.f32 %v4087, 0.0
  %v4224 = vmax.f32 %v4089, 0.0
  %v4225 = vmax.f32 %v4093, 0.0
  %v4226 = vmax.f32 %v4095, 0.0
  %v4227 = vmax.f32 %v4097, 0.0
  %v4228 = vmax.f32 %v4099, 0.0
  %v4229 = vpack.c.bf16 %v4103, %v4101
  %v4230 = vpack.c.bf16 %v4104, %v4102
  %v4231 = vpack.c.bf16 %v4107, %v4105
  %v4232 = vpack.c.bf16 %v4108, %v4106
  %v4233 = vpack.c.bf16 %v4111, %v4109
  %v4234 = vpack.c.bf16 %v4112, %v4110
  %v4235 = vpack.c.bf16 %v4115, %v4113
  %v4236 = vpack.c.bf16 %v4116, %v4114
  %v4237 = vpack.c.bf16 %v4119, %v4117
  %v4238 = vpack.c.bf16 %v4120, %v4118
  %v4239 = vpack.c.bf16 %v4123, %v4121
  %v4240 = vpack.c.bf16 %v4124, %v4122
  %v4241 = vpack.c.bf16 %v4127, %v4125
  %v4242 = vpack.c.bf16 %v4128, %v4126
  %v4243 = vpack.c.bf16 %v4131, %v4129
  %v4244 = vpack.c.bf16 %v4132, %v4130
  %v4245 = vpack.c.bf16 %v4135, %v4133
  %v4246 = vpack.c.bf16 %v4136, %v4134
  %v4247 = vpack.c.bf16 %v4139, %v4137
  %v4248 = vpack.c.bf16 %v4140, %v4138
  %v4249 = vpack.c.bf16 %v4143, %v4141
  %v4250 = vpack.c.bf16 %v4144, %v4142
  %v4251 = vpack.c.bf16 %v4147, %v4145
  %v4252 = vpack.c.bf16 %v4148, %v4146
  %v4253 = vpack.c.bf16 %v4151, %v4149
  %v4254 = vpack.c.bf16 %v4152, %v4150
  %v4255 = vpack.c.bf16 %v4155, %v4153
  %v4256 = vpack.c.bf16 %v4156, %v4154
  %v4257 = vpack.c.bf16 %v4159, %v4157
  %v4258 = vpack.c.bf16 %v4160, %v4158
  %v4259 = vpack.c.bf16 %v4163, %v4161
  %v4260 = vpack.c.bf16 %v4164, %v4162
  %v4261 = vpack.c.bf16 %v4167, %v4165
  %v4262 = vpack.c.bf16 %v4168, %v4166
  %v4263 = vpack.c.bf16 %v4171, %v4169
  %v4264 = vpack.c.bf16 %v4172, %v4170
  %v4265 = vpack.c.bf16 %v4175, %v4173
  %v4266 = vpack.c.bf16 %v4176, %v4174
  %v4267 = vpack.c.bf16 %v4179, %v4177
  %v4268 = vpack.c.bf16 %v4180, %v4178
  %v4269 = vpack.c.bf16 %v4183, %v4181
  %v4270 = vpack.c.bf16 %v4184, %v4182
  %v4271 = vpack.c.bf16 %v4187, %v4185
  %v4272 = vpack.c.bf16 %v4188, %v4186
  %v4273 = vpack.c.bf16 %v4191, %v4189
  %v4274 = vpack.c.bf16 %v4192, %v4190
  %v4275 = vpack.c.bf16 %v4195, %v4193
  %v4276 = vpack.c.bf16 %v4196, %v4194
  %v4277 = vpack.c.bf16 %v4199, %v4197
  %v4278 = vpack.c.bf16 %v4200, %v4198
  %v4279 = vpack.c.bf16 %v4203, %v4201
  %v4280 = vpack.c.bf16 %v4204, %v4202
  %v4281 = vpack.c.bf16 %v4207, %v4205
  %v4282 = vpack.c.bf16 %v4208, %v4206
  %v4283 = vpack.c.bf16 %v4211, %v4209
  %v4284 = vpack.c.bf16 %v4212, %v4210
  %v4285 = vpack.c.bf16 %v4215, %v4213
  %v4286 = vpack.c.bf16 %v4216, %v4214
  %v4287 = vpack.c.bf16 %v4219, %v4217
  %v4288 = vpack.c.bf16 %v4220, %v4218
  %v4289 = vpack.c.bf16 %v4223, %v4221
  %v4290 = vpack.c.bf16 %v4224, %v4222
  %v4291 = vpack.c.bf16 %v4227, %v4225
  %v4292 = vpack.c.bf16 %v4228, %v4226
  %s4293 = scalar_lea.vmem %s2, 1024
  %v4294 = vld [vmem:[%s4293] sm:$0xff]
  %v4295 = vld [vmem:[%s4293 + $0x8] sm:$0xff]
  %v4296 = vld [vmem:[%s4293 + $0x10] sm:$0xff]
  %v4297 = vld [vmem:[%s4293 + $0x18] sm:$0xff]
  %v4298 = vld [vmem:[%s4293 + $0x20] sm:$0xff]
  %v4299 = vld [vmem:[%s4293 + $0x28] sm:$0xff]
  %v4300 = vld [vmem:[%s4293 + $0x30] sm:$0xff]
  %v4301 = vld [vmem:[%s4293 + $0x38] sm:$0xff]
  %v4302 = vld [vmem:[%s4293 + $0x40] sm:$0xff]
  %v4303 = vld [vmem:[%s4293 + $0x48] sm:$0xff]
  %v4304 = vld [vmem:[%s4293 + $0x50] sm:$0xff]
  %v4305 = vld [vmem:[%s4293 + $0x58] sm:$0xff]
  %v4306 = vld [vmem:[%s4293 + $0x60] sm:$0xff]
  %v4307 = vld [vmem:[%s4293 + $0x68] sm:$0xff]
  %v4308 = vld [vmem:[%s4293 + $0x70] sm:$0xff]
  %v4309 = vld [vmem:[%s4293 + $0x78] sm:$0xff]
  %v4310 = vld [vmem:[%s4293 + $0x80] sm:$0xff]
  %v4311 = vld [vmem:[%s4293 + $0x88] sm:$0xff]
  %v4312 = vld [vmem:[%s4293 + $0x90] sm:$0xff]
  %v4313 = vld [vmem:[%s4293 + $0x98] sm:$0xff]
  %v4314 = vld [vmem:[%s4293 + $0xa0] sm:$0xff]
  %v4315 = vld [vmem:[%s4293 + $0xa8] sm:$0xff]
  %v4316 = vld [vmem:[%s4293 + $0xb0] sm:$0xff]
  %v4317 = vld [vmem:[%s4293 + $0xb8] sm:$0xff]
  %v4318 = vld [vmem:[%s4293 + $0xc0] sm:$0xff]
  %v4319 = vld [vmem:[%s4293 + $0xc8] sm:$0xff]
  %v4320 = vld [vmem:[%s4293 + $0xd0] sm:$0xff]
  %v4321 = vld [vmem:[%s4293 + $0xd8] sm:$0xff]
  %v4322 = vld [vmem:[%s4293 + $0xe0] sm:$0xff]
  %v4323 = vld [vmem:[%s4293 + $0xe8] sm:$0xff]
  %v4324 = vld [vmem:[%s4293 + $0xf0] sm:$0xff]
  %v4325 = vld [vmem:[%s4293 + $0xf8] sm:$0xff]
  %s4326 = scalar_lea.vmem %s3, 5
  %v4327 = vld [vmem:[%s4326] ss:$8 sm:$0x3]
  %v4329 = vlaneseq
  %v4330 = vshrl.u32 %v4329, 7
  %v4331 = vsub.s32 0, %v4330
  %v4332 = vrot.slane %v4327, %v4331
  %v4333 = vlaneseq
  %v4334 = vshrl.u32 %v4333, 7
  %v4335 = vsub.s32 1, %v4334
  %v4336 = vrot.slane %v4327, %v4335
  %v4371 = vunpack.c.l.b16 %v4294
  %v4372 = vunpack.c.h.b16 %v4294
  %v4373 = vunpack.c.l.b16 %v4295
  %v4374 = vunpack.c.h.b16 %v4295
  %v4375 = vunpack.c.l.b16 %v4296
  %v4376 = vunpack.c.h.b16 %v4296
  %v4377 = vunpack.c.l.b16 %v4297
  %v4378 = vunpack.c.h.b16 %v4297
  %v4379 = vunpack.c.l.b16 %v4298
  %v4380 = vunpack.c.h.b16 %v4298
  %v4381 = vunpack.c.l.b16 %v4299
  %v4382 = vunpack.c.h.b16 %v4299
  %v4383 = vunpack.c.l.b16 %v4300
  %v4384 = vunpack.c.h.b16 %v4300
  %v4385 = vunpack.c.l.b16 %v4301
  %v4386 = vunpack.c.h.b16 %v4301
  %v4387 = vunpack.c.l.b16 %v4302
  %v4388 = vunpack.c.h.b16 %v4302
  %v4389 = vunpack.c.l.b16 %v4303
  %v4390 = vunpack.c.h.b16 %v4303
  %v4391 = vunpack.c.l.b16 %v4304
  %v4392 = vunpack.c.h.b16 %v4304
  %v4393 = vunpack.c.l.b16 %v4305
  %v4394 = vunpack.c.h.b16 %v4305
  %v4395 = vunpack.c.l.b16 %v4306
  %v4396 = vunpack.c.h.b16 %v4306
  %v4397 = vunpack.c.l.b16 %v4307
  %v4398 = vunpack.c.h.b16 %v4307
  %v4399 = vunpack.c.l.b16 %v4308
  %v4400 = vunpack.c.h.b16 %v4308
  %v4401 = vunpack.c.l.b16 %v4309
  %v4402 = vunpack.c.h.b16 %v4309
  %v4403 = vunpack.c.l.b16 %v4310
  %v4404 = vunpack.c.h.b16 %v4310
  %v4405 = vunpack.c.l.b16 %v4311
  %v4406 = vunpack.c.h.b16 %v4311
  %v4407 = vunpack.c.l.b16 %v4312
  %v4408 = vunpack.c.h.b16 %v4312
  %v4409 = vunpack.c.l.b16 %v4313
  %v4410 = vunpack.c.h.b16 %v4313
  %v4411 = vunpack.c.l.b16 %v4314
  %v4412 = vunpack.c.h.b16 %v4314
  %v4413 = vunpack.c.l.b16 %v4315
  %v4414 = vunpack.c.h.b16 %v4315
  %v4415 = vunpack.c.l.b16 %v4316
  %v4416 = vunpack.c.h.b16 %v4316
  %v4417 = vunpack.c.l.b16 %v4317
  %v4418 = vunpack.c.h.b16 %v4317
  %v4419 = vunpack.c.l.b16 %v4318
  %v4420 = vunpack.c.h.b16 %v4318
  %v4421 = vunpack.c.l.b16 %v4319
  %v4422 = vunpack.c.h.b16 %v4319
  %v4423 = vunpack.c.l.b16 %v4320
  %v4424 = vunpack.c.h.b16 %v4320
  %v4425 = vunpack.c.l.b16 %v4321
  %v4426 = vunpack.c.h.b16 %v4321
  %v4427 = vunpack.c.l.b16 %v4322
  %v4428 = vunpack.c.h.b16 %v4322
  %v4429 = vunpack.c.l.b16 %v4323
  %v4430 = vunpack.c.h.b16 %v4323
  %v4431 = vunpack.c.l.b16 %v4324
  %v4432 = vunpack.c.h.b16 %v4324
  %v4433 = vunpack.c.l.b16 %v4325
  %v4434 = vunpack.c.h.b16 %v4325
  %v4435 = vpack.c.b16 %v4373, %v4371
  %v4436 = vpack.c.b16 %v4374, %v4372
  %v4437 = vpack.c.b16 %v4377, %v4375
  %v4438 = vpack.c.b16 %v4378, %v4376
  %v4439 = vpack.c.b16 %v4381, %v4379
  %v4440 = vpack.c.b16 %v4382, %v4380
  %v4441 = vpack.c.b16 %v4385, %v4383
  %v4442 = vpack.c.b16 %v4386, %v4384
  %v4443 = vpack.c.b16 %v4389, %v4387
  %v4444 = vpack.c.b16 %v4390, %v4388
  %v4445 = vpack.c.b16 %v4393, %v4391
  %v4446 = vpack.c.b16 %v4394, %v4392
  %v4447 = vpack.c.b16 %v4397, %v4395
  %v4448 = vpack.c.b16 %v4398, %v4396
  %v4449 = vpack.c.b16 %v4401, %v4399
  %v4450 = vpack.c.b16 %v4402, %v4400
  %v4451 = vpack.c.b16 %v4405, %v4403
  %v4452 = vpack.c.b16 %v4406, %v4404
  %v4453 = vpack.c.b16 %v4409, %v4407
  %v4454 = vpack.c.b16 %v4410, %v4408
  %v4455 = vpack.c.b16 %v4413, %v4411
  %v4456 = vpack.c.b16 %v4414, %v4412
  %v4457 = vpack.c.b16 %v4417, %v4415
  %v4458 = vpack.c.b16 %v4418, %v4416
  %v4459 = vpack.c.b16 %v4421, %v4419
  %v4460 = vpack.c.b16 %v4422, %v4420
  %v4461 = vpack.c.b16 %v4425, %v4423
  %v4462 = vpack.c.b16 %v4426, %v4424
  %v4463 = vpack.c.b16 %v4429, %v4427
  %v4464 = vpack.c.b16 %v4430, %v4428
  %v4465 = vpack.c.b16 %v4433, %v4431
  %v4466 = vpack.c.b16 %v4434, %v4432
  %4499 = vmatprep.subr.bf16.mxu0 %v4450
  %4500 = vmatpush1.bf16.msra.mxu0 %v4449
  %4501 = vmatprep.subr.bf16.mxu0 %v4448
  %4502 = vmatpush1.bf16.msra.mxu0 %v4447
  %4503 = vmatprep.subr.bf16.mxu0 %v4446
  %4504 = vmatpush1.bf16.msra.mxu0 %v4445
  %4505 = vmatprep.subr.bf16.mxu0 %v4444
  %4506 = vmatpush1.bf16.msra.mxu0 %v4443
  %4507 = vmatprep.subr.bf16.mxu0 %v4442
  %4508 = vmatpush1.bf16.msra.mxu0 %v4441
  %4509 = vmatprep.subr.bf16.mxu0 %v4440
  %4510 = vmatpush1.bf16.msra.mxu0 %v4439
  %4511 = vmatprep.subr.bf16.mxu0 %v4438
  %4512 = vmatpush1.bf16.msra.mxu0 %v4437
  %4513 = vmatprep.subr.bf16.mxu0 %v4436
  %4514 = vmatpush1.bf16.msra.mxu0 %v4435
  %4515 = vmatprep.subr.bf16.mxu0 %v4466
  %4516 = vmatpush2.bf16.msra.mxu0 %v4465
  %4517 = vmatprep.subr.bf16.mxu0 %v4464
  %4518 = vmatpush2.bf16.msra.mxu0 %v4463
  %4519 = vmatprep.subr.bf16.mxu0 %v4462
  %4520 = vmatpush2.bf16.msra.mxu0 %v4461
  %4521 = vmatprep.subr.bf16.mxu0 %v4460
  %4522 = vmatpush2.bf16.msra.mxu0 %v4459
  %4523 = vmatprep.subr.bf16.mxu0 %v4458
  %4524 = vmatpush2.bf16.msra.mxu0 %v4457
  %4525 = vmatprep.subr.bf16.mxu0 %v4456
  %4526 = vmatpush2.bf16.msra.mxu0 %v4455
  %4527 = vmatprep.subr.bf16.mxu0 %v4454
  %4528 = vmatpush2.bf16.msra.mxu0 %v4453
  %4529 = vmatprep.subr.bf16.mxu0 %v4452
  %4530 = vmatpush2.bf16.msra.mxu0 %v4451
  %4531 = vmatprep.mubr.bf16.mxu0 %v4230
  %4532 = vmatmul.mubr.bf16.gmra.mxu0 %v4229
  %v4533 = vpop.f32.mrf.mxu0
  %v4534 = vadd.f32 %v4332, %v4533
  %v4535 = vpop.f32.mrf.mxu0
  %v4536 = vadd.f32 %v4336, %v4535
  %v4537 = vpop.f32.mrf.mxu0
  %v4538 = vadd.f32 %v4332, %v4537
  %v4539 = vpop.f32.mrf.mxu0
  %v4540 = vadd.f32 %v4336, %v4539
  %4541 = vmatprep.mubr.bf16.mxu0 %v4232
  %4542 = vmatmul.mubr.bf16.gmra.mxu0 %v4231
  %v4543 = vpop.f32.mrf.mxu0
  %v4544 = vadd.f32 %v4332, %v4543
  %v4545 = vpop.f32.mrf.mxu0
  %v4546 = vadd.f32 %v4336, %v4545
  %v4547 = vpop.f32.mrf.mxu0
  %v4548 = vadd.f32 %v4332, %v4547
  %v4549 = vpop.f32.mrf.mxu0
  %v4550 = vadd.f32 %v4336, %v4549
  %4551 = vmatprep.mubr.bf16.mxu0 %v4234
  %4552 = vmatmul.mubr.bf16.gmra.mxu0 %v4233
  %v4553 = vpop.f32.mrf.mxu0
  %v4554 = vadd.f32 %v4332, %v4553
  %v4555 = vpop.f32.mrf.mxu0
  %v4556 = vadd.f32 %v4336, %v4555
  %v4557 = vpop.f32.mrf.mxu0
  %v4558 = vadd.f32 %v4332, %v4557
  %v4559 = vpop.f32.mrf.mxu0
  %v4560 = vadd.f32 %v4336, %v4559
  %4561 = vmatprep.mubr.bf16.mxu0 %v4236
  %4562 = vmatmul.mubr.bf16.gmra.mxu0 %v4235
  %v4563 = vpop.f32.mrf.mxu0
  %v4564 = vadd.f32 %v4332, %v4563
  %v4565 = vpop.f32.mrf.mxu0
  %v4566 = vadd.f32 %v4336, %v4565
  %v4567 = vpop.f32.mrf.mxu0
  %v4568 = vadd.f32 %v4332, %v4567
  %v4569 = vpop.f32.mrf.mxu0
  %v4570 = vadd.f32 %v4336, %v4569
  %4571 = vmatprep.mubr.bf16.mxu0 %v4238
  %4572 = vmatmul.mubr.bf16.gmra.mxu0 %v4237
  %v4573 = vpop.f32.mrf.mxu0
  %v4574 = vadd.f32 %v4332, %v4573
  %v4575 = vpop.f32.mrf.mxu0
  %v4576 = vadd.f32 %v4336, %v4575
  %v4577 = vpop.f32.mrf.mxu0
  %v4578 = vadd.f32 %v4332, %v4577
  %v4579 = vpop.f32.mrf.mxu0
  %v4580 = vadd.f32 %v4336, %v4579
  %4581 = vmatprep.mubr.bf16.mxu0 %v4240
  %4582 = vmatmul.mubr.bf16.gmra.mxu0 %v4239
  %v4583 = vpop.f32.mrf.mxu0
  %v4584 = vadd.f32 %v4332, %v4583
  %v4585 = vpop.f32.mrf.mxu0
  %v4586 = vadd.f32 %v4336, %v4585
  %v4587 = vpop.f32.mrf.mxu0
  %v4588 = vadd.f32 %v4332, %v4587
  %v4589 = vpop.f32.mrf.mxu0
  %v4590 = vadd.f32 %v4336, %v4589
  %4591 = vmatprep.mubr.bf16.mxu0 %v4242
  %4592 = vmatmul.mubr.bf16.gmra.mxu0 %v4241
  %v4593 = vpop.f32.mrf.mxu0
  %v4594 = vadd.f32 %v4332, %v4593
  %v4595 = vpop.f32.mrf.mxu0
  %v4596 = vadd.f32 %v4336, %v4595
  %v4597 = vpop.f32.mrf.mxu0
  %v4598 = vadd.f32 %v4332, %v4597
  %v4599 = vpop.f32.mrf.mxu0
  %v4600 = vadd.f32 %v4336, %v4599
  %4601 = vmatprep.mubr.bf16.mxu0 %v4244
  %4602 = vmatmul.mubr.bf16.gmra.mxu0 %v4243
  %v4603 = vpop.f32.mrf.mxu0
  %v4604 = vadd.f32 %v4332, %v4603
  %v4605 = vpop.f32.mrf.mxu0
  %v4606 = vadd.f32 %v4336, %v4605
  %v4607 = vpop.f32.mrf.mxu0
  %v4608 = vadd.f32 %v4332, %v4607
  %v4609 = vpop.f32.mrf.mxu0
  %v4610 = vadd.f32 %v4336, %v4609
  %4611 = vmatprep.mubr.bf16.mxu0 %v4246
  %4612 = vmatmul.mubr.bf16.gmra.mxu0 %v4245
  %v4613 = vpop.f32.mrf.mxu0
  %v4614 = vadd.f32 %v4332, %v4613
  %v4615 = vpop.f32.mrf.mxu0
  %v4616 = vadd.f32 %v4336, %v4615
  %v4617 = vpop.f32.mrf.mxu0
  %v4618 = vadd.f32 %v4332, %v4617
  %v4619 = vpop.f32.mrf.mxu0
  %v4620 = vadd.f32 %v4336, %v4619
  %4621 = vmatprep.mubr.bf16.mxu0 %v4248
  %4622 = vmatmul.mubr.bf16.gmra.mxu0 %v4247
  %v4623 = vpop.f32.mrf.mxu0
  %v4624 = vadd.f32 %v4332, %v4623
  %v4625 = vpop.f32.mrf.mxu0
  %v4626 = vadd.f32 %v4336, %v4625
  %v4627 = vpop.f32.mrf.mxu0
  %v4628 = vadd.f32 %v4332, %v4627
  %v4629 = vpop.f32.mrf.mxu0
  %v4630 = vadd.f32 %v4336, %v4629
  %4631 = vmatprep.mubr.bf16.mxu0 %v4250
  %4632 = vmatmul.mubr.bf16.gmra.mxu0 %v4249
  %v4633 = vpop.f32.mrf.mxu0
  %v4634 = vadd.f32 %v4332, %v4633
  %v4635 = vpop.f32.mrf.mxu0
  %v4636 = vadd.f32 %v4336, %v4635
  %v4637 = vpop.f32.mrf.mxu0
  %v4638 = vadd.f32 %v4332, %v4637
  %v4639 = vpop.f32.mrf.mxu0
  %v4640 = vadd.f32 %v4336, %v4639
  %4641 = vmatprep.mubr.bf16.mxu0 %v4252
  %4642 = vmatmul.mubr.bf16.gmra.mxu0 %v4251
  %v4643 = vpop.f32.mrf.mxu0
  %v4644 = vadd.f32 %v4332, %v4643
  %v4645 = vpop.f32.mrf.mxu0
  %v4646 = vadd.f32 %v4336, %v4645
  %v4647 = vpop.f32.mrf.mxu0
  %v4648 = vadd.f32 %v4332, %v4647
  %v4649 = vpop.f32.mrf.mxu0
  %v4650 = vadd.f32 %v4336, %v4649
  %4651 = vmatprep.mubr.bf16.mxu0 %v4254
  %4652 = vmatmul.mubr.bf16.gmra.mxu0 %v4253
  %v4653 = vpop.f32.mrf.mxu0
  %v4654 = vadd.f32 %v4332, %v4653
  %v4655 = vpop.f32.mrf.mxu0
  %v4656 = vadd.f32 %v4336, %v4655
  %v4657 = vpop.f32.mrf.mxu0
  %v4658 = vadd.f32 %v4332, %v4657
  %v4659 = vpop.f32.mrf.mxu0
  %v4660 = vadd.f32 %v4336, %v4659
  %4661 = vmatprep.mubr.bf16.mxu0 %v4256
  %4662 = vmatmul.mubr.bf16.gmra.mxu0 %v4255
  %v4663 = vpop.f32.mrf.mxu0
  %v4664 = vadd.f32 %v4332, %v4663
  %v4665 = vpop.f32.mrf.mxu0
  %v4666 = vadd.f32 %v4336, %v4665
  %v4667 = vpop.f32.mrf.mxu0
  %v4668 = vadd.f32 %v4332, %v4667
  %v4669 = vpop.f32.mrf.mxu0
  %v4670 = vadd.f32 %v4336, %v4669
  %4671 = vmatprep.mubr.bf16.mxu0 %v4258
  %4672 = vmatmul.mubr.bf16.gmra.mxu0 %v4257
  %v4673 = vpop.f32.mrf.mxu0
  %v4674 = vadd.f32 %v4332, %v4673
  %v4675 = vpop.f32.mrf.mxu0
  %v4676 = vadd.f32 %v4336, %v4675
  %v4677 = vpop.f32.mrf.mxu0
  %v4678 = vadd.f32 %v4332, %v4677
  %v4679 = vpop.f32.mrf.mxu0
  %v4680 = vadd.f32 %v4336, %v4679
  %4681 = vmatprep.mubr.bf16.mxu0 %v4260
  %4682 = vmatmul.mubr.bf16.gmra.mxu0 %v4259
  %v4683 = vpop.f32.mrf.mxu0
  %v4684 = vadd.f32 %v4332, %v4683
  %v4685 = vpop.f32.mrf.mxu0
  %v4686 = vadd.f32 %v4336, %v4685
  %v4687 = vpop.f32.mrf.mxu0
  %v4688 = vadd.f32 %v4332, %v4687
  %v4689 = vpop.f32.mrf.mxu0
  %v4690 = vadd.f32 %v4336, %v4689
  %4691 = vmatprep.mubr.bf16.mxu0 %v4262
  %4692 = vmatmul.mubr.bf16.gmra.mxu0 %v4261
  %v4693 = vpop.f32.mrf.mxu0
  %v4694 = vadd.f32 %v4332, %v4693
  %v4695 = vpop.f32.mrf.mxu0
  %v4696 = vadd.f32 %v4336, %v4695
  %v4697 = vpop.f32.mrf.mxu0
  %v4698 = vadd.f32 %v4332, %v4697
  %v4699 = vpop.f32.mrf.mxu0
  %v4700 = vadd.f32 %v4336, %v4699
  %4701 = vmatprep.mubr.bf16.mxu0 %v4264
  %4702 = vmatmul.mubr.bf16.gmra.mxu0 %v4263
  %v4703 = vpop.f32.mrf.mxu0
  %v4704 = vadd.f32 %v4332, %v4703
  %v4705 = vpop.f32.mrf.mxu0
  %v4706 = vadd.f32 %v4336, %v4705
  %v4707 = vpop.f32.mrf.mxu0
  %v4708 = vadd.f32 %v4332, %v4707
  %v4709 = vpop.f32.mrf.mxu0
  %v4710 = vadd.f32 %v4336, %v4709
  %4711 = vmatprep.mubr.bf16.mxu0 %v4266
  %4712 = vmatmul.mubr.bf16.gmra.mxu0 %v4265
  %v4713 = vpop.f32.mrf.mxu0
  %v4714 = vadd.f32 %v4332, %v4713
  %v4715 = vpop.f32.mrf.mxu0
  %v4716 = vadd.f32 %v4336, %v4715
  %v4717 = vpop.f32.mrf.mxu0
  %v4718 = vadd.f32 %v4332, %v4717
  %v4719 = vpop.f32.mrf.mxu0
  %v4720 = vadd.f32 %v4336, %v4719
  %4721 = vmatprep.mubr.bf16.mxu0 %v4268
  %4722 = vmatmul.mubr.bf16.gmra.mxu0 %v4267
  %v4723 = vpop.f32.mrf.mxu0
  %v4724 = vadd.f32 %v4332, %v4723
  %v4725 = vpop.f32.mrf.mxu0
  %v4726 = vadd.f32 %v4336, %v4725
  %v4727 = vpop.f32.mrf.mxu0
  %v4728 = vadd.f32 %v4332, %v4727
  %v4729 = vpop.f32.mrf.mxu0
  %v4730 = vadd.f32 %v4336, %v4729
  %4731 = vmatprep.mubr.bf16.mxu0 %v4270
  %4732 = vmatmul.mubr.bf16.gmra.mxu0 %v4269
  %v4733 = vpop.f32.mrf.mxu0
  %v4734 = vadd.f32 %v4332, %v4733
  %v4735 = vpop.f32.mrf.mxu0
  %v4736 = vadd.f32 %v4336, %v4735
  %v4737 = vpop.f32.mrf.mxu0
  %v4738 = vadd.f32 %v4332, %v4737
  %v4739 = vpop.f32.mrf.mxu0
  %v4740 = vadd.f32 %v4336, %v4739
  %4741 = vmatprep.mubr.bf16.mxu0 %v4272
  %4742 = vmatmul.mubr.bf16.gmra.mxu0 %v4271
  %v4743 = vpop.f32.mrf.mxu0
  %v4744 = vadd.f32 %v4332, %v4743
  %v4745 = vpop.f32.mrf.mxu0
  %v4746 = vadd.f32 %v4336, %v4745
  %v4747 = vpop.f32.mrf.mxu0
  %v4748 = vadd.f32 %v4332, %v4747
  %v4749 = vpop.f32.mrf.mxu0
  %v4750 = vadd.f32 %v4336, %v4749
  %4751 = vmatprep.mubr.bf16.mxu0 %v4274
  %4752 = vmatmul.mubr.bf16.gmra.mxu0 %v4273
  %v4753 = vpop.f32.mrf.mxu0
  %v4754 = vadd.f32 %v4332, %v4753
  %v4755 = vpop.f32.mrf.mxu0
  %v4756 = vadd.f32 %v4336, %v4755
  %v4757 = vpop.f32.mrf.mxu0
  %v4758 = vadd.f32 %v4332, %v4757
  %v4759 = vpop.f32.mrf.mxu0
  %v4760 = vadd.f32 %v4336, %v4759
  %4761 = vmatprep.mubr.bf16.mxu0 %v4276
  %4762 = vmatmul.mubr.bf16.gmra.mxu0 %v4275
  %v4763 = vpop.f32.mrf.mxu0
  %v4764 = vadd.f32 %v4332, %v4763
  %v4765 = vpop.f32.mrf.mxu0
  %v4766 = vadd.f32 %v4336, %v4765
  %v4767 = vpop.f32.mrf.mxu0
  %v4768 = vadd.f32 %v4332, %v4767
  %v4769 = vpop.f32.mrf.mxu0
  %v4770 = vadd.f32 %v4336, %v4769
  %4771 = vmatprep.mubr.bf16.mxu0 %v4278
  %4772 = vmatmul.mubr.bf16.gmra.mxu0 %v4277
  %v4773 = vpop.f32.mrf.mxu0
  %v4774 = vadd.f32 %v4332, %v4773
  %v4775 = vpop.f32.mrf.mxu0
  %v4776 = vadd.f32 %v4336, %v4775
  %v4777 = vpop.f32.mrf.mxu0
  %v4778 = vadd.f32 %v4332, %v4777
  %v4779 = vpop.f32.mrf.mxu0
  %v4780 = vadd.f32 %v4336, %v4779
  %4781 = vmatprep.mubr.bf16.mxu0 %v4280
  %4782 = vmatmul.mubr.bf16.gmra.mxu0 %v4279
  %v4783 = vpop.f32.mrf.mxu0
  %v4784 = vadd.f32 %v4332, %v4783
  %v4785 = vpop.f32.mrf.mxu0
  %v4786 = vadd.f32 %v4336, %v4785
  %v4787 = vpop.f32.mrf.mxu0
  %v4788 = vadd.f32 %v4332, %v4787
  %v4789 = vpop.f32.mrf.mxu0
  %v4790 = vadd.f32 %v4336, %v4789
  %4791 = vmatprep.mubr.bf16.mxu0 %v4282
  %4792 = vmatmul.mubr.bf16.gmra.mxu0 %v4281
  %v4793 = vpop.f32.mrf.mxu0
  %v4794 = vadd.f32 %v4332, %v4793
  %v4795 = vpop.f32.mrf.mxu0
  %v4796 = vadd.f32 %v4336, %v4795
  %v4797 = vpop.f32.mrf.mxu0
  %v4798 = vadd.f32 %v4332, %v4797
  %v4799 = vpop.f32.mrf.mxu0
  %v4800 = vadd.f32 %v4336, %v4799
  %4801 = vmatprep.mubr.bf16.mxu0 %v4284
  %4802 = vmatmul.mubr.bf16.gmra.mxu0 %v4283
  %v4803 = vpop.f32.mrf.mxu0
  %v4804 = vadd.f32 %v4332, %v4803
  %v4805 = vpop.f32.mrf.mxu0
  %v4806 = vadd.f32 %v4336, %v4805
  %v4807 = vpop.f32.mrf.mxu0
  %v4808 = vadd.f32 %v4332, %v4807
  %v4809 = vpop.f32.mrf.mxu0
  %v4810 = vadd.f32 %v4336, %v4809
  %4811 = vmatprep.mubr.bf16.mxu0 %v4286
  %4812 = vmatmul.mubr.bf16.gmra.mxu0 %v4285
  %v4813 = vpop.f32.mrf.mxu0
  %v4814 = vadd.f32 %v4332, %v4813
  %v4815 = vpop.f32.mrf.mxu0
  %v4816 = vadd.f32 %v4336, %v4815
  %v4817 = vpop.f32.mrf.mxu0
  %v4818 = vadd.f32 %v4332, %v4817
  %v4819 = vpop.f32.mrf.mxu0
  %v4820 = vadd.f32 %v4336, %v4819
  %4821 = vmatprep.mubr.bf16.mxu0 %v4288
  %4822 = vmatmul.mubr.bf16.gmra.mxu0 %v4287
  %v4823 = vpop.f32.mrf.mxu0
  %v4824 = vadd.f32 %v4332, %v4823
  %v4825 = vpop.f32.mrf.mxu0
  %v4826 = vadd.f32 %v4336, %v4825
  %v4827 = vpop.f32.mrf.mxu0
  %v4828 = vadd.f32 %v4332, %v4827
  %v4829 = vpop.f32.mrf.mxu0
  %v4830 = vadd.f32 %v4336, %v4829
  %4831 = vmatprep.mubr.bf16.mxu0 %v4290
  %4832 = vmatmul.mubr.bf16.gmra.mxu0 %v4289
  %v4833 = vpop.f32.mrf.mxu0
  %v4834 = vadd.f32 %v4332, %v4833
  %v4835 = vpop.f32.mrf.mxu0
  %v4836 = vadd.f32 %v4336, %v4835
  %v4837 = vpop.f32.mrf.mxu0
  %v4838 = vadd.f32 %v4332, %v4837
  %v4839 = vpop.f32.mrf.mxu0
  %v4840 = vadd.f32 %v4336, %v4839
  %4841 = vmatprep.mubr.bf16.mxu0 %v4292
  %4842 = vmatmul.mubr.bf16.gmra.mxu0 %v4291
  %v4843 = vpop.f32.mrf.mxu0
  %v4844 = vadd.f32 %v4332, %v4843
  %v4845 = vpop.f32.mrf.mxu0
  %v4846 = vadd.f32 %v4336, %v4845
  %v4847 = vpop.f32.mrf.mxu0
  %v4848 = vadd.f32 %v4332, %v4847
  %v4849 = vpop.f32.mrf.mxu0
  %v4850 = vadd.f32 %v4336, %v4849
  %4851 = vdwg.mxu0
  %v4852 = vadd.f32 %v4534, %v640
  %v4853 = vadd.f32 %v4536, %v642
  %v4854 = vadd.f32 %v4538, %v644
  %v4855 = vadd.f32 %v4540, %v646
  %v4856 = vadd.f32 %v4544, %v650
  %v4857 = vadd.f32 %v4546, %v652
  %v4858 = vadd.f32 %v4548, %v654
  %v4859 = vadd.f32 %v4550, %v656
  %v4860 = vadd.f32 %v4554, %v660
  %v4861 = vadd.f32 %v4556, %v662
  %v4862 = vadd.f32 %v4558, %v664
  %v4863 = vadd.f32 %v4560, %v666
  %v4864 = vadd.f32 %v4564, %v670
  %v4865 = vadd.f32 %v4566, %v672
  %v4866 = vadd.f32 %v4568, %v674
  %v4867 = vadd.f32 %v4570, %v676
  %v4868 = vadd.f32 %v4574, %v680
  %v4869 = vadd.f32 %v4576, %v682
  %v4870 = vadd.f32 %v4578, %v684
  %v4871 = vadd.f32 %v4580, %v686
  %v4872 = vadd.f32 %v4584, %v690
  %v4873 = vadd.f32 %v4586, %v692
  %v4874 = vadd.f32 %v4588, %v694
  %v4875 = vadd.f32 %v4590, %v696
  %v4876 = vadd.f32 %v4594, %v700
  %v4877 = vadd.f32 %v4596, %v702
  %v4878 = vadd.f32 %v4598, %v704
  %v4879 = vadd.f32 %v4600, %v706
  %v4880 = vadd.f32 %v4604, %v710
  %v4881 = vadd.f32 %v4606, %v712
  %v4882 = vadd.f32 %v4608, %v714
  %v4883 = vadd.f32 %v4610, %v716
  %v4884 = vadd.f32 %v4614, %v720
  %v4885 = vadd.f32 %v4616, %v722
  %v4886 = vadd.f32 %v4618, %v724
  %v4887 = vadd.f32 %v4620, %v726
  %v4888 = vadd.f32 %v4624, %v730
  %v4889 = vadd.f32 %v4626, %v732
  %v4890 = vadd.f32 %v4628, %v734
  %v4891 = vadd.f32 %v4630, %v736
  %v4892 = vadd.f32 %v4634, %v740
  %v4893 = vadd.f32 %v4636, %v742
  %v4894 = vadd.f32 %v4638, %v744
  %v4895 = vadd.f32 %v4640, %v746
  %v4896 = vadd.f32 %v4644, %v750
  %v4897 = vadd.f32 %v4646, %v752
  %v4898 = vadd.f32 %v4648, %v754
  %v4899 = vadd.f32 %v4650, %v756
  %v4900 = vadd.f32 %v4654, %v760
  %v4901 = vadd.f32 %v4656, %v762
  %v4902 = vadd.f32 %v4658, %v764
  %v4903 = vadd.f32 %v4660, %v766
  %v4904 = vadd.f32 %v4664, %v770
  %v4905 = vadd.f32 %v4666, %v772
  %v4906 = vadd.f32 %v4668, %v774
  %v4907 = vadd.f32 %v4670, %v776
  %v4908 = vadd.f32 %v4674, %v780
  %v4909 = vadd.f32 %v4676, %v782
  %v4910 = vadd.f32 %v4678, %v784
  %v4911 = vadd.f32 %v4680, %v786
  %v4912 = vadd.f32 %v4684, %v790
  %v4913 = vadd.f32 %v4686, %v792
  %v4914 = vadd.f32 %v4688, %v794
  %v4915 = vadd.f32 %v4690, %v796
  %v4916 = vadd.f32 %v4694, %v800
  %v4917 = vadd.f32 %v4696, %v802
  %v4918 = vadd.f32 %v4698, %v804
  %v4919 = vadd.f32 %v4700, %v806
  %v4920 = vadd.f32 %v4704, %v810
  %v4921 = vadd.f32 %v4706, %v812
  %v4922 = vadd.f32 %v4708, %v814
  %v4923 = vadd.f32 %v4710, %v816
  %v4924 = vadd.f32 %v4714, %v820
  %v4925 = vadd.f32 %v4716, %v822
  %v4926 = vadd.f32 %v4718, %v824
  %v4927 = vadd.f32 %v4720, %v826
  %v4928 = vadd.f32 %v4724, %v830
  %v4929 = vadd.f32 %v4726, %v832
  %v4930 = vadd.f32 %v4728, %v834
  %v4931 = vadd.f32 %v4730, %v836
  %v4932 = vadd.f32 %v4734, %v840
  %v4933 = vadd.f32 %v4736, %v842
  %v4934 = vadd.f32 %v4738, %v844
  %v4935 = vadd.f32 %v4740, %v846
  %v4936 = vadd.f32 %v4744, %v850
  %v4937 = vadd.f32 %v4746, %v852
  %v4938 = vadd.f32 %v4748, %v854
  %v4939 = vadd.f32 %v4750, %v856
  %v4940 = vadd.f32 %v4754, %v860
  %v4941 = vadd.f32 %v4756, %v862
  %v4942 = vadd.f32 %v4758, %v864
  %v4943 = vadd.f32 %v4760, %v866
  %v4944 = vadd.f32 %v4764, %v870
  %v4945 = vadd.f32 %v4766, %v872
  %v4946 = vadd.f32 %v4768, %v874
  %v4947 = vadd.f32 %v4770, %v876
  %v4948 = vadd.f32 %v4774, %v880
  %v4949 = vadd.f32 %v4776, %v882
  %v4950 = vadd.f32 %v4778, %v884
  %v4951 = vadd.f32 %v4780, %v886
  %v4952 = vadd.f32 %v4784, %v890
  %v4953 = vadd.f32 %v4786, %v892
  %v4954 = vadd.f32 %v4788, %v894
  %v4955 = vadd.f32 %v4790, %v896
  %v4956 = vadd.f32 %v4794, %v900
  %v4957 = vadd.f32 %v4796, %v902
  %v4958 = vadd.f32 %v4798, %v904
  %v4959 = vadd.f32 %v4800, %v906
  %v4960 = vadd.f32 %v4804, %v910
  %v4961 = vadd.f32 %v4806, %v912
  %v4962 = vadd.f32 %v4808, %v914
  %v4963 = vadd.f32 %v4810, %v916
  %v4964 = vadd.f32 %v4814, %v920
  %v4965 = vadd.f32 %v4816, %v922
  %v4966 = vadd.f32 %v4818, %v924
  %v4967 = vadd.f32 %v4820, %v926
  %v4968 = vadd.f32 %v4824, %v930
  %v4969 = vadd.f32 %v4826, %v932
  %v4970 = vadd.f32 %v4828, %v934
  %v4971 = vadd.f32 %v4830, %v936
  %v4972 = vadd.f32 %v4834, %v940
  %v4973 = vadd.f32 %v4836, %v942
  %v4974 = vadd.f32 %v4838, %v944
  %v4975 = vadd.f32 %v4840, %v946
  %v4976 = vadd.f32 %v4844, %v950
  %v4977 = vadd.f32 %v4846, %v952
  %v4978 = vadd.f32 %v4848, %v954
  %v4979 = vadd.f32 %v4850, %v956
  %v4980 = vmax.f32 %v4852, 0.0
  %v4981 = vmax.f32 %v4853, 0.0
  %v4982 = vmax.f32 %v4854, 0.0
  %v4983 = vmax.f32 %v4855, 0.0
  %v4984 = vmax.f32 %v4856, 0.0
  %v4985 = vmax.f32 %v4857, 0.0
  %v4986 = vmax.f32 %v4858, 0.0
  %v4987 = vmax.f32 %v4859, 0.0
  %v4988 = vmax.f32 %v4860, 0.0
  %v4989 = vmax.f32 %v4861, 0.0
  %v4990 = vmax.f32 %v4862, 0.0
  %v4991 = vmax.f32 %v4863, 0.0
  %v4992 = vmax.f32 %v4864, 0.0
  %v4993 = vmax.f32 %v4865, 0.0
  %v4994 = vmax.f32 %v4866, 0.0
  %v4995 = vmax.f32 %v4867, 0.0
  %v4996 = vmax.f32 %v4868, 0.0
  %v4997 = vmax.f32 %v4869, 0.0
  %v4998 = vmax.f32 %v4870, 0.0
  %v4999 = vmax.f32 %v4871, 0.0
  %v5000 = vmax.f32 %v4872, 0.0
  %v5001 = vmax.f32 %v4873, 0.0
  %v5002 = vmax.f32 %v4874, 0.0
  %v5003 = vmax.f32 %v4875, 0.0
  %v5004 = vmax.f32 %v4876, 0.0
  %v5005 = vmax.f32 %v4877, 0.0
  %v5006 = vmax.f32 %v4878, 0.0
  %v5007 = vmax.f32 %v4879, 0.0
  %v5008 = vmax.f32 %v4880, 0.0
  %v5009 = vmax.f32 %v4881, 0.0
  %v5010 = vmax.f32 %v4882, 0.0
  %v5011 = vmax.f32 %v4883, 0.0
  %v5012 = vmax.f32 %v4884, 0.0
  %v5013 = vmax.f32 %v4885, 0.0
  %v5014 = vmax.f32 %v4886, 0.0
  %v5015 = vmax.f32 %v4887, 0.0
  %v5016 = vmax.f32 %v4888, 0.0
  %v5017 = vmax.f32 %v4889, 0.0
  %v5018 = vmax.f32 %v4890, 0.0
  %v5019 = vmax.f32 %v4891, 0.0
  %v5020 = vmax.f32 %v4892, 0.0
  %v5021 = vmax.f32 %v4893, 0.0
  %v5022 = vmax.f32 %v4894, 0.0
  %v5023 = vmax.f32 %v4895, 0.0
  %v5024 = vmax.f32 %v4896, 0.0
  %v5025 = vmax.f32 %v4897, 0.0
  %v5026 = vmax.f32 %v4898, 0.0
  %v5027 = vmax.f32 %v4899, 0.0
  %v5028 = vmax.f32 %v4900, 0.0
  %v5029 = vmax.f32 %v4901, 0.0
  %v5030 = vmax.f32 %v4902, 0.0
  %v5031 = vmax.f32 %v4903, 0.0
  %v5032 = vmax.f32 %v4904, 0.0
  %v5033 = vmax.f32 %v4905, 0.0
  %v5034 = vmax.f32 %v4906, 0.0
  %v5035 = vmax.f32 %v4907, 0.0
  %v5036 = vmax.f32 %v4908, 0.0
  %v5037 = vmax.f32 %v4909, 0.0
  %v5038 = vmax.f32 %v4910, 0.0
  %v5039 = vmax.f32 %v4911, 0.0
  %v5040 = vmax.f32 %v4912, 0.0
  %v5041 = vmax.f32 %v4913, 0.0
  %v5042 = vmax.f32 %v4914, 0.0
  %v5043 = vmax.f32 %v4915, 0.0
  %v5044 = vmax.f32 %v4916, 0.0
  %v5045 = vmax.f32 %v4917, 0.0
  %v5046 = vmax.f32 %v4918, 0.0
  %v5047 = vmax.f32 %v4919, 0.0
  %v5048 = vmax.f32 %v4920, 0.0
  %v5049 = vmax.f32 %v4921, 0.0
  %v5050 = vmax.f32 %v4922, 0.0
  %v5051 = vmax.f32 %v4923, 0.0
  %v5052 = vmax.f32 %v4924, 0.0
  %v5053 = vmax.f32 %v4925, 0.0
  %v5054 = vmax.f32 %v4926, 0.0
  %v5055 = vmax.f32 %v4927, 0.0
  %v5056 = vmax.f32 %v4928, 0.0
  %v5057 = vmax.f32 %v4929, 0.0
  %v5058 = vmax.f32 %v4930, 0.0
  %v5059 = vmax.f32 %v4931, 0.0
  %v5060 = vmax.f32 %v4932, 0.0
  %v5061 = vmax.f32 %v4933, 0.0
  %v5062 = vmax.f32 %v4934, 0.0
  %v5063 = vmax.f32 %v4935, 0.0
  %v5064 = vmax.f32 %v4936, 0.0
  %v5065 = vmax.f32 %v4937, 0.0
  %v5066 = vmax.f32 %v4938, 0.0
  %v5067 = vmax.f32 %v4939, 0.0
  %v5068 = vmax.f32 %v4940, 0.0
  %v5069 = vmax.f32 %v4941, 0.0
  %v5070 = vmax.f32 %v4942, 0.0
  %v5071 = vmax.f32 %v4943, 0.0
  %v5072 = vmax.f32 %v4944, 0.0
  %v5073 = vmax.f32 %v4945, 0.0
  %v5074 = vmax.f32 %v4946, 0.0
  %v5075 = vmax.f32 %v4947, 0.0
  %v5076 = vmax.f32 %v4948, 0.0
  %v5077 = vmax.f32 %v4949, 0.0
  %v5078 = vmax.f32 %v4950, 0.0
  %v5079 = vmax.f32 %v4951, 0.0
  %v5080 = vmax.f32 %v4952, 0.0
  %v5081 = vmax.f32 %v4953, 0.0
  %v5082 = vmax.f32 %v4954, 0.0
  %v5083 = vmax.f32 %v4955, 0.0
  %v5084 = vmax.f32 %v4956, 0.0
  %v5085 = vmax.f32 %v4957, 0.0
  %v5086 = vmax.f32 %v4958, 0.0
  %v5087 = vmax.f32 %v4959, 0.0
  %v5088 = vmax.f32 %v4960, 0.0
  %v5089 = vmax.f32 %v4961, 0.0
  %v5090 = vmax.f32 %v4962, 0.0
  %v5091 = vmax.f32 %v4963, 0.0
  %v5092 = vmax.f32 %v4964, 0.0
  %v5093 = vmax.f32 %v4965, 0.0
  %v5094 = vmax.f32 %v4966, 0.0
  %v5095 = vmax.f32 %v4967, 0.0
  %v5096 = vmax.f32 %v4968, 0.0
  %v5097 = vmax.f32 %v4969, 0.0
  %v5098 = vmax.f32 %v4970, 0.0
  %v5099 = vmax.f32 %v4971, 0.0
  %v5100 = vmax.f32 %v4972, 0.0
  %v5101 = vmax.f32 %v4973, 0.0
  %v5102 = vmax.f32 %v4974, 0.0
  %v5103 = vmax.f32 %v4975, 0.0
  %v5104 = vmax.f32 %v4976, 0.0
  %v5105 = vmax.f32 %v4977, 0.0
  %v5106 = vmax.f32 %v4978, 0.0
  %v5107 = vmax.f32 %v4979, 0.0
  %v5108 = vpack.c.bf16 %v4982, %v4980
  %v5109 = vpack.c.bf16 %v4983, %v4981
  %v5110 = vpack.c.bf16 %v4986, %v4984
  %v5111 = vpack.c.bf16 %v4987, %v4985
  %v5112 = vpack.c.bf16 %v4990, %v4988
  %v5113 = vpack.c.bf16 %v4991, %v4989
  %v5114 = vpack.c.bf16 %v4994, %v4992
  %v5115 = vpack.c.bf16 %v4995, %v4993
  %v5116 = vpack.c.bf16 %v4998, %v4996
  %v5117 = vpack.c.bf16 %v4999, %v4997
  %v5118 = vpack.c.bf16 %v5002, %v5000
  %v5119 = vpack.c.bf16 %v5003, %v5001
  %v5120 = vpack.c.bf16 %v5006, %v5004
  %v5121 = vpack.c.bf16 %v5007, %v5005
  %v5122 = vpack.c.bf16 %v5010, %v5008
  %v5123 = vpack.c.bf16 %v5011, %v5009
  %v5124 = vpack.c.bf16 %v5014, %v5012
  %v5125 = vpack.c.bf16 %v5015, %v5013
  %v5126 = vpack.c.bf16 %v5018, %v5016
  %v5127 = vpack.c.bf16 %v5019, %v5017
  %v5128 = vpack.c.bf16 %v5022, %v5020
  %v5129 = vpack.c.bf16 %v5023, %v5021
  %v5130 = vpack.c.bf16 %v5026, %v5024
  %v5131 = vpack.c.bf16 %v5027, %v5025
  %v5132 = vpack.c.bf16 %v5030, %v5028
  %v5133 = vpack.c.bf16 %v5031, %v5029
  %v5134 = vpack.c.bf16 %v5034, %v5032
  %v5135 = vpack.c.bf16 %v5035, %v5033
  %v5136 = vpack.c.bf16 %v5038, %v5036
  %v5137 = vpack.c.bf16 %v5039, %v5037
  %v5138 = vpack.c.bf16 %v5042, %v5040
  %v5139 = vpack.c.bf16 %v5043, %v5041
  %v5140 = vpack.c.bf16 %v5046, %v5044
  %v5141 = vpack.c.bf16 %v5047, %v5045
  %v5142 = vpack.c.bf16 %v5050, %v5048
  %v5143 = vpack.c.bf16 %v5051, %v5049
  %v5144 = vpack.c.bf16 %v5054, %v5052
  %v5145 = vpack.c.bf16 %v5055, %v5053
  %v5146 = vpack.c.bf16 %v5058, %v5056
  %v5147 = vpack.c.bf16 %v5059, %v5057
  %v5148 = vpack.c.bf16 %v5062, %v5060
  %v5149 = vpack.c.bf16 %v5063, %v5061
  %v5150 = vpack.c.bf16 %v5066, %v5064
  %v5151 = vpack.c.bf16 %v5067, %v5065
  %v5152 = vpack.c.bf16 %v5070, %v5068
  %v5153 = vpack.c.bf16 %v5071, %v5069
  %v5154 = vpack.c.bf16 %v5074, %v5072
  %v5155 = vpack.c.bf16 %v5075, %v5073
  %v5156 = vpack.c.bf16 %v5078, %v5076
  %v5157 = vpack.c.bf16 %v5079, %v5077
  %v5158 = vpack.c.bf16 %v5082, %v5080
  %v5159 = vpack.c.bf16 %v5083, %v5081
  %v5160 = vpack.c.bf16 %v5086, %v5084
  %v5161 = vpack.c.bf16 %v5087, %v5085
  %v5162 = vpack.c.bf16 %v5090, %v5088
  %v5163 = vpack.c.bf16 %v5091, %v5089
  %v5164 = vpack.c.bf16 %v5094, %v5092
  %v5165 = vpack.c.bf16 %v5095, %v5093
  %v5166 = vpack.c.bf16 %v5098, %v5096
  %v5167 = vpack.c.bf16 %v5099, %v5097
  %v5168 = vpack.c.bf16 %v5102, %v5100
  %v5169 = vpack.c.bf16 %v5103, %v5101
  %v5170 = vpack.c.bf16 %v5106, %v5104
  %v5171 = vpack.c.bf16 %v5107, %v5105
  %s5172 = scalar_lea.vmem %s2, 1280
  %v5173 = vld [vmem:[%s5172] sm:$0xff]
  %v5174 = vld [vmem:[%s5172 + $0x8] sm:$0xff]
  %v5175 = vld [vmem:[%s5172 + $0x10] sm:$0xff]
  %v5176 = vld [vmem:[%s5172 + $0x18] sm:$0xff]
  %v5177 = vld [vmem:[%s5172 + $0x20] sm:$0xff]
  %v5178 = vld [vmem:[%s5172 + $0x28] sm:$0xff]
  %v5179 = vld [vmem:[%s5172 + $0x30] sm:$0xff]
  %v5180 = vld [vmem:[%s5172 + $0x38] sm:$0xff]
  %v5181 = vld [vmem:[%s5172 + $0x40] sm:$0xff]
  %v5182 = vld [vmem:[%s5172 + $0x48] sm:$0xff]
  %v5183 = vld [vmem:[%s5172 + $0x50] sm:$0xff]
  %v5184 = vld [vmem:[%s5172 + $0x58] sm:$0xff]
  %v5185 = vld [vmem:[%s5172 + $0x60] sm:$0xff]
  %v5186 = vld [vmem:[%s5172 + $0x68] sm:$0xff]
  %v5187 = vld [vmem:[%s5172 + $0x70] sm:$0xff]
  %v5188 = vld [vmem:[%s5172 + $0x78] sm:$0xff]
  %v5189 = vld [vmem:[%s5172 + $0x80] sm:$0xff]
  %v5190 = vld [vmem:[%s5172 + $0x88] sm:$0xff]
  %v5191 = vld [vmem:[%s5172 + $0x90] sm:$0xff]
  %v5192 = vld [vmem:[%s5172 + $0x98] sm:$0xff]
  %v5193 = vld [vmem:[%s5172 + $0xa0] sm:$0xff]
  %v5194 = vld [vmem:[%s5172 + $0xa8] sm:$0xff]
  %v5195 = vld [vmem:[%s5172 + $0xb0] sm:$0xff]
  %v5196 = vld [vmem:[%s5172 + $0xb8] sm:$0xff]
  %v5197 = vld [vmem:[%s5172 + $0xc0] sm:$0xff]
  %v5198 = vld [vmem:[%s5172 + $0xc8] sm:$0xff]
  %v5199 = vld [vmem:[%s5172 + $0xd0] sm:$0xff]
  %v5200 = vld [vmem:[%s5172 + $0xd8] sm:$0xff]
  %v5201 = vld [vmem:[%s5172 + $0xe0] sm:$0xff]
  %v5202 = vld [vmem:[%s5172 + $0xe8] sm:$0xff]
  %v5203 = vld [vmem:[%s5172 + $0xf0] sm:$0xff]
  %v5204 = vld [vmem:[%s5172 + $0xf8] sm:$0xff]
  %s5205 = scalar_lea.vmem %s3, 6
  %v5206 = vld [vmem:[%s5205] ss:$8 sm:$0x3]
  %v5208 = vlaneseq
  %v5209 = vshrl.u32 %v5208, 7
  %v5210 = vsub.s32 0, %v5209
  %v5211 = vrot.slane %v5206, %v5210
  %v5212 = vlaneseq
  %v5213 = vshrl.u32 %v5212, 7
  %v5214 = vsub.s32 1, %v5213
  %v5215 = vrot.slane %v5206, %v5214
  %v5250 = vunpack.c.l.b16 %v5173
  %v5251 = vunpack.c.h.b16 %v5173
  %v5252 = vunpack.c.l.b16 %v5174
  %v5253 = vunpack.c.h.b16 %v5174
  %v5254 = vunpack.c.l.b16 %v5175
  %v5255 = vunpack.c.h.b16 %v5175
  %v5256 = vunpack.c.l.b16 %v5176
  %v5257 = vunpack.c.h.b16 %v5176
  %v5258 = vunpack.c.l.b16 %v5177
  %v5259 = vunpack.c.h.b16 %v5177
  %v5260 = vunpack.c.l.b16 %v5178
  %v5261 = vunpack.c.h.b16 %v5178
  %v5262 = vunpack.c.l.b16 %v5179
  %v5263 = vunpack.c.h.b16 %v5179
  %v5264 = vunpack.c.l.b16 %v5180
  %v5265 = vunpack.c.h.b16 %v5180
  %v5266 = vunpack.c.l.b16 %v5181
  %v5267 = vunpack.c.h.b16 %v5181
  %v5268 = vunpack.c.l.b16 %v5182
  %v5269 = vunpack.c.h.b16 %v5182
  %v5270 = vunpack.c.l.b16 %v5183
  %v5271 = vunpack.c.h.b16 %v5183
  %v5272 = vunpack.c.l.b16 %v5184
  %v5273 = vunpack.c.h.b16 %v5184
  %v5274 = vunpack.c.l.b16 %v5185
  %v5275 = vunpack.c.h.b16 %v5185
  %v5276 = vunpack.c.l.b16 %v5186
  %v5277 = vunpack.c.h.b16 %v5186
  %v5278 = vunpack.c.l.b16 %v5187
  %v5279 = vunpack.c.h.b16 %v5187
  %v5280 = vunpack.c.l.b16 %v5188
  %v5281 = vunpack.c.h.b16 %v5188
  %v5282 = vunpack.c.l.b16 %v5189
  %v5283 = vunpack.c.h.b16 %v5189
  %v5284 = vunpack.c.l.b16 %v5190
  %v5285 = vunpack.c.h.b16 %v5190
  %v5286 = vunpack.c.l.b16 %v5191
  %v5287 = vunpack.c.h.b16 %v5191
  %v5288 = vunpack.c.l.b16 %v5192
  %v5289 = vunpack.c.h.b16 %v5192
  %v5290 = vunpack.c.l.b16 %v5193
  %v5291 = vunpack.c.h.b16 %v5193
  %v5292 = vunpack.c.l.b16 %v5194
  %v5293 = vunpack.c.h.b16 %v5194
  %v5294 = vunpack.c.l.b16 %v5195
  %v5295 = vunpack.c.h.b16 %v5195
  %v5296 = vunpack.c.l.b16 %v5196
  %v5297 = vunpack.c.h.b16 %v5196
  %v5298 = vunpack.c.l.b16 %v5197
  %v5299 = vunpack.c.h.b16 %v5197
  %v5300 = vunpack.c.l.b16 %v5198
  %v5301 = vunpack.c.h.b16 %v5198
  %v5302 = vunpack.c.l.b16 %v5199
  %v5303 = vunpack.c.h.b16 %v5199
  %v5304 = vunpack.c.l.b16 %v5200
  %v5305 = vunpack.c.h.b16 %v5200
  %v5306 = vunpack.c.l.b16 %v5201
  %v5307 = vunpack.c.h.b16 %v5201
  %v5308 = vunpack.c.l.b16 %v5202
  %v5309 = vunpack.c.h.b16 %v5202
  %v5310 = vunpack.c.l.b16 %v5203
  %v5311 = vunpack.c.h.b16 %v5203
  %v5312 = vunpack.c.l.b16 %v5204
  %v5313 = vunpack.c.h.b16 %v5204
  %v5314 = vpack.c.b16 %v5252, %v5250
  %v5315 = vpack.c.b16 %v5253, %v5251
  %v5316 = vpack.c.b16 %v5256, %v5254
  %v5317 = vpack.c.b16 %v5257, %v5255
  %v5318 = vpack.c.b16 %v5260, %v5258
  %v5319 = vpack.c.b16 %v5261, %v5259
  %v5320 = vpack.c.b16 %v5264, %v5262
  %v5321 = vpack.c.b16 %v5265, %v5263
  %v5322 = vpack.c.b16 %v5268, %v5266
  %v5323 = vpack.c.b16 %v5269, %v5267
  %v5324 = vpack.c.b16 %v5272, %v5270
  %v5325 = vpack.c.b16 %v5273, %v5271
  %v5326 = vpack.c.b16 %v5276, %v5274
  %v5327 = vpack.c.b16 %v5277, %v5275
  %v5328 = vpack.c.b16 %v5280, %v5278
  %v5329 = vpack.c.b16 %v5281, %v5279
  %v5330 = vpack.c.b16 %v5284, %v5282
  %v5331 = vpack.c.b16 %v5285, %v5283
  %v5332 = vpack.c.b16 %v5288, %v5286
  %v5333 = vpack.c.b16 %v5289, %v5287
  %v5334 = vpack.c.b16 %v5292, %v5290
  %v5335 = vpack.c.b16 %v5293, %v5291
  %v5336 = vpack.c.b16 %v5296, %v5294
  %v5337 = vpack.c.b16 %v5297, %v5295
  %v5338 = vpack.c.b16 %v5300, %v5298
  %v5339 = vpack.c.b16 %v5301, %v5299
  %v5340 = vpack.c.b16 %v5304, %v5302
  %v5341 = vpack.c.b16 %v5305, %v5303
  %v5342 = vpack.c.b16 %v5308, %v5306
  %v5343 = vpack.c.b16 %v5309, %v5307
  %v5344 = vpack.c.b16 %v5312, %v5310
  %v5345 = vpack.c.b16 %v5313, %v5311
  %5378 = vmatprep.subr.bf16.mxu0 %v5329
  %5379 = vmatpush1.bf16.msra.mxu0 %v5328
  %5380 = vmatprep.subr.bf16.mxu0 %v5327
  %5381 = vmatpush1.bf16.msra.mxu0 %v5326
  %5382 = vmatprep.subr.bf16.mxu0 %v5325
  %5383 = vmatpush1.bf16.msra.mxu0 %v5324
  %5384 = vmatprep.subr.bf16.mxu0 %v5323
  %5385 = vmatpush1.bf16.msra.mxu0 %v5322
  %5386 = vmatprep.subr.bf16.mxu0 %v5321
  %5387 = vmatpush1.bf16.msra.mxu0 %v5320
  %5388 = vmatprep.subr.bf16.mxu0 %v5319
  %5389 = vmatpush1.bf16.msra.mxu0 %v5318
  %5390 = vmatprep.subr.bf16.mxu0 %v5317
  %5391 = vmatpush1.bf16.msra.mxu0 %v5316
  %5392 = vmatprep.subr.bf16.mxu0 %v5315
  %5393 = vmatpush1.bf16.msra.mxu0 %v5314
  %5394 = vmatprep.subr.bf16.mxu0 %v5345
  %5395 = vmatpush2.bf16.msra.mxu0 %v5344
  %5396 = vmatprep.subr.bf16.mxu0 %v5343
  %5397 = vmatpush2.bf16.msra.mxu0 %v5342
  %5398 = vmatprep.subr.bf16.mxu0 %v5341
  %5399 = vmatpush2.bf16.msra.mxu0 %v5340
  %5400 = vmatprep.subr.bf16.mxu0 %v5339
  %5401 = vmatpush2.bf16.msra.mxu0 %v5338
  %5402 = vmatprep.subr.bf16.mxu0 %v5337
  %5403 = vmatpush2.bf16.msra.mxu0 %v5336
  %5404 = vmatprep.subr.bf16.mxu0 %v5335
  %5405 = vmatpush2.bf16.msra.mxu0 %v5334
  %5406 = vmatprep.subr.bf16.mxu0 %v5333
  %5407 = vmatpush2.bf16.msra.mxu0 %v5332
  %5408 = vmatprep.subr.bf16.mxu0 %v5331
  %5409 = vmatpush2.bf16.msra.mxu0 %v5330
  %5410 = vmatprep.mubr.bf16.mxu0 %v5109
  %5411 = vmatmul.mubr.bf16.gmra.mxu0 %v5108
  %v5412 = vpop.f32.mrf.mxu0
  %v5413 = vadd.f32 %v5211, %v5412
  %v5414 = vpop.f32.mrf.mxu0
  %v5415 = vadd.f32 %v5215, %v5414
  %v5416 = vpop.f32.mrf.mxu0
  %v5417 = vadd.f32 %v5211, %v5416
  %v5418 = vpop.f32.mrf.mxu0
  %v5419 = vadd.f32 %v5215, %v5418
  %5420 = vmatprep.mubr.bf16.mxu0 %v5111
  %5421 = vmatmul.mubr.bf16.gmra.mxu0 %v5110
  %v5422 = vpop.f32.mrf.mxu0
  %v5423 = vadd.f32 %v5211, %v5422
  %v5424 = vpop.f32.mrf.mxu0
  %v5425 = vadd.f32 %v5215, %v5424
  %v5426 = vpop.f32.mrf.mxu0
  %v5427 = vadd.f32 %v5211, %v5426
  %v5428 = vpop.f32.mrf.mxu0
  %v5429 = vadd.f32 %v5215, %v5428
  %5430 = vmatprep.mubr.bf16.mxu0 %v5113
  %5431 = vmatmul.mubr.bf16.gmra.mxu0 %v5112
  %v5432 = vpop.f32.mrf.mxu0
  %v5433 = vadd.f32 %v5211, %v5432
  %v5434 = vpop.f32.mrf.mxu0
  %v5435 = vadd.f32 %v5215, %v5434
  %v5436 = vpop.f32.mrf.mxu0
  %v5437 = vadd.f32 %v5211, %v5436
  %v5438 = vpop.f32.mrf.mxu0
  %v5439 = vadd.f32 %v5215, %v5438
  %5440 = vmatprep.mubr.bf16.mxu0 %v5115
  %5441 = vmatmul.mubr.bf16.gmra.mxu0 %v5114
  %v5442 = vpop.f32.mrf.mxu0
  %v5443 = vadd.f32 %v5211, %v5442
  %v5444 = vpop.f32.mrf.mxu0
  %v5445 = vadd.f32 %v5215, %v5444
  %v5446 = vpop.f32.mrf.mxu0
  %v5447 = vadd.f32 %v5211, %v5446
  %v5448 = vpop.f32.mrf.mxu0
  %v5449 = vadd.f32 %v5215, %v5448
  %5450 = vmatprep.mubr.bf16.mxu0 %v5117
  %5451 = vmatmul.mubr.bf16.gmra.mxu0 %v5116
  %v5452 = vpop.f32.mrf.mxu0
  %v5453 = vadd.f32 %v5211, %v5452
  %v5454 = vpop.f32.mrf.mxu0
  %v5455 = vadd.f32 %v5215, %v5454
  %v5456 = vpop.f32.mrf.mxu0
  %v5457 = vadd.f32 %v5211, %v5456
  %v5458 = vpop.f32.mrf.mxu0
  %v5459 = vadd.f32 %v5215, %v5458
  %5460 = vmatprep.mubr.bf16.mxu0 %v5119
  %5461 = vmatmul.mubr.bf16.gmra.mxu0 %v5118
  %v5462 = vpop.f32.mrf.mxu0
  %v5463 = vadd.f32 %v5211, %v5462
  %v5464 = vpop.f32.mrf.mxu0
  %v5465 = vadd.f32 %v5215, %v5464
  %v5466 = vpop.f32.mrf.mxu0
  %v5467 = vadd.f32 %v5211, %v5466
  %v5468 = vpop.f32.mrf.mxu0
  %v5469 = vadd.f32 %v5215, %v5468
  %5470 = vmatprep.mubr.bf16.mxu0 %v5121
  %5471 = vmatmul.mubr.bf16.gmra.mxu0 %v5120
  %v5472 = vpop.f32.mrf.mxu0
  %v5473 = vadd.f32 %v5211, %v5472
  %v5474 = vpop.f32.mrf.mxu0
  %v5475 = vadd.f32 %v5215, %v5474
  %v5476 = vpop.f32.mrf.mxu0
  %v5477 = vadd.f32 %v5211, %v5476
  %v5478 = vpop.f32.mrf.mxu0
  %v5479 = vadd.f32 %v5215, %v5478
  %5480 = vmatprep.mubr.bf16.mxu0 %v5123
  %5481 = vmatmul.mubr.bf16.gmra.mxu0 %v5122
  %v5482 = vpop.f32.mrf.mxu0
  %v5483 = vadd.f32 %v5211, %v5482
  %v5484 = vpop.f32.mrf.mxu0
  %v5485 = vadd.f32 %v5215, %v5484
  %v5486 = vpop.f32.mrf.mxu0
  %v5487 = vadd.f32 %v5211, %v5486
  %v5488 = vpop.f32.mrf.mxu0
  %v5489 = vadd.f32 %v5215, %v5488
  %5490 = vmatprep.mubr.bf16.mxu0 %v5125
  %5491 = vmatmul.mubr.bf16.gmra.mxu0 %v5124
  %v5492 = vpop.f32.mrf.mxu0
  %v5493 = vadd.f32 %v5211, %v5492
  %v5494 = vpop.f32.mrf.mxu0
  %v5495 = vadd.f32 %v5215, %v5494
  %v5496 = vpop.f32.mrf.mxu0
  %v5497 = vadd.f32 %v5211, %v5496
  %v5498 = vpop.f32.mrf.mxu0
  %v5499 = vadd.f32 %v5215, %v5498
  %5500 = vmatprep.mubr.bf16.mxu0 %v5127
  %5501 = vmatmul.mubr.bf16.gmra.mxu0 %v5126
  %v5502 = vpop.f32.mrf.mxu0
  %v5503 = vadd.f32 %v5211, %v5502
  %v5504 = vpop.f32.mrf.mxu0
  %v5505 = vadd.f32 %v5215, %v5504
  %v5506 = vpop.f32.mrf.mxu0
  %v5507 = vadd.f32 %v5211, %v5506
  %v5508 = vpop.f32.mrf.mxu0
  %v5509 = vadd.f32 %v5215, %v5508
  %5510 = vmatprep.mubr.bf16.mxu0 %v5129
  %5511 = vmatmul.mubr.bf16.gmra.mxu0 %v5128
  %v5512 = vpop.f32.mrf.mxu0
  %v5513 = vadd.f32 %v5211, %v5512
  %v5514 = vpop.f32.mrf.mxu0
  %v5515 = vadd.f32 %v5215, %v5514
  %v5516 = vpop.f32.mrf.mxu0
  %v5517 = vadd.f32 %v5211, %v5516
  %v5518 = vpop.f32.mrf.mxu0
  %v5519 = vadd.f32 %v5215, %v5518
  %5520 = vmatprep.mubr.bf16.mxu0 %v5131
  %5521 = vmatmul.mubr.bf16.gmra.mxu0 %v5130
  %v5522 = vpop.f32.mrf.mxu0
  %v5523 = vadd.f32 %v5211, %v5522
  %v5524 = vpop.f32.mrf.mxu0
  %v5525 = vadd.f32 %v5215, %v5524
  %v5526 = vpop.f32.mrf.mxu0
  %v5527 = vadd.f32 %v5211, %v5526
  %v5528 = vpop.f32.mrf.mxu0
  %v5529 = vadd.f32 %v5215, %v5528
  %5530 = vmatprep.mubr.bf16.mxu0 %v5133
  %5531 = vmatmul.mubr.bf16.gmra.mxu0 %v5132
  %v5532 = vpop.f32.mrf.mxu0
  %v5533 = vadd.f32 %v5211, %v5532
  %v5534 = vpop.f32.mrf.mxu0
  %v5535 = vadd.f32 %v5215, %v5534
  %v5536 = vpop.f32.mrf.mxu0
  %v5537 = vadd.f32 %v5211, %v5536
  %v5538 = vpop.f32.mrf.mxu0
  %v5539 = vadd.f32 %v5215, %v5538
  %5540 = vmatprep.mubr.bf16.mxu0 %v5135
  %5541 = vmatmul.mubr.bf16.gmra.mxu0 %v5134
  %v5542 = vpop.f32.mrf.mxu0
  %v5543 = vadd.f32 %v5211, %v5542
  %v5544 = vpop.f32.mrf.mxu0
  %v5545 = vadd.f32 %v5215, %v5544
  %v5546 = vpop.f32.mrf.mxu0
  %v5547 = vadd.f32 %v5211, %v5546
  %v5548 = vpop.f32.mrf.mxu0
  %v5549 = vadd.f32 %v5215, %v5548
  %5550 = vmatprep.mubr.bf16.mxu0 %v5137
  %5551 = vmatmul.mubr.bf16.gmra.mxu0 %v5136
  %v5552 = vpop.f32.mrf.mxu0
  %v5553 = vadd.f32 %v5211, %v5552
  %v5554 = vpop.f32.mrf.mxu0
  %v5555 = vadd.f32 %v5215, %v5554
  %v5556 = vpop.f32.mrf.mxu0
  %v5557 = vadd.f32 %v5211, %v5556
  %v5558 = vpop.f32.mrf.mxu0
  %v5559 = vadd.f32 %v5215, %v5558
  %5560 = vmatprep.mubr.bf16.mxu0 %v5139
  %5561 = vmatmul.mubr.bf16.gmra.mxu0 %v5138
  %v5562 = vpop.f32.mrf.mxu0
  %v5563 = vadd.f32 %v5211, %v5562
  %v5564 = vpop.f32.mrf.mxu0
  %v5565 = vadd.f32 %v5215, %v5564
  %v5566 = vpop.f32.mrf.mxu0
  %v5567 = vadd.f32 %v5211, %v5566
  %v5568 = vpop.f32.mrf.mxu0
  %v5569 = vadd.f32 %v5215, %v5568
  %5570 = vmatprep.mubr.bf16.mxu0 %v5141
  %5571 = vmatmul.mubr.bf16.gmra.mxu0 %v5140
  %v5572 = vpop.f32.mrf.mxu0
  %v5573 = vadd.f32 %v5211, %v5572
  %v5574 = vpop.f32.mrf.mxu0
  %v5575 = vadd.f32 %v5215, %v5574
  %v5576 = vpop.f32.mrf.mxu0
  %v5577 = vadd.f32 %v5211, %v5576
  %v5578 = vpop.f32.mrf.mxu0
  %v5579 = vadd.f32 %v5215, %v5578
  %5580 = vmatprep.mubr.bf16.mxu0 %v5143
  %5581 = vmatmul.mubr.bf16.gmra.mxu0 %v5142
  %v5582 = vpop.f32.mrf.mxu0
  %v5583 = vadd.f32 %v5211, %v5582
  %v5584 = vpop.f32.mrf.mxu0
  %v5585 = vadd.f32 %v5215, %v5584
  %v5586 = vpop.f32.mrf.mxu0
  %v5587 = vadd.f32 %v5211, %v5586
  %v5588 = vpop.f32.mrf.mxu0
  %v5589 = vadd.f32 %v5215, %v5588
  %5590 = vmatprep.mubr.bf16.mxu0 %v5145
  %5591 = vmatmul.mubr.bf16.gmra.mxu0 %v5144
  %v5592 = vpop.f32.mrf.mxu0
  %v5593 = vadd.f32 %v5211, %v5592
  %v5594 = vpop.f32.mrf.mxu0
  %v5595 = vadd.f32 %v5215, %v5594
  %v5596 = vpop.f32.mrf.mxu0
  %v5597 = vadd.f32 %v5211, %v5596
  %v5598 = vpop.f32.mrf.mxu0
  %v5599 = vadd.f32 %v5215, %v5598
  %5600 = vmatprep.mubr.bf16.mxu0 %v5147
  %5601 = vmatmul.mubr.bf16.gmra.mxu0 %v5146
  %v5602 = vpop.f32.mrf.mxu0
  %v5603 = vadd.f32 %v5211, %v5602
  %v5604 = vpop.f32.mrf.mxu0
  %v5605 = vadd.f32 %v5215, %v5604
  %v5606 = vpop.f32.mrf.mxu0
  %v5607 = vadd.f32 %v5211, %v5606
  %v5608 = vpop.f32.mrf.mxu0
  %v5609 = vadd.f32 %v5215, %v5608
  %5610 = vmatprep.mubr.bf16.mxu0 %v5149
  %5611 = vmatmul.mubr.bf16.gmra.mxu0 %v5148
  %v5612 = vpop.f32.mrf.mxu0
  %v5613 = vadd.f32 %v5211, %v5612
  %v5614 = vpop.f32.mrf.mxu0
  %v5615 = vadd.f32 %v5215, %v5614
  %v5616 = vpop.f32.mrf.mxu0
  %v5617 = vadd.f32 %v5211, %v5616
  %v5618 = vpop.f32.mrf.mxu0
  %v5619 = vadd.f32 %v5215, %v5618
  %5620 = vmatprep.mubr.bf16.mxu0 %v5151
  %5621 = vmatmul.mubr.bf16.gmra.mxu0 %v5150
  %v5622 = vpop.f32.mrf.mxu0
  %v5623 = vadd.f32 %v5211, %v5622
  %v5624 = vpop.f32.mrf.mxu0
  %v5625 = vadd.f32 %v5215, %v5624
  %v5626 = vpop.f32.mrf.mxu0
  %v5627 = vadd.f32 %v5211, %v5626
  %v5628 = vpop.f32.mrf.mxu0
  %v5629 = vadd.f32 %v5215, %v5628
  %5630 = vmatprep.mubr.bf16.mxu0 %v5153
  %5631 = vmatmul.mubr.bf16.gmra.mxu0 %v5152
  %v5632 = vpop.f32.mrf.mxu0
  %v5633 = vadd.f32 %v5211, %v5632
  %v5634 = vpop.f32.mrf.mxu0
  %v5635 = vadd.f32 %v5215, %v5634
  %v5636 = vpop.f32.mrf.mxu0
  %v5637 = vadd.f32 %v5211, %v5636
  %v5638 = vpop.f32.mrf.mxu0
  %v5639 = vadd.f32 %v5215, %v5638
  %5640 = vmatprep.mubr.bf16.mxu0 %v5155
  %5641 = vmatmul.mubr.bf16.gmra.mxu0 %v5154
  %v5642 = vpop.f32.mrf.mxu0
  %v5643 = vadd.f32 %v5211, %v5642
  %v5644 = vpop.f32.mrf.mxu0
  %v5645 = vadd.f32 %v5215, %v5644
  %v5646 = vpop.f32.mrf.mxu0
  %v5647 = vadd.f32 %v5211, %v5646
  %v5648 = vpop.f32.mrf.mxu0
  %v5649 = vadd.f32 %v5215, %v5648
  %5650 = vmatprep.mubr.bf16.mxu0 %v5157
  %5651 = vmatmul.mubr.bf16.gmra.mxu0 %v5156
  %v5652 = vpop.f32.mrf.mxu0
  %v5653 = vadd.f32 %v5211, %v5652
  %v5654 = vpop.f32.mrf.mxu0
  %v5655 = vadd.f32 %v5215, %v5654
  %v5656 = vpop.f32.mrf.mxu0
  %v5657 = vadd.f32 %v5211, %v5656
  %v5658 = vpop.f32.mrf.mxu0
  %v5659 = vadd.f32 %v5215, %v5658
  %5660 = vmatprep.mubr.bf16.mxu0 %v5159
  %5661 = vmatmul.mubr.bf16.gmra.mxu0 %v5158
  %v5662 = vpop.f32.mrf.mxu0
  %v5663 = vadd.f32 %v5211, %v5662
  %v5664 = vpop.f32.mrf.mxu0
  %v5665 = vadd.f32 %v5215, %v5664
  %v5666 = vpop.f32.mrf.mxu0
  %v5667 = vadd.f32 %v5211, %v5666
  %v5668 = vpop.f32.mrf.mxu0
  %v5669 = vadd.f32 %v5215, %v5668
  %5670 = vmatprep.mubr.bf16.mxu0 %v5161
  %5671 = vmatmul.mubr.bf16.gmra.mxu0 %v5160
  %v5672 = vpop.f32.mrf.mxu0
  %v5673 = vadd.f32 %v5211, %v5672
  %v5674 = vpop.f32.mrf.mxu0
  %v5675 = vadd.f32 %v5215, %v5674
  %v5676 = vpop.f32.mrf.mxu0
  %v5677 = vadd.f32 %v5211, %v5676
  %v5678 = vpop.f32.mrf.mxu0
  %v5679 = vadd.f32 %v5215, %v5678
  %5680 = vmatprep.mubr.bf16.mxu0 %v5163
  %5681 = vmatmul.mubr.bf16.gmra.mxu0 %v5162
  %v5682 = vpop.f32.mrf.mxu0
  %v5683 = vadd.f32 %v5211, %v5682
  %v5684 = vpop.f32.mrf.mxu0
  %v5685 = vadd.f32 %v5215, %v5684
  %v5686 = vpop.f32.mrf.mxu0
  %v5687 = vadd.f32 %v5211, %v5686
  %v5688 = vpop.f32.mrf.mxu0
  %v5689 = vadd.f32 %v5215, %v5688
  %5690 = vmatprep.mubr.bf16.mxu0 %v5165
  %5691 = vmatmul.mubr.bf16.gmra.mxu0 %v5164
  %v5692 = vpop.f32.mrf.mxu0
  %v5693 = vadd.f32 %v5211, %v5692
  %v5694 = vpop.f32.mrf.mxu0
  %v5695 = vadd.f32 %v5215, %v5694
  %v5696 = vpop.f32.mrf.mxu0
  %v5697 = vadd.f32 %v5211, %v5696
  %v5698 = vpop.f32.mrf.mxu0
  %v5699 = vadd.f32 %v5215, %v5698
  %5700 = vmatprep.mubr.bf16.mxu0 %v5167
  %5701 = vmatmul.mubr.bf16.gmra.mxu0 %v5166
  %v5702 = vpop.f32.mrf.mxu0
  %v5703 = vadd.f32 %v5211, %v5702
  %v5704 = vpop.f32.mrf.mxu0
  %v5705 = vadd.f32 %v5215, %v5704
  %v5706 = vpop.f32.mrf.mxu0
  %v5707 = vadd.f32 %v5211, %v5706
  %v5708 = vpop.f32.mrf.mxu0
  %v5709 = vadd.f32 %v5215, %v5708
  %5710 = vmatprep.mubr.bf16.mxu0 %v5169
  %5711 = vmatmul.mubr.bf16.gmra.mxu0 %v5168
  %v5712 = vpop.f32.mrf.mxu0
  %v5713 = vadd.f32 %v5211, %v5712
  %v5714 = vpop.f32.mrf.mxu0
  %v5715 = vadd.f32 %v5215, %v5714
  %v5716 = vpop.f32.mrf.mxu0
  %v5717 = vadd.f32 %v5211, %v5716
  %v5718 = vpop.f32.mrf.mxu0
  %v5719 = vadd.f32 %v5215, %v5718
  %5720 = vmatprep.mubr.bf16.mxu0 %v5171
  %5721 = vmatmul.mubr.bf16.gmra.mxu0 %v5170
  %v5722 = vpop.f32.mrf.mxu0
  %v5723 = vadd.f32 %v5211, %v5722
  %v5724 = vpop.f32.mrf.mxu0
  %v5725 = vadd.f32 %v5215, %v5724
  %v5726 = vpop.f32.mrf.mxu0
  %v5727 = vadd.f32 %v5211, %v5726
  %v5728 = vpop.f32.mrf.mxu0
  %v5729 = vadd.f32 %v5215, %v5728
  %5730 = vdwg.mxu0
  %v5731 = vmax.f32 %v5413, 0.0
  %v5732 = vmax.f32 %v5415, 0.0
  %v5733 = vmax.f32 %v5417, 0.0
  %v5734 = vmax.f32 %v5419, 0.0
  %v5735 = vmax.f32 %v5423, 0.0
  %v5736 = vmax.f32 %v5425, 0.0
  %v5737 = vmax.f32 %v5427, 0.0
  %v5738 = vmax.f32 %v5429, 0.0
  %v5739 = vmax.f32 %v5433, 0.0
  %v5740 = vmax.f32 %v5435, 0.0
  %v5741 = vmax.f32 %v5437, 0.0
  %v5742 = vmax.f32 %v5439, 0.0
  %v5743 = vmax.f32 %v5443, 0.0
  %v5744 = vmax.f32 %v5445, 0.0
  %v5745 = vmax.f32 %v5447, 0.0
  %v5746 = vmax.f32 %v5449, 0.0
  %v5747 = vmax.f32 %v5453, 0.0
  %v5748 = vmax.f32 %v5455, 0.0
  %v5749 = vmax.f32 %v5457, 0.0
  %v5750 = vmax.f32 %v5459, 0.0
  %v5751 = vmax.f32 %v5463, 0.0
  %v5752 = vmax.f32 %v5465, 0.0
  %v5753 = vmax.f32 %v5467, 0.0
  %v5754 = vmax.f32 %v5469, 0.0
  %v5755 = vmax.f32 %v5473, 0.0
  %v5756 = vmax.f32 %v5475, 0.0
  %v5757 = vmax.f32 %v5477, 0.0
  %v5758 = vmax.f32 %v5479, 0.0
  %v5759 = vmax.f32 %v5483, 0.0
  %v5760 = vmax.f32 %v5485, 0.0
  %v5761 = vmax.f32 %v5487, 0.0
  %v5762 = vmax.f32 %v5489, 0.0
  %v5763 = vmax.f32 %v5493, 0.0
  %v5764 = vmax.f32 %v5495, 0.0
  %v5765 = vmax.f32 %v5497, 0.0
  %v5766 = vmax.f32 %v5499, 0.0
  %v5767 = vmax.f32 %v5503, 0.0
  %v5768 = vmax.f32 %v5505, 0.0
  %v5769 = vmax.f32 %v5507, 0.0
  %v5770 = vmax.f32 %v5509, 0.0
  %v5771 = vmax.f32 %v5513, 0.0
  %v5772 = vmax.f32 %v5515, 0.0
  %v5773 = vmax.f32 %v5517, 0.0
  %v5774 = vmax.f32 %v5519, 0.0
  %v5775 = vmax.f32 %v5523, 0.0
  %v5776 = vmax.f32 %v5525, 0.0
  %v5777 = vmax.f32 %v5527, 0.0
  %v5778 = vmax.f32 %v5529, 0.0
  %v5779 = vmax.f32 %v5533, 0.0
  %v5780 = vmax.f32 %v5535, 0.0
  %v5781 = vmax.f32 %v5537, 0.0
  %v5782 = vmax.f32 %v5539, 0.0
  %v5783 = vmax.f32 %v5543, 0.0
  %v5784 = vmax.f32 %v5545, 0.0
  %v5785 = vmax.f32 %v5547, 0.0
  %v5786 = vmax.f32 %v5549, 0.0
  %v5787 = vmax.f32 %v5553, 0.0
  %v5788 = vmax.f32 %v5555, 0.0
  %v5789 = vmax.f32 %v5557, 0.0
  %v5790 = vmax.f32 %v5559, 0.0
  %v5791 = vmax.f32 %v5563, 0.0
  %v5792 = vmax.f32 %v5565, 0.0
  %v5793 = vmax.f32 %v5567, 0.0
  %v5794 = vmax.f32 %v5569, 0.0
  %v5795 = vmax.f32 %v5573, 0.0
  %v5796 = vmax.f32 %v5575, 0.0
  %v5797 = vmax.f32 %v5577, 0.0
  %v5798 = vmax.f32 %v5579, 0.0
  %v5799 = vmax.f32 %v5583, 0.0
  %v5800 = vmax.f32 %v5585, 0.0
  %v5801 = vmax.f32 %v5587, 0.0
  %v5802 = vmax.f32 %v5589, 0.0
  %v5803 = vmax.f32 %v5593, 0.0
  %v5804 = vmax.f32 %v5595, 0.0
  %v5805 = vmax.f32 %v5597, 0.0
  %v5806 = vmax.f32 %v5599, 0.0
  %v5807 = vmax.f32 %v5603, 0.0
  %v5808 = vmax.f32 %v5605, 0.0
  %v5809 = vmax.f32 %v5607, 0.0
  %v5810 = vmax.f32 %v5609, 0.0
  %v5811 = vmax.f32 %v5613, 0.0
  %v5812 = vmax.f32 %v5615, 0.0
  %v5813 = vmax.f32 %v5617, 0.0
  %v5814 = vmax.f32 %v5619, 0.0
  %v5815 = vmax.f32 %v5623, 0.0
  %v5816 = vmax.f32 %v5625, 0.0
  %v5817 = vmax.f32 %v5627, 0.0
  %v5818 = vmax.f32 %v5629, 0.0
  %v5819 = vmax.f32 %v5633, 0.0
  %v5820 = vmax.f32 %v5635, 0.0
  %v5821 = vmax.f32 %v5637, 0.0
  %v5822 = vmax.f32 %v5639, 0.0
  %v5823 = vmax.f32 %v5643, 0.0
  %v5824 = vmax.f32 %v5645, 0.0
  %v5825 = vmax.f32 %v5647, 0.0
  %v5826 = vmax.f32 %v5649, 0.0
  %v5827 = vmax.f32 %v5653, 0.0
  %v5828 = vmax.f32 %v5655, 0.0
  %v5829 = vmax.f32 %v5657, 0.0
  %v5830 = vmax.f32 %v5659, 0.0
  %v5831 = vmax.f32 %v5663, 0.0
  %v5832 = vmax.f32 %v5665, 0.0
  %v5833 = vmax.f32 %v5667, 0.0
  %v5834 = vmax.f32 %v5669, 0.0
  %v5835 = vmax.f32 %v5673, 0.0
  %v5836 = vmax.f32 %v5675, 0.0
  %v5837 = vmax.f32 %v5677, 0.0
  %v5838 = vmax.f32 %v5679, 0.0
  %v5839 = vmax.f32 %v5683, 0.0
  %v5840 = vmax.f32 %v5685, 0.0
  %v5841 = vmax.f32 %v5687, 0.0
  %v5842 = vmax.f32 %v5689, 0.0
  %v5843 = vmax.f32 %v5693, 0.0
  %v5844 = vmax.f32 %v5695, 0.0
  %v5845 = vmax.f32 %v5697, 0.0
  %v5846 = vmax.f32 %v5699, 0.0
  %v5847 = vmax.f32 %v5703, 0.0
  %v5848 = vmax.f32 %v5705, 0.0
  %v5849 = vmax.f32 %v5707, 0.0
  %v5850 = vmax.f32 %v5709, 0.0
  %v5851 = vmax.f32 %v5713, 0.0
  %v5852 = vmax.f32 %v5715, 0.0
  %v5853 = vmax.f32 %v5717, 0.0
  %v5854 = vmax.f32 %v5719, 0.0
  %v5855 = vmax.f32 %v5723, 0.0
  %v5856 = vmax.f32 %v5725, 0.0
  %v5857 = vmax.f32 %v5727, 0.0
  %v5858 = vmax.f32 %v5729, 0.0
  %v5859 = vpack.c.bf16 %v5733, %v5731
  %v5860 = vpack.c.bf16 %v5734, %v5732
  %v5861 = vpack.c.bf16 %v5737, %v5735
  %v5862 = vpack.c.bf16 %v5738, %v5736
  %v5863 = vpack.c.bf16 %v5741, %v5739
  %v5864 = vpack.c.bf16 %v5742, %v5740
  %v5865 = vpack.c.bf16 %v5745, %v5743
  %v5866 = vpack.c.bf16 %v5746, %v5744
  %v5867 = vpack.c.bf16 %v5749, %v5747
  %v5868 = vpack.c.bf16 %v5750, %v5748
  %v5869 = vpack.c.bf16 %v5753, %v5751
  %v5870 = vpack.c.bf16 %v5754, %v5752
  %v5871 = vpack.c.bf16 %v5757, %v5755
  %v5872 = vpack.c.bf16 %v5758, %v5756
  %v5873 = vpack.c.bf16 %v5761, %v5759
  %v5874 = vpack.c.bf16 %v5762, %v5760
  %v5875 = vpack.c.bf16 %v5765, %v5763
  %v5876 = vpack.c.bf16 %v5766, %v5764
  %v5877 = vpack.c.bf16 %v5769, %v5767
  %v5878 = vpack.c.bf16 %v5770, %v5768
  %v5879 = vpack.c.bf16 %v5773, %v5771
  %v5880 = vpack.c.bf16 %v5774, %v5772
  %v5881 = vpack.c.bf16 %v5777, %v5775
  %v5882 = vpack.c.bf16 %v5778, %v5776
  %v5883 = vpack.c.bf16 %v5781, %v5779
  %v5884 = vpack.c.bf16 %v5782, %v5780
  %v5885 = vpack.c.bf16 %v5785, %v5783
  %v5886 = vpack.c.bf16 %v5786, %v5784
  %v5887 = vpack.c.bf16 %v5789, %v5787
  %v5888 = vpack.c.bf16 %v5790, %v5788
  %v5889 = vpack.c.bf16 %v5793, %v5791
  %v5890 = vpack.c.bf16 %v5794, %v5792
  %v5891 = vpack.c.bf16 %v5797, %v5795
  %v5892 = vpack.c.bf16 %v5798, %v5796
  %v5893 = vpack.c.bf16 %v5801, %v5799
  %v5894 = vpack.c.bf16 %v5802, %v5800
  %v5895 = vpack.c.bf16 %v5805, %v5803
  %v5896 = vpack.c.bf16 %v5806, %v5804
  %v5897 = vpack.c.bf16 %v5809, %v5807
  %v5898 = vpack.c.bf16 %v5810, %v5808
  %v5899 = vpack.c.bf16 %v5813, %v5811
  %v5900 = vpack.c.bf16 %v5814, %v5812
  %v5901 = vpack.c.bf16 %v5817, %v5815
  %v5902 = vpack.c.bf16 %v5818, %v5816
  %v5903 = vpack.c.bf16 %v5821, %v5819
  %v5904 = vpack.c.bf16 %v5822, %v5820
  %v5905 = vpack.c.bf16 %v5825, %v5823
  %v5906 = vpack.c.bf16 %v5826, %v5824
  %v5907 = vpack.c.bf16 %v5829, %v5827
  %v5908 = vpack.c.bf16 %v5830, %v5828
  %v5909 = vpack.c.bf16 %v5833, %v5831
  %v5910 = vpack.c.bf16 %v5834, %v5832
  %v5911 = vpack.c.bf16 %v5837, %v5835
  %v5912 = vpack.c.bf16 %v5838, %v5836
  %v5913 = vpack.c.bf16 %v5841, %v5839
  %v5914 = vpack.c.bf16 %v5842, %v5840
  %v5915 = vpack.c.bf16 %v5845, %v5843
  %v5916 = vpack.c.bf16 %v5846, %v5844
  %v5917 = vpack.c.bf16 %v5849, %v5847
  %v5918 = vpack.c.bf16 %v5850, %v5848
  %v5919 = vpack.c.bf16 %v5853, %v5851
  %v5920 = vpack.c.bf16 %v5854, %v5852
  %v5921 = vpack.c.bf16 %v5857, %v5855
  %v5922 = vpack.c.bf16 %v5858, %v5856
  %s5923 = scalar_lea.vmem %s2, 1536
  %v5924 = vld [vmem:[%s5923] sm:$0xff]
  %v5925 = vld [vmem:[%s5923 + $0x8] sm:$0xff]
  %v5926 = vld [vmem:[%s5923 + $0x10] sm:$0xff]
  %v5927 = vld [vmem:[%s5923 + $0x18] sm:$0xff]
  %v5928 = vld [vmem:[%s5923 + $0x20] sm:$0xff]
  %v5929 = vld [vmem:[%s5923 + $0x28] sm:$0xff]
  %v5930 = vld [vmem:[%s5923 + $0x30] sm:$0xff]
  %v5931 = vld [vmem:[%s5923 + $0x38] sm:$0xff]
  %v5932 = vld [vmem:[%s5923 + $0x40] sm:$0xff]
  %v5933 = vld [vmem:[%s5923 + $0x48] sm:$0xff]
  %v5934 = vld [vmem:[%s5923 + $0x50] sm:$0xff]
  %v5935 = vld [vmem:[%s5923 + $0x58] sm:$0xff]
  %v5936 = vld [vmem:[%s5923 + $0x60] sm:$0xff]
  %v5937 = vld [vmem:[%s5923 + $0x68] sm:$0xff]
  %v5938 = vld [vmem:[%s5923 + $0x70] sm:$0xff]
  %v5939 = vld [vmem:[%s5923 + $0x78] sm:$0xff]
  %v5940 = vld [vmem:[%s5923 + $0x80] sm:$0xff]
  %v5941 = vld [vmem:[%s5923 + $0x88] sm:$0xff]
  %v5942 = vld [vmem:[%s5923 + $0x90] sm:$0xff]
  %v5943 = vld [vmem:[%s5923 + $0x98] sm:$0xff]
  %v5944 = vld [vmem:[%s5923 + $0xa0] sm:$0xff]
  %v5945 = vld [vmem:[%s5923 + $0xa8] sm:$0xff]
  %v5946 = vld [vmem:[%s5923 + $0xb0] sm:$0xff]
  %v5947 = vld [vmem:[%s5923 + $0xb8] sm:$0xff]
  %v5948 = vld [vmem:[%s5923 + $0xc0] sm:$0xff]
  %v5949 = vld [vmem:[%s5923 + $0xc8] sm:$0xff]
  %v5950 = vld [vmem:[%s5923 + $0xd0] sm:$0xff]
  %v5951 = vld [vmem:[%s5923 + $0xd8] sm:$0xff]
  %v5952 = vld [vmem:[%s5923 + $0xe0] sm:$0xff]
  %v5953 = vld [vmem:[%s5923 + $0xe8] sm:$0xff]
  %v5954 = vld [vmem:[%s5923 + $0xf0] sm:$0xff]
  %v5955 = vld [vmem:[%s5923 + $0xf8] sm:$0xff]
  %s5956 = scalar_lea.vmem %s3, 7
  %v5957 = vld [vmem:[%s5956] ss:$8 sm:$0x3]
  %v5959 = vlaneseq
  %v5960 = vshrl.u32 %v5959, 7
  %v5961 = vsub.s32 0, %v5960
  %v5962 = vrot.slane %v5957, %v5961
  %v5963 = vlaneseq
  %v5964 = vshrl.u32 %v5963, 7
  %v5965 = vsub.s32 1, %v5964
  %v5966 = vrot.slane %v5957, %v5965
  %v6001 = vunpack.c.l.b16 %v5924
  %v6002 = vunpack.c.h.b16 %v5924
  %v6003 = vunpack.c.l.b16 %v5925
  %v6004 = vunpack.c.h.b16 %v5925
  %v6005 = vunpack.c.l.b16 %v5926
  %v6006 = vunpack.c.h.b16 %v5926
  %v6007 = vunpack.c.l.b16 %v5927
  %v6008 = vunpack.c.h.b16 %v5927
  %v6009 = vunpack.c.l.b16 %v5928
  %v6010 = vunpack.c.h.b16 %v5928
  %v6011 = vunpack.c.l.b16 %v5929
  %v6012 = vunpack.c.h.b16 %v5929
  %v6013 = vunpack.c.l.b16 %v5930
  %v6014 = vunpack.c.h.b16 %v5930
  %v6015 = vunpack.c.l.b16 %v5931
  %v6016 = vunpack.c.h.b16 %v5931
  %v6017 = vunpack.c.l.b16 %v5932
  %v6018 = vunpack.c.h.b16 %v5932
  %v6019 = vunpack.c.l.b16 %v5933
  %v6020 = vunpack.c.h.b16 %v5933
  %v6021 = vunpack.c.l.b16 %v5934
  %v6022 = vunpack.c.h.b16 %v5934
  %v6023 = vunpack.c.l.b16 %v5935
  %v6024 = vunpack.c.h.b16 %v5935
  %v6025 = vunpack.c.l.b16 %v5936
  %v6026 = vunpack.c.h.b16 %v5936
  %v6027 = vunpack.c.l.b16 %v5937
  %v6028 = vunpack.c.h.b16 %v5937
  %v6029 = vunpack.c.l.b16 %v5938
  %v6030 = vunpack.c.h.b16 %v5938
  %v6031 = vunpack.c.l.b16 %v5939
  %v6032 = vunpack.c.h.b16 %v5939
  %v6033 = vunpack.c.l.b16 %v5940
  %v6034 = vunpack.c.h.b16 %v5940
  %v6035 = vunpack.c.l.b16 %v5941
  %v6036 = vunpack.c.h.b16 %v5941
  %v6037 = vunpack.c.l.b16 %v5942
  %v6038 = vunpack.c.h.b16 %v5942
  %v6039 = vunpack.c.l.b16 %v5943
  %v6040 = vunpack.c.h.b16 %v5943
  %v6041 = vunpack.c.l.b16 %v5944
  %v6042 = vunpack.c.h.b16 %v5944
  %v6043 = vunpack.c.l.b16 %v5945
  %v6044 = vunpack.c.h.b16 %v5945
  %v6045 = vunpack.c.l.b16 %v5946
  %v6046 = vunpack.c.h.b16 %v5946
  %v6047 = vunpack.c.l.b16 %v5947
  %v6048 = vunpack.c.h.b16 %v5947
  %v6049 = vunpack.c.l.b16 %v5948
  %v6050 = vunpack.c.h.b16 %v5948
  %v6051 = vunpack.c.l.b16 %v5949
  %v6052 = vunpack.c.h.b16 %v5949
  %v6053 = vunpack.c.l.b16 %v5950
  %v6054 = vunpack.c.h.b16 %v5950
  %v6055 = vunpack.c.l.b16 %v5951
  %v6056 = vunpack.c.h.b16 %v5951
  %v6057 = vunpack.c.l.b16 %v5952
  %v6058 = vunpack.c.h.b16 %v5952
  %v6059 = vunpack.c.l.b16 %v5953
  %v6060 = vunpack.c.h.b16 %v5953
  %v6061 = vunpack.c.l.b16 %v5954
  %v6062 = vunpack.c.h.b16 %v5954
  %v6063 = vunpack.c.l.b16 %v5955
  %v6064 = vunpack.c.h.b16 %v5955
  %v6065 = vpack.c.b16 %v6003, %v6001
  %v6066 = vpack.c.b16 %v6004, %v6002
  %v6067 = vpack.c.b16 %v6007, %v6005
  %v6068 = vpack.c.b16 %v6008, %v6006
  %v6069 = vpack.c.b16 %v6011, %v6009
  %v6070 = vpack.c.b16 %v6012, %v6010
  %v6071 = vpack.c.b16 %v6015, %v6013
  %v6072 = vpack.c.b16 %v6016, %v6014
  %v6073 = vpack.c.b16 %v6019, %v6017
  %v6074 = vpack.c.b16 %v6020, %v6018
  %v6075 = vpack.c.b16 %v6023, %v6021
  %v6076 = vpack.c.b16 %v6024, %v6022
  %v6077 = vpack.c.b16 %v6027, %v6025
  %v6078 = vpack.c.b16 %v6028, %v6026
  %v6079 = vpack.c.b16 %v6031, %v6029
  %v6080 = vpack.c.b16 %v6032, %v6030
  %v6081 = vpack.c.b16 %v6035, %v6033
  %v6082 = vpack.c.b16 %v6036, %v6034
  %v6083 = vpack.c.b16 %v6039, %v6037
  %v6084 = vpack.c.b16 %v6040, %v6038
  %v6085 = vpack.c.b16 %v6043, %v6041
  %v6086 = vpack.c.b16 %v6044, %v6042
  %v6087 = vpack.c.b16 %v6047, %v6045
  %v6088 = vpack.c.b16 %v6048, %v6046
  %v6089 = vpack.c.b16 %v6051, %v6049
  %v6090 = vpack.c.b16 %v6052, %v6050
  %v6091 = vpack.c.b16 %v6055, %v6053
  %v6092 = vpack.c.b16 %v6056, %v6054
  %v6093 = vpack.c.b16 %v6059, %v6057
  %v6094 = vpack.c.b16 %v6060, %v6058
  %v6095 = vpack.c.b16 %v6063, %v6061
  %v6096 = vpack.c.b16 %v6064, %v6062
  %6129 = vmatprep.subr.bf16.mxu0 %v6080
  %6130 = vmatpush1.bf16.msra.mxu0 %v6079
  %6131 = vmatprep.subr.bf16.mxu0 %v6078
  %6132 = vmatpush1.bf16.msra.mxu0 %v6077
  %6133 = vmatprep.subr.bf16.mxu0 %v6076
  %6134 = vmatpush1.bf16.msra.mxu0 %v6075
  %6135 = vmatprep.subr.bf16.mxu0 %v6074
  %6136 = vmatpush1.bf16.msra.mxu0 %v6073
  %6137 = vmatprep.subr.bf16.mxu0 %v6072
  %6138 = vmatpush1.bf16.msra.mxu0 %v6071
  %6139 = vmatprep.subr.bf16.mxu0 %v6070
  %6140 = vmatpush1.bf16.msra.mxu0 %v6069
  %6141 = vmatprep.subr.bf16.mxu0 %v6068
  %6142 = vmatpush1.bf16.msra.mxu0 %v6067
  %6143 = vmatprep.subr.bf16.mxu0 %v6066
  %6144 = vmatpush1.bf16.msra.mxu0 %v6065
  %6145 = vmatprep.subr.bf16.mxu0 %v6096
  %6146 = vmatpush2.bf16.msra.mxu0 %v6095
  %6147 = vmatprep.subr.bf16.mxu0 %v6094
  %6148 = vmatpush2.bf16.msra.mxu0 %v6093
  %6149 = vmatprep.subr.bf16.mxu0 %v6092
  %6150 = vmatpush2.bf16.msra.mxu0 %v6091
  %6151 = vmatprep.subr.bf16.mxu0 %v6090
  %6152 = vmatpush2.bf16.msra.mxu0 %v6089
  %6153 = vmatprep.subr.bf16.mxu0 %v6088
  %6154 = vmatpush2.bf16.msra.mxu0 %v6087
  %6155 = vmatprep.subr.bf16.mxu0 %v6086
  %6156 = vmatpush2.bf16.msra.mxu0 %v6085
  %6157 = vmatprep.subr.bf16.mxu0 %v6084
  %6158 = vmatpush2.bf16.msra.mxu0 %v6083
  %6159 = vmatprep.subr.bf16.mxu0 %v6082
  %6160 = vmatpush2.bf16.msra.mxu0 %v6081
  %6161 = vmatprep.mubr.bf16.mxu0 %v5860
  %6162 = vmatmul.mubr.bf16.gmra.mxu0 %v5859
  %v6163 = vpop.f32.mrf.mxu0
  %v6164 = vadd.f32 %v5962, %v6163
  %v6165 = vpop.f32.mrf.mxu0
  %v6166 = vadd.f32 %v5966, %v6165
  %v6167 = vpop.f32.mrf.mxu0
  %v6168 = vadd.f32 %v5962, %v6167
  %v6169 = vpop.f32.mrf.mxu0
  %v6170 = vadd.f32 %v5966, %v6169
  %6171 = vmatprep.mubr.bf16.mxu0 %v5862
  %6172 = vmatmul.mubr.bf16.gmra.mxu0 %v5861
  %v6173 = vpop.f32.mrf.mxu0
  %v6174 = vadd.f32 %v5962, %v6173
  %v6175 = vpop.f32.mrf.mxu0
  %v6176 = vadd.f32 %v5966, %v6175
  %v6177 = vpop.f32.mrf.mxu0
  %v6178 = vadd.f32 %v5962, %v6177
  %v6179 = vpop.f32.mrf.mxu0
  %v6180 = vadd.f32 %v5966, %v6179
  %6181 = vmatprep.mubr.bf16.mxu0 %v5864
  %6182 = vmatmul.mubr.bf16.gmra.mxu0 %v5863
  %v6183 = vpop.f32.mrf.mxu0
  %v6184 = vadd.f32 %v5962, %v6183
  %v6185 = vpop.f32.mrf.mxu0
  %v6186 = vadd.f32 %v5966, %v6185
  %v6187 = vpop.f32.mrf.mxu0
  %v6188 = vadd.f32 %v5962, %v6187
  %v6189 = vpop.f32.mrf.mxu0
  %v6190 = vadd.f32 %v5966, %v6189
  %6191 = vmatprep.mubr.bf16.mxu0 %v5866
  %6192 = vmatmul.mubr.bf16.gmra.mxu0 %v5865
  %v6193 = vpop.f32.mrf.mxu0
  %v6194 = vadd.f32 %v5962, %v6193
  %v6195 = vpop.f32.mrf.mxu0
  %v6196 = vadd.f32 %v5966, %v6195
  %v6197 = vpop.f32.mrf.mxu0
  %v6198 = vadd.f32 %v5962, %v6197
  %v6199 = vpop.f32.mrf.mxu0
  %v6200 = vadd.f32 %v5966, %v6199
  %6201 = vmatprep.mubr.bf16.mxu0 %v5868
  %6202 = vmatmul.mubr.bf16.gmra.mxu0 %v5867
  %v6203 = vpop.f32.mrf.mxu0
  %v6204 = vadd.f32 %v5962, %v6203
  %v6205 = vpop.f32.mrf.mxu0
  %v6206 = vadd.f32 %v5966, %v6205
  %v6207 = vpop.f32.mrf.mxu0
  %v6208 = vadd.f32 %v5962, %v6207
  %v6209 = vpop.f32.mrf.mxu0
  %v6210 = vadd.f32 %v5966, %v6209
  %6211 = vmatprep.mubr.bf16.mxu0 %v5870
  %6212 = vmatmul.mubr.bf16.gmra.mxu0 %v5869
  %v6213 = vpop.f32.mrf.mxu0
  %v6214 = vadd.f32 %v5962, %v6213
  %v6215 = vpop.f32.mrf.mxu0
  %v6216 = vadd.f32 %v5966, %v6215
  %v6217 = vpop.f32.mrf.mxu0
  %v6218 = vadd.f32 %v5962, %v6217
  %v6219 = vpop.f32.mrf.mxu0
  %v6220 = vadd.f32 %v5966, %v6219
  %6221 = vmatprep.mubr.bf16.mxu0 %v5872
  %6222 = vmatmul.mubr.bf16.gmra.mxu0 %v5871
  %v6223 = vpop.f32.mrf.mxu0
  %v6224 = vadd.f32 %v5962, %v6223
  %v6225 = vpop.f32.mrf.mxu0
  %v6226 = vadd.f32 %v5966, %v6225
  %v6227 = vpop.f32.mrf.mxu0
  %v6228 = vadd.f32 %v5962, %v6227
  %v6229 = vpop.f32.mrf.mxu0
  %v6230 = vadd.f32 %v5966, %v6229
  %6231 = vmatprep.mubr.bf16.mxu0 %v5874
  %6232 = vmatmul.mubr.bf16.gmra.mxu0 %v5873
  %v6233 = vpop.f32.mrf.mxu0
  %v6234 = vadd.f32 %v5962, %v6233
  %v6235 = vpop.f32.mrf.mxu0
  %v6236 = vadd.f32 %v5966, %v6235
  %v6237 = vpop.f32.mrf.mxu0
  %v6238 = vadd.f32 %v5962, %v6237
  %v6239 = vpop.f32.mrf.mxu0
  %v6240 = vadd.f32 %v5966, %v6239
  %6241 = vmatprep.mubr.bf16.mxu0 %v5876
  %6242 = vmatmul.mubr.bf16.gmra.mxu0 %v5875
  %v6243 = vpop.f32.mrf.mxu0
  %v6244 = vadd.f32 %v5962, %v6243
  %v6245 = vpop.f32.mrf.mxu0
  %v6246 = vadd.f32 %v5966, %v6245
  %v6247 = vpop.f32.mrf.mxu0
  %v6248 = vadd.f32 %v5962, %v6247
  %v6249 = vpop.f32.mrf.mxu0
  %v6250 = vadd.f32 %v5966, %v6249
  %6251 = vmatprep.mubr.bf16.mxu0 %v5878
  %6252 = vmatmul.mubr.bf16.gmra.mxu0 %v5877
  %v6253 = vpop.f32.mrf.mxu0
  %v6254 = vadd.f32 %v5962, %v6253
  %v6255 = vpop.f32.mrf.mxu0
  %v6256 = vadd.f32 %v5966, %v6255
  %v6257 = vpop.f32.mrf.mxu0
  %v6258 = vadd.f32 %v5962, %v6257
  %v6259 = vpop.f32.mrf.mxu0
  %v6260 = vadd.f32 %v5966, %v6259
  %6261 = vmatprep.mubr.bf16.mxu0 %v5880
  %6262 = vmatmul.mubr.bf16.gmra.mxu0 %v5879
  %v6263 = vpop.f32.mrf.mxu0
  %v6264 = vadd.f32 %v5962, %v6263
  %v6265 = vpop.f32.mrf.mxu0
  %v6266 = vadd.f32 %v5966, %v6265
  %v6267 = vpop.f32.mrf.mxu0
  %v6268 = vadd.f32 %v5962, %v6267
  %v6269 = vpop.f32.mrf.mxu0
  %v6270 = vadd.f32 %v5966, %v6269
  %6271 = vmatprep.mubr.bf16.mxu0 %v5882
  %6272 = vmatmul.mubr.bf16.gmra.mxu0 %v5881
  %v6273 = vpop.f32.mrf.mxu0
  %v6274 = vadd.f32 %v5962, %v6273
  %v6275 = vpop.f32.mrf.mxu0
  %v6276 = vadd.f32 %v5966, %v6275
  %v6277 = vpop.f32.mrf.mxu0
  %v6278 = vadd.f32 %v5962, %v6277
  %v6279 = vpop.f32.mrf.mxu0
  %v6280 = vadd.f32 %v5966, %v6279
  %6281 = vmatprep.mubr.bf16.mxu0 %v5884
  %6282 = vmatmul.mubr.bf16.gmra.mxu0 %v5883
  %v6283 = vpop.f32.mrf.mxu0
  %v6284 = vadd.f32 %v5962, %v6283
  %v6285 = vpop.f32.mrf.mxu0
  %v6286 = vadd.f32 %v5966, %v6285
  %v6287 = vpop.f32.mrf.mxu0
  %v6288 = vadd.f32 %v5962, %v6287
  %v6289 = vpop.f32.mrf.mxu0
  %v6290 = vadd.f32 %v5966, %v6289
  %6291 = vmatprep.mubr.bf16.mxu0 %v5886
  %6292 = vmatmul.mubr.bf16.gmra.mxu0 %v5885
  %v6293 = vpop.f32.mrf.mxu0
  %v6294 = vadd.f32 %v5962, %v6293
  %v6295 = vpop.f32.mrf.mxu0
  %v6296 = vadd.f32 %v5966, %v6295
  %v6297 = vpop.f32.mrf.mxu0
  %v6298 = vadd.f32 %v5962, %v6297
  %v6299 = vpop.f32.mrf.mxu0
  %v6300 = vadd.f32 %v5966, %v6299
  %6301 = vmatprep.mubr.bf16.mxu0 %v5888
  %6302 = vmatmul.mubr.bf16.gmra.mxu0 %v5887
  %v6303 = vpop.f32.mrf.mxu0
  %v6304 = vadd.f32 %v5962, %v6303
  %v6305 = vpop.f32.mrf.mxu0
  %v6306 = vadd.f32 %v5966, %v6305
  %v6307 = vpop.f32.mrf.mxu0
  %v6308 = vadd.f32 %v5962, %v6307
  %v6309 = vpop.f32.mrf.mxu0
  %v6310 = vadd.f32 %v5966, %v6309
  %6311 = vmatprep.mubr.bf16.mxu0 %v5890
  %6312 = vmatmul.mubr.bf16.gmra.mxu0 %v5889
  %v6313 = vpop.f32.mrf.mxu0
  %v6314 = vadd.f32 %v5962, %v6313
  %v6315 = vpop.f32.mrf.mxu0
  %v6316 = vadd.f32 %v5966, %v6315
  %v6317 = vpop.f32.mrf.mxu0
  %v6318 = vadd.f32 %v5962, %v6317
  %v6319 = vpop.f32.mrf.mxu0
  %v6320 = vadd.f32 %v5966, %v6319
  %6321 = vmatprep.mubr.bf16.mxu0 %v5892
  %6322 = vmatmul.mubr.bf16.gmra.mxu0 %v5891
  %v6323 = vpop.f32.mrf.mxu0
  %v6324 = vadd.f32 %v5962, %v6323
  %v6325 = vpop.f32.mrf.mxu0
  %v6326 = vadd.f32 %v5966, %v6325
  %v6327 = vpop.f32.mrf.mxu0
  %v6328 = vadd.f32 %v5962, %v6327
  %v6329 = vpop.f32.mrf.mxu0
  %v6330 = vadd.f32 %v5966, %v6329
  %6331 = vmatprep.mubr.bf16.mxu0 %v5894
  %6332 = vmatmul.mubr.bf16.gmra.mxu0 %v5893
  %v6333 = vpop.f32.mrf.mxu0
  %v6334 = vadd.f32 %v5962, %v6333
  %v6335 = vpop.f32.mrf.mxu0
  %v6336 = vadd.f32 %v5966, %v6335
  %v6337 = vpop.f32.mrf.mxu0
  %v6338 = vadd.f32 %v5962, %v6337
  %v6339 = vpop.f32.mrf.mxu0
  %v6340 = vadd.f32 %v5966, %v6339
  %6341 = vmatprep.mubr.bf16.mxu0 %v5896
  %6342 = vmatmul.mubr.bf16.gmra.mxu0 %v5895
  %v6343 = vpop.f32.mrf.mxu0
  %v6344 = vadd.f32 %v5962, %v6343
  %v6345 = vpop.f32.mrf.mxu0
  %v6346 = vadd.f32 %v5966, %v6345
  %v6347 = vpop.f32.mrf.mxu0
  %v6348 = vadd.f32 %v5962, %v6347
  %v6349 = vpop.f32.mrf.mxu0
  %v6350 = vadd.f32 %v5966, %v6349
  %6351 = vmatprep.mubr.bf16.mxu0 %v5898
  %6352 = vmatmul.mubr.bf16.gmra.mxu0 %v5897
  %v6353 = vpop.f32.mrf.mxu0
  %v6354 = vadd.f32 %v5962, %v6353
  %v6355 = vpop.f32.mrf.mxu0
  %v6356 = vadd.f32 %v5966, %v6355
  %v6357 = vpop.f32.mrf.mxu0
  %v6358 = vadd.f32 %v5962, %v6357
  %v6359 = vpop.f32.mrf.mxu0
  %v6360 = vadd.f32 %v5966, %v6359
  %6361 = vmatprep.mubr.bf16.mxu0 %v5900
  %6362 = vmatmul.mubr.bf16.gmra.mxu0 %v5899
  %v6363 = vpop.f32.mrf.mxu0
  %v6364 = vadd.f32 %v5962, %v6363
  %v6365 = vpop.f32.mrf.mxu0
  %v6366 = vadd.f32 %v5966, %v6365
  %v6367 = vpop.f32.mrf.mxu0
  %v6368 = vadd.f32 %v5962, %v6367
  %v6369 = vpop.f32.mrf.mxu0
  %v6370 = vadd.f32 %v5966, %v6369
  %6371 = vmatprep.mubr.bf16.mxu0 %v5902
  %6372 = vmatmul.mubr.bf16.gmra.mxu0 %v5901
  %v6373 = vpop.f32.mrf.mxu0
  %v6374 = vadd.f32 %v5962, %v6373
  %v6375 = vpop.f32.mrf.mxu0
  %v6376 = vadd.f32 %v5966, %v6375
  %v6377 = vpop.f32.mrf.mxu0
  %v6378 = vadd.f32 %v5962, %v6377
  %v6379 = vpop.f32.mrf.mxu0
  %v6380 = vadd.f32 %v5966, %v6379
  %6381 = vmatprep.mubr.bf16.mxu0 %v5904
  %6382 = vmatmul.mubr.bf16.gmra.mxu0 %v5903
  %v6383 = vpop.f32.mrf.mxu0
  %v6384 = vadd.f32 %v5962, %v6383
  %v6385 = vpop.f32.mrf.mxu0
  %v6386 = vadd.f32 %v5966, %v6385
  %v6387 = vpop.f32.mrf.mxu0
  %v6388 = vadd.f32 %v5962, %v6387
  %v6389 = vpop.f32.mrf.mxu0
  %v6390 = vadd.f32 %v5966, %v6389
  %6391 = vmatprep.mubr.bf16.mxu0 %v5906
  %6392 = vmatmul.mubr.bf16.gmra.mxu0 %v5905
  %v6393 = vpop.f32.mrf.mxu0
  %v6394 = vadd.f32 %v5962, %v6393
  %v6395 = vpop.f32.mrf.mxu0
  %v6396 = vadd.f32 %v5966, %v6395
  %v6397 = vpop.f32.mrf.mxu0
  %v6398 = vadd.f32 %v5962, %v6397
  %v6399 = vpop.f32.mrf.mxu0
  %v6400 = vadd.f32 %v5966, %v6399
  %6401 = vmatprep.mubr.bf16.mxu0 %v5908
  %6402 = vmatmul.mubr.bf16.gmra.mxu0 %v5907
  %v6403 = vpop.f32.mrf.mxu0
  %v6404 = vadd.f32 %v5962, %v6403
  %v6405 = vpop.f32.mrf.mxu0
  %v6406 = vadd.f32 %v5966, %v6405
  %v6407 = vpop.f32.mrf.mxu0
  %v6408 = vadd.f32 %v5962, %v6407
  %v6409 = vpop.f32.mrf.mxu0
  %v6410 = vadd.f32 %v5966, %v6409
  %6411 = vmatprep.mubr.bf16.mxu0 %v5910
  %6412 = vmatmul.mubr.bf16.gmra.mxu0 %v5909
  %v6413 = vpop.f32.mrf.mxu0
  %v6414 = vadd.f32 %v5962, %v6413
  %v6415 = vpop.f32.mrf.mxu0
  %v6416 = vadd.f32 %v5966, %v6415
  %v6417 = vpop.f32.mrf.mxu0
  %v6418 = vadd.f32 %v5962, %v6417
  %v6419 = vpop.f32.mrf.mxu0
  %v6420 = vadd.f32 %v5966, %v6419
  %6421 = vmatprep.mubr.bf16.mxu0 %v5912
  %6422 = vmatmul.mubr.bf16.gmra.mxu0 %v5911
  %v6423 = vpop.f32.mrf.mxu0
  %v6424 = vadd.f32 %v5962, %v6423
  %v6425 = vpop.f32.mrf.mxu0
  %v6426 = vadd.f32 %v5966, %v6425
  %v6427 = vpop.f32.mrf.mxu0
  %v6428 = vadd.f32 %v5962, %v6427
  %v6429 = vpop.f32.mrf.mxu0
  %v6430 = vadd.f32 %v5966, %v6429
  %6431 = vmatprep.mubr.bf16.mxu0 %v5914
  %6432 = vmatmul.mubr.bf16.gmra.mxu0 %v5913
  %v6433 = vpop.f32.mrf.mxu0
  %v6434 = vadd.f32 %v5962, %v6433
  %v6435 = vpop.f32.mrf.mxu0
  %v6436 = vadd.f32 %v5966, %v6435
  %v6437 = vpop.f32.mrf.mxu0
  %v6438 = vadd.f32 %v5962, %v6437
  %v6439 = vpop.f32.mrf.mxu0
  %v6440 = vadd.f32 %v5966, %v6439
  %6441 = vmatprep.mubr.bf16.mxu0 %v5916
  %6442 = vmatmul.mubr.bf16.gmra.mxu0 %v5915
  %v6443 = vpop.f32.mrf.mxu0
  %v6444 = vadd.f32 %v5962, %v6443
  %v6445 = vpop.f32.mrf.mxu0
  %v6446 = vadd.f32 %v5966, %v6445
  %v6447 = vpop.f32.mrf.mxu0
  %v6448 = vadd.f32 %v5962, %v6447
  %v6449 = vpop.f32.mrf.mxu0
  %v6450 = vadd.f32 %v5966, %v6449
  %6451 = vmatprep.mubr.bf16.mxu0 %v5918
  %6452 = vmatmul.mubr.bf16.gmra.mxu0 %v5917
  %v6453 = vpop.f32.mrf.mxu0
  %v6454 = vadd.f32 %v5962, %v6453
  %v6455 = vpop.f32.mrf.mxu0
  %v6456 = vadd.f32 %v5966, %v6455
  %v6457 = vpop.f32.mrf.mxu0
  %v6458 = vadd.f32 %v5962, %v6457
  %v6459 = vpop.f32.mrf.mxu0
  %v6460 = vadd.f32 %v5966, %v6459
  %6461 = vmatprep.mubr.bf16.mxu0 %v5920
  %6462 = vmatmul.mubr.bf16.gmra.mxu0 %v5919
  %v6463 = vpop.f32.mrf.mxu0
  %v6464 = vadd.f32 %v5962, %v6463
  %v6465 = vpop.f32.mrf.mxu0
  %v6466 = vadd.f32 %v5966, %v6465
  %v6467 = vpop.f32.mrf.mxu0
  %v6468 = vadd.f32 %v5962, %v6467
  %v6469 = vpop.f32.mrf.mxu0
  %v6470 = vadd.f32 %v5966, %v6469
  %6471 = vmatprep.mubr.bf16.mxu0 %v5922
  %6472 = vmatmul.mubr.bf16.gmra.mxu0 %v5921
  %v6473 = vpop.f32.mrf.mxu0
  %v6474 = vadd.f32 %v5962, %v6473
  %v6475 = vpop.f32.mrf.mxu0
  %v6476 = vadd.f32 %v5966, %v6475
  %v6477 = vpop.f32.mrf.mxu0
  %v6478 = vadd.f32 %v5962, %v6477
  %v6479 = vpop.f32.mrf.mxu0
  %v6480 = vadd.f32 %v5966, %v6479
  %6481 = vdwg.mxu0
  %v6482 = vmax.f32 %v6164, 0.0
  %v6483 = vmax.f32 %v6166, 0.0
  %v6484 = vmax.f32 %v6168, 0.0
  %v6485 = vmax.f32 %v6170, 0.0
  %v6486 = vmax.f32 %v6174, 0.0
  %v6487 = vmax.f32 %v6176, 0.0
  %v6488 = vmax.f32 %v6178, 0.0
  %v6489 = vmax.f32 %v6180, 0.0
  %v6490 = vmax.f32 %v6184, 0.0
  %v6491 = vmax.f32 %v6186, 0.0
  %v6492 = vmax.f32 %v6188, 0.0
  %v6493 = vmax.f32 %v6190, 0.0
  %v6494 = vmax.f32 %v6194, 0.0
  %v6495 = vmax.f32 %v6196, 0.0
  %v6496 = vmax.f32 %v6198, 0.0
  %v6497 = vmax.f32 %v6200, 0.0
  %v6498 = vmax.f32 %v6204, 0.0
  %v6499 = vmax.f32 %v6206, 0.0
  %v6500 = vmax.f32 %v6208, 0.0
  %v6501 = vmax.f32 %v6210, 0.0
  %v6502 = vmax.f32 %v6214, 0.0
  %v6503 = vmax.f32 %v6216, 0.0
  %v6504 = vmax.f32 %v6218, 0.0
  %v6505 = vmax.f32 %v6220, 0.0
  %v6506 = vmax.f32 %v6224, 0.0
  %v6507 = vmax.f32 %v6226, 0.0
  %v6508 = vmax.f32 %v6228, 0.0
  %v6509 = vmax.f32 %v6230, 0.0
  %v6510 = vmax.f32 %v6234, 0.0
  %v6511 = vmax.f32 %v6236, 0.0
  %v6512 = vmax.f32 %v6238, 0.0
  %v6513 = vmax.f32 %v6240, 0.0
  %v6514 = vmax.f32 %v6244, 0.0
  %v6515 = vmax.f32 %v6246, 0.0
  %v6516 = vmax.f32 %v6248, 0.0
  %v6517 = vmax.f32 %v6250, 0.0
  %v6518 = vmax.f32 %v6254, 0.0
  %v6519 = vmax.f32 %v6256, 0.0
  %v6520 = vmax.f32 %v6258, 0.0
  %v6521 = vmax.f32 %v6260, 0.0
  %v6522 = vmax.f32 %v6264, 0.0
  %v6523 = vmax.f32 %v6266, 0.0
  %v6524 = vmax.f32 %v6268, 0.0
  %v6525 = vmax.f32 %v6270, 0.0
  %v6526 = vmax.f32 %v6274, 0.0
  %v6527 = vmax.f32 %v6276, 0.0
  %v6528 = vmax.f32 %v6278, 0.0
  %v6529 = vmax.f32 %v6280, 0.0
  %v6530 = vmax.f32 %v6284, 0.0
  %v6531 = vmax.f32 %v6286, 0.0
  %v6532 = vmax.f32 %v6288, 0.0
  %v6533 = vmax.f32 %v6290, 0.0
  %v6534 = vmax.f32 %v6294, 0.0
  %v6535 = vmax.f32 %v6296, 0.0
  %v6536 = vmax.f32 %v6298, 0.0
  %v6537 = vmax.f32 %v6300, 0.0
  %v6538 = vmax.f32 %v6304, 0.0
  %v6539 = vmax.f32 %v6306, 0.0
  %v6540 = vmax.f32 %v6308, 0.0
  %v6541 = vmax.f32 %v6310, 0.0
  %v6542 = vmax.f32 %v6314, 0.0
  %v6543 = vmax.f32 %v6316, 0.0
  %v6544 = vmax.f32 %v6318, 0.0
  %v6545 = vmax.f32 %v6320, 0.0
  %v6546 = vmax.f32 %v6324, 0.0
  %v6547 = vmax.f32 %v6326, 0.0
  %v6548 = vmax.f32 %v6328, 0.0
  %v6549 = vmax.f32 %v6330, 0.0
  %v6550 = vmax.f32 %v6334, 0.0
  %v6551 = vmax.f32 %v6336, 0.0
  %v6552 = vmax.f32 %v6338, 0.0
  %v6553 = vmax.f32 %v6340, 0.0
  %v6554 = vmax.f32 %v6344, 0.0
  %v6555 = vmax.f32 %v6346, 0.0
  %v6556 = vmax.f32 %v6348, 0.0
  %v6557 = vmax.f32 %v6350, 0.0
  %v6558 = vmax.f32 %v6354, 0.0
  %v6559 = vmax.f32 %v6356, 0.0
  %v6560 = vmax.f32 %v6358, 0.0
  %v6561 = vmax.f32 %v6360, 0.0
  %v6562 = vmax.f32 %v6364, 0.0
  %v6563 = vmax.f32 %v6366, 0.0
  %v6564 = vmax.f32 %v6368, 0.0
  %v6565 = vmax.f32 %v6370, 0.0
  %v6566 = vmax.f32 %v6374, 0.0
  %v6567 = vmax.f32 %v6376, 0.0
  %v6568 = vmax.f32 %v6378, 0.0
  %v6569 = vmax.f32 %v6380, 0.0
  %v6570 = vmax.f32 %v6384, 0.0
  %v6571 = vmax.f32 %v6386, 0.0
  %v6572 = vmax.f32 %v6388, 0.0
  %v6573 = vmax.f32 %v6390, 0.0
  %v6574 = vmax.f32 %v6394, 0.0
  %v6575 = vmax.f32 %v6396, 0.0
  %v6576 = vmax.f32 %v6398, 0.0
  %v6577 = vmax.f32 %v6400, 0.0
  %v6578 = vmax.f32 %v6404, 0.0
  %v6579 = vmax.f32 %v6406, 0.0
  %v6580 = vmax.f32 %v6408, 0.0
  %v6581 = vmax.f32 %v6410, 0.0
  %v6582 = vmax.f32 %v6414, 0.0
  %v6583 = vmax.f32 %v6416, 0.0
  %v6584 = vmax.f32 %v6418, 0.0
  %v6585 = vmax.f32 %v6420, 0.0
  %v6586 = vmax.f32 %v6424, 0.0
  %v6587 = vmax.f32 %v6426, 0.0
  %v6588 = vmax.f32 %v6428, 0.0
  %v6589 = vmax.f32 %v6430, 0.0
  %v6590 = vmax.f32 %v6434, 0.0
  %v6591 = vmax.f32 %v6436, 0.0
  %v6592 = vmax.f32 %v6438, 0.0
  %v6593 = vmax.f32 %v6440, 0.0
  %v6594 = vmax.f32 %v6444, 0.0
  %v6595 = vmax.f32 %v6446, 0.0
  %v6596 = vmax.f32 %v6448, 0.0
  %v6597 = vmax.f32 %v6450, 0.0
  %v6598 = vmax.f32 %v6454, 0.0
  %v6599 = vmax.f32 %v6456, 0.0
  %v6600 = vmax.f32 %v6458, 0.0
  %v6601 = vmax.f32 %v6460, 0.0
  %v6602 = vmax.f32 %v6464, 0.0
  %v6603 = vmax.f32 %v6466, 0.0
  %v6604 = vmax.f32 %v6468, 0.0
  %v6605 = vmax.f32 %v6470, 0.0
  %v6606 = vmax.f32 %v6474, 0.0
  %v6607 = vmax.f32 %v6476, 0.0
  %v6608 = vmax.f32 %v6478, 0.0
  %v6609 = vmax.f32 %v6480, 0.0
  %v6610 = vpack.c.bf16 %v6484, %v6482
  %v6611 = vpack.c.bf16 %v6485, %v6483
  %v6612 = vpack.c.bf16 %v6488, %v6486
  %v6613 = vpack.c.bf16 %v6489, %v6487
  %v6614 = vpack.c.bf16 %v6492, %v6490
  %v6615 = vpack.c.bf16 %v6493, %v6491
  %v6616 = vpack.c.bf16 %v6496, %v6494
  %v6617 = vpack.c.bf16 %v6497, %v6495
  %v6618 = vpack.c.bf16 %v6500, %v6498
  %v6619 = vpack.c.bf16 %v6501, %v6499
  %v6620 = vpack.c.bf16 %v6504, %v6502
  %v6621 = vpack.c.bf16 %v6505, %v6503
  %v6622 = vpack.c.bf16 %v6508, %v6506
  %v6623 = vpack.c.bf16 %v6509, %v6507
  %v6624 = vpack.c.bf16 %v6512, %v6510
  %v6625 = vpack.c.bf16 %v6513, %v6511
  %v6626 = vpack.c.bf16 %v6516, %v6514
  %v6627 = vpack.c.bf16 %v6517, %v6515
  %v6628 = vpack.c.bf16 %v6520, %v6518
  %v6629 = vpack.c.bf16 %v6521, %v6519
  %v6630 = vpack.c.bf16 %v6524, %v6522
  %v6631 = vpack.c.bf16 %v6525, %v6523
  %v6632 = vpack.c.bf16 %v6528, %v6526
  %v6633 = vpack.c.bf16 %v6529, %v6527
  %v6634 = vpack.c.bf16 %v6532, %v6530
  %v6635 = vpack.c.bf16 %v6533, %v6531
  %v6636 = vpack.c.bf16 %v6536, %v6534
  %v6637 = vpack.c.bf16 %v6537, %v6535
  %v6638 = vpack.c.bf16 %v6540, %v6538
  %v6639 = vpack.c.bf16 %v6541, %v6539
  %v6640 = vpack.c.bf16 %v6544, %v6542
  %v6641 = vpack.c.bf16 %v6545, %v6543
  %v6642 = vpack.c.bf16 %v6548, %v6546
  %v6643 = vpack.c.bf16 %v6549, %v6547
  %v6644 = vpack.c.bf16 %v6552, %v6550
  %v6645 = vpack.c.bf16 %v6553, %v6551
  %v6646 = vpack.c.bf16 %v6556, %v6554
  %v6647 = vpack.c.bf16 %v6557, %v6555
  %v6648 = vpack.c.bf16 %v6560, %v6558
  %v6649 = vpack.c.bf16 %v6561, %v6559
  %v6650 = vpack.c.bf16 %v6564, %v6562
  %v6651 = vpack.c.bf16 %v6565, %v6563
  %v6652 = vpack.c.bf16 %v6568, %v6566
  %v6653 = vpack.c.bf16 %v6569, %v6567
  %v6654 = vpack.c.bf16 %v6572, %v6570
  %v6655 = vpack.c.bf16 %v6573, %v6571
  %v6656 = vpack.c.bf16 %v6576, %v6574
  %v6657 = vpack.c.bf16 %v6577, %v6575
  %v6658 = vpack.c.bf16 %v6580, %v6578
  %v6659 = vpack.c.bf16 %v6581, %v6579
  %v6660 = vpack.c.bf16 %v6584, %v6582
  %v6661 = vpack.c.bf16 %v6585, %v6583
  %v6662 = vpack.c.bf16 %v6588, %v6586
  %v6663 = vpack.c.bf16 %v6589, %v6587
  %v6664 = vpack.c.bf16 %v6592, %v6590
  %v6665 = vpack.c.bf16 %v6593, %v6591
  %v6666 = vpack.c.bf16 %v6596, %v6594
  %v6667 = vpack.c.bf16 %v6597, %v6595
  %v6668 = vpack.c.bf16 %v6600, %v6598
  %v6669 = vpack.c.bf16 %v6601, %v6599
  %v6670 = vpack.c.bf16 %v6604, %v6602
  %v6671 = vpack.c.bf16 %v6605, %v6603
  %v6672 = vpack.c.bf16 %v6608, %v6606
  %v6673 = vpack.c.bf16 %v6609, %v6607
  %v6674 = vld [vmem:[%s4] sm:$0xf]
  %v6675 = vld [vmem:[%s4 + $0x4] sm:$0xf]
  %v6676 = vld [vmem:[%s4 + $0x8] sm:$0xf]
  %v6677 = vld [vmem:[%s4 + $0xc] sm:$0xf]
  %v6678 = vld [vmem:[%s4 + $0x10] sm:$0xf]
  %v6679 = vld [vmem:[%s4 + $0x14] sm:$0xf]
  %v6680 = vld [vmem:[%s4 + $0x18] sm:$0xf]
  %v6681 = vld [vmem:[%s4 + $0x1c] sm:$0xf]
  %v6682 = vld [vmem:[%s4 + $0x20] sm:$0xf]
  %v6683 = vld [vmem:[%s4 + $0x24] sm:$0xf]
  %v6684 = vld [vmem:[%s4 + $0x28] sm:$0xf]
  %v6685 = vld [vmem:[%s4 + $0x2c] sm:$0xf]
  %v6686 = vld [vmem:[%s4 + $0x30] sm:$0xf]
  %v6687 = vld [vmem:[%s4 + $0x34] sm:$0xf]
  %v6688 = vld [vmem:[%s4 + $0x38] sm:$0xf]
  %v6689 = vld [vmem:[%s4 + $0x3c] sm:$0xf]
  %v6690 = vld [vmem:[%s4 + $0x40] sm:$0xf]
  %v6691 = vld [vmem:[%s4 + $0x44] sm:$0xf]
  %v6692 = vld [vmem:[%s4 + $0x48] sm:$0xf]
  %v6693 = vld [vmem:[%s4 + $0x4c] sm:$0xf]
  %v6694 = vld [vmem:[%s4 + $0x50] sm:$0xf]
  %v6695 = vld [vmem:[%s4 + $0x54] sm:$0xf]
  %v6696 = vld [vmem:[%s4 + $0x58] sm:$0xf]
  %v6697 = vld [vmem:[%s4 + $0x5c] sm:$0xf]
  %v6698 = vld [vmem:[%s4 + $0x60] sm:$0xf]
  %v6699 = vld [vmem:[%s4 + $0x64] sm:$0xf]
  %v6700 = vld [vmem:[%s4 + $0x68] sm:$0xf]
  %v6701 = vld [vmem:[%s4 + $0x6c] sm:$0xf]
  %v6702 = vld [vmem:[%s4 + $0x70] sm:$0xf]
  %v6703 = vld [vmem:[%s4 + $0x74] sm:$0xf]
  %v6704 = vld [vmem:[%s4 + $0x78] sm:$0xf]
  %v6705 = vld [vmem:[%s4 + $0x7c] sm:$0xf]
  %v6706 = vld [vmem:[%s5] sm:$0x1]
  %v6708 = vlaneseq
  %v6709 = vshrl.u32 %v6708, 7
  %v6710 = vsub.s32 0, %v6709
  %v6711 = vrot.slane %v6706, %v6710
  %v6745 = vunpack.c.l.b16 %v6674
  %v6746 = vunpack.c.l.b16 %v6675
  %v6747 = vunpack.c.l.b16 %v6676
  %v6748 = vunpack.c.l.b16 %v6677
  %v6749 = vunpack.c.l.b16 %v6678
  %v6750 = vunpack.c.l.b16 %v6679
  %v6751 = vunpack.c.l.b16 %v6680
  %v6752 = vunpack.c.l.b16 %v6681
  %v6753 = vunpack.c.l.b16 %v6682
  %v6754 = vunpack.c.l.b16 %v6683
  %v6755 = vunpack.c.l.b16 %v6684
  %v6756 = vunpack.c.l.b16 %v6685
  %v6757 = vunpack.c.l.b16 %v6686
  %v6758 = vunpack.c.l.b16 %v6687
  %v6759 = vunpack.c.l.b16 %v6688
  %v6760 = vunpack.c.l.b16 %v6689
  %v6761 = vunpack.c.l.b16 %v6690
  %v6762 = vunpack.c.l.b16 %v6691
  %v6763 = vunpack.c.l.b16 %v6692
  %v6764 = vunpack.c.l.b16 %v6693
  %v6765 = vunpack.c.l.b16 %v6694
  %v6766 = vunpack.c.l.b16 %v6695
  %v6767 = vunpack.c.l.b16 %v6696
  %v6768 = vunpack.c.l.b16 %v6697
  %v6769 = vunpack.c.l.b16 %v6698
  %v6770 = vunpack.c.l.b16 %v6699
  %v6771 = vunpack.c.l.b16 %v6700
  %v6772 = vunpack.c.l.b16 %v6701
  %v6773 = vunpack.c.l.b16 %v6702
  %v6774 = vunpack.c.l.b16 %v6703
  %v6775 = vunpack.c.l.b16 %v6704
  %v6776 = vunpack.c.l.b16 %v6705
  %v6777 = vpack.c.b16 %v6746, %v6745
  %v6778 = vpack.c.b16 %v6748, %v6747
  %v6779 = vpack.c.b16 %v6750, %v6749
  %v6780 = vpack.c.b16 %v6752, %v6751
  %v6781 = vpack.c.b16 %v6754, %v6753
  %v6782 = vpack.c.b16 %v6756, %v6755
  %v6783 = vpack.c.b16 %v6758, %v6757
  %v6784 = vpack.c.b16 %v6760, %v6759
  %v6785 = vpack.c.b16 %v6762, %v6761
  %v6786 = vpack.c.b16 %v6764, %v6763
  %v6787 = vpack.c.b16 %v6766, %v6765
  %v6788 = vpack.c.b16 %v6768, %v6767
  %v6789 = vpack.c.b16 %v6770, %v6769
  %v6790 = vpack.c.b16 %v6772, %v6771
  %v6791 = vpack.c.b16 %v6774, %v6773
  %v6792 = vpack.c.b16 %v6776, %v6775
  %6809 = vmatprep.subr.bf16.mxu0 0
  %6810 = vmatpush1.bf16.msra.mxu0 %v6784
  %6811 = vmatprep.subr.bf16.mxu0 0
  %6812 = vmatpush1.bf16.msra.mxu0 %v6783
  %6813 = vmatprep.subr.bf16.mxu0 0
  %6814 = vmatpush1.bf16.msra.mxu0 %v6782
  %6815 = vmatprep.subr.bf16.mxu0 0
  %6816 = vmatpush1.bf16.msra.mxu0 %v6781
  %6817 = vmatprep.subr.bf16.mxu0 0
  %6818 = vmatpush1.bf16.msra.mxu0 %v6780
  %6819 = vmatprep.subr.bf16.mxu0 0
  %6820 = vmatpush1.bf16.msra.mxu0 %v6779
  %6821 = vmatprep.subr.bf16.mxu0 0
  %6822 = vmatpush1.bf16.msra.mxu0 %v6778
  %6823 = vmatprep.subr.bf16.mxu0 0
  %6824 = vmatpush1.bf16.msra.mxu0 %v6777
  %6825 = vmatprep.subr.bf16.mxu0 0
  %6826 = vmatpush2.bf16.msra.mxu0 %v6792
  %6827 = vmatprep.subr.bf16.mxu0 0
  %6828 = vmatpush2.bf16.msra.mxu0 %v6791
  %6829 = vmatprep.subr.bf16.mxu0 0
  %6830 = vmatpush2.bf16.msra.mxu0 %v6790
  %6831 = vmatprep.subr.bf16.mxu0 0
  %6832 = vmatpush2.bf16.msra.mxu0 %v6789
  %6833 = vmatprep.subr.bf16.mxu0 0
  %6834 = vmatpush2.bf16.msra.mxu0 %v6788
  %6835 = vmatprep.subr.bf16.mxu0 0
  %6836 = vmatpush2.bf16.msra.mxu0 %v6787
  %6837 = vmatprep.subr.bf16.mxu0 0
  %6838 = vmatpush2.bf16.msra.mxu0 %v6786
  %6839 = vmatprep.subr.bf16.mxu0 0
  %6840 = vmatpush2.bf16.msra.mxu0 %v6785
  %6841 = vmatprep.mubr.bf16.mxu0 %v6611
  %6842 = vmatmul.mubr.bf16.gmra.mxu0 %v6610
  %v6843 = vpop.f32.mrf.mxu0
  %v6844 = vadd.f32 %v6711, %v6843
  %v6845 = vpop.f32.mrf.mxu0
  %v6846 = vpop.f32.mrf.mxu0
  %v6847 = vadd.f32 %v6711, %v6846
  %v6848 = vpop.f32.mrf.mxu0
  %6849 = vmatprep.mubr.bf16.mxu0 %v6613
  %6850 = vmatmul.mubr.bf16.gmra.mxu0 %v6612
  %v6851 = vpop.f32.mrf.mxu0
  %v6852 = vadd.f32 %v6711, %v6851
  %v6853 = vpop.f32.mrf.mxu0
  %v6854 = vpop.f32.mrf.mxu0
  %v6855 = vadd.f32 %v6711, %v6854
  %v6856 = vpop.f32.mrf.mxu0
  %6857 = vmatprep.mubr.bf16.mxu0 %v6615
  %6858 = vmatmul.mubr.bf16.gmra.mxu0 %v6614
  %v6859 = vpop.f32.mrf.mxu0
  %v6860 = vadd.f32 %v6711, %v6859
  %v6861 = vpop.f32.mrf.mxu0
  %v6862 = vpop.f32.mrf.mxu0
  %v6863 = vadd.f32 %v6711, %v6862
  %v6864 = vpop.f32.mrf.mxu0
  %6865 = vmatprep.mubr.bf16.mxu0 %v6617
  %6866 = vmatmul.mubr.bf16.gmra.mxu0 %v6616
  %v6867 = vpop.f32.mrf.mxu0
  %v6868 = vadd.f32 %v6711, %v6867
  %v6869 = vpop.f32.mrf.mxu0
  %v6870 = vpop.f32.mrf.mxu0
  %v6871 = vadd.f32 %v6711, %v6870
  %v6872 = vpop.f32.mrf.mxu0
  %6873 = vmatprep.mubr.bf16.mxu0 %v6619
  %6874 = vmatmul.mubr.bf16.gmra.mxu0 %v6618
  %v6875 = vpop.f32.mrf.mxu0
  %v6876 = vadd.f32 %v6711, %v6875
  %v6877 = vpop.f32.mrf.mxu0
  %v6878 = vpop.f32.mrf.mxu0
  %v6879 = vadd.f32 %v6711, %v6878
  %v6880 = vpop.f32.mrf.mxu0
  %6881 = vmatprep.mubr.bf16.mxu0 %v6621
  %6882 = vmatmul.mubr.bf16.gmra.mxu0 %v6620
  %v6883 = vpop.f32.mrf.mxu0
  %v6884 = vadd.f32 %v6711, %v6883
  %v6885 = vpop.f32.mrf.mxu0
  %v6886 = vpop.f32.mrf.mxu0
  %v6887 = vadd.f32 %v6711, %v6886
  %v6888 = vpop.f32.mrf.mxu0
  %6889 = vmatprep.mubr.bf16.mxu0 %v6623
  %6890 = vmatmul.mubr.bf16.gmra.mxu0 %v6622
  %v6891 = vpop.f32.mrf.mxu0
  %v6892 = vadd.f32 %v6711, %v6891
  %v6893 = vpop.f32.mrf.mxu0
  %v6894 = vpop.f32.mrf.mxu0
  %v6895 = vadd.f32 %v6711, %v6894
  %v6896 = vpop.f32.mrf.mxu0
  %6897 = vmatprep.mubr.bf16.mxu0 %v6625
  %6898 = vmatmul.mubr.bf16.gmra.mxu0 %v6624
  %v6899 = vpop.f32.mrf.mxu0
  %v6900 = vadd.f32 %v6711, %v6899
  %v6901 = vpop.f32.mrf.mxu0
  %v6902 = vpop.f32.mrf.mxu0
  %v6903 = vadd.f32 %v6711, %v6902
  %v6904 = vpop.f32.mrf.mxu0
  %6905 = vmatprep.mubr.bf16.mxu0 %v6627
  %6906 = vmatmul.mubr.bf16.gmra.mxu0 %v6626
  %v6907 = vpop.f32.mrf.mxu0
  %v6908 = vadd.f32 %v6711, %v6907
  %v6909 = vpop.f32.mrf.mxu0
  %v6910 = vpop.f32.mrf.mxu0
  %v6911 = vadd.f32 %v6711, %v6910
  %v6912 = vpop.f32.mrf.mxu0
  %6913 = vmatprep.mubr.bf16.mxu0 %v6629
  %6914 = vmatmul.mubr.bf16.gmra.mxu0 %v6628
  %v6915 = vpop.f32.mrf.mxu0
  %v6916 = vadd.f32 %v6711, %v6915
  %v6917 = vpop.f32.mrf.mxu0
  %v6918 = vpop.f32.mrf.mxu0
  %v6919 = vadd.f32 %v6711, %v6918
  %v6920 = vpop.f32.mrf.mxu0
  %6921 = vmatprep.mubr.bf16.mxu0 %v6631
  %6922 = vmatmul.mubr.bf16.gmra.mxu0 %v6630
  %v6923 = vpop.f32.mrf.mxu0
  %v6924 = vadd.f32 %v6711, %v6923
  %v6925 = vpop.f32.mrf.mxu0
  %v6926 = vpop.f32.mrf.mxu0
  %v6927 = vadd.f32 %v6711, %v6926
  %v6928 = vpop.f32.mrf.mxu0
  %6929 = vmatprep.mubr.bf16.mxu0 %v6633
  %6930 = vmatmul.mubr.bf16.gmra.mxu0 %v6632
  %v6931 = vpop.f32.mrf.mxu0
  %v6932 = vadd.f32 %v6711, %v6931
  %v6933 = vpop.f32.mrf.mxu0
  %v6934 = vpop.f32.mrf.mxu0
  %v6935 = vadd.f32 %v6711, %v6934
  %v6936 = vpop.f32.mrf.mxu0
  %6937 = vmatprep.mubr.bf16.mxu0 %v6635
  %6938 = vmatmul.mubr.bf16.gmra.mxu0 %v6634
  %v6939 = vpop.f32.mrf.mxu0
  %v6940 = vadd.f32 %v6711, %v6939
  %v6941 = vpop.f32.mrf.mxu0
  %v6942 = vpop.f32.mrf.mxu0
  %v6943 = vadd.f32 %v6711, %v6942
  %v6944 = vpop.f32.mrf.mxu0
  %6945 = vmatprep.mubr.bf16.mxu0 %v6637
  %6946 = vmatmul.mubr.bf16.gmra.mxu0 %v6636
  %v6947 = vpop.f32.mrf.mxu0
  %v6948 = vadd.f32 %v6711, %v6947
  %v6949 = vpop.f32.mrf.mxu0
  %v6950 = vpop.f32.mrf.mxu0
  %v6951 = vadd.f32 %v6711, %v6950
  %v6952 = vpop.f32.mrf.mxu0
  %6953 = vmatprep.mubr.bf16.mxu0 %v6639
  %6954 = vmatmul.mubr.bf16.gmra.mxu0 %v6638
  %v6955 = vpop.f32.mrf.mxu0
  %v6956 = vadd.f32 %v6711, %v6955
  %v6957 = vpop.f32.mrf.mxu0
  %v6958 = vpop.f32.mrf.mxu0
  %v6959 = vadd.f32 %v6711, %v6958
  %v6960 = vpop.f32.mrf.mxu0
  %6961 = vmatprep.mubr.bf16.mxu0 %v6641
  %6962 = vmatmul.mubr.bf16.gmra.mxu0 %v6640
  %v6963 = vpop.f32.mrf.mxu0
  %v6964 = vadd.f32 %v6711, %v6963
  %v6965 = vpop.f32.mrf.mxu0
  %v6966 = vpop.f32.mrf.mxu0
  %v6967 = vadd.f32 %v6711, %v6966
  %v6968 = vpop.f32.mrf.mxu0
  %6969 = vmatprep.mubr.bf16.mxu0 %v6643
  %6970 = vmatmul.mubr.bf16.gmra.mxu0 %v6642
  %v6971 = vpop.f32.mrf.mxu0
  %v6972 = vadd.f32 %v6711, %v6971
  %v6973 = vpop.f32.mrf.mxu0
  %v6974 = vpop.f32.mrf.mxu0
  %v6975 = vadd.f32 %v6711, %v6974
  %v6976 = vpop.f32.mrf.mxu0
  %6977 = vmatprep.mubr.bf16.mxu0 %v6645
  %6978 = vmatmul.mubr.bf16.gmra.mxu0 %v6644
  %v6979 = vpop.f32.mrf.mxu0
  %v6980 = vadd.f32 %v6711, %v6979
  %v6981 = vpop.f32.mrf.mxu0
  %v6982 = vpop.f32.mrf.mxu0
  %v6983 = vadd.f32 %v6711, %v6982
  %v6984 = vpop.f32.mrf.mxu0
  %6985 = vmatprep.mubr.bf16.mxu0 %v6647
  %6986 = vmatmul.mubr.bf16.gmra.mxu0 %v6646
  %v6987 = vpop.f32.mrf.mxu0
  %v6988 = vadd.f32 %v6711, %v6987
  %v6989 = vpop.f32.mrf.mxu0
  %v6990 = vpop.f32.mrf.mxu0
  %v6991 = vadd.f32 %v6711, %v6990
  %v6992 = vpop.f32.mrf.mxu0
  %6993 = vmatprep.mubr.bf16.mxu0 %v6649
  %6994 = vmatmul.mubr.bf16.gmra.mxu0 %v6648
  %v6995 = vpop.f32.mrf.mxu0
  %v6996 = vadd.f32 %v6711, %v6995
  %v6997 = vpop.f32.mrf.mxu0
  %v6998 = vpop.f32.mrf.mxu0
  %v6999 = vadd.f32 %v6711, %v6998
  %v7000 = vpop.f32.mrf.mxu0
  %7001 = vmatprep.mubr.bf16.mxu0 %v6651
  %7002 = vmatmul.mubr.bf16.gmra.mxu0 %v6650
  %v7003 = vpop.f32.mrf.mxu0
  %v7004 = vadd.f32 %v6711, %v7003
  %v7005 = vpop.f32.mrf.mxu0
  %v7006 = vpop.f32.mrf.mxu0
  %v7007 = vadd.f32 %v6711, %v7006
  %v7008 = vpop.f32.mrf.mxu0
  %7009 = vmatprep.mubr.bf16.mxu0 %v6653
  %7010 = vmatmul.mubr.bf16.gmra.mxu0 %v6652
  %v7011 = vpop.f32.mrf.mxu0
  %v7012 = vadd.f32 %v6711, %v7011
  %v7013 = vpop.f32.mrf.mxu0
  %v7014 = vpop.f32.mrf.mxu0
  %v7015 = vadd.f32 %v6711, %v7014
  %v7016 = vpop.f32.mrf.mxu0
  %7017 = vmatprep.mubr.bf16.mxu0 %v6655
  %7018 = vmatmul.mubr.bf16.gmra.mxu0 %v6654
  %v7019 = vpop.f32.mrf.mxu0
  %v7020 = vadd.f32 %v6711, %v7019
  %v7021 = vpop.f32.mrf.mxu0
  %v7022 = vpop.f32.mrf.mxu0
  %v7023 = vadd.f32 %v6711, %v7022
  %v7024 = vpop.f32.mrf.mxu0
  %7025 = vmatprep.mubr.bf16.mxu0 %v6657
  %7026 = vmatmul.mubr.bf16.gmra.mxu0 %v6656
  %v7027 = vpop.f32.mrf.mxu0
  %v7028 = vadd.f32 %v6711, %v7027
  %v7029 = vpop.f32.mrf.mxu0
  %v7030 = vpop.f32.mrf.mxu0
  %v7031 = vadd.f32 %v6711, %v7030
  %v7032 = vpop.f32.mrf.mxu0
  %7033 = vmatprep.mubr.bf16.mxu0 %v6659
  %7034 = vmatmul.mubr.bf16.gmra.mxu0 %v6658
  %v7035 = vpop.f32.mrf.mxu0
  %v7036 = vadd.f32 %v6711, %v7035
  %v7037 = vpop.f32.mrf.mxu0
  %v7038 = vpop.f32.mrf.mxu0
  %v7039 = vadd.f32 %v6711, %v7038
  %v7040 = vpop.f32.mrf.mxu0
  %7041 = vmatprep.mubr.bf16.mxu0 %v6661
  %7042 = vmatmul.mubr.bf16.gmra.mxu0 %v6660
  %v7043 = vpop.f32.mrf.mxu0
  %v7044 = vadd.f32 %v6711, %v7043
  %v7045 = vpop.f32.mrf.mxu0
  %v7046 = vpop.f32.mrf.mxu0
  %v7047 = vadd.f32 %v6711, %v7046
  %v7048 = vpop.f32.mrf.mxu0
  %7049 = vmatprep.mubr.bf16.mxu0 %v6663
  %7050 = vmatmul.mubr.bf16.gmra.mxu0 %v6662
  %v7051 = vpop.f32.mrf.mxu0
  %v7052 = vadd.f32 %v6711, %v7051
  %v7053 = vpop.f32.mrf.mxu0
  %v7054 = vpop.f32.mrf.mxu0
  %v7055 = vadd.f32 %v6711, %v7054
  %v7056 = vpop.f32.mrf.mxu0
  %7057 = vmatprep.mubr.bf16.mxu0 %v6665
  %7058 = vmatmul.mubr.bf16.gmra.mxu0 %v6664
  %v7059 = vpop.f32.mrf.mxu0
  %v7060 = vadd.f32 %v6711, %v7059
  %v7061 = vpop.f32.mrf.mxu0
  %v7062 = vpop.f32.mrf.mxu0
  %v7063 = vadd.f32 %v6711, %v7062
  %v7064 = vpop.f32.mrf.mxu0
  %7065 = vmatprep.mubr.bf16.mxu0 %v6667
  %7066 = vmatmul.mubr.bf16.gmra.mxu0 %v6666
  %v7067 = vpop.f32.mrf.mxu0
  %v7068 = vadd.f32 %v6711, %v7067
  %v7069 = vpop.f32.mrf.mxu0
  %v7070 = vpop.f32.mrf.mxu0
  %v7071 = vadd.f32 %v6711, %v7070
  %v7072 = vpop.f32.mrf.mxu0
  %7073 = vmatprep.mubr.bf16.mxu0 %v6669
  %7074 = vmatmul.mubr.bf16.gmra.mxu0 %v6668
  %v7075 = vpop.f32.mrf.mxu0
  %v7076 = vadd.f32 %v6711, %v7075
  %v7077 = vpop.f32.mrf.mxu0
  %v7078 = vpop.f32.mrf.mxu0
  %v7079 = vadd.f32 %v6711, %v7078
  %v7080 = vpop.f32.mrf.mxu0
  %7081 = vmatprep.mubr.bf16.mxu0 %v6671
  %7082 = vmatmul.mubr.bf16.gmra.mxu0 %v6670
  %v7083 = vpop.f32.mrf.mxu0
  %v7084 = vadd.f32 %v6711, %v7083
  %v7085 = vpop.f32.mrf.mxu0
  %v7086 = vpop.f32.mrf.mxu0
  %v7087 = vadd.f32 %v6711, %v7086
  %v7088 = vpop.f32.mrf.mxu0
  %7089 = vmatprep.mubr.bf16.mxu0 %v6673
  %7090 = vmatmul.mubr.bf16.gmra.mxu0 %v6672
  %v7091 = vpop.f32.mrf.mxu0
  %v7092 = vadd.f32 %v6711, %v7091
  %v7093 = vpop.f32.mrf.mxu0
  %v7094 = vpop.f32.mrf.mxu0
  %v7095 = vadd.f32 %v6711, %v7094
  %v7096 = vpop.f32.mrf.mxu0
  %7097 = vdwg.mxu0
  %7098 = vst [vmem:[%s6] sm:$0xff] %v6844
  %7099 = vst [vmem:[%s6 + $0x8] sm:$0xff] %v6847
  %7100 = vst [vmem:[%s6 + $0x10] sm:$0xff] %v6852
  %7101 = vst [vmem:[%s6 + $0x18] sm:$0xff] %v6855
  %7102 = vst [vmem:[%s6 + $0x20] sm:$0xff] %v6860
  %7103 = vst [vmem:[%s6 + $0x28] sm:$0xff] %v6863
  %7104 = vst [vmem:[%s6 + $0x30] sm:$0xff] %v6868
  %7105 = vst [vmem:[%s6 + $0x38] sm:$0xff] %v6871
  %7106 = vst [vmem:[%s6 + $0x40] sm:$0xff] %v6876
  %7107 = vst [vmem:[%s6 + $0x48] sm:$0xff] %v6879
  %7108 = vst [vmem:[%s6 + $0x50] sm:$0xff] %v6884
  %7109 = vst [vmem:[%s6 + $0x58] sm:$0xff] %v6887
  %7110 = vst [vmem:[%s6 + $0x60] sm:$0xff] %v6892
  %7111 = vst [vmem:[%s6 + $0x68] sm:$0xff] %v6895
  %7112 = vst [vmem:[%s6 + $0x70] sm:$0xff] %v6900
  %7113 = vst [vmem:[%s6 + $0x78] sm:$0xff] %v6903
  %7114 = vst [vmem:[%s6 + $0x80] sm:$0xff] %v6908
  %7115 = vst [vmem:[%s6 + $0x88] sm:$0xff] %v6911
  %7116 = vst [vmem:[%s6 + $0x90] sm:$0xff] %v6916
  %7117 = vst [vmem:[%s6 + $0x98] sm:$0xff] %v6919
  %7118 = vst [vmem:[%s6 + $0xa0] sm:$0xff] %v6924
  %7119 = vst [vmem:[%s6 + $0xa8] sm:$0xff] %v6927
  %7120 = vst [vmem:[%s6 + $0xb0] sm:$0xff] %v6932
  %7121 = vst [vmem:[%s6 + $0xb8] sm:$0xff] %v6935
  %7122 = vst [vmem:[%s6 + $0xc0] sm:$0xff] %v6940
  %7123 = vst [vmem:[%s6 + $0xc8] sm:$0xff] %v6943
  %7124 = vst [vmem:[%s6 + $0xd0] sm:$0xff] %v6948
  %7125 = vst [vmem:[%s6 + $0xd8] sm:$0xff] %v6951
  %7126 = vst [vmem:[%s6 + $0xe0] sm:$0xff] %v6956
  %7127 = vst [vmem:[%s6 + $0xe8] sm:$0xff] %v6959
  %7128 = vst [vmem:[%s6 + $0xf0] sm:$0xff] %v6964
  %7129 = vst [vmem:[%s6 + $0xf8] sm:$0xff] %v6967
  %7130 = vst [vmem:[%s6 + $0x100] sm:$0xff] %v6972
  %7131 = vst [vmem:[%s6 + $0x108] sm:$0xff] %v6975
  %7132 = vst [vmem:[%s6 + $0x110] sm:$0xff] %v6980
  %7133 = vst [vmem:[%s6 + $0x118] sm:$0xff] %v6983
  %7134 = vst [vmem:[%s6 + $0x120] sm:$0xff] %v6988
  %7135 = vst [vmem:[%s6 + $0x128] sm:$0xff] %v6991
  %7136 = vst [vmem:[%s6 + $0x130] sm:$0xff] %v6996
  %7137 = vst [vmem:[%s6 + $0x138] sm:$0xff] %v6999
  %7138 = vst [vmem:[%s6 + $0x140] sm:$0xff] %v7004
  %7139 = vst [vmem:[%s6 + $0x148] sm:$0xff] %v7007
  %7140 = vst [vmem:[%s6 + $0x150] sm:$0xff] %v7012
  %7141 = vst [vmem:[%s6 + $0x158] sm:$0xff] %v7015
  %7142 = vst [vmem:[%s6 + $0x160] sm:$0xff] %v7020
  %7143 = vst [vmem:[%s6 + $0x168] sm:$0xff] %v7023
  %7144 = vst [vmem:[%s6 + $0x170] sm:$0xff] %v7028
  %7145 = vst [vmem:[%s6 + $0x178] sm:$0xff] %v7031
  %7146 = vst [vmem:[%s6 + $0x180] sm:$0xff] %v7036
  %7147 = vst [vmem:[%s6 + $0x188] sm:$0xff] %v7039
  %7148 = vst [vmem:[%s6 + $0x190] sm:$0xff] %v7044
  %7149 = vst [vmem:[%s6 + $0x198] sm:$0xff] %v7047
  %7150 = vst [vmem:[%s6 + $0x1a0] sm:$0xff] %v7052
  %7151 = vst [vmem:[%s6 + $0x1a8] sm:$0xff] %v7055
  %7152 = vst [vmem:[%s6 + $0x1b0] sm:$0xff] %v7060
  %7153 = vst [vmem:[%s6 + $0x1b8] sm:$0xff] %v7063
  %7154 = vst [vmem:[%s6 + $0x1c0] sm:$0xff] %v7068
  %7155 = vst [vmem:[%s6 + $0x1c8] sm:$0xff] %v7071
  %7156 = vst [vmem:[%s6 + $0x1d0] sm:$0xff] %v7076
  %7157 = vst [vmem:[%s6 + $0x1d8] sm:$0xff] %v7079
  %7158 = vst [vmem:[%s6 + $0x1e0] sm:$0xff] %v7084
  %7159 = vst [vmem:[%s6 + $0x1e8] sm:$0xff] %v7087
  %7160 = vst [vmem:[%s6 + $0x1f0] sm:$0xff] %v7092
  %7161 = vst [vmem:[%s6 + $0x1f8] sm:$0xff] %v7095
  // Predicated region
  $region26: #{prnerf_forward.1} parent=0 // pred_check
    _
  $region27: #{prnerf_forward.1} parent=0 // pred_check_branch
    %7163 = sbr.rel (0) target = $region29
  $region28: #{prnerf_forward.1} parent=0 // pred_region
    _
  $region29: #{prnerf_forward.1} parent=0 // pred_fallthru
    _
  // Predicated region
  $region30: #{prnerf_forward.1} parent=0 // pred_check
    _
  $region31: #{prnerf_forward.1} parent=0 // pred_check_branch
    %7165 = sbr.rel (0) target = $region33
  $region32: #{prnerf_forward.1} parent=0 // pred_region
    _
  $region33: #{prnerf_forward.1} parent=0 // pred_fallthru
    _

</llo_original>
